<compile_context>
chip_gen: v6e
topology: v6e:2x2x1
jax: 0.10.0
libtpu: 0.0.40
codegen_flags: <defaults>
</compile_context>

<pallas_src>
import functools

import jax
import jax.numpy as jnp
from jax import lax
from jax.experimental import pallas as pl
from jax.experimental.pallas import tpu as pltpu

# Model hyper-parameters (2048 / 512 dims fixed by the module).
FEAT = 2048      # backbone output channels (Linear(2048, 512) input)
MAP = 512        # mapSeq hidden
HID = 32         # GRU hidden_size
NLAYERS = 2      # GRU n_layers
VOCAB = 16       # vocab_size

GATE = 128       # padded per-gate column width (>= 2*HID, multiple of 128)
HPAD = GATE      # padded hidden width (h packed as [h_fwd | h_bwd | zeros])
assert 2 * HID <= GATE and GATE % 128 == 0

_VMEM_LIMIT = 32 * 1024 * 1024


# -----------------------------------------------------------------------------
# Kernel 1: conv stem + AdaptiveAvgPool2d((1,None)) + mapSeq Linear+ReLU fused.
#   patches : (Hc*Wc*B, kh*kw) rows ordered (h, w, b)
#   output  : (Wc*B, 512) bf16, rows ordered (t, b)  -- time-major sequence
# Single invocation: one (64,16)x(16,2048) matmul, in-register pooling over the
# Hc row-groups, then the (16,2048)x(2048,512) mapSeq matmul.  The (·,2048)
# feature map never touches HBM.
# -----------------------------------------------------------------------------
def _stem_kernel(p_ref, cw_ref, cb_ref, mw_ref, mb_ref, o_ref, *, hc):
    # conv (im2col matmul) + bias + ReLU over all Hc*Wc*B patch rows at once
    y = jnp.dot(p_ref[...].astype(cw_ref.dtype), cw_ref[...],
                preferred_element_type=jnp.float32) + cb_ref[...]
    y = jnp.maximum(y, 0.0)                                   # (Hc*M, 2048)
    m = y.shape[0] // hc
    # AdaptiveAvgPool2d((1, None)): mean over the Hc row-groups (tile-aligned
    # static slices, no grid accumulate / read-modify-write).
    pooled = y[0:m, :]
    for h in range(1, hc):
        pooled = pooled + y[h * m:(h + 1) * m, :]
    pooled = pooled * (1.0 / hc)                              # (M, 2048)
    # mapSeq: Linear(2048, 512) + ReLU (Dropout = identity at inference)
    z = jnp.dot(pooled.astype(mw_ref.dtype), mw_ref[...],
                preferred_element_type=jnp.float32) + mb_ref[...]
    o_ref[...] = jnp.maximum(z, 0.0).astype(o_ref.dtype)


def pallas_stem(patches, conv_w, conv_b, map_w, map_b, *, hc):
    hcm, _ = patches.shape
    m = hcm // hc
    n = map_w.shape[1]
    kernel = functools.partial(_stem_kernel, hc=hc)
    return pl.pallas_call(
        kernel,
        out_shape=jax.ShapeDtypeStruct((m, n), jnp.bfloat16),
        compiler_params=pltpu.CompilerParams(vmem_limit_bytes=_VMEM_LIMIT),
    )(patches, conv_w, conv_b.reshape(1, -1), map_w, map_b.reshape(1, -1))


# -----------------------------------------------------------------------------
# Kernel 2: ONE bidirectional GRU layer, with the 6-gate input projection fused
# in front of the recurrence, and (optionally) the LayerNorm + Linear +
# LogSoftmax head fused behind it (used for the last layer).
#
# Packing (all produced by init_params):
#   w_ih : (Din, 3*GATE) bf16   columns = [r-block | z-block | n-block],
#                               each block = [fwd(H) | bwd(H) | zero pad]
#   b_ih : (3*GATE,) f32        same column layout (pad = 0), b_ih folded here
#   w_hh : (HPAD, 3*GATE) bf16  block-diagonal: rows [h_fwd | h_bwd | zero pad]
#   b_hh : (3*GATE,) f32
#
# PyTorch gate equations per direction:
#   r = sig(x_r + h W_hr + b_hr); z = sig(x_z + h W_hz + b_hz)
#   n = tanh(x_n + r * (h W_hn + b_hn)); h' = (1-z)*n + z*h
# The backward direction processes input time T-1-s at loop step s; the
# fwd/bwd selection is hoisted out of the recurrence loop.  T is static, so
# the loop is fully unrolled and every slice below is static / vreg-aligned.
# -----------------------------------------------------------------------------
def _gru_layer_kernel(*refs, T, B, H, fuse_head):
    if fuse_head:
        (x_ref, wih_ref, bih_ref, whh_ref, bhh_ref,
         g_ref, beta_ref, wout_ref, bout_ref,
         o_ref, xg_ref, hbuf_ref, cbuf_ref) = refs
    else:
        (x_ref, wih_ref, bih_ref, whh_ref, bhh_ref,
         o_ref, xg_ref, hbuf_ref) = refs

    hpad, G = whh_ref.shape
    gate = G // 3
    H2 = 2 * H

    # ---- fused 6-gate input projection for all T steps / both directions
    xg_ref[...] = jnp.dot(x_ref[...], wih_ref[...],
                          preferred_element_type=jnp.float32) + bih_ref[...]

    # ---- hoist the fwd/bwd time selection off the recurrence critical path:
    # x_ts[s] holds [fwd gates(time s) | bwd gates(time T-1-s)] per gate block.
    col = lax.broadcasted_iota(jnp.int32, (1, G), 1)
    fwd_mask = (col % gate) < H
    x_ts = []
    for s in range(T):
        a = xg_ref[pl.ds(s * B, B), :]
        b = xg_ref[pl.ds((T - 1 - s) * B, B), :]
        x_ts.append(jnp.where(fwd_mask, a, b))

    whh = whh_ref[...]                 # bf16, hoisted out of the unrolled loop
    bhh = bhh_ref[...]                 # f32

    h = jnp.zeros((B, hpad), jnp.float32)          # [h_fwd | h_bwd | zeros]
    for s in range(T):
        x_t = x_ts[s]
        # bf16 operands / f32 accumulate on the recurrent matmul
        hg = jnp.dot(h.astype(whh.dtype), whh,
                     preferred_element_type=jnp.float32) + bhh      # (B, 3*GATE)
        # whole-vreg (128-lane) gate slices
        xr, xz, xn = x_t[:, :gate], x_t[:, gate:2 * gate], x_t[:, 2 * gate:]
        hr, hz, hn = hg[:, :gate], hg[:, gate:2 * gate], hg[:, 2 * gate:]
        r = jax.nn.sigmoid(xr + hr)
        z = jax.nn.sigmoid(xz + hz)
        n = jnp.tanh(xn + r * hn)
        h = (1.0 - z) * n + z * h
        # one lane-dense (128-wide) store per step; no masked gate stores here
        hbuf_ref[pl.ds(s * B, B), :] = h

    # ---- compose the time-major bidirectional output once, after the loop:
    # output time t = [h_fwd from step t | h_bwd from step T-1-t]
    lane = lax.broadcasted_iota(jnp.int32, (1, H2), 1)
    take_fwd = lane < H
    for t in range(T):
        a = hbuf_ref[pl.ds(t * B, B), pl.ds(0, H2)]
        b = hbuf_ref[pl.ds((T - 1 - t) * B, B), pl.ds(0, H2)]
        row = jnp.where(take_fwd, a, b)
        if fuse_head:
            cbuf_ref[pl.ds(t * B, B), :] = row
        else:
            o_ref[pl.ds(t * B, B), :] = row.astype(o_ref.dtype)

    if not fuse_head:
        return

    # ---- fused LayerNorm(2H) + Linear(2H, V) + LogSoftmax head (f32 LN /
    # softmax, bf16 matmul operands)
    y = cbuf_ref[...]                                        # (T*B, 2H) f32
    mean = jnp.mean(y, axis=-1, keepdims=True)
    var = jnp.mean((y - mean) ** 2, axis=-1, keepdims=True)
    yn = (y - mean) * lax.rsqrt(var + 1e-5)
    yn = yn * g_ref[...] + beta_ref[...]
    logits = jnp.dot(yn.astype(wout_ref.dtype), wout_ref[...],
                     preferred_element_type=jnp.float32) + bout_ref[...]
    m = jnp.max(logits, axis=-1, keepdims=True)
    lse = m + jnp.log(jnp.sum(jnp.exp(logits - m), axis=-1, keepdims=True))
    o_ref[...] = logits - lse


def pallas_gru_layer(x, w_ih, b_ih, w_hh, b_hh, *, T, B, H, head=None):
    hpad, G = w_hh.shape
    assert G == 3 * GATE and hpad == HPAD
    fuse_head = head is not None
    kernel = functools.partial(_gru_layer_kernel, T=T, B=B, H=H,
                               fuse_head=fuse_head)
    scratch = [pltpu.VMEM((T * B, G), jnp.float32),      # xg (input projection)
               pltpu.VMEM((T * B, hpad), jnp.float32)]   # per-step hidden states
    ins = [x, w_ih, b_ih.reshape(1, G), w_hh, b_hh.reshape(1, G)]
    if fuse_head:
        ln_g, ln_b, out_w, out_b = head
        V = out_w.shape[1]
        ins += [ln_g.reshape(1, 2 * H), ln_b.reshape(1, 2 * H),
                out_w, out_b.reshape(1, V)]
        scratch.append(pltpu.VMEM((T * B, 2 * H), jnp.float32))  # composed seq
        out_shape = jax.ShapeDtypeStruct((T * B, V), jnp.float32)
    else:
        out_shape = jax.ShapeDtypeStruct((T * B, 2 * H), jnp.bfloat16)
    return pl.pallas_call(
        kernel,
        out_shape=out_shape,
        scratch_shapes=scratch,
        compiler_params=pltpu.CompilerParams(vmem_limit_bytes=_VMEM_LIMIT),
    )(*ins)


# -----------------------------------------------------------------------------
# Full forward pass: 3 Pallas launches (stem, GRU layer 0, GRU layer 1 + head).
# -----------------------------------------------------------------------------
def crnn_forward(x, params):
    B, Cin, H, W = x.shape
    assert Cin == 1
    kh = kw = 4
    Hc, Wc = H // kh, W // kw
    T = Wc

    # TODO(synk): ResNet-152 backbone replaced by a 4x4/stride-4 conv stem.
    # im2col with rows ordered (h, w, b) so the pooled output is directly
    # time-major (T*B, 2048) inside the fused stem kernel.
    patches = (x.reshape(B, Hc, kh, Wc, kw)
                 .transpose(1, 3, 0, 2, 4)             # (Hc, Wc, B, kh, kw)
                 .reshape(Hc * Wc * B, kh * kw))
    layer_in = pallas_stem(patches, params["conv_w"], params["conv_b"],
                           params["map_w"], params["map_b"], hc=Hc)  # (T*B,512) bf16

    n_layers = len(params["gru"])
    for li, lp in enumerate(params["gru"]):
        head = None
        if li == n_layers - 1:
            head = (params["ln_g"], params["ln_b"],
                    params["out_w"], params["out_b"])
        layer_in = pallas_gru_layer(layer_in, lp["w_ih"], lp["b_ih"],
                                    lp["w_hh"], lp["b_hh"],
                                    T=T, B=B, H=HID, head=head)

    # Already time-major: reshape (T*B, V) -> (T, B, V)  (== PyTorch permute).
    return layer_in.reshape(T, B, VOCAB)


# -----------------------------------------------------------------------------
# Deterministic parameter init (PyTorch-style uniform(-1/sqrt(fan), ...)) in
# the padded / packed layouts the kernels expect.  Matmul weights stored bf16.
# -----------------------------------------------------------------------------
def init_params(key):
    keys = jax.random.split(key, 80)
    it = iter(keys)

    def unif(shape, fan_in):
        lim = 1.0 / float(fan_in) ** 0.5
        return jax.random.uniform(next(it), shape, jnp.float32, -lim, lim)

    params = {}
    params["conv_w"] = unif((16, FEAT), 16).astype(jnp.bfloat16)  # (kh*kw*Cin, Cout)
    params["conv_b"] = unif((FEAT,), 16)
    params["map_w"] = unif((FEAT, MAP), FEAT).astype(jnp.bfloat16)
    params["map_b"] = unif((MAP,), FEAT)

    gru = []
    in_dim = MAP
    for _ in range(NLAYERS):
        def gblock_ih(dim):
            # per-gate input block: [fwd(H) | bwd(H) | zero pad] -> (dim, GATE)
            w_f = unif((dim, HID), HID)
            w_b = unif((dim, HID), HID)
            pad = jnp.zeros((dim, GATE - 2 * HID), jnp.float32)
            return jnp.concatenate([w_f, w_b, pad], axis=1)

        def gblock_hh():
            # block-diagonal recurrent block on padded hidden: (HPAD, GATE)
            w_f = unif((HID, HID), HID)
            w_b = unif((HID, HID), HID)
            blk = jnp.zeros((HPAD, GATE), jnp.float32)
            blk = blk.at[:HID, :HID].set(w_f)
            blk = blk.at[HID:2 * HID, HID:2 * HID].set(w_b)
            return blk

        def gbias():
            b_f = unif((HID,), HID)
            b_b = unif((HID,), HID)
            pad = jnp.zeros((GATE - 2 * HID,), jnp.float32)
            return jnp.concatenate([b_f, b_b, pad])

        w_ih = jnp.concatenate([gblock_ih(in_dim) for _ in range(3)], axis=1)
        b_ih = jnp.concatenate([gbias() for _ in range(3)])
        w_hh = jnp.concatenate([gblock_hh() for _ in range(3)], axis=1)
        b_hh = jnp.concatenate([gbias() for _ in range(3)])

        gru.append({"w_ih": w_ih.astype(jnp.bfloat16), "b_ih": b_ih,
                    "w_hh": w_hh.astype(jnp.bfloat16), "b_hh": b_hh})
        in_dim = 2 * HID
    params["gru"] = gru

    params["ln_g"] = jnp.ones((2 * HID,), jnp.float32)
    params["ln_b"] = jnp.zeros((2 * HID,), jnp.float32)
    params["out_w"] = unif((2 * HID, VOCAB), 2 * HID).astype(jnp.bfloat16)
    params["out_b"] = unif((VOCAB,), 2 * HID)
    return params


if __name__ == "__main__":
    key = jax.random.PRNGKey(0)
    pkey, xkey = jax.random.split(key)
    params = init_params(pkey)

    # Small NCHW input (B=2, Cin=1, H=16, W=32) -> sequence length T = W/4 = 8.
    x = jax.random.normal(xkey, (2, 1, 16, 32), dtype=jnp.float32)

    fwd = jax.jit(crnn_forward)
    y = jax.block_until_ready(fwd(x, params))

    assert y.shape == (8, 2, VOCAB), y.shape
    assert bool(jnp.all(jnp.isfinite(y)))
    # log-softmax rows exponentiate to a probability simplex
    assert bool(jnp.allclose(jnp.sum(jnp.exp(y), axis=-1), 1.0, atol=1e-4))
    print("KERNEL_OK")
</pallas_src>

<mosaic_0001>
module attributes {stable_mosaic.version = 11 : i64} {
  func.func @_stem_kernel(%arg0: memref<64x16xf32, #tpu.memory_space<vmem>>, %arg1: memref<16x2048xbf16, #tpu.memory_space<vmem>>, %arg2: memref<1x2048xf32, #tpu.memory_space<vmem>>, %arg3: memref<2048x512xbf16, #tpu.memory_space<vmem>>, %arg4: memref<1x512xf32, #tpu.memory_space<vmem>>, %arg5: memref<16x512xbf16, #tpu.memory_space<vmem>>) attributes {dimension_semantics = [], scalar_prefetch = 0 : i64, scratch_operands = 0 : i64, tpu.core_type = #tpu.core_type<tc>} {
    %c0 = arith.constant 0 : index
    %c0_0 = arith.constant 0 : index
    %0 = vector.load %arg0[%c0, %c0_0] : memref<64x16xf32, #tpu.memory_space<vmem>>, vector<64x16xf32>
    %1 = arith.truncf %0 : vector<64x16xf32> to vector<64x16xbf16>
    %c0_1 = arith.constant 0 : index
    %c0_2 = arith.constant 0 : index
    %2 = vector.load %arg1[%c0_1, %c0_2] : memref<16x2048xbf16, #tpu.memory_space<vmem>>, vector<16x2048xbf16>
    %cst = arith.constant dense<0.000000e+00> : vector<64x2048xf32>
    %3 = tpu.matmul %1, %2, %cst {dimension_numbers = #tpu.dot_dimension_numbers<[1], [0], [0], [1], [0, 0, 1, 1], [], []>} : vector<64x16xbf16>, vector<16x2048xbf16>, vector<64x2048xf32> -> vector<64x2048xf32>
    %c0_3 = arith.constant 0 : index
    %c0_4 = arith.constant 0 : index
    %4 = vector.load %arg2[%c0_3, %c0_4] : memref<1x2048xf32, #tpu.memory_space<vmem>>, vector<1x2048xf32>
    %5 = vector.broadcast %4 : vector<1x2048xf32> to vector<64x2048xf32>
    %6 = arith.addf %3, %5 : vector<64x2048xf32>
    %cst_5 = arith.constant 0.000000e+00 : f32
    %7 = vector.broadcast %cst_5 : f32 to vector<64x2048xf32>
    %8 = arith.maximumf %6, %7 : vector<64x2048xf32>
    %9 = vector.extract_strided_slice %8 {offsets = [0, 0], sizes = [16, 2048], strides = [1, 1]} : vector<64x2048xf32> to vector<16x2048xf32>
    %10 = vector.extract_strided_slice %8 {offsets = [16, 0], sizes = [16, 2048], strides = [1, 1]} : vector<64x2048xf32> to vector<16x2048xf32>
    %11 = arith.addf %9, %10 : vector<16x2048xf32>
    %12 = vector.extract_strided_slice %8 {offsets = [32, 0], sizes = [16, 2048], strides = [1, 1]} : vector<64x2048xf32> to vector<16x2048xf32>
    %13 = arith.addf %11, %12 : vector<16x2048xf32>
    %14 = vector.extract_strided_slice %8 {offsets = [48, 0], sizes = [16, 2048], strides = [1, 1]} : vector<64x2048xf32> to vector<16x2048xf32>
    %15 = arith.addf %13, %14 : vector<16x2048xf32>
    %cst_6 = arith.constant 2.500000e-01 : f32
    %16 = vector.broadcast %cst_6 : f32 to vector<16x2048xf32>
    %17 = arith.mulf %15, %16 : vector<16x2048xf32>
    %18 = arith.truncf %17 : vector<16x2048xf32> to vector<16x2048xbf16>
    %c0_7 = arith.constant 0 : index
    %c0_8 = arith.constant 0 : index
    %19 = vector.load %arg3[%c0_7, %c0_8] : memref<2048x512xbf16, #tpu.memory_space<vmem>>, vector<2048x512xbf16>
    %cst_9 = arith.constant dense<0.000000e+00> : vector<16x512xf32>
    %20 = tpu.matmul %18, %19, %cst_9 {dimension_numbers = #tpu.dot_dimension_numbers<[1], [0], [0], [1], [0, 0, 1, 1], [], []>} : vector<16x2048xbf16>, vector<2048x512xbf16>, vector<16x512xf32> -> vector<16x512xf32>
    %c0_10 = arith.constant 0 : index
    %c0_11 = arith.constant 0 : index
    %21 = vector.load %arg4[%c0_10, %c0_11] : memref<1x512xf32, #tpu.memory_space<vmem>>, vector<1x512xf32>
    %22 = vector.broadcast %21 : vector<1x512xf32> to vector<16x512xf32>
    %23 = arith.addf %20, %22 : vector<16x512xf32>
    %cst_12 = arith.constant 0.000000e+00 : f32
    %24 = vector.broadcast %cst_12 : f32 to vector<16x512xf32>
    %25 = arith.maximumf %23, %24 : vector<16x512xf32>
    %26 = arith.truncf %25 : vector<16x512xf32> to vector<16x512xbf16>
    %c0_13 = arith.constant 0 : index
    %c0_14 = arith.constant 0 : index
    %27 = vector.load %arg5[%c0_13, %c0_14] : memref<16x512xbf16, #tpu.memory_space<vmem>>, vector<16x512xbf16>
    tpu.vector_store %arg5[%c0_13, %c0_14], %26 {strides = array<i32>} : memref<16x512xbf16, #tpu.memory_space<vmem>>, vector<16x512xbf16>,
    return
  }
}

module attributes {stable_mosaic.version = 11 : i64} {
  func.func @_gru_layer_kernel(%arg0: memref<16x512xbf16, #tpu.memory_space<vmem>>, %arg1: memref<512x384xbf16, #tpu.memory_space<vmem>>, %arg2: memref<1x384xf32, #tpu.memory_space<vmem>>, %arg3: memref<128x384xbf16, #tpu.memory_space<vmem>>, %arg4: memref<1x384xf32, #tpu.memory_space<vmem>>, %arg5: memref<16x64xbf16, #tpu.memory_space<vmem>>, %arg6: memref<16x384xf32, #tpu.memory_space<vmem>>, %arg7: memref<16x128xf32, #tpu.memory_space<vmem>>) attributes {dimension_semantics = [], scalar_prefetch = 0 : i64, scratch_operands = 2 : i64, tpu.core_type = #tpu.core_type<tc>} {
    %c0 = arith.constant 0 : index
    %c0_0 = arith.constant 0 : index
    %0 = vector.load %arg0[%c0, %c0_0] : memref<16x512xbf16, #tpu.memory_space<vmem>>, vector<16x512xbf16>
    %c0_1 = arith.constant 0 : index
    %c0_2 = arith.constant 0 : index
    %1 = vector.load %arg1[%c0_1, %c0_2] : memref<512x384xbf16, #tpu.memory_space<vmem>>, vector<512x384xbf16>
    %cst = arith.constant dense<0.000000e+00> : vector<16x384xf32>
    %2 = tpu.matmul %0, %1, %cst {dimension_numbers = #tpu.dot_dimension_numbers<[1], [0], [0], [1], [0, 0, 1, 1], [], []>} : vector<16x512xbf16>, vector<512x384xbf16>, vector<16x384xf32> -> vector<16x384xf32>
    %c0_3 = arith.constant 0 : index
    %c0_4 = arith.constant 0 : index
    %3 = vector.load %arg2[%c0_3, %c0_4] : memref<1x384xf32, #tpu.memory_space<vmem>>, vector<1x384xf32>
    %4 = vector.broadcast %3 : vector<1x384xf32> to vector<16x384xf32>
    %5 = arith.addf %2, %4 : vector<16x384xf32>
    %c0_5 = arith.constant 0 : index
    %c0_6 = arith.constant 0 : index
    %6 = vector.load %arg6[%c0_5, %c0_6] : memref<16x384xf32, #tpu.memory_space<vmem>>, vector<16x384xf32>
    tpu.vector_store %arg6[%c0_5, %c0_6], %5 {strides = array<i32>} : memref<16x384xf32, #tpu.memory_space<vmem>>, vector<16x384xf32>,
    %7 = tpu.iota {dimensions = array<i32: 1>} : vector<1x384xi32>
    %c128_i32 = arith.constant 128 : i32
    %c0_i32 = arith.constant 0 : i32
    %8 = arith.cmpi eq, %c128_i32, %c0_i32 : i32
    %c1_i32 = arith.constant 1 : i32
    %9 = arith.select %8, %c1_i32, %c128_i32 : i32
    %10 = vector.broadcast %9 : i32 to vector<1x384xi32>
    %11 = arith.remsi %7, %10 : vector<1x384xi32>
    %c0_i32_7 = arith.constant 0 : i32
    %12 = vector.broadcast %c0_i32_7 : i32 to vector<1x384xi32>
    %13 = arith.cmpi ne, %11, %12 : vector<1x384xi32>
    %c0_i32_8 = arith.constant 0 : i32
    %14 = vector.broadcast %c0_i32_8 : i32 to vector<1x384xi32>
    %15 = arith.cmpi slt, %11, %14 : vector<1x384xi32>
    %c0_i32_9 = arith.constant 0 : i32
    %16 = arith.cmpi slt, %9, %c0_i32_9 : i32
    %17 = vector.broadcast %16 : i1 to vector<1x384xi1>
    %18 = vector.broadcast %17 : vector<1x384xi1> to vector<1x384xi1>
    %19 = arith.xori %15, %18 : vector<1x384xi1>
    %20 = arith.andi %19, %13 : vector<1x384xi1>
    %21 = vector.broadcast %9 : i32 to vector<1x384xi32>
    %22 = arith.addi %11, %21 : vector<1x384xi32>
    %23 = arith.select %20, %22, %11 : vector<1x384xi1>, vector<1x384xi32>
    %c32_i32 = arith.constant 32 : i32
    %24 = vector.broadcast %c32_i32 : i32 to vector<1x384xi32>
    %25 = arith.cmpi slt, %23, %24 : vector<1x384xi32>
    %c0_10 = arith.constant 0 : index
    %c0_11 = arith.constant 0 : index
    %26 = vector.load %arg6[%c0_10, %c0_11] : memref<16x384xf32, #tpu.memory_space<vmem>>, vector<2x384xf32>
    %c14 = arith.constant 14 : index
    %c0_12 = arith.constant 0 : index
    %27 = vector.load %arg6[%c14, %c0_12] : memref<16x384xf32, #tpu.memory_space<vmem>>, vector<2x384xf32>
    %28 = vector.shape_cast %25 : vector<1x384xi1> to vector<1x384xi1>
    %29 = vector.broadcast %28 : vector<1x384xi1> to vector<2x384xi1>
    %30 = arith.select %29, %26, %27 : vector<2x384xi1>, vector<2x384xf32>
    %c2 = arith.constant 2 : index
    %c0_13 = arith.constant 0 : index
    %31 = vector.load %arg6[%c2, %c0_13] : memref<16x384xf32, #tpu.memory_space<vmem>>, vector<2x384xf32>
    %c12 = arith.constant 12 : index
    %c0_14 = arith.constant 0 : index
    %32 = vector.load %arg6[%c12, %c0_14] : memref<16x384xf32, #tpu.memory_space<vmem>>, vector<2x384xf32>
    %33 = vector.shape_cast %25 : vector<1x384xi1> to vector<1x384xi1>
    %34 = vector.broadcast %33 : vector<1x384xi1> to vector<2x384xi1>
    %35 = arith.select %34, %31, %32 : vector<2x384xi1>, vector<2x384xf32>
    %c4 = arith.constant 4 : index
    %c0_15 = arith.constant 0 : index
    %36 = vector.load %arg6[%c4, %c0_15] : memref<16x384xf32, #tpu.memory_space<vmem>>, vector<2x384xf32>
    %c10 = arith.constant 10 : index
    %c0_16 = arith.constant 0 : index
    %37 = vector.load %arg6[%c10, %c0_16] : memref<16x384xf32, #tpu.memory_space<vmem>>, vector<2x384xf32>
    %38 = vector.shape_cast %25 : vector<1x384xi1> to vector<1x384xi1>
    %39 = vector.broadcast %38 : vector<1x384xi1> to vector<2x384xi1>
    %40 = arith.select %39, %36, %37 : vector<2x384xi1>, vector<2x384xf32>
    %c6 = arith.constant 6 : index
    %c0_17 = arith.constant 0 : index
    %41 = vector.load %arg6[%c6, %c0_17] : memref<16x384xf32, #tpu.memory_space<vmem>>, vector<2x384xf32>
    %c8 = arith.constant 8 : index
    %c0_18 = arith.constant 0 : index
    %42 = vector.load %arg6[%c8, %c0_18] : memref<16x384xf32, #tpu.memory_space<vmem>>, vector<2x384xf32>
    %43 = vector.shape_cast %25 : vector<1x384xi1> to vector<1x384xi1>
    %44 = vector.broadcast %43 : vector<1x384xi1> to vector<2x384xi1>
    %45 = arith.select %44, %41, %42 : vector<2x384xi1>, vector<2x384xf32>
    %c8_19 = arith.constant 8 : index
    %c0_20 = arith.constant 0 : index
    %46 = vector.load %arg6[%c8_19, %c0_20] : memref<16x384xf32, #tpu.memory_space<vmem>>, vector<2x384xf32>
    %c6_21 = arith.constant 6 : index
    %c0_22 = arith.constant 0 : index
    %47 = vector.load %arg6[%c6_21, %c0_22] : memref<16x384xf32, #tpu.memory_space<vmem>>, vector<2x384xf32>
    %48 = vector.shape_cast %25 : vector<1x384xi1> to vector<1x384xi1>
    %49 = vector.broadcast %48 : vector<1x384xi1> to vector<2x384xi1>
    %50 = arith.select %49, %46, %47 : vector<2x384xi1>, vector<2x384xf32>
    %c10_23 = arith.constant 10 : index
    %c0_24 = arith.constant 0 : index
    %51 = vector.load %arg6[%c10_23, %c0_24] : memref<16x384xf32, #tpu.memory_space<vmem>>, vector<2x384xf32>
    %c4_25 = arith.constant 4 : index
    %c0_26 = arith.constant 0 : index
    %52 = vector.load %arg6[%c4_25, %c0_26] : memref<16x384xf32, #tpu.memory_space<vmem>>, vector<2x384xf32>
    %53 = vector.shape_cast %25 : vector<1x384xi1> to vector<1x384xi1>
    %54 = vector.broadcast %53 : vector<1x384xi1> to vector<2x384xi1>
    %55 = arith.select %54, %51, %52 : vector<2x384xi1>, vector<2x384xf32>
    %c12_27 = arith.constant 12 : index
    %c0_28 = arith.constant 0 : index
    %56 = vector.load %arg6[%c12_27, %c0_28] : memref<16x384xf32, #tpu.memory_space<vmem>>, vector<2x384xf32>
    %c2_29 = arith.constant 2 : index
    %c0_30 = arith.constant 0 : index
    %57 = vector.load %arg6[%c2_29, %c0_30] : memref<16x384xf32, #tpu.memory_space<vmem>>, vector<2x384xf32>
    %58 = vector.shape_cast %25 : vector<1x384xi1> to vector<1x384xi1>
    %59 = vector.broadcast %58 : vector<1x384xi1> to vector<2x384xi1>
    %60 = arith.select %59, %56, %57 : vector<2x384xi1>, vector<2x384xf32>
    %c14_31 = arith.constant 14 : index
    %c0_32 = arith.constant 0 : index
    %61 = vector.load %arg6[%c14_31, %c0_32] : memref<16x384xf32, #tpu.memory_space<vmem>>, vector<2x384xf32>
    %c0_33 = arith.constant 0 : index
    %c0_34 = arith.constant 0 : index
    %62 = vector.load %arg6[%c0_33, %c0_34] : memref<16x384xf32, #tpu.memory_space<vmem>>, vector<2x384xf32>
    %63 = vector.shape_cast %25 : vector<1x384xi1> to vector<1x384xi1>
    %64 = vector.broadcast %63 : vector<1x384xi1> to vector<2x384xi1>
    %65 = arith.select %64, %61, %62 : vector<2x384xi1>, vector<2x384xf32>
    %c0_35 = arith.constant 0 : index
    %c0_36 = arith.constant 0 : index
    %66 = vector.load %arg3[%c0_35, %c0_36] : memref<128x384xbf16, #tpu.memory_space<vmem>>, vector<128x384xbf16>
    %c0_37 = arith.constant 0 : index
    %c0_38 = arith.constant 0 : index
    %67 = vector.load %arg4[%c0_37, %c0_38] : memref<1x384xf32, #tpu.memory_space<vmem>>, vector<1x384xf32>
    %cst_39 = arith.constant 0.000000e+00 : f32
    %68 = vector.broadcast %cst_39 : f32 to vector<2x128xf32>
    %69 = arith.truncf %68 : vector<2x128xf32> to vector<2x128xbf16>
    %cst_40 = arith.constant dense<0.000000e+00> : vector<2x384xf32>
    %70 = tpu.matmul %69, %66, %cst_40 {dimension_numbers = #tpu.dot_dimension_numbers<[1], [0], [0], [1], [0, 0, 1, 1], [], []>} : vector<2x128xbf16>, vector<128x384xbf16>, vector<2x384xf32> -> vector<2x384xf32>
    %71 = vector.broadcast %67 : vector<1x384xf32> to vector<2x384xf32>
    %72 = arith.addf %70, %71 : vector<2x384xf32>
    %73 = vector.extract_strided_slice %30 {offsets = [0, 0], sizes = [2, 128], strides = [1, 1]} : vector<2x384xf32> to vector<2x128xf32>
    %74 = vector.extract_strided_slice %30 {offsets = [0, 128], sizes = [2, 128], strides = [1, 1]} : vector<2x384xf32> to vector<2x128xf32>
    %75 = vector.extract_strided_slice %30 {offsets = [0, 256], sizes = [2, 128], strides = [1, 1]} : vector<2x384xf32> to vector<2x128xf32>
    %76 = vector.extract_strided_slice %72 {offsets = [0, 0], sizes = [2, 128], strides = [1, 1]} : vector<2x384xf32> to vector<2x128xf32>
    %77 = vector.extract_strided_slice %72 {offsets = [0, 128], sizes = [2, 128], strides = [1, 1]} : vector<2x384xf32> to vector<2x128xf32>
    %78 = vector.extract_strided_slice %72 {offsets = [0, 256], sizes = [2, 128], strides = [1, 1]} : vector<2x384xf32> to vector<2x128xf32>
    %79 = arith.addf %73, %76 : vector<2x128xf32>
    %80 = arith.negf %79 : vector<2x128xf32>
    %81 = math.exp %80 : vector<2x128xf32>
    %cst_41 = arith.constant 1.000000e+00 : f32
    %82 = vector.broadcast %cst_41 : f32 to vector<2x128xf32>
    %83 = arith.addf %82, %81 : vector<2x128xf32>
    %84 = arith.divf %82, %83 : vector<2x128xf32>
    %85 = arith.addf %74, %77 : vector<2x128xf32>
    %86 = arith.negf %85 : vector<2x128xf32>
    %87 = math.exp %86 : vector<2x128xf32>
    %cst_42 = arith.constant 1.000000e+00 : f32
    %88 = vector.broadcast %cst_42 : f32 to vector<2x128xf32>
    %89 = arith.addf %88, %87 : vector<2x128xf32>
    %90 = arith.divf %88, %89 : vector<2x128xf32>
    %91 = arith.mulf %84, %78 : vector<2x128xf32>
    %92 = arith.addf %75, %91 : vector<2x128xf32>
    %93 = math.tanh %92 : vector<2x128xf32>
    %cst_43 = arith.constant 1.000000e+00 : f32
    %94 = vector.broadcast %cst_43 : f32 to vector<2x128xf32>
    %95 = arith.subf %94, %90 : vector<2x128xf32>
    %96 = arith.mulf %95, %93 : vector<2x128xf32>
    %97 = arith.mulf %90, %68 : vector<2x128xf32>
    %98 = arith.addf %96, %97 : vector<2x128xf32>
    %c0_44 = arith.constant 0 : index
    %c0_45 = arith.constant 0 : index
    %99 = vector.load %arg7[%c0_44, %c0_45] : memref<16x128xf32, #tpu.memory_space<vmem>>, vector<2x128xf32>
    tpu.vector_store %arg7[%c0_44, %c0_45], %98 {strides = array<i32>} : memref<16x128xf32, #tpu.memory_space<vmem>>, vector<2x128xf32>,
    %100 = arith.truncf %98 : vector<2x128xf32> to vector<2x128xbf16>
    %cst_46 = arith.constant dense<0.000000e+00> : vector<2x384xf32>
    %101 = tpu.matmul %100, %66, %cst_46 {dimension_numbers = #tpu.dot_dimension_numbers<[1], [0], [0], [1], [0, 0, 1, 1], [], []>} : vector<2x128xbf16>, vector<128x384xbf16>, vector<2x384xf32> -> vector<2x384xf32>
    %102 = vector.broadcast %67 : vector<1x384xf32> to vector<2x384xf32>
    %103 = arith.addf %101, %102 : vector<2x384xf32>
    %104 = vector.extract_strided_slice %35 {offsets = [0, 0], sizes = [2, 128], strides = [1, 1]} : vector<2x384xf32> to vector<2x128xf32>
    %105 = vector.extract_strided_slice %35 {offsets = [0, 128], sizes = [2, 128], strides = [1, 1]} : vector<2x384xf32> to vector<2x128xf32>
    %106 = vector.extract_strided_slice %35 {offsets = [0, 256], sizes = [2, 128], strides = [1, 1]} : vector<2x384xf32> to vector<2x128xf32>
    %107 = vector.extract_strided_slice %103 {offsets = [0, 0], sizes = [2, 128], strides = [1, 1]} : vector<2x384xf32> to vector<2x128xf32>
    %108 = vector.extract_strided_slice %103 {offsets = [0, 128], sizes = [2, 128], strides = [1, 1]} : vector<2x384xf32> to vector<2x128xf32>
    %109 = vector.extract_strided_slice %103 {offsets = [0, 256], sizes = [2, 128], strides = [1, 1]} : vector<2x384xf32> to vector<2x128xf32>
    %110 = arith.addf %104, %107 : vector<2x128xf32>
    %111 = arith.negf %110 : vector<2x128xf32>
    %112 = math.exp %111 : vector<2x128xf32>
    %cst_47 = arith.constant 1.000000e+00 : f32
    %113 = vector.broadcast %cst_47 : f32 to vector<2x128xf32>
    %114 = arith.addf %113, %112 : vector<2x128xf32>
    %115 = arith.divf %113, %114 : vector<2x128xf32>
    %116 = arith.addf %105, %108 : vector<2x128xf32>
    %117 = arith.negf %116 : vector<2x128xf32>
    %118 = math.exp %117 : vector<2x128xf32>
    %cst_48 = arith.constant 1.000000e+00 : f32
    %119 = vector.broadcast %cst_48 : f32 to vector<2x128xf32>
    %120 = arith.addf %119, %118 : vector<2x128xf32>
    %121 = arith.divf %119, %120 : vector<2x128xf32>
    %122 = arith.mulf %115, %109 : vector<2x128xf32>
    %123 = arith.addf %106, %122 : vector<2x128xf32>
    %124 = math.tanh %123 : vector<2x128xf32>
    %cst_49 = arith.constant 1.000000e+00 : f32
    %125 = vector.broadcast %cst_49 : f32 to vector<2x128xf32>
    %126 = arith.subf %125, %121 : vector<2x128xf32>
    %127 = arith.mulf %126, %124 : vector<2x128xf32>
    %128 = arith.mulf %121, %98 : vector<2x128xf32>
    %129 = arith.addf %127, %128 : vector<2x128xf32>
    %c2_50 = arith.constant 2 : index
    %c0_51 = arith.constant 0 : index
    %130 = vector.load %arg7[%c2_50, %c0_51] : memref<16x128xf32, #tpu.memory_space<vmem>>, vector<2x128xf32>
    tpu.vector_store %arg7[%c2_50, %c0_51], %129 {strides = array<i32>} : memref<16x128xf32, #tpu.memory_space<vmem>>, vector<2x128xf32>,
    %131 = arith.truncf %129 : vector<2x128xf32> to vector<2x128xbf16>
    %cst_52 = arith.constant dense<0.000000e+00> : vector<2x384xf32>
    %132 = tpu.matmul %131, %66, %cst_52 {dimension_numbers = #tpu.dot_dimension_numbers<[1], [0], [0], [1], [0, 0, 1, 1], [], []>} : vector<2x128xbf16>, vector<128x384xbf16>, vector<2x384xf32> -> vector<2x384xf32>
    %133 = vector.broadcast %67 : vector<1x384xf32> to vector<2x384xf32>
    %134 = arith.addf %132, %133 : vector<2x384xf32>
    %135 = vector.extract_strided_slice %40 {offsets = [0, 0], sizes = [2, 128], strides = [1, 1]} : vector<2x384xf32> to vector<2x128xf32>
    %136 = vector.extract_strided_slice %40 {offsets = [0, 128], sizes = [2, 128], strides = [1, 1]} : vector<2x384xf32> to vector<2x128xf32>
    %137 = vector.extract_strided_slice %40 {offsets = [0, 256], sizes = [2, 128], strides = [1, 1]} : vector<2x384xf32> to vector<2x128xf32>
    %138 = vector.extract_strided_slice %134 {offsets = [0, 0], sizes = [2, 128], strides = [1, 1]} : vector<2x384xf32> to vector<2x128xf32>
    %139 = vector.extract_strided_slice %134 {offsets = [0, 128], sizes = [2, 128], strides = [1, 1]} : vector<2x384xf32> to vector<2x128xf32>
    %140 = vector.extract_strided_slice %134 {offsets = [0, 256], sizes = [2, 128], strides = [1, 1]} : vector<2x384xf32> to vector<2x128xf32>
    %141 = arith.addf %135, %138 : vector<2x128xf32>
    %142 = arith.negf %141 : vector<2x128xf32>
    %143 = math.exp %142 : vector<2x128xf32>
    %cst_53 = arith.constant 1.000000e+00 : f32
    %144 = vector.broadcast %cst_53 : f32 to vector<2x128xf32>
    %145 = arith.addf %144, %143 : vector<2x128xf32>
    %146 = arith.divf %144, %145 : vector<2x128xf32>
    %147 = arith.addf %136, %139 : vector<2x128xf32>
    %148 = arith.negf %147 : vector<2x128xf32>
    %149 = math.exp %148 : vector<2x128xf32>
    %cst_54 = arith.constant 1.000000e+00 : f32
    %150 = vector.broadcast %cst_54 : f32 to vector<2x128xf32>
    %151 = arith.addf %150, %149 : vector<2x128xf32>
    %152 = arith.divf %150, %151 : vector<2x128xf32>
    %153 = arith.mulf %146, %140 : vector<2x128xf32>
    %154 = arith.addf %137, %153 : vector<2x128xf32>
    %155 = math.tanh %154 : vector<2x128xf32>
    %cst_55 = arith.constant 1.000000e+00 : f32
    %156 = vector.broadcast %cst_55 : f32 to vector<2x128xf32>
    %157 = arith.subf %156, %152 : vector<2x128xf32>
    %158 = arith.mulf %157, %155 : vector<2x128xf32>
    %159 = arith.mulf %152, %129 : vector<2x128xf32>
    %160 = arith.addf %158, %159 : vector<2x128xf32>
    %c4_56 = arith.constant 4 : index
    %c0_57 = arith.constant 0 : index
    %161 = vector.load %arg7[%c4_56, %c0_57] : memref<16x128xf32, #tpu.memory_space<vmem>>, vector<2x128xf32>
    tpu.vector_store %arg7[%c4_56, %c0_57], %160 {strides = array<i32>} : memref<16x128xf32, #tpu.memory_space<vmem>>, vector<2x128xf32>,
    %162 = arith.truncf %160 : vector<2x128xf32> to vector<2x128xbf16>
    %cst_58 = arith.constant dense<0.000000e+00> : vector<2x384xf32>
    %163 = tpu.matmul %162, %66, %cst_58 {dimension_numbers = #tpu.dot_dimension_numbers<[1], [0], [0], [1], [0, 0, 1, 1], [], []>} : vector<2x128xbf16>, vector<128x384xbf16>, vector<2x384xf32> -> vector<2x384xf32>
    %164 = vector.broadcast %67 : vector<1x384xf32> to vector<2x384xf32>
    %165 = arith.addf %163, %164 : vector<2x384xf32>
    %166 = vector.extract_strided_slice %45 {offsets = [0, 0], sizes = [2, 128], strides = [1, 1]} : vector<2x384xf32> to vector<2x128xf32>
    %167 = vector.extract_strided_slice %45 {offsets = [0, 128], sizes = [2, 128], strides = [1, 1]} : vector<2x384xf32> to vector<2x128xf32>
    %168 = vector.extract_strided_slice %45 {offsets = [0, 256], sizes = [2, 128], strides = [1, 1]} : vector<2x384xf32> to vector<2x128xf32>
    %169 = vector.extract_strided_slice %165 {offsets = [0, 0], sizes = [2, 128], strides = [1, 1]} : vector<2x384xf32> to vector<2x128xf32>
    %170 = vector.extract_strided_slice %165 {offsets = [0, 128], sizes = [2, 128], strides = [1, 1]} : vector<2x384xf32> to vector<2x128xf32>
    %171 = vector.extract_strided_slice %165 {offsets = [0, 256], sizes = [2, 128], strides = [1, 1]} : vector<2x384xf32> to vector<2x128xf32>
    %172 = arith.addf %166, %169 : vector<2x128xf32>
    %173 = arith.negf %172 : vector<2x128xf32>
    %174 = math.exp %173 : vector<2x128xf32>
    %cst_59 = arith.constant 1.000000e+00 : f32
    %175 = vector.broadcast %cst_59 : f32 to vector<2x128xf32>
    %176 = arith.addf %175, %174 : vector<2x128xf32>
    %177 = arith.divf %175, %176 : vector<2x128xf32>
    %178 = arith.addf %167, %170 : vector<2x128xf32>
    %179 = arith.negf %178 : vector<2x128xf32>
    %180 = math.exp %179 : vector<2x128xf32>
    %cst_60 = arith.constant 1.000000e+00 : f32
    %181 = vector.broadcast %cst_60 : f32 to vector<2x128xf32>
    %182 = arith.addf %181, %180 : vector<2x128xf32>
    %183 = arith.divf %181, %182 : vector<2x128xf32>
    %184 = arith.mulf %177, %171 : vector<2x128xf32>
    %185 = arith.addf %168, %184 : vector<2x128xf32>
    %186 = math.tanh %185 : vector<2x128xf32>
    %cst_61 = arith.constant 1.000000e+00 : f32
    %187 = vector.broadcast %cst_61 : f32 to vector<2x128xf32>
    %188 = arith.subf %187, %183 : vector<2x128xf32>
    %189 = arith.mulf %188, %186 : vector<2x128xf32>
    %190 = arith.mulf %183, %160 : vector<2x128xf32>
    %191 = arith.addf %189, %190 : vector<2x128xf32>
    %c6_62 = arith.constant 6 : index
    %c0_63 = arith.constant 0 : index
    %192 = vector.load %arg7[%c6_62, %c0_63] : memref<16x128xf32, #tpu.memory_space<vmem>>, vector<2x128xf32>
    tpu.vector_store %arg7[%c6_62, %c0_63], %191 {strides = array<i32>} : memref<16x128xf32, #tpu.memory_space<vmem>>, vector<2x128xf32>,
    %193 = arith.truncf %191 : vector<2x128xf32> to vector<2x128xbf16>
    %cst_64 = arith.constant dense<0.000000e+00> : vector<2x384xf32>
    %194 = tpu.matmul %193, %66, %cst_64 {dimension_numbers = #tpu.dot_dimension_numbers<[1], [0], [0], [1], [0, 0, 1, 1], [], []>} : vector<2x128xbf16>, vector<128x384xbf16>, vector<2x384xf32> -> vector<2x384xf32>
    %195 = vector.broadcast %67 : vector<1x384xf32> to vector<2x384xf32>
    %196 = arith.addf %194, %195 : vector<2x384xf32>
    %197 = vector.extract_strided_slice %50 {offsets = [0, 0], sizes = [2, 128], strides = [1, 1]} : vector<2x384xf32> to vector<2x128xf32>
    %198 = vector.extract_strided_slice %50 {offsets = [0, 128], sizes = [2, 128], strides = [1, 1]} : vector<2x384xf32> to vector<2x128xf32>
    %199 = vector.extract_strided_slice %50 {offsets = [0, 256], sizes = [2, 128], strides = [1, 1]} : vector<2x384xf32> to vector<2x128xf32>
    %200 = vector.extract_strided_slice %196 {offsets = [0, 0], sizes = [2, 128], strides = [1, 1]} : vector<2x384xf32> to vector<2x128xf32>
    %201 = vector.extract_strided_slice %196 {offsets = [0, 128], sizes = [2, 128], strides = [1, 1]} : vector<2x384xf32> to vector<2x128xf32>
    %202 = vector.extract_strided_slice %196 {offsets = [0, 256], sizes = [2, 128], strides = [1, 1]} : vector<2x384xf32> to vector<2x128xf32>
    %203 = arith.addf %197, %200 : vector<2x128xf32>
    %204 = arith.negf %203 : vector<2x128xf32>
    %205 = math.exp %204 : vector<2x128xf32>
    %cst_65 = arith.constant 1.000000e+00 : f32
    %206 = vector.broadcast %cst_65 : f32 to vector<2x128xf32>
    %207 = arith.addf %206, %205 : vector<2x128xf32>
    %208 = arith.divf %206, %207 : vector<2x128xf32>
    %209 = arith.addf %198, %201 : vector<2x128xf32>
    %210 = arith.negf %209 : vector<2x128xf32>
    %211 = math.exp %210 : vector<2x128xf32>
    %cst_66 = arith.constant 1.000000e+00 : f32
    %212 = vector.broadcast %cst_66 : f32 to vector<2x128xf32>
    %213 = arith.addf %212, %211 : vector<2x128xf32>
    %214 = arith.divf %212, %213 : vector<2x128xf32>
    %215 = arith.mulf %208, %202 : vector<2x128xf32>
    %216 = arith.addf %199, %215 : vector<2x128xf32>
    %217 = math.tanh %216 : vector<2x128xf32>
    %cst_67 = arith.constant 1.000000e+00 : f32
    %218 = vector.broadcast %cst_67 : f32 to vector<2x128xf32>
    %219 = arith.subf %218, %214 : vector<2x128xf32>
    %220 = arith.mulf %219, %217 : vector<2x128xf32>
    %221 = arith.mulf %214, %191 : vector<2x128xf32>
    %222 = arith.addf %220, %221 : vector<2x128xf32>
    %c8_68 = arith.constant 8 : index
    %c0_69 = arith.constant 0 : index
    %223 = vector.load %arg7[%c8_68, %c0_69] : memref<16x128xf32, #tpu.memory_space<vmem>>, vector<2x128xf32>
    tpu.vector_store %arg7[%c8_68, %c0_69], %222 {strides = array<i32>} : memref<16x128xf32, #tpu.memory_space<vmem>>, vector<2x128xf32>,
    %224 = arith.truncf %222 : vector<2x128xf32> to vector<2x128xbf16>
    %cst_70 = arith.constant dense<0.000000e+00> : vector<2x384xf32>
    %225 = tpu.matmul %224, %66, %cst_70 {dimension_numbers = #tpu.dot_dimension_numbers<[1], [0], [0], [1], [0, 0, 1, 1], [], []>} : vector<2x128xbf16>, vector<128x384xbf16>, vector<2x384xf32> -> vector<2x384xf32>
    %226 = vector.broadcast %67 : vector<1x384xf32> to vector<2x384xf32>
    %227 = arith.addf %225, %226 : vector<2x384xf32>
    %228 = vector.extract_strided_slice %55 {offsets = [0, 0], sizes = [2, 128], strides = [1, 1]} : vector<2x384xf32> to vector<2x128xf32>
    %229 = vector.extract_strided_slice %55 {offsets = [0, 128], sizes = [2, 128], strides = [1, 1]} : vector<2x384xf32> to vector<2x128xf32>
    %230 = vector.extract_strided_slice %55 {offsets = [0, 256], sizes = [2, 128], strides = [1, 1]} : vector<2x384xf32> to vector<2x128xf32>
    %231 = vector.extract_strided_slice %227 {offsets = [0, 0], sizes = [2, 128], strides = [1, 1]} : vector<2x384xf32> to vector<2x128xf32>
    %232 = vector.extract_strided_slice %227 {offsets = [0, 128], sizes = [2, 128], strides = [1, 1]} : vector<2x384xf32> to vector<2x128xf32>
    %233 = vector.extract_strided_slice %227 {offsets = [0, 256], sizes = [2, 128], strides = [1, 1]} : vector<2x384xf32> to vector<2x128xf32>
    %234 = arith.addf %228, %231 : vector<2x128xf32>
    %235 = arith.negf %234 : vector<2x128xf32>
    %236 = math.exp %235 : vector<2x128xf32>
    %cst_71 = arith.constant 1.000000e+00 : f32
    %237 = vector.broadcast %cst_71 : f32 to vector<2x128xf32>
    %238 = arith.addf %237, %236 : vector<2x128xf32>
    %239 = arith.divf %237, %238 : vector<2x128xf32>
    %240 = arith.addf %229, %232 : vector<2x128xf32>
    %241 = arith.negf %240 : vector<2x128xf32>
    %242 = math.exp %241 : vector<2x128xf32>
    %cst_72 = arith.constant 1.000000e+00 : f32
    %243 = vector.broadcast %cst_72 : f32 to vector<2x128xf32>
    %244 = arith.addf %243, %242 : vector<2x128xf32>
    %245 = arith.divf %243, %244 : vector<2x128xf32>
    %246 = arith.mulf %239, %233 : vector<2x128xf32>
    %247 = arith.addf %230, %246 : vector<2x128xf32>
    %248 = math.tanh %247 : vector<2x128xf32>
    %cst_73 = arith.constant 1.000000e+00 : f32
    %249 = vector.broadcast %cst_73 : f32 to vector<2x128xf32>
    %250 = arith.subf %249, %245 : vector<2x128xf32>
    %251 = arith.mulf %250, %248 : vector<2x128xf32>
    %252 = arith.mulf %245, %222 : vector<2x128xf32>
    %253 = arith.addf %251, %252 : vector<2x128xf32>
    %c10_74 = arith.constant 10 : index
    %c0_75 = arith.constant 0 : index
    %254 = vector.load %arg7[%c10_74, %c0_75] : memref<16x128xf32, #tpu.memory_space<vmem>>, vector<2x128xf32>
    tpu.vector_store %arg7[%c10_74, %c0_75], %253 {strides = array<i32>} : memref<16x128xf32, #tpu.memory_space<vmem>>, vector<2x128xf32>,
    %255 = arith.truncf %253 : vector<2x128xf32> to vector<2x128xbf16>
    %cst_76 = arith.constant dense<0.000000e+00> : vector<2x384xf32>
    %256 = tpu.matmul %255, %66, %cst_76 {dimension_numbers = #tpu.dot_dimension_numbers<[1], [0], [0], [1], [0, 0, 1, 1], [], []>} : vector<2x128xbf16>, vector<128x384xbf16>, vector<2x384xf32> -> vector<2x384xf32>
    %257 = vector.broadcast %67 : vector<1x384xf32> to vector<2x384xf32>
    %258 = arith.addf %256, %257 : vector<2x384xf32>
    %259 = vector.extract_strided_slice %60 {offsets = [0, 0], sizes = [2, 128], strides = [1, 1]} : vector<2x384xf32> to vector<2x128xf32>
    %260 = vector.extract_strided_slice %60 {offsets = [0, 128], sizes = [2, 128], strides = [1, 1]} : vector<2x384xf32> to vector<2x128xf32>
    %261 = vector.extract_strided_slice %60 {offsets = [0, 256], sizes = [2, 128], strides = [1, 1]} : vector<2x384xf32> to vector<2x128xf32>
    %262 = vector.extract_strided_slice %258 {offsets = [0, 0], sizes = [2, 128], strides = [1, 1]} : vector<2x384xf32> to vector<2x128xf32>
    %263 = vector.extract_strided_slice %258 {offsets = [0, 128], sizes = [2, 128], strides = [1, 1]} : vector<2x384xf32> to vector<2x128xf32>
    %264 = vector.extract_strided_slice %258 {offsets = [0, 256], sizes = [2, 128], strides = [1, 1]} : vector<2x384xf32> to vector<2x128xf32>
    %265 = arith.addf %259, %262 : vector<2x128xf32>
    %266 = arith.negf %265 : vector<2x128xf32>
    %267 = math.exp %266 : vector<2x128xf32>
    %cst_77 = arith.constant 1.000000e+00 : f32
    %268 = vector.broadcast %cst_77 : f32 to vector<2x128xf32>
    %269 = arith.addf %268, %267 : vector<2x128xf32>
    %270 = arith.divf %268, %269 : vector<2x128xf32>
    %271 = arith.addf %260, %263 : vector<2x128xf32>
    %272 = arith.negf %271 : vector<2x128xf32>
    %273 = math.exp %272 : vector<2x128xf32>
    %cst_78 = arith.constant 1.000000e+00 : f32
    %274 = vector.broadcast %cst_78 : f32 to vector<2x128xf32>
    %275 = arith.addf %274, %273 : vector<2x128xf32>
    %276 = arith.divf %274, %275 : vector<2x128xf32>
    %277 = arith.mulf %270, %264 : vector<2x128xf32>
    %278 = arith.addf %261, %277 : vector<2x128xf32>
    %279 = math.tanh %278 : vector<2x128xf32>
    %cst_79 = arith.constant 1.000000e+00 : f32
    %280 = vector.broadcast %cst_79 : f32 to vector<2x128xf32>
    %281 = arith.subf %280, %276 : vector<2x128xf32>
    %282 = arith.mulf %281, %279 : vector<2x128xf32>
    %283 = arith.mulf %276, %253 : vector<2x128xf32>
    %284 = arith.addf %282, %283 : vector<2x128xf32>
    %c12_80 = arith.constant 12 : index
    %c0_81 = arith.constant 0 : index
    %285 = vector.load %arg7[%c12_80, %c0_81] : memref<16x128xf32, #tpu.memory_space<vmem>>, vector<2x128xf32>
    tpu.vector_store %arg7[%c12_80, %c0_81], %284 {strides = array<i32>} : memref<16x128xf32, #tpu.memory_space<vmem>>, vector<2x128xf32>,
    %286 = arith.truncf %284 : vector<2x128xf32> to vector<2x128xbf16>
    %cst_82 = arith.constant dense<0.000000e+00> : vector<2x384xf32>
    %287 = tpu.matmul %286, %66, %cst_82 {dimension_numbers = #tpu.dot_dimension_numbers<[1], [0], [0], [1], [0, 0, 1, 1], [], []>} : vector<2x128xbf16>, vector<128x384xbf16>, vector<2x384xf32> -> vector<2x384xf32>
    %288 = vector.broadcast %67 : vector<1x384xf32> to vector<2x384xf32>
    %289 = arith.addf %287, %288 : vector<2x384xf32>
    %290 = vector.extract_strided_slice %65 {offsets = [0, 0], sizes = [2, 128], strides = [1, 1]} : vector<2x384xf32> to vector<2x128xf32>
    %291 = vector.extract_strided_slice %65 {offsets = [0, 128], sizes = [2, 128], strides = [1, 1]} : vector<2x384xf32> to vector<2x128xf32>
    %292 = vector.extract_strided_slice %65 {offsets = [0, 256], sizes = [2, 128], strides = [1, 1]} : vector<2x384xf32> to vector<2x128xf32>
    %293 = vector.extract_strided_slice %289 {offsets = [0, 0], sizes = [2, 128], strides = [1, 1]} : vector<2x384xf32> to vector<2x128xf32>
    %294 = vector.extract_strided_slice %289 {offsets = [0, 128], sizes = [2, 128], strides = [1, 1]} : vector<2x384xf32> to vector<2x128xf32>
    %295 = vector.extract_strided_slice %289 {offsets = [0, 256], sizes = [2, 128], strides = [1, 1]} : vector<2x384xf32> to vector<2x128xf32>
    %296 = arith.addf %290, %293 : vector<2x128xf32>
    %297 = arith.negf %296 : vector<2x128xf32>
    %298 = math.exp %297 : vector<2x128xf32>
    %cst_83 = arith.constant 1.000000e+00 : f32
    %299 = vector.broadcast %cst_83 : f32 to vector<2x128xf32>
    %300 = arith.addf %299, %298 : vector<2x128xf32>
    %301 = arith.divf %299, %300 : vector<2x128xf32>
    %302 = arith.addf %291, %294 : vector<2x128xf32>
    %303 = arith.negf %302 : vector<2x128xf32>
    %304 = math.exp %303 : vector<2x128xf32>
    %cst_84 = arith.constant 1.000000e+00 : f32
    %305 = vector.broadcast %cst_84 : f32 to vector<2x128xf32>
    %306 = arith.addf %305, %304 : vector<2x128xf32>
    %307 = arith.divf %305, %306 : vector<2x128xf32>
    %308 = arith.mulf %301, %295 : vector<2x128xf32>
    %309 = arith.addf %292, %308 : vector<2x128xf32>
    %310 = math.tanh %309 : vector<2x128xf32>
    %cst_85 = arith.constant 1.000000e+00 : f32
    %311 = vector.broadcast %cst_85 : f32 to vector<2x128xf32>
    %312 = arith.subf %311, %307 : vector<2x128xf32>
    %313 = arith.mulf %312, %310 : vector<2x128xf32>
    %314 = arith.mulf %307, %284 : vector<2x128xf32>
    %315 = arith.addf %313, %314 : vector<2x128xf32>
    %c14_86 = arith.constant 14 : index
    %c0_87 = arith.constant 0 : index
    %316 = vector.load %arg7[%c14_86, %c0_87] : memref<16x128xf32, #tpu.memory_space<vmem>>, vector<2x128xf32>
    tpu.vector_store %arg7[%c14_86, %c0_87], %315 {strides = array<i32>} : memref<16x128xf32, #tpu.memory_space<vmem>>, vector<2x128xf32>,
    %317 = tpu.iota {dimensions = array<i32: 1>} : vector<1x64xi32>
    %c32_i32_88 = arith.constant 32 : i32
    %318 = vector.broadcast %c32_i32_88 : i32 to vector<1x64xi32>
    %319 = arith.cmpi slt, %317, %318 : vector<1x64xi32>
    %c0_89 = arith.constant 0 : index
    %c0_90 = arith.constant 0 : index
    %320 = vector.load %arg7[%c0_89, %c0_90] : memref<16x128xf32, #tpu.memory_space<vmem>>, vector<2x64xf32>
    %c14_91 = arith.constant 14 : index
    %c0_92 = arith.constant 0 : index
    %321 = vector.load %arg7[%c14_91, %c0_92] : memref<16x128xf32, #tpu.memory_space<vmem>>, vector<2x64xf32>
    %322 = vector.shape_cast %319 : vector<1x64xi1> to vector<1x64xi1>
    %323 = vector.broadcast %322 : vector<1x64xi1> to vector<2x64xi1>
    %324 = arith.select %323, %320, %321 : vector<2x64xi1>, vector<2x64xf32>
    %325 = arith.truncf %324 : vector<2x64xf32> to vector<2x64xbf16>
    %c0_93 = arith.constant 0 : index
    %c0_94 = arith.constant 0 : index
    %326 = vector.load %arg5[%c0_93, %c0_94] : memref<16x64xbf16, #tpu.memory_space<vmem>>, vector<2x64xbf16>
    tpu.vector_store %arg5[%c0_93, %c0_94], %325 {strides = array<i32>} : memref<16x64xbf16, #tpu.memory_space<vmem>>, vector<2x64xbf16>,
    %c2_95 = arith.constant 2 : index
    %c0_96 = arith.constant 0 : index
    %327 = vector.load %arg7[%c2_95, %c0_96] : memref<16x128xf32, #tpu.memory_space<vmem>>, vector<2x64xf32>
    %c12_97 = arith.constant 12 : index
    %c0_98 = arith.constant 0 : index
    %328 = vector.load %arg7[%c12_97, %c0_98] : memref<16x128xf32, #tpu.memory_space<vmem>>, vector<2x64xf32>
    %329 = vector.shape_cast %319 : vector<1x64xi1> to vector<1x64xi1>
    %330 = vector.broadcast %329 : vector<1x64xi1> to vector<2x64xi1>
    %331 = arith.select %330, %327, %328 : vector<2x64xi1>, vector<2x64xf32>
    %332 = arith.truncf %331 : vector<2x64xf32> to vector<2x64xbf16>
    %c2_99 = arith.constant 2 : index
    %c0_100 = arith.constant 0 : index
    %333 = vector.load %arg5[%c2_99, %c0_100] : memref<16x64xbf16, #tpu.memory_space<vmem>>, vector<2x64xbf16>
    tpu.vector_store %arg5[%c2_99, %c0_100], %332 {strides = array<i32>} : memref<16x64xbf16, #tpu.memory_space<vmem>>, vector<2x64xbf16>,
    %c4_101 = arith.constant 4 : index
    %c0_102 = arith.constant 0 : index
    %334 = vector.load %arg7[%c4_101, %c0_102] : memref<16x128xf32, #tpu.memory_space<vmem>>, vector<2x64xf32>
    %c10_103 = arith.constant 10 : index
    %c0_104 = arith.constant 0 : index
    %335 = vector.load %arg7[%c10_103, %c0_104] : memref<16x128xf32, #tpu.memory_space<vmem>>, vector<2x64xf32>
    %336 = vector.shape_cast %319 : vector<1x64xi1> to vector<1x64xi1>
    %337 = vector.broadcast %336 : vector<1x64xi1> to vector<2x64xi1>
    %338 = arith.select %337, %334, %335 : vector<2x64xi1>, vector<2x64xf32>
    %339 = arith.truncf %338 : vector<2x64xf32> to vector<2x64xbf16>
    %c4_105 = arith.constant 4 : index
    %c0_106 = arith.constant 0 : index
    %340 = vector.load %arg5[%c4_105, %c0_106] : memref<16x64xbf16, #tpu.memory_space<vmem>>, vector<2x64xbf16>
    tpu.vector_store %arg5[%c4_105, %c0_106], %339 {strides = array<i32>} : memref<16x64xbf16, #tpu.memory_space<vmem>>, vector<2x64xbf16>,
    %c6_107 = arith.constant 6 : index
    %c0_108 = arith.constant 0 : index
    %341 = vector.load %arg7[%c6_107, %c0_108] : memref<16x128xf32, #tpu.memory_space<vmem>>, vector<2x64xf32>
    %c8_109 = arith.constant 8 : index
    %c0_110 = arith.constant 0 : index
    %342 = vector.load %arg7[%c8_109, %c0_110] : memref<16x128xf32, #tpu.memory_space<vmem>>, vector<2x64xf32>
    %343 = vector.shape_cast %319 : vector<1x64xi1> to vector<1x64xi1>
    %344 = vector.broadcast %343 : vector<1x64xi1> to vector<2x64xi1>
    %345 = arith.select %344, %341, %342 : vector<2x64xi1>, vector<2x64xf32>
    %346 = arith.truncf %345 : vector<2x64xf32> to vector<2x64xbf16>
    %c6_111 = arith.constant 6 : index
    %c0_112 = arith.constant 0 : index
    %347 = vector.load %arg5[%c6_111, %c0_112] : memref<16x64xbf16, #tpu.memory_space<vmem>>, vector<2x64xbf16>
    tpu.vector_store %arg5[%c6_111, %c0_112], %346 {strides = array<i32>} : memref<16x64xbf16, #tpu.memory_space<vmem>>, vector<2x64xbf16>,
    %c8_113 = arith.constant 8 : index
    %c0_114 = arith.constant 0 : index
    %348 = vector.load %arg7[%c8_113, %c0_114] : memref<16x128xf32, #tpu.memory_space<vmem>>, vector<2x64xf32>
    %c6_115 = arith.constant 6 : index
    %c0_116 = arith.constant 0 : index
    %349 = vector.load %arg7[%c6_115, %c0_116] : memref<16x128xf32, #tpu.memory_space<vmem>>, vector<2x64xf32>
    %350 = vector.shape_cast %319 : vector<1x64xi1> to vector<1x64xi1>
    %351 = vector.broadcast %350 : vector<1x64xi1> to vector<2x64xi1>
    %352 = arith.select %351, %348, %349 : vector<2x64xi1>, vector<2x64xf32>
    %353 = arith.truncf %352 : vector<2x64xf32> to vector<2x64xbf16>
    %c8_117 = arith.constant 8 : index
    %c0_118 = arith.constant 0 : index
    %354 = vector.load %arg5[%c8_117, %c0_118] : memref<16x64xbf16, #tpu.memory_space<vmem>>, vector<2x64xbf16>
    tpu.vector_store %arg5[%c8_117, %c0_118], %353 {strides = array<i32>} : memref<16x64xbf16, #tpu.memory_space<vmem>>, vector<2x64xbf16>,
    %c10_119 = arith.constant 10 : index
    %c0_120 = arith.constant 0 : index
    %355 = vector.load %arg7[%c10_119, %c0_120] : memref<16x128xf32, #tpu.memory_space<vmem>>, vector<2x64xf32>
    %c4_121 = arith.constant 4 : index
    %c0_122 = arith.constant 0 : index
    %356 = vector.load %arg7[%c4_121, %c0_122] : memref<16x128xf32, #tpu.memory_space<vmem>>, vector<2x64xf32>
    %357 = vector.shape_cast %319 : vector<1x64xi1> to vector<1x64xi1>
    %358 = vector.broadcast %357 : vector<1x64xi1> to vector<2x64xi1>
    %359 = arith.select %358, %355, %356 : vector<2x64xi1>, vector<2x64xf32>
    %360 = arith.truncf %359 : vector<2x64xf32> to vector<2x64xbf16>
    %c10_123 = arith.constant 10 : index
    %c0_124 = arith.constant 0 : index
    %361 = vector.load %arg5[%c10_123, %c0_124] : memref<16x64xbf16, #tpu.memory_space<vmem>>, vector<2x64xbf16>
    tpu.vector_store %arg5[%c10_123, %c0_124], %360 {strides = array<i32>} : memref<16x64xbf16, #tpu.memory_space<vmem>>, vector<2x64xbf16>,
    %c12_125 = arith.constant 12 : index
    %c0_126 = arith.constant 0 : index
    %362 = vector.load %arg7[%c12_125, %c0_126] : memref<16x128xf32, #tpu.memory_space<vmem>>, vector<2x64xf32>
    %c2_127 = arith.constant 2 : index
    %c0_128 = arith.constant 0 : index
    %363 = vector.load %arg7[%c2_127, %c0_128] : memref<16x128xf32, #tpu.memory_space<vmem>>, vector<2x64xf32>
    %364 = vector.shape_cast %319 : vector<1x64xi1> to vector<1x64xi1>
    %365 = vector.broadcast %364 : vector<1x64xi1> to vector<2x64xi1>
    %366 = arith.select %365, %362, %363 : vector<2x64xi1>, vector<2x64xf32>
    %367 = arith.truncf %366 : vector<2x64xf32> to vector<2x64xbf16>
    %c12_129 = arith.constant 12 : index
    %c0_130 = arith.constant 0 : index
    %368 = vector.load %arg5[%c12_129, %c0_130] : memref<16x64xbf16, #tpu.memory_space<vmem>>, vector<2x64xbf16>
    tpu.vector_store %arg5[%c12_129, %c0_130], %367 {strides = array<i32>} : memref<16x64xbf16, #tpu.memory_space<vmem>>, vector<2x64xbf16>,
    %c14_131 = arith.constant 14 : index
    %c0_132 = arith.constant 0 : index
    %369 = vector.load %arg7[%c14_131, %c0_132] : memref<16x128xf32, #tpu.memory_space<vmem>>, vector<2x64xf32>
    %c0_133 = arith.constant 0 : index
    %c0_134 = arith.constant 0 : index
    %370 = vector.load %arg7[%c0_133, %c0_134] : memref<16x128xf32, #tpu.memory_space<vmem>>, vector<2x64xf32>
    %371 = vector.shape_cast %319 : vector<1x64xi1> to vector<1x64xi1>
    %372 = vector.broadcast %371 : vector<1x64xi1> to vector<2x64xi1>
    %373 = arith.select %372, %369, %370 : vector<2x64xi1>, vector<2x64xf32>
    %374 = arith.truncf %373 : vector<2x64xf32> to vector<2x64xbf16>
    %c14_135 = arith.constant 14 : index
    %c0_136 = arith.constant 0 : index
    %375 = vector.load %arg5[%c14_135, %c0_136] : memref<16x64xbf16, #tpu.memory_space<vmem>>, vector<2x64xbf16>
    tpu.vector_store %arg5[%c14_135, %c0_136], %374 {strides = array<i32>} : memref<16x64xbf16, #tpu.memory_space<vmem>>, vector<2x64xbf16>,
    return
  }
}

module attributes {stable_mosaic.version = 11 : i64} {
  func.func @_gru_layer_kernel(%arg0: memref<16x64xbf16, #tpu.memory_space<vmem>>, %arg1: memref<64x384xbf16, #tpu.memory_space<vmem>>, %arg2: memref<1x384xf32, #tpu.memory_space<vmem>>, %arg3: memref<128x384xbf16, #tpu.memory_space<vmem>>, %arg4: memref<1x384xf32, #tpu.memory_space<vmem>>, %arg5: memref<1x64xf32, #tpu.memory_space<vmem>>, %arg6: memref<1x64xf32, #tpu.memory_space<vmem>>, %arg7: memref<64x16xbf16, #tpu.memory_space<vmem>>, %arg8: memref<1x16xf32, #tpu.memory_space<vmem>>, %arg9: memref<16x16xf32, #tpu.memory_space<vmem>>, %arg10: memref<16x384xf32, #tpu.memory_space<vmem>>, %arg11: memref<16x128xf32, #tpu.memory_space<vmem>>, %arg12: memref<16x64xf32, #tpu.memory_space<vmem>>) attributes {dimension_semantics = [], scalar_prefetch = 0 : i64, scratch_operands = 3 : i64, tpu.core_type = #tpu.core_type<tc>} {
    %c0 = arith.constant 0 : index
    %c0_0 = arith.constant 0 : index
    %0 = vector.load %arg0[%c0, %c0_0] : memref<16x64xbf16, #tpu.memory_space<vmem>>, vector<16x64xbf16>
    %c0_1 = arith.constant 0 : index
    %c0_2 = arith.constant 0 : index
    %1 = vector.load %arg1[%c0_1, %c0_2] : memref<64x384xbf16, #tpu.memory_space<vmem>>, vector<64x384xbf16>
    %cst = arith.constant dense<0.000000e+00> : vector<16x384xf32>
    %2 = tpu.matmul %0, %1, %cst {dimension_numbers = #tpu.dot_dimension_numbers<[1], [0], [0], [1], [0, 0, 1, 1], [], []>} : vector<16x64xbf16>, vector<64x384xbf16>, vector<16x384xf32> -> vector<16x384xf32>
    %c0_3 = arith.constant 0 : index
    %c0_4 = arith.constant 0 : index
    %3 = vector.load %arg2[%c0_3, %c0_4] : memref<1x384xf32, #tpu.memory_space<vmem>>, vector<1x384xf32>
    %4 = vector.broadcast %3 : vector<1x384xf32> to vector<16x384xf32>
    %5 = arith.addf %2, %4 : vector<16x384xf32>
    %c0_5 = arith.constant 0 : index
    %c0_6 = arith.constant 0 : index
    %6 = vector.load %arg10[%c0_5, %c0_6] : memref<16x384xf32, #tpu.memory_space<vmem>>, vector<16x384xf32>
    tpu.vector_store %arg10[%c0_5, %c0_6], %5 {strides = array<i32>} : memref<16x384xf32, #tpu.memory_space<vmem>>, vector<16x384xf32>,
    %7 = tpu.iota {dimensions = array<i32: 1>} : vector<1x384xi32>
    %c128_i32 = arith.constant 128 : i32
    %c0_i32 = arith.constant 0 : i32
    %8 = arith.cmpi eq, %c128_i32, %c0_i32 : i32
    %c1_i32 = arith.constant 1 : i32
    %9 = arith.select %8, %c1_i32, %c128_i32 : i32
    %10 = vector.broadcast %9 : i32 to vector<1x384xi32>
    %11 = arith.remsi %7, %10 : vector<1x384xi32>
    %c0_i32_7 = arith.constant 0 : i32
    %12 = vector.broadcast %c0_i32_7 : i32 to vector<1x384xi32>
    %13 = arith.cmpi ne, %11, %12 : vector<1x384xi32>
    %c0_i32_8 = arith.constant 0 : i32
    %14 = vector.broadcast %c0_i32_8 : i32 to vector<1x384xi32>
    %15 = arith.cmpi slt, %11, %14 : vector<1x384xi32>
    %c0_i32_9 = arith.constant 0 : i32
    %16 = arith.cmpi slt, %9, %c0_i32_9 : i32
    %17 = vector.broadcast %16 : i1 to vector<1x384xi1>
    %18 = vector.broadcast %17 : vector<1x384xi1> to vector<1x384xi1>
    %19 = arith.xori %15, %18 : vector<1x384xi1>
    %20 = arith.andi %19, %13 : vector<1x384xi1>
    %21 = vector.broadcast %9 : i32 to vector<1x384xi32>
    %22 = arith.addi %11, %21 : vector<1x384xi32>
    %23 = arith.select %20, %22, %11 : vector<1x384xi1>, vector<1x384xi32>
    %c32_i32 = arith.constant 32 : i32
    %24 = vector.broadcast %c32_i32 : i32 to vector<1x384xi32>
    %25 = arith.cmpi slt, %23, %24 : vector<1x384xi32>
    %c0_10 = arith.constant 0 : index
    %c0_11 = arith.constant 0 : index
    %26 = vector.load %arg10[%c0_10, %c0_11] : memref<16x384xf32, #tpu.memory_space<vmem>>, vector<2x384xf32>
    %c14 = arith.constant 14 : index
    %c0_12 = arith.constant 0 : index
    %27 = vector.load %arg10[%c14, %c0_12] : memref<16x384xf32, #tpu.memory_space<vmem>>, vector<2x384xf32>
    %28 = vector.shape_cast %25 : vector<1x384xi1> to vector<1x384xi1>
    %29 = vector.broadcast %28 : vector<1x384xi1> to vector<2x384xi1>
    %30 = arith.select %29, %26, %27 : vector<2x384xi1>, vector<2x384xf32>
    %c2 = arith.constant 2 : index
    %c0_13 = arith.constant 0 : index
    %31 = vector.load %arg10[%c2, %c0_13] : memref<16x384xf32, #tpu.memory_space<vmem>>, vector<2x384xf32>
    %c12 = arith.constant 12 : index
    %c0_14 = arith.constant 0 : index
    %32 = vector.load %arg10[%c12, %c0_14] : memref<16x384xf32, #tpu.memory_space<vmem>>, vector<2x384xf32>
    %33 = vector.shape_cast %25 : vector<1x384xi1> to vector<1x384xi1>
    %34 = vector.broadcast %33 : vector<1x384xi1> to vector<2x384xi1>
    %35 = arith.select %34, %31, %32 : vector<2x384xi1>, vector<2x384xf32>
    %c4 = arith.constant 4 : index
    %c0_15 = arith.constant 0 : index
    %36 = vector.load %arg10[%c4, %c0_15] : memref<16x384xf32, #tpu.memory_space<vmem>>, vector<2x384xf32>
    %c10 = arith.constant 10 : index
    %c0_16 = arith.constant 0 : index
    %37 = vector.load %arg10[%c10, %c0_16] : memref<16x384xf32, #tpu.memory_space<vmem>>, vector<2x384xf32>
    %38 = vector.shape_cast %25 : vector<1x384xi1> to vector<1x384xi1>
    %39 = vector.broadcast %38 : vector<1x384xi1> to vector<2x384xi1>
    %40 = arith.select %39, %36, %37 : vector<2x384xi1>, vector<2x384xf32>
    %c6 = arith.constant 6 : index
    %c0_17 = arith.constant 0 : index
    %41 = vector.load %arg10[%c6, %c0_17] : memref<16x384xf32, #tpu.memory_space<vmem>>, vector<2x384xf32>
    %c8 = arith.constant 8 : index
    %c0_18 = arith.constant 0 : index
    %42 = vector.load %arg10[%c8, %c0_18] : memref<16x384xf32, #tpu.memory_space<vmem>>, vector<2x384xf32>
    %43 = vector.shape_cast %25 : vector<1x384xi1> to vector<1x384xi1>
    %44 = vector.broadcast %43 : vector<1x384xi1> to vector<2x384xi1>
    %45 = arith.select %44, %41, %42 : vector<2x384xi1>, vector<2x384xf32>
    %c8_19 = arith.constant 8 : index
    %c0_20 = arith.constant 0 : index
    %46 = vector.load %arg10[%c8_19, %c0_20] : memref<16x384xf32, #tpu.memory_space<vmem>>, vector<2x384xf32>
    %c6_21 = arith.constant 6 : index
    %c0_22 = arith.constant 0 : index
    %47 = vector.load %arg10[%c6_21, %c0_22] : memref<16x384xf32, #tpu.memory_space<vmem>>, vector<2x384xf32>
    %48 = vector.shape_cast %25 : vector<1x384xi1> to vector<1x384xi1>
    %49 = vector.broadcast %48 : vector<1x384xi1> to vector<2x384xi1>
    %50 = arith.select %49, %46, %47 : vector<2x384xi1>, vector<2x384xf32>
    %c10_23 = arith.constant 10 : index
    %c0_24 = arith.constant 0 : index
    %51 = vector.load %arg10[%c10_23, %c0_24] : memref<16x384xf32, #tpu.memory_space<vmem>>, vector<2x384xf32>
    %c4_25 = arith.constant 4 : index
    %c0_26 = arith.constant 0 : index
    %52 = vector.load %arg10[%c4_25, %c0_26] : memref<16x384xf32, #tpu.memory_space<vmem>>, vector<2x384xf32>
    %53 = vector.shape_cast %25 : vector<1x384xi1> to vector<1x384xi1>
    %54 = vector.broadcast %53 : vector<1x384xi1> to vector<2x384xi1>
    %55 = arith.select %54, %51, %52 : vector<2x384xi1>, vector<2x384xf32>
    %c12_27 = arith.constant 12 : index
    %c0_28 = arith.constant 0 : index
    %56 = vector.load %arg10[%c12_27, %c0_28] : memref<16x384xf32, #tpu.memory_space<vmem>>, vector<2x384xf32>
    %c2_29 = arith.constant 2 : index
    %c0_30 = arith.constant 0 : index
    %57 = vector.load %arg10[%c2_29, %c0_30] : memref<16x384xf32, #tpu.memory_space<vmem>>, vector<2x384xf32>
    %58 = vector.shape_cast %25 : vector<1x384xi1> to vector<1x384xi1>
    %59 = vector.broadcast %58 : vector<1x384xi1> to vector<2x384xi1>
    %60 = arith.select %59, %56, %57 : vector<2x384xi1>, vector<2x384xf32>
    %c14_31 = arith.constant 14 : index
    %c0_32 = arith.constant 0 : index
    %61 = vector.load %arg10[%c14_31, %c0_32] : memref<16x384xf32, #tpu.memory_space<vmem>>, vector<2x384xf32>
    %c0_33 = arith.constant 0 : index
    %c0_34 = arith.constant 0 : index
    %62 = vector.load %arg10[%c0_33, %c0_34] : memref<16x384xf32, #tpu.memory_space<vmem>>, vector<2x384xf32>
    %63 = vector.shape_cast %25 : vector<1x384xi1> to vector<1x384xi1>
    %64 = vector.broadcast %63 : vector<1x384xi1> to vector<2x384xi1>
    %65 = arith.select %64, %61, %62 : vector<2x384xi1>, vector<2x384xf32>
    %c0_35 = arith.constant 0 : index
    %c0_36 = arith.constant 0 : index
    %66 = vector.load %arg3[%c0_35, %c0_36] : memref<128x384xbf16, #tpu.memory_space<vmem>>, vector<128x384xbf16>
    %c0_37 = arith.constant 0 : index
    %c0_38 = arith.constant 0 : index
    %67 = vector.load %arg4[%c0_37, %c0_38] : memref<1x384xf32, #tpu.memory_space<vmem>>, vector<1x384xf32>
    %cst_39 = arith.constant 0.000000e+00 : f32
    %68 = vector.broadcast %cst_39 : f32 to vector<2x128xf32>
    %69 = arith.truncf %68 : vector<2x128xf32> to vector<2x128xbf16>
    %cst_40 = arith.constant dense<0.000000e+00> : vector<2x384xf32>
    %70 = tpu.matmul %69, %66, %cst_40 {dimension_numbers = #tpu.dot_dimension_numbers<[1], [0], [0], [1], [0, 0, 1, 1], [], []>} : vector<2x128xbf16>, vector<128x384xbf16>, vector<2x384xf32> -> vector<2x384xf32>
    %71 = vector.broadcast %67 : vector<1x384xf32> to vector<2x384xf32>
    %72 = arith.addf %70, %71 : vector<2x384xf32>
    %73 = vector.extract_strided_slice %30 {offsets = [0, 0], sizes = [2, 128], strides = [1, 1]} : vector<2x384xf32> to vector<2x128xf32>
    %74 = vector.extract_strided_slice %30 {offsets = [0, 128], sizes = [2, 128], strides = [1, 1]} : vector<2x384xf32> to vector<2x128xf32>
    %75 = vector.extract_strided_slice %30 {offsets = [0, 256], sizes = [2, 128], strides = [1, 1]} : vector<2x384xf32> to vector<2x128xf32>
    %76 = vector.extract_strided_slice %72 {offsets = [0, 0], sizes = [2, 128], strides = [1, 1]} : vector<2x384xf32> to vector<2x128xf32>
    %77 = vector.extract_strided_slice %72 {offsets = [0, 128], sizes = [2, 128], strides = [1, 1]} : vector<2x384xf32> to vector<2x128xf32>
    %78 = vector.extract_strided_slice %72 {offsets = [0, 256], sizes = [2, 128], strides = [1, 1]} : vector<2x384xf32> to vector<2x128xf32>
    %79 = arith.addf %73, %76 : vector<2x128xf32>
    %80 = arith.negf %79 : vector<2x128xf32>
    %81 = math.exp %80 : vector<2x128xf32>
    %cst_41 = arith.constant 1.000000e+00 : f32
    %82 = vector.broadcast %cst_41 : f32 to vector<2x128xf32>
    %83 = arith.addf %82, %81 : vector<2x128xf32>
    %84 = arith.divf %82, %83 : vector<2x128xf32>
    %85 = arith.addf %74, %77 : vector<2x128xf32>
    %86 = arith.negf %85 : vector<2x128xf32>
    %87 = math.exp %86 : vector<2x128xf32>
    %cst_42 = arith.constant 1.000000e+00 : f32
    %88 = vector.broadcast %cst_42 : f32 to vector<2x128xf32>
    %89 = arith.addf %88, %87 : vector<2x128xf32>
    %90 = arith.divf %88, %89 : vector<2x128xf32>
    %91 = arith.mulf %84, %78 : vector<2x128xf32>
    %92 = arith.addf %75, %91 : vector<2x128xf32>
    %93 = math.tanh %92 : vector<2x128xf32>
    %cst_43 = arith.constant 1.000000e+00 : f32
    %94 = vector.broadcast %cst_43 : f32 to vector<2x128xf32>
    %95 = arith.subf %94, %90 : vector<2x128xf32>
    %96 = arith.mulf %95, %93 : vector<2x128xf32>
    %97 = arith.mulf %90, %68 : vector<2x128xf32>
    %98 = arith.addf %96, %97 : vector<2x128xf32>
    %c0_44 = arith.constant 0 : index
    %c0_45 = arith.constant 0 : index
    %99 = vector.load %arg11[%c0_44, %c0_45] : memref<16x128xf32, #tpu.memory_space<vmem>>, vector<2x128xf32>
    tpu.vector_store %arg11[%c0_44, %c0_45], %98 {strides = array<i32>} : memref<16x128xf32, #tpu.memory_space<vmem>>, vector<2x128xf32>,
    %100 = arith.truncf %98 : vector<2x128xf32> to vector<2x128xbf16>
    %cst_46 = arith.constant dense<0.000000e+00> : vector<2x384xf32>
    %101 = tpu.matmul %100, %66, %cst_46 {dimension_numbers = #tpu.dot_dimension_numbers<[1], [0], [0], [1], [0, 0, 1, 1], [], []>} : vector<2x128xbf16>, vector<128x384xbf16>, vector<2x384xf32> -> vector<2x384xf32>
    %102 = vector.broadcast %67 : vector<1x384xf32> to vector<2x384xf32>
    %103 = arith.addf %101, %102 : vector<2x384xf32>
    %104 = vector.extract_strided_slice %35 {offsets = [0, 0], sizes = [2, 128], strides = [1, 1]} : vector<2x384xf32> to vector<2x128xf32>
    %105 = vector.extract_strided_slice %35 {offsets = [0, 128], sizes = [2, 128], strides = [1, 1]} : vector<2x384xf32> to vector<2x128xf32>
    %106 = vector.extract_strided_slice %35 {offsets = [0, 256], sizes = [2, 128], strides = [1, 1]} : vector<2x384xf32> to vector<2x128xf32>
    %107 = vector.extract_strided_slice %103 {offsets = [0, 0], sizes = [2, 128], strides = [1, 1]} : vector<2x384xf32> to vector<2x128xf32>
    %108 = vector.extract_strided_slice %103 {offsets = [0, 128], sizes = [2, 128], strides = [1, 1]} : vector<2x384xf32> to vector<2x128xf32>
    %109 = vector.extract_strided_slice %103 {offsets = [0, 256], sizes = [2, 128], strides = [1, 1]} : vector<2x384xf32> to vector<2x128xf32>
    %110 = arith.addf %104, %107 : vector<2x128xf32>
    %111 = arith.negf %110 : vector<2x128xf32>
    %112 = math.exp %111 : vector<2x128xf32>
    %cst_47 = arith.constant 1.000000e+00 : f32
    %113 = vector.broadcast %cst_47 : f32 to vector<2x128xf32>
    %114 = arith.addf %113, %112 : vector<2x128xf32>
    %115 = arith.divf %113, %114 : vector<2x128xf32>
    %116 = arith.addf %105, %108 : vector<2x128xf32>
    %117 = arith.negf %116 : vector<2x128xf32>
    %118 = math.exp %117 : vector<2x128xf32>
    %cst_48 = arith.constant 1.000000e+00 : f32
    %119 = vector.broadcast %cst_48 : f32 to vector<2x128xf32>
    %120 = arith.addf %119, %118 : vector<2x128xf32>
    %121 = arith.divf %119, %120 : vector<2x128xf32>
    %122 = arith.mulf %115, %109 : vector<2x128xf32>
    %123 = arith.addf %106, %122 : vector<2x128xf32>
    %124 = math.tanh %123 : vector<2x128xf32>
    %cst_49 = arith.constant 1.000000e+00 : f32
    %125 = vector.broadcast %cst_49 : f32 to vector<2x128xf32>
    %126 = arith.subf %125, %121 : vector<2x128xf32>
    %127 = arith.mulf %126, %124 : vector<2x128xf32>
    %128 = arith.mulf %121, %98 : vector<2x128xf32>
    %129 = arith.addf %127, %128 : vector<2x128xf32>
    %c2_50 = arith.constant 2 : index
    %c0_51 = arith.constant 0 : index
    %130 = vector.load %arg11[%c2_50, %c0_51] : memref<16x128xf32, #tpu.memory_space<vmem>>, vector<2x128xf32>
    tpu.vector_store %arg11[%c2_50, %c0_51], %129 {strides = array<i32>} : memref<16x128xf32, #tpu.memory_space<vmem>>, vector<2x128xf32>,
    %131 = arith.truncf %129 : vector<2x128xf32> to vector<2x128xbf16>
    %cst_52 = arith.constant dense<0.000000e+00> : vector<2x384xf32>
    %132 = tpu.matmul %131, %66, %cst_52 {dimension_numbers = #tpu.dot_dimension_numbers<[1], [0], [0], [1], [0, 0, 1, 1], [], []>} : vector<2x128xbf16>, vector<128x384xbf16>, vector<2x384xf32> -> vector<2x384xf32>
    %133 = vector.broadcast %67 : vector<1x384xf32> to vector<2x384xf32>
    %134 = arith.addf %132, %133 : vector<2x384xf32>
    %135 = vector.extract_strided_slice %40 {offsets = [0, 0], sizes = [2, 128], strides = [1, 1]} : vector<2x384xf32> to vector<2x128xf32>
    %136 = vector.extract_strided_slice %40 {offsets = [0, 128], sizes = [2, 128], strides = [1, 1]} : vector<2x384xf32> to vector<2x128xf32>
    %137 = vector.extract_strided_slice %40 {offsets = [0, 256], sizes = [2, 128], strides = [1, 1]} : vector<2x384xf32> to vector<2x128xf32>
    %138 = vector.extract_strided_slice %134 {offsets = [0, 0], sizes = [2, 128], strides = [1, 1]} : vector<2x384xf32> to vector<2x128xf32>
    %139 = vector.extract_strided_slice %134 {offsets = [0, 128], sizes = [2, 128], strides = [1, 1]} : vector<2x384xf32> to vector<2x128xf32>
    %140 = vector.extract_strided_slice %134 {offsets = [0, 256], sizes = [2, 128], strides = [1, 1]} : vector<2x384xf32> to vector<2x128xf32>
    %141 = arith.addf %135, %138 : vector<2x128xf32>
    %142 = arith.negf %141 : vector<2x128xf32>
    %143 = math.exp %142 : vector<2x128xf32>
    %cst_53 = arith.constant 1.000000e+00 : f32
    %144 = vector.broadcast %cst_53 : f32 to vector<2x128xf32>
    %145 = arith.addf %144, %143 : vector<2x128xf32>
    %146 = arith.divf %144, %145 : vector<2x128xf32>
    %147 = arith.addf %136, %139 : vector<2x128xf32>
    %148 = arith.negf %147 : vector<2x128xf32>
    %149 = math.exp %148 : vector<2x128xf32>
    %cst_54 = arith.constant 1.000000e+00 : f32
    %150 = vector.broadcast %cst_54 : f32 to vector<2x128xf32>
    %151 = arith.addf %150, %149 : vector<2x128xf32>
    %152 = arith.divf %150, %151 : vector<2x128xf32>
    %153 = arith.mulf %146, %140 : vector<2x128xf32>
    %154 = arith.addf %137, %153 : vector<2x128xf32>
    %155 = math.tanh %154 : vector<2x128xf32>
    %cst_55 = arith.constant 1.000000e+00 : f32
    %156 = vector.broadcast %cst_55 : f32 to vector<2x128xf32>
    %157 = arith.subf %156, %152 : vector<2x128xf32>
    %158 = arith.mulf %157, %155 : vector<2x128xf32>
    %159 = arith.mulf %152, %129 : vector<2x128xf32>
    %160 = arith.addf %158, %159 : vector<2x128xf32>
    %c4_56 = arith.constant 4 : index
    %c0_57 = arith.constant 0 : index
    %161 = vector.load %arg11[%c4_56, %c0_57] : memref<16x128xf32, #tpu.memory_space<vmem>>, vector<2x128xf32>
    tpu.vector_store %arg11[%c4_56, %c0_57], %160 {strides = array<i32>} : memref<16x128xf32, #tpu.memory_space<vmem>>, vector<2x128xf32>,
    %162 = arith.truncf %160 : vector<2x128xf32> to vector<2x128xbf16>
    %cst_58 = arith.constant dense<0.000000e+00> : vector<2x384xf32>
    %163 = tpu.matmul %162, %66, %cst_58 {dimension_numbers = #tpu.dot_dimension_numbers<[1], [0], [0], [1], [0, 0, 1, 1], [], []>} : vector<2x128xbf16>, vector<128x384xbf16>, vector<2x384xf32> -> vector<2x384xf32>
    %164 = vector.broadcast %67 : vector<1x384xf32> to vector<2x384xf32>
    %165 = arith.addf %163, %164 : vector<2x384xf32>
    %166 = vector.extract_strided_slice %45 {offsets = [0, 0], sizes = [2, 128], strides = [1, 1]} : vector<2x384xf32> to vector<2x128xf32>
    %167 = vector.extract_strided_slice %45 {offsets = [0, 128], sizes = [2, 128], strides = [1, 1]} : vector<2x384xf32> to vector<2x128xf32>
    %168 = vector.extract_strided_slice %45 {offsets = [0, 256], sizes = [2, 128], strides = [1, 1]} : vector<2x384xf32> to vector<2x128xf32>
    %169 = vector.extract_strided_slice %165 {offsets = [0, 0], sizes = [2, 128], strides = [1, 1]} : vector<2x384xf32> to vector<2x128xf32>
    %170 = vector.extract_strided_slice %165 {offsets = [0, 128], sizes = [2, 128], strides = [1, 1]} : vector<2x384xf32> to vector<2x128xf32>
    %171 = vector.extract_strided_slice %165 {offsets = [0, 256], sizes = [2, 128], strides = [1, 1]} : vector<2x384xf32> to vector<2x128xf32>
    %172 = arith.addf %166, %169 : vector<2x128xf32>
    %173 = arith.negf %172 : vector<2x128xf32>
    %174 = math.exp %173 : vector<2x128xf32>
    %cst_59 = arith.constant 1.000000e+00 : f32
    %175 = vector.broadcast %cst_59 : f32 to vector<2x128xf32>
    %176 = arith.addf %175, %174 : vector<2x128xf32>
    %177 = arith.divf %175, %176 : vector<2x128xf32>
    %178 = arith.addf %167, %170 : vector<2x128xf32>
    %179 = arith.negf %178 : vector<2x128xf32>
    %180 = math.exp %179 : vector<2x128xf32>
    %cst_60 = arith.constant 1.000000e+00 : f32
    %181 = vector.broadcast %cst_60 : f32 to vector<2x128xf32>
    %182 = arith.addf %181, %180 : vector<2x128xf32>
    %183 = arith.divf %181, %182 : vector<2x128xf32>
    %184 = arith.mulf %177, %171 : vector<2x128xf32>
    %185 = arith.addf %168, %184 : vector<2x128xf32>
    %186 = math.tanh %185 : vector<2x128xf32>
    %cst_61 = arith.constant 1.000000e+00 : f32
    %187 = vector.broadcast %cst_61 : f32 to vector<2x128xf32>
    %188 = arith.subf %187, %183 : vector<2x128xf32>
    %189 = arith.mulf %188, %186 : vector<2x128xf32>
    %190 = arith.mulf %183, %160 : vector<2x128xf32>
    %191 = arith.addf %189, %190 : vector<2x128xf32>
    %c6_62 = arith.constant 6 : index
    %c0_63 = arith.constant 0 : index
    %192 = vector.load %arg11[%c6_62, %c0_63] : memref<16x128xf32, #tpu.memory_space<vmem>>, vector<2x128xf32>
    tpu.vector_store %arg11[%c6_62, %c0_63], %191 {strides = array<i32>} : memref<16x128xf32, #tpu.memory_space<vmem>>, vector<2x128xf32>,
    %193 = arith.truncf %191 : vector<2x128xf32> to vector<2x128xbf16>
    %cst_64 = arith.constant dense<0.000000e+00> : vector<2x384xf32>
    %194 = tpu.matmul %193, %66, %cst_64 {dimension_numbers = #tpu.dot_dimension_numbers<[1], [0], [0], [1], [0, 0, 1, 1], [], []>} : vector<2x128xbf16>, vector<128x384xbf16>, vector<2x384xf32> -> vector<2x384xf32>
    %195 = vector.broadcast %67 : vector<1x384xf32> to vector<2x384xf32>
    %196 = arith.addf %194, %195 : vector<2x384xf32>
    %197 = vector.extract_strided_slice %50 {offsets = [0, 0], sizes = [2, 128], strides = [1, 1]} : vector<2x384xf32> to vector<2x128xf32>
    %198 = vector.extract_strided_slice %50 {offsets = [0, 128], sizes = [2, 128], strides = [1, 1]} : vector<2x384xf32> to vector<2x128xf32>
    %199 = vector.extract_strided_slice %50 {offsets = [0, 256], sizes = [2, 128], strides = [1, 1]} : vector<2x384xf32> to vector<2x128xf32>
    %200 = vector.extract_strided_slice %196 {offsets = [0, 0], sizes = [2, 128], strides = [1, 1]} : vector<2x384xf32> to vector<2x128xf32>
    %201 = vector.extract_strided_slice %196 {offsets = [0, 128], sizes = [2, 128], strides = [1, 1]} : vector<2x384xf32> to vector<2x128xf32>
    %202 = vector.extract_strided_slice %196 {offsets = [0, 256], sizes = [2, 128], strides = [1, 1]} : vector<2x384xf32> to vector<2x128xf32>
    %203 = arith.addf %197, %200 : vector<2x128xf32>
    %204 = arith.negf %203 : vector<2x128xf32>
    %205 = math.exp %204 : vector<2x128xf32>
    %cst_65 = arith.constant 1.000000e+00 : f32
    %206 = vector.broadcast %cst_65 : f32 to vector<2x128xf32>
    %207 = arith.addf %206, %205 : vector<2x128xf32>
    %208 = arith.divf %206, %207 : vector<2x128xf32>
    %209 = arith.addf %198, %201 : vector<2x128xf32>
    %210 = arith.negf %209 : vector<2x128xf32>
    %211 = math.exp %210 : vector<2x128xf32>
    %cst_66 = arith.constant 1.000000e+00 : f32
    %212 = vector.broadcast %cst_66 : f32 to vector<2x128xf32>
    %213 = arith.addf %212, %211 : vector<2x128xf32>
    %214 = arith.divf %212, %213 : vector<2x128xf32>
    %215 = arith.mulf %208, %202 : vector<2x128xf32>
    %216 = arith.addf %199, %215 : vector<2x128xf32>
    %217 = math.tanh %216 : vector<2x128xf32>
    %cst_67 = arith.constant 1.000000e+00 : f32
    %218 = vector.broadcast %cst_67 : f32 to vector<2x128xf32>
    %219 = arith.subf %218, %214 : vector<2x128xf32>
    %220 = arith.mulf %219, %217 : vector<2x128xf32>
    %221 = arith.mulf %214, %191 : vector<2x128xf32>
    %222 = arith.addf %220, %221 : vector<2x128xf32>
    %c8_68 = arith.constant 8 : index
    %c0_69 = arith.constant 0 : index
    %223 = vector.load %arg11[%c8_68, %c0_69] : memref<16x128xf32, #tpu.memory_space<vmem>>, vector<2x128xf32>
    tpu.vector_store %arg11[%c8_68, %c0_69], %222 {strides = array<i32>} : memref<16x128xf32, #tpu.memory_space<vmem>>, vector<2x128xf32>,
    %224 = arith.truncf %222 : vector<2x128xf32> to vector<2x128xbf16>
    %cst_70 = arith.constant dense<0.000000e+00> : vector<2x384xf32>
    %225 = tpu.matmul %224, %66, %cst_70 {dimension_numbers = #tpu.dot_dimension_numbers<[1], [0], [0], [1], [0, 0, 1, 1], [], []>} : vector<2x128xbf16>, vector<128x384xbf16>, vector<2x384xf32> -> vector<2x384xf32>
    %226 = vector.broadcast %67 : vector<1x384xf32> to vector<2x384xf32>
    %227 = arith.addf %225, %226 : vector<2x384xf32>
    %228 = vector.extract_strided_slice %55 {offsets = [0, 0], sizes = [2, 128], strides = [1, 1]} : vector<2x384xf32> to vector<2x128xf32>
    %229 = vector.extract_strided_slice %55 {offsets = [0, 128], sizes = [2, 128], strides = [1, 1]} : vector<2x384xf32> to vector<2x128xf32>
    %230 = vector.extract_strided_slice %55 {offsets = [0, 256], sizes = [2, 128], strides = [1, 1]} : vector<2x384xf32> to vector<2x128xf32>
    %231 = vector.extract_strided_slice %227 {offsets = [0, 0], sizes = [2, 128], strides = [1, 1]} : vector<2x384xf32> to vector<2x128xf32>
    %232 = vector.extract_strided_slice %227 {offsets = [0, 128], sizes = [2, 128], strides = [1, 1]} : vector<2x384xf32> to vector<2x128xf32>
    %233 = vector.extract_strided_slice %227 {offsets = [0, 256], sizes = [2, 128], strides = [1, 1]} : vector<2x384xf32> to vector<2x128xf32>
    %234 = arith.addf %228, %231 : vector<2x128xf32>
    %235 = arith.negf %234 : vector<2x128xf32>
    %236 = math.exp %235 : vector<2x128xf32>
    %cst_71 = arith.constant 1.000000e+00 : f32
    %237 = vector.broadcast %cst_71 : f32 to vector<2x128xf32>
    %238 = arith.addf %237, %236 : vector<2x128xf32>
    %239 = arith.divf %237, %238 : vector<2x128xf32>
    %240 = arith.addf %229, %232 : vector<2x128xf32>
    %241 = arith.negf %240 : vector<2x128xf32>
    %242 = math.exp %241 : vector<2x128xf32>
    %cst_72 = arith.constant 1.000000e+00 : f32
    %243 = vector.broadcast %cst_72 : f32 to vector<2x128xf32>
    %244 = arith.addf %243, %242 : vector<2x128xf32>
    %245 = arith.divf %243, %244 : vector<2x128xf32>
    %246 = arith.mulf %239, %233 : vector<2x128xf32>
    %247 = arith.addf %230, %246 : vector<2x128xf32>
    %248 = math.tanh %247 : vector<2x128xf32>
    %cst_73 = arith.constant 1.000000e+00 : f32
    %249 = vector.broadcast %cst_73 : f32 to vector<2x128xf32>
    %250 = arith.subf %249, %245 : vector<2x128xf32>
    %251 = arith.mulf %250, %248 : vector<2x128xf32>
    %252 = arith.mulf %245, %222 : vector<2x128xf32>
    %253 = arith.addf %251, %252 : vector<2x128xf32>
    %c10_74 = arith.constant 10 : index
    %c0_75 = arith.constant 0 : index
    %254 = vector.load %arg11[%c10_74, %c0_75] : memref<16x128xf32, #tpu.memory_space<vmem>>, vector<2x128xf32>
    tpu.vector_store %arg11[%c10_74, %c0_75], %253 {strides = array<i32>} : memref<16x128xf32, #tpu.memory_space<vmem>>, vector<2x128xf32>,
    %255 = arith.truncf %253 : vector<2x128xf32> to vector<2x128xbf16>
    %cst_76 = arith.constant dense<0.000000e+00> : vector<2x384xf32>
    %256 = tpu.matmul %255, %66, %cst_76 {dimension_numbers = #tpu.dot_dimension_numbers<[1], [0], [0], [1], [0, 0, 1, 1], [], []>} : vector<2x128xbf16>, vector<128x384xbf16>, vector<2x384xf32> -> vector<2x384xf32>
    %257 = vector.broadcast %67 : vector<1x384xf32> to vector<2x384xf32>
    %258 = arith.addf %256, %257 : vector<2x384xf32>
    %259 = vector.extract_strided_slice %60 {offsets = [0, 0], sizes = [2, 128], strides = [1, 1]} : vector<2x384xf32> to vector<2x128xf32>
    %260 = vector.extract_strided_slice %60 {offsets = [0, 128], sizes = [2, 128], strides = [1, 1]} : vector<2x384xf32> to vector<2x128xf32>
    %261 = vector.extract_strided_slice %60 {offsets = [0, 256], sizes = [2, 128], strides = [1, 1]} : vector<2x384xf32> to vector<2x128xf32>
    %262 = vector.extract_strided_slice %258 {offsets = [0, 0], sizes = [2, 128], strides = [1, 1]} : vector<2x384xf32> to vector<2x128xf32>
    %263 = vector.extract_strided_slice %258 {offsets = [0, 128], sizes = [2, 128], strides = [1, 1]} : vector<2x384xf32> to vector<2x128xf32>
    %264 = vector.extract_strided_slice %258 {offsets = [0, 256], sizes = [2, 128], strides = [1, 1]} : vector<2x384xf32> to vector<2x128xf32>
    %265 = arith.addf %259, %262 : vector<2x128xf32>
    %266 = arith.negf %265 : vector<2x128xf32>
    %267 = math.exp %266 : vector<2x128xf32>
    %cst_77 = arith.constant 1.000000e+00 : f32
    %268 = vector.broadcast %cst_77 : f32 to vector<2x128xf32>
    %269 = arith.addf %268, %267 : vector<2x128xf32>
    %270 = arith.divf %268, %269 : vector<2x128xf32>
    %271 = arith.addf %260, %263 : vector<2x128xf32>
    %272 = arith.negf %271 : vector<2x128xf32>
    %273 = math.exp %272 : vector<2x128xf32>
    %cst_78 = arith.constant 1.000000e+00 : f32
    %274 = vector.broadcast %cst_78 : f32 to vector<2x128xf32>
    %275 = arith.addf %274, %273 : vector<2x128xf32>
    %276 = arith.divf %274, %275 : vector<2x128xf32>
    %277 = arith.mulf %270, %264 : vector<2x128xf32>
    %278 = arith.addf %261, %277 : vector<2x128xf32>
    %279 = math.tanh %278 : vector<2x128xf32>
    %cst_79 = arith.constant 1.000000e+00 : f32
    %280 = vector.broadcast %cst_79 : f32 to vector<2x128xf32>
    %281 = arith.subf %280, %276 : vector<2x128xf32>
    %282 = arith.mulf %281, %279 : vector<2x128xf32>
    %283 = arith.mulf %276, %253 : vector<2x128xf32>
    %284 = arith.addf %282, %283 : vector<2x128xf32>
    %c12_80 = arith.constant 12 : index
    %c0_81 = arith.constant 0 : index
    %285 = vector.load %arg11[%c12_80, %c0_81] : memref<16x128xf32, #tpu.memory_space<vmem>>, vector<2x128xf32>
    tpu.vector_store %arg11[%c12_80, %c0_81], %284 {strides = array<i32>} : memref<16x128xf32, #tpu.memory_space<vmem>>, vector<2x128xf32>,
    %286 = arith.truncf %284 : vector<2x128xf32> to vector<2x128xbf16>
    %cst_82 = arith.constant dense<0.000000e+00> : vector<2x384xf32>
    %287 = tpu.matmul %286, %66, %cst_82 {dimension_numbers = #tpu.dot_dimension_numbers<[1], [0], [0], [1], [0, 0, 1, 1], [], []>} : vector<2x128xbf16>, vector<128x384xbf16>, vector<2x384xf32> -> vector<2x384xf32>
    %288 = vector.broadcast %67 : vector<1x384xf32> to vector<2x384xf32>
    %289 = arith.addf %287, %288 : vector<2x384xf32>
    %290 = vector.extract_strided_slice %65 {offsets = [0, 0], sizes = [2, 128], strides = [1, 1]} : vector<2x384xf32> to vector<2x128xf32>
    %291 = vector.extract_strided_slice %65 {offsets = [0, 128], sizes = [2, 128], strides = [1, 1]} : vector<2x384xf32> to vector<2x128xf32>
    %292 = vector.extract_strided_slice %65 {offsets = [0, 256], sizes = [2, 128], strides = [1, 1]} : vector<2x384xf32> to vector<2x128xf32>
    %293 = vector.extract_strided_slice %289 {offsets = [0, 0], sizes = [2, 128], strides = [1, 1]} : vector<2x384xf32> to vector<2x128xf32>
    %294 = vector.extract_strided_slice %289 {offsets = [0, 128], sizes = [2, 128], strides = [1, 1]} : vector<2x384xf32> to vector<2x128xf32>
    %295 = vector.extract_strided_slice %289 {offsets = [0, 256], sizes = [2, 128], strides = [1, 1]} : vector<2x384xf32> to vector<2x128xf32>
    %296 = arith.addf %290, %293 : vector<2x128xf32>
    %297 = arith.negf %296 : vector<2x128xf32>
    %298 = math.exp %297 : vector<2x128xf32>
    %cst_83 = arith.constant 1.000000e+00 : f32
    %299 = vector.broadcast %cst_83 : f32 to vector<2x128xf32>
    %300 = arith.addf %299, %298 : vector<2x128xf32>
    %301 = arith.divf %299, %300 : vector<2x128xf32>
    %302 = arith.addf %291, %294 : vector<2x128xf32>
    %303 = arith.negf %302 : vector<2x128xf32>
    %304 = math.exp %303 : vector<2x128xf32>
    %cst_84 = arith.constant 1.000000e+00 : f32
    %305 = vector.broadcast %cst_84 : f32 to vector<2x128xf32>
    %306 = arith.addf %305, %304 : vector<2x128xf32>
    %307 = arith.divf %305, %306 : vector<2x128xf32>
    %308 = arith.mulf %301, %295 : vector<2x128xf32>
    %309 = arith.addf %292, %308 : vector<2x128xf32>
    %310 = math.tanh %309 : vector<2x128xf32>
    %cst_85 = arith.constant 1.000000e+00 : f32
    %311 = vector.broadcast %cst_85 : f32 to vector<2x128xf32>
    %312 = arith.subf %311, %307 : vector<2x128xf32>
    %313 = arith.mulf %312, %310 : vector<2x128xf32>
    %314 = arith.mulf %307, %284 : vector<2x128xf32>
    %315 = arith.addf %313, %314 : vector<2x128xf32>
    %c14_86 = arith.constant 14 : index
    %c0_87 = arith.constant 0 : index
    %316 = vector.load %arg11[%c14_86, %c0_87] : memref<16x128xf32, #tpu.memory_space<vmem>>, vector<2x128xf32>
    tpu.vector_store %arg11[%c14_86, %c0_87], %315 {strides = array<i32>} : memref<16x128xf32, #tpu.memory_space<vmem>>, vector<2x128xf32>,
    %317 = tpu.iota {dimensions = array<i32: 1>} : vector<1x64xi32>
    %c32_i32_88 = arith.constant 32 : i32
    %318 = vector.broadcast %c32_i32_88 : i32 to vector<1x64xi32>
    %319 = arith.cmpi slt, %317, %318 : vector<1x64xi32>
    %c0_89 = arith.constant 0 : index
    %c0_90 = arith.constant 0 : index
    %320 = vector.load %arg11[%c0_89, %c0_90] : memref<16x128xf32, #tpu.memory_space<vmem>>, vector<2x64xf32>
    %c14_91 = arith.constant 14 : index
    %c0_92 = arith.constant 0 : index
    %321 = vector.load %arg11[%c14_91, %c0_92] : memref<16x128xf32, #tpu.memory_space<vmem>>, vector<2x64xf32>
    %322 = vector.shape_cast %319 : vector<1x64xi1> to vector<1x64xi1>
    %323 = vector.broadcast %322 : vector<1x64xi1> to vector<2x64xi1>
    %324 = arith.select %323, %320, %321 : vector<2x64xi1>, vector<2x64xf32>
    %c0_93 = arith.constant 0 : index
    %c0_94 = arith.constant 0 : index
    %325 = vector.load %arg12[%c0_93, %c0_94] : memref<16x64xf32, #tpu.memory_space<vmem>>, vector<2x64xf32>
    tpu.vector_store %arg12[%c0_93, %c0_94], %324 {strides = array<i32>} : memref<16x64xf32, #tpu.memory_space<vmem>>, vector<2x64xf32>,
    %c2_95 = arith.constant 2 : index
    %c0_96 = arith.constant 0 : index
    %326 = vector.load %arg11[%c2_95, %c0_96] : memref<16x128xf32, #tpu.memory_space<vmem>>, vector<2x64xf32>
    %c12_97 = arith.constant 12 : index
    %c0_98 = arith.constant 0 : index
    %327 = vector.load %arg11[%c12_97, %c0_98] : memref<16x128xf32, #tpu.memory_space<vmem>>, vector<2x64xf32>
    %328 = vector.shape_cast %319 : vector<1x64xi1> to vector<1x64xi1>
    %329 = vector.broadcast %328 : vector<1x64xi1> to vector<2x64xi1>
    %330 = arith.select %329, %326, %327 : vector<2x64xi1>, vector<2x64xf32>
    %c2_99 = arith.constant 2 : index
    %c0_100 = arith.constant 0 : index
    %331 = vector.load %arg12[%c2_99, %c0_100] : memref<16x64xf32, #tpu.memory_space<vmem>>, vector<2x64xf32>
    tpu.vector_store %arg12[%c2_99, %c0_100], %330 {strides = array<i32>} : memref<16x64xf32, #tpu.memory_space<vmem>>, vector<2x64xf32>,
    %c4_101 = arith.constant 4 : index
    %c0_102 = arith.constant 0 : index
    %332 = vector.load %arg11[%c4_101, %c0_102] : memref<16x128xf32, #tpu.memory_space<vmem>>, vector<2x64xf32>
    %c10_103 = arith.constant 10 : index
    %c0_104 = arith.constant 0 : index
    %333 = vector.load %arg11[%c10_103, %c0_104] : memref<16x128xf32, #tpu.memory_space<vmem>>, vector<2x64xf32>
    %334 = vector.shape_cast %319 : vector<1x64xi1> to vector<1x64xi1>
    %335 = vector.broadcast %334 : vector<1x64xi1> to vector<2x64xi1>
    %336 = arith.select %335, %332, %333 : vector<2x64xi1>, vector<2x64xf32>
    %c4_105 = arith.constant 4 : index
    %c0_106 = arith.constant 0 : index
    %337 = vector.load %arg12[%c4_105, %c0_106] : memref<16x64xf32, #tpu.memory_space<vmem>>, vector<2x64xf32>
    tpu.vector_store %arg12[%c4_105, %c0_106], %336 {strides = array<i32>} : memref<16x64xf32, #tpu.memory_space<vmem>>, vector<2x64xf32>,
    %c6_107 = arith.constant 6 : index
    %c0_108 = arith.constant 0 : index
    %338 = vector.load %arg11[%c6_107, %c0_108] : memref<16x128xf32, #tpu.memory_space<vmem>>, vector<2x64xf32>
    %c8_109 = arith.constant 8 : index
    %c0_110 = arith.constant 0 : index
    %339 = vector.load %arg11[%c8_109, %c0_110] : memref<16x128xf32, #tpu.memory_space<vmem>>, vector<2x64xf32>
    %340 = vector.shape_cast %319 : vector<1x64xi1> to vector<1x64xi1>
    %341 = vector.broadcast %340 : vector<1x64xi1> to vector<2x64xi1>
    %342 = arith.select %341, %338, %339 : vector<2x64xi1>, vector<2x64xf32>
    %c6_111 = arith.constant 6 : index
    %c0_112 = arith.constant 0 : index
    %343 = vector.load %arg12[%c6_111, %c0_112] : memref<16x64xf32, #tpu.memory_space<vmem>>, vector<2x64xf32>
    tpu.vector_store %arg12[%c6_111, %c0_112], %342 {strides = array<i32>} : memref<16x64xf32, #tpu.memory_space<vmem>>, vector<2x64xf32>,
    %c8_113 = arith.constant 8 : index
    %c0_114 = arith.constant 0 : index
    %344 = vector.load %arg11[%c8_113, %c0_114] : memref<16x128xf32, #tpu.memory_space<vmem>>, vector<2x64xf32>
    %c6_115 = arith.constant 6 : index
    %c0_116 = arith.constant 0 : index
    %345 = vector.load %arg11[%c6_115, %c0_116] : memref<16x128xf32, #tpu.memory_space<vmem>>, vector<2x64xf32>
    %346 = vector.shape_cast %319 : vector<1x64xi1> to vector<1x64xi1>
    %347 = vector.broadcast %346 : vector<1x64xi1> to vector<2x64xi1>
    %348 = arith.select %347, %344, %345 : vector<2x64xi1>, vector<2x64xf32>
    %c8_117 = arith.constant 8 : index
    %c0_118 = arith.constant 0 : index
    %349 = vector.load %arg12[%c8_117, %c0_118] : memref<16x64xf32, #tpu.memory_space<vmem>>, vector<2x64xf32>
    tpu.vector_store %arg12[%c8_117, %c0_118], %348 {strides = array<i32>} : memref<16x64xf32, #tpu.memory_space<vmem>>, vector<2x64xf32>,
    %c10_119 = arith.constant 10 : index
    %c0_120 = arith.constant 0 : index
    %350 = vector.load %arg11[%c10_119, %c0_120] : memref<16x128xf32, #tpu.memory_space<vmem>>, vector<2x64xf32>
    %c4_121 = arith.constant 4 : index
    %c0_122 = arith.constant 0 : index
    %351 = vector.load %arg11[%c4_121, %c0_122] : memref<16x128xf32, #tpu.memory_space<vmem>>, vector<2x64xf32>
    %352 = vector.shape_cast %319 : vector<1x64xi1> to vector<1x64xi1>
    %353 = vector.broadcast %352 : vector<1x64xi1> to vector<2x64xi1>
    %354 = arith.select %353, %350, %351 : vector<2x64xi1>, vector<2x64xf32>
    %c10_123 = arith.constant 10 : index
    %c0_124 = arith.constant 0 : index
    %355 = vector.load %arg12[%c10_123, %c0_124] : memref<16x64xf32, #tpu.memory_space<vmem>>, vector<2x64xf32>
    tpu.vector_store %arg12[%c10_123, %c0_124], %354 {strides = array<i32>} : memref<16x64xf32, #tpu.memory_space<vmem>>, vector<2x64xf32>,
    %c12_125 = arith.constant 12 : index
    %c0_126 = arith.constant 0 : index
    %356 = vector.load %arg11[%c12_125, %c0_126] : memref<16x128xf32, #tpu.memory_space<vmem>>, vector<2x64xf32>
    %c2_127 = arith.constant 2 : index
    %c0_128 = arith.constant 0 : index
    %357 = vector.load %arg11[%c2_127, %c0_128] : memref<16x128xf32, #tpu.memory_space<vmem>>, vector<2x64xf32>
    %358 = vector.shape_cast %319 : vector<1x64xi1> to vector<1x64xi1>
    %359 = vector.broadcast %358 : vector<1x64xi1> to vector<2x64xi1>
    %360 = arith.select %359, %356, %357 : vector<2x64xi1>, vector<2x64xf32>
    %c12_129 = arith.constant 12 : index
    %c0_130 = arith.constant 0 : index
    %361 = vector.load %arg12[%c12_129, %c0_130] : memref<16x64xf32, #tpu.memory_space<vmem>>, vector<2x64xf32>
    tpu.vector_store %arg12[%c12_129, %c0_130], %360 {strides = array<i32>} : memref<16x64xf32, #tpu.memory_space<vmem>>, vector<2x64xf32>,
    %c14_131 = arith.constant 14 : index
    %c0_132 = arith.constant 0 : index
    %362 = vector.load %arg11[%c14_131, %c0_132] : memref<16x128xf32, #tpu.memory_space<vmem>>, vector<2x64xf32>
    %c0_133 = arith.constant 0 : index
    %c0_134 = arith.constant 0 : index
    %363 = vector.load %arg11[%c0_133, %c0_134] : memref<16x128xf32, #tpu.memory_space<vmem>>, vector<2x64xf32>
    %364 = vector.shape_cast %319 : vector<1x64xi1> to vector<1x64xi1>
    %365 = vector.broadcast %364 : vector<1x64xi1> to vector<2x64xi1>
    %366 = arith.select %365, %362, %363 : vector<2x64xi1>, vector<2x64xf32>
    %c14_135 = arith.constant 14 : index
    %c0_136 = arith.constant 0 : index
    %367 = vector.load %arg12[%c14_135, %c0_136] : memref<16x64xf32, #tpu.memory_space<vmem>>, vector<2x64xf32>
    tpu.vector_store %arg12[%c14_135, %c0_136], %366 {strides = array<i32>} : memref<16x64xf32, #tpu.memory_space<vmem>>, vector<2x64xf32>,
    %c0_137 = arith.constant 0 : index
    %c0_138 = arith.constant 0 : index
    %368 = vector.load %arg12[%c0_137, %c0_138] : memref<16x64xf32, #tpu.memory_space<vmem>>, vector<16x64xf32>
    %cst_139 = arith.constant dense<0.000000e+00> : vector<16xf32>
    %369 = vector.multi_reduction <add>, %368, %cst_139 [1] : vector<16x64xf32> to vector<16xf32>
    %370 = vector.shape_cast %369 : vector<16xf32> to vector<16x1xf32>
    %cst_140 = arith.constant 6.400000e+01 : f32
    %371 = vector.broadcast %cst_140 : f32 to vector<16x1xf32>
    %372 = arith.divf %370, %371 : vector<16x1xf32>
    %373 = vector.broadcast %372 : vector<16x1xf32> to vector<16x64xf32>
    %374 = arith.subf %368, %373 : vector<16x64xf32>
    %375 = arith.mulf %374, %374 : vector<16x64xf32>
    %cst_141 = arith.constant dense<0.000000e+00> : vector<16xf32>
    %376 = vector.multi_reduction <add>, %375, %cst_141 [1] : vector<16x64xf32> to vector<16xf32>
    %377 = vector.shape_cast %376 : vector<16xf32> to vector<16x1xf32>
    %cst_142 = arith.constant 6.400000e+01 : f32
    %378 = vector.broadcast %cst_142 : f32 to vector<16x1xf32>
    %379 = arith.divf %377, %378 : vector<16x1xf32>
    %380 = vector.broadcast %372 : vector<16x1xf32> to vector<16x64xf32>
    %381 = arith.subf %368, %380 : vector<16x64xf32>
    %cst_143 = arith.constant 9.99999974E-6 : f32
    %382 = vector.broadcast %cst_143 : f32 to vector<16x1xf32>
    %383 = arith.addf %379, %382 : vector<16x1xf32>
    %384 = math.rsqrt %383 : vector<16x1xf32>
    %385 = vector.broadcast %384 : vector<16x1xf32> to vector<16x64xf32>
    %386 = arith.mulf %381, %385 : vector<16x64xf32>
    %c0_144 = arith.constant 0 : index
    %c0_145 = arith.constant 0 : index
    %387 = vector.load %arg5[%c0_144, %c0_145] : memref<1x64xf32, #tpu.memory_space<vmem>>, vector<1x64xf32>
    %388 = vector.broadcast %387 : vector<1x64xf32> to vector<16x64xf32>
    %389 = arith.mulf %386, %388 : vector<16x64xf32>
    %c0_146 = arith.constant 0 : index
    %c0_147 = arith.constant 0 : index
    %390 = vector.load %arg6[%c0_146, %c0_147] : memref<1x64xf32, #tpu.memory_space<vmem>>, vector<1x64xf32>
    %391 = vector.broadcast %390 : vector<1x64xf32> to vector<16x64xf32>
    %392 = arith.addf %389, %391 : vector<16x64xf32>
    %393 = arith.truncf %392 : vector<16x64xf32> to vector<16x64xbf16>
    %c0_148 = arith.constant 0 : index
    %c0_149 = arith.constant 0 : index
    %394 = vector.load %arg7[%c0_148, %c0_149] : memref<64x16xbf16, #tpu.memory_space<vmem>>, vector<64x16xbf16>
    %cst_150 = arith.constant dense<0.000000e+00> : vector<16x16xf32>
    %395 = tpu.matmul %393, %394, %cst_150 {dimension_numbers = #tpu.dot_dimension_numbers<[1], [0], [0], [1], [0, 0, 1, 1], [], []>} : vector<16x64xbf16>, vector<64x16xbf16>, vector<16x16xf32> -> vector<16x16xf32>
    %c0_151 = arith.constant 0 : index
    %c0_152 = arith.constant 0 : index
    %396 = vector.load %arg8[%c0_151, %c0_152] : memref<1x16xf32, #tpu.memory_space<vmem>>, vector<1x16xf32>
    %397 = vector.broadcast %396 : vector<1x16xf32> to vector<16x16xf32>
    %398 = arith.addf %395, %397 : vector<16x16xf32>
    %cst_153 = arith.constant dense<0xFF800000> : vector<16xf32>
    %399 = vector.multi_reduction <maximumf>, %398, %cst_153 [1] : vector<16x16xf32> to vector<16xf32>
    %400 = vector.shape_cast %399 : vector<16xf32> to vector<16x1xf32>
    %401 = vector.broadcast %400 : vector<16x1xf32> to vector<16x16xf32>
    %402 = arith.subf %398, %401 : vector<16x16xf32>
    %403 = math.exp %402 : vector<16x16xf32>
    %cst_154 = arith.constant dense<0.000000e+00> : vector<16xf32>
    %404 = vector.multi_reduction <add>, %403, %cst_154 [1] : vector<16x16xf32> to vector<16xf32>
    %405 = vector.shape_cast %404 : vector<16xf32> to vector<16x1xf32>
    %406 = math.log %405 : vector<16x1xf32>
    %407 = arith.addf %400, %406 : vector<16x1xf32>
    %408 = vector.broadcast %407 : vector<16x1xf32> to vector<16x16xf32>
    %409 = arith.subf %398, %408 : vector<16x16xf32>
    %c0_155 = arith.constant 0 : index
    %c0_156 = arith.constant 0 : index
    %410 = vector.load %arg9[%c0_155, %c0_156] : memref<16x16xf32, #tpu.memory_space<vmem>>, vector<16x16xf32>
    tpu.vector_store %arg9[%c0_155, %c0_156], %409 {strides = array<i32>} : memref<16x16xf32, #tpu.memory_space<vmem>>, vector<16x16xf32>,
    return
  }
}

</mosaic_0001>

<llo_original>
// kernel: crnn_forward.5
$region0: #{crnn_forward.5}
  #allocation0 [shape = 'u32[]', space=smem, size = 0x4, offset = 0x4, fixed_abs, tag = 'smem constant byte address 0x4 - core index']
  #allocation1 [shape = 'u32[144,128]{1,0:T(1,128)}', space=vmem, size = 0x12000, scoped, tag = 'internal scratch']
  #allocation2 [shape = 'f32[16,384]{1,0:T(8,128)}', space=vmem, size = 0x6000, scoped, tag = 'scratch operand']
  #allocation3 [shape = 'f32[16,128]{1,0:T(8,128)}', space=vmem, size = 0x2000, scoped, tag = 'scratch operand']
  #allocation4 [shape = 'f32[16,64]{1,0:T(8,128)}', space=vmem, size = 0x2000, scoped, tag = 'scratch operand']
  %s0 = inlined_call_operand.vmem [shape: bf16[16,64], index: 0, kind: input, shape index: {}]
  %s1 = inlined_call_operand.vmem [shape: bf16[64,384], index: 1, kind: input, shape index: {}]
  %s2 = inlined_call_operand.vmem [shape: f32[1,384], index: 2, kind: input, shape index: {}]
  %s3 = inlined_call_operand.vmem [shape: bf16[128,384], index: 3, kind: input, shape index: {}]
  %s4 = inlined_call_operand.vmem [shape: f32[1,384], index: 4, kind: input, shape index: {}]
  %s5 = inlined_call_operand.vmem [shape: f32[1,64], index: 5, kind: input, shape index: {}]
  %s6 = inlined_call_operand.vmem [shape: f32[1,64], index: 6, kind: input, shape index: {}]
  %s7 = inlined_call_operand.vmem [shape: bf16[64,16], index: 7, kind: input, shape index: {}]
  %s8 = inlined_call_operand.vmem [shape: f32[1,16], index: 8, kind: input, shape index: {}]
  %s9 = inlined_call_operand.hbm [shape: f32[16,16], index: 9, kind: output, shape index: {}]
  %s10 = sld [smem:[#allocation0]]
  $region46: #{crnn_forward.5} parent=0
    _
  %s12 = ssub.s32 1, %s10
  %s13 = scalar_select 0, %s12, %s10
  $region1: #{crnn_forward.5} parent=0
    #allocation5 [shape = 'u8[8192]{0}', space=vmem, size = 0x2000, scoped, tag = 'output window, operand 0, single buffered']
    #allocation6 [shape = 's32[1]{0}', space=sflag, size = 0x4, scoped, tag = 'scoped memory for crnn_forward.5']
    %14 = vsyncpa [#allocation6], 0
    // Predicated region
    $region2: #{crnn_forward.5} parent=1 // pred_check
      _
    $region3: #{crnn_forward.5} parent=1 // pred_check_branch
      %16 = sbr.rel (0) target = $region5
    $region4: #{crnn_forward.5} parent=1 // pred_region
      _
    $region5: #{crnn_forward.5} parent=1 // pred_fallthru
      _
    // Predicated region
    $region6: #{crnn_forward.5} parent=1 // pred_check
      _
    $region7: #{crnn_forward.5} parent=1 // pred_check_branch
      %18 = sbr.rel (0) target = $region9
    $region8: #{crnn_forward.5} parent=1 // pred_region
      _
    $region9: #{crnn_forward.5} parent=1 // pred_fallthru
      _
    // Predicated region
    $region10: #{crnn_forward.5} parent=1 // pred_check
      _
    $region11: #{crnn_forward.5} parent=1 // pred_check_branch
      %20 = sbr.rel (0) target = $region13
    $region12: #{crnn_forward.5} parent=1 // pred_region
      _
    $region13: #{crnn_forward.5} parent=1 // pred_fallthru
      _
    // Predicated region
    $region14: #{crnn_forward.5} parent=1 // pred_check
      _
    $region15: #{crnn_forward.5} parent=1 // pred_check_branch
      %22 = sbr.rel (0) target = $region17
    $region16: #{crnn_forward.5} parent=1 // pred_region
      _
    $region17: #{crnn_forward.5} parent=1 // pred_fallthru
      _
    // Predicated region
    $region18: #{crnn_forward.5} parent=1 // pred_check
      _
    $region19: #{crnn_forward.5} parent=1 // pred_check_branch
      %24 = sbr.rel (0) target = $region21
    $region20: #{crnn_forward.5} parent=1 // pred_region
      _
    $region21: #{crnn_forward.5} parent=1 // pred_fallthru
      _
    // Predicated region
    $region22: #{crnn_forward.5} parent=1 // pred_check
      _
    $region23: #{crnn_forward.5} parent=1 // pred_check_branch
      %26 = sbr.rel (0) target = $region25
    $region24: #{crnn_forward.5} parent=1 // pred_region
      _
    $region25: #{crnn_forward.5} parent=1 // pred_fallthru
      _
    // Predicated region
    $region26: #{crnn_forward.5} parent=1 // pred_check
      _
    $region27: #{crnn_forward.5} parent=1 // pred_check_branch
      %28 = sbr.rel (0) target = $region29
    $region28: #{crnn_forward.5} parent=1 // pred_region
      _
    $region29: #{crnn_forward.5} parent=1 // pred_fallthru
      _
    // Predicated region
    $region30: #{crnn_forward.5} parent=1 // pred_check
      _
    $region31: #{crnn_forward.5} parent=1 // pred_check_branch
      %30 = sbr.rel (0) target = $region33
    $region32: #{crnn_forward.5} parent=1 // pred_region
      _
    $region33: #{crnn_forward.5} parent=1 // pred_fallthru
      _
    // Predicated region
    $region34: #{crnn_forward.5} parent=1 // pred_check
      _
    $region35: #{crnn_forward.5} parent=1 // pred_check_branch
      %32 = sbr.rel (0) target = $region37
    $region36: #{crnn_forward.5} parent=1 // pred_region
      _
    $region37: #{crnn_forward.5} parent=1 // pred_fallthru
      _
    %v34 = vld [vmem:[%s0] sm:$0xf]
    %v35 = vld [vmem:[%s0 + $0x4] sm:$0xf]
    %v36 = vld [vmem:[%s1] sm:$0xff]
    %v37 = vld [vmem:[%s1 + $0x8] sm:$0xf]
    %v38 = vld [vmem:[%s1 + $0xc] sm:$0xff]
    %v39 = vld [vmem:[%s1 + $0x14] sm:$0xf]
    %v40 = vld [vmem:[%s1 + $0x18] sm:$0xff]
    %v41 = vld [vmem:[%s1 + $0x20] sm:$0xf]
    %v42 = vld [vmem:[%s1 + $0x24] sm:$0xff]
    %v43 = vld [vmem:[%s1 + $0x2c] sm:$0xf]
    %v44 = vld [vmem:[%s1 + $0x30] sm:$0xff]
    %v45 = vld [vmem:[%s1 + $0x38] sm:$0xf]
    %v46 = vld [vmem:[%s1 + $0x3c] sm:$0xff]
    %v47 = vld [vmem:[%s1 + $0x44] sm:$0xf]
    %v48 = vld [vmem:[%s1 + $0x48] sm:$0xff]
    %v49 = vld [vmem:[%s1 + $0x50] sm:$0xf]
    %v50 = vld [vmem:[%s1 + $0x54] sm:$0xff]
    %v51 = vld [vmem:[%s1 + $0x5c] sm:$0xf]
    %v52 = vld [vmem:[%s2] sm:$0x7]
    %v54 = vlaneseq
    %v55 = vshrl.u32 %v54, 7
    %v56 = vsub.s32 0, %v55
    %v57 = vrot.slane %v52, %v56
    %v58 = vlaneseq
    %v59 = vshrl.u32 %v58, 7
    %v60 = vsub.s32 1, %v59
    %v61 = vrot.slane %v52, %v60
    %v62 = vlaneseq
    %v63 = vshrl.u32 %v62, 7
    %v64 = vsub.s32 2, %v63
    %v65 = vrot.slane %v52, %v64
    %v71 = vunpack.c.l.b16 %v34
    %v72 = vunpack.c.l.b16 %v35
    %v73 = vpack.c.b16 %v72, %v71
    %v90 = vunpack.c.l.b16 %v36
    %v91 = vunpack.c.h.b16 %v36
    %v92 = vunpack.c.l.b16 %v37
    %v93 = vunpack.c.l.b16 %v38
    %v94 = vunpack.c.h.b16 %v38
    %v95 = vunpack.c.l.b16 %v39
    %v96 = vunpack.c.l.b16 %v40
    %v97 = vunpack.c.h.b16 %v40
    %v98 = vunpack.c.l.b16 %v41
    %v99 = vunpack.c.l.b16 %v42
    %v100 = vunpack.c.h.b16 %v42
    %v101 = vunpack.c.l.b16 %v43
    %v102 = vunpack.c.l.b16 %v44
    %v103 = vunpack.c.h.b16 %v44
    %v104 = vunpack.c.l.b16 %v45
    %v105 = vunpack.c.l.b16 %v46
    %v106 = vunpack.c.h.b16 %v46
    %v107 = vunpack.c.l.b16 %v47
    %v108 = vunpack.c.l.b16 %v48
    %v109 = vunpack.c.h.b16 %v48
    %v110 = vunpack.c.l.b16 %v49
    %v111 = vunpack.c.l.b16 %v50
    %v112 = vunpack.c.h.b16 %v50
    %v113 = vunpack.c.l.b16 %v51
    %v114 = vpack.c.b16 %v93, %v90
    %v115 = vpack.c.b16 %v94, %v91
    %v116 = vpack.c.b16 %v95, %v92
    %v117 = vpack.c.b16 %v99, %v96
    %v118 = vpack.c.b16 %v100, %v97
    %v119 = vpack.c.b16 %v101, %v98
    %v120 = vpack.c.b16 %v105, %v102
    %v121 = vpack.c.b16 %v106, %v103
    %v122 = vpack.c.b16 %v107, %v104
    %v123 = vpack.c.b16 %v111, %v108
    %v124 = vpack.c.b16 %v112, %v109
    %v125 = vpack.c.b16 %v113, %v110
    %vm138 = vcmask 523264
    %v140 = vsel %vm138, %v73, 0
    %142 = vmatprep.subr.bf16.mxu0 0
    %143 = vmatpush1.bf16.msra.mxu0 0
    %144 = vmatprep.subr.bf16.mxu0 0
    %145 = vmatpush1.bf16.msra.mxu0 0
    %146 = vmatprep.subr.bf16.mxu0 0
    %147 = vmatpush1.bf16.msra.mxu0 0
    %148 = vmatprep.subr.bf16.mxu0 0
    %149 = vmatpush1.bf16.msra.mxu0 0
    %150 = vmatprep.subr.bf16.mxu0 %v124
    %151 = vmatpush1.bf16.msra.mxu0 %v123
    %152 = vmatprep.subr.bf16.mxu0 %v121
    %153 = vmatpush1.bf16.msra.mxu0 %v120
    %154 = vmatprep.subr.bf16.mxu0 %v118
    %155 = vmatpush1.bf16.msra.mxu0 %v117
    %156 = vmatprep.subr.bf16.mxu0 %v115
    %157 = vmatpush1.bf16.msra.mxu0 %v114
    %158 = vmatprep.subr.bf16.mxu0 0
    %159 = vmatpush2.bf16.msra.mxu0 0
    %160 = vmatprep.subr.bf16.mxu0 0
    %161 = vmatpush2.bf16.msra.mxu0 0
    %162 = vmatprep.subr.bf16.mxu0 0
    %163 = vmatpush2.bf16.msra.mxu0 0
    %164 = vmatprep.subr.bf16.mxu0 0
    %165 = vmatpush2.bf16.msra.mxu0 0
    %166 = vmatprep.subr.bf16.mxu0 0
    %167 = vmatpush2.bf16.msra.mxu0 0
    %168 = vmatprep.subr.bf16.mxu0 0
    %169 = vmatpush2.bf16.msra.mxu0 0
    %170 = vmatprep.subr.bf16.mxu0 0
    %171 = vmatpush2.bf16.msra.mxu0 0
    %172 = vmatprep.subr.bf16.mxu0 0
    %173 = vmatpush2.bf16.msra.mxu0 0
    %174 = vmatprep.mubr.bf16.mxu0 0
    %175 = vmatmul.mubr.bf16.gmra.mxu0 %v140
    %v176 = vpop.f32.mrf.mxu0
    %v177 = vadd.f32 %v57, %v176
    %v178 = vpop.f32.mrf.mxu0
    %v179 = vadd.f32 %v61, %v178
    %v180 = vpop.f32.mrf.mxu0
    %v181 = vadd.f32 %v57, %v180
    %v182 = vpop.f32.mrf.mxu0
    %v183 = vadd.f32 %v61, %v182
    %184 = vdwg.mxu0
    %185 = vmatprep.subr.bf16.mxu0 0
    %186 = vmatpush1.bf16.msra.mxu0 0
    %187 = vmatprep.subr.bf16.mxu0 0
    %188 = vmatpush1.bf16.msra.mxu0 0
    %189 = vmatprep.subr.bf16.mxu0 0
    %190 = vmatpush1.bf16.msra.mxu0 0
    %191 = vmatprep.subr.bf16.mxu0 0
    %192 = vmatpush1.bf16.msra.mxu0 0
    %193 = vmatprep.subr.bf16.mxu0 0
    %194 = vmatpush1.bf16.msra.mxu0 %v125
    %195 = vmatprep.subr.bf16.mxu0 0
    %196 = vmatpush1.bf16.msra.mxu0 %v122
    %197 = vmatprep.subr.bf16.mxu0 0
    %198 = vmatpush1.bf16.msra.mxu0 %v119
    %199 = vmatprep.subr.bf16.mxu0 0
    %200 = vmatpush1.bf16.msra.mxu0 %v116
    %201 = vmatprep.subr.bf16.mxu0 0
    %202 = vmatpush2.bf16.msra.mxu0 0
    %203 = vmatprep.subr.bf16.mxu0 0
    %204 = vmatpush2.bf16.msra.mxu0 0
    %205 = vmatprep.subr.bf16.mxu0 0
    %206 = vmatpush2.bf16.msra.mxu0 0
    %207 = vmatprep.subr.bf16.mxu0 0
    %208 = vmatpush2.bf16.msra.mxu0 0
    %209 = vmatprep.subr.bf16.mxu0 0
    %210 = vmatpush2.bf16.msra.mxu0 0
    %211 = vmatprep.subr.bf16.mxu0 0
    %212 = vmatpush2.bf16.msra.mxu0 0
    %213 = vmatprep.subr.bf16.mxu0 0
    %214 = vmatpush2.bf16.msra.mxu0 0
    %215 = vmatprep.subr.bf16.mxu0 0
    %216 = vmatpush2.bf16.msra.mxu0 0
    %217 = vmatprep.mubr.bf16.mxu0 0
    %218 = vmatmul.mubr.bf16.gmra.mxu0 %v140
    %v219 = vpop.f32.mrf.mxu0
    %v220 = vadd.f32 %v65, %v219
    %v221 = vpop.f32.mrf.mxu0
    %v222 = vpop.f32.mrf.mxu0
    %v223 = vadd.f32 %v65, %v222
    %v224 = vpop.f32.mrf.mxu0
    %225 = vdwg.mxu0
    %226 = vst [vmem:[#allocation2] sm:$0xff] %v177
    %227 = vst [vmem:[#allocation2 + $0x8] sm:$0xff] %v179
    %228 = vst [vmem:[#allocation2 + $0x10] sm:$0xff] %v220
    %229 = vst [vmem:[#allocation2 + $0x18] sm:$0xff] %v181
    %230 = vst [vmem:[#allocation2 + $0x20] sm:$0xff] %v183
    %231 = vst [vmem:[#allocation2 + $0x28] sm:$0xff] %v223
    %v232 = vlaneseq
    %v233 = vand.u32 %v232, 127
    %v234 = vadd.s32 %v233, 128
    %v235 = vadd.s32 %v233, 256
    %vm236 = vcmp.lt.s32.totalorder %v233, 0
    %v237 = vsub.s32 0, %v233
    %v238 = vsel %vm236, %v237, %v233
    %v239 = vshrl.u32 %v238, 7
    %v240 = vand.u32 %v238, 127
    %v241 = vsub.s32 0, %v240
    %v242 = vsel %vm236, %v241, %v240
    %vm243 = vcmp.lt.s32.totalorder %v234, 0
    %v244 = vsub.s32 0, %v234
    %v245 = vsel %vm243, %v244, %v234
    %v246 = vshrl.u32 %v245, 7
    %v247 = vand.u32 %v245, 127
    %v248 = vsub.s32 0, %v247
    %v249 = vsel %vm243, %v248, %v247
    %vm250 = vcmp.lt.s32.totalorder %v235, 0
    %v251 = vsub.s32 0, %v235
    %v252 = vsel %vm250, %v251, %v235
    %v253 = vshrl.u32 %v252, 7
    %v254 = vand.u32 %v252, 127
    %v255 = vsub.s32 0, %v254
    %v256 = vsel %vm250, %v255, %v254
    %vm257 = vcmp.ne.s32.totalorder %v242, 0
    %vm258 = vcmp.ne.s32.totalorder %v249, 0
    %vm259 = vcmp.ne.s32.totalorder %v256, 0
    %vm260 = vcmp.lt.s32.totalorder %v242, 0
    %vm261 = vcmp.lt.s32.totalorder %v249, 0
    %vm262 = vcmp.lt.s32.totalorder %v256, 0
    %vm263 = vmand %vm260, %vm257
    %vm264 = vmand %vm261, %vm258
    %vm265 = vmand %vm262, %vm259
    %v266 = vadd.s32 %v242, 128
    %v267 = vadd.s32 %v249, 128
    %v268 = vadd.s32 %v256, 128
    %v269 = vsel %vm263, %v266, %v242
    %v270 = vsel %vm264, %v267, %v249
    %v271 = vsel %vm265, %v268, %v256
    %vm272 = vcmp.lt.s32.totalorder %v269, 32
    %vm273 = vcmp.lt.s32.totalorder %v270, 32
    %vm274 = vcmp.lt.s32.totalorder %v271, 32
    %v275 = vld [vmem:[#allocation2] sm:$0x3]
    %v276 = vld [vmem:[#allocation2 + $0x8] sm:$0x3]
    %v277 = vld [vmem:[#allocation2 + $0x10] sm:$0x3]
    %v278 = vld [vmem:[#allocation2 + $0x18] sm:$0xc0]
    %v279 = vld [vmem:[#allocation2 + $0x20] sm:$0xc0]
    %v280 = vld [vmem:[#allocation2 + $0x28] sm:$0xc0]
    %v281 = vsel %vm272, 1, 0
    %v282 = vsel %vm273, 1, 0
    %v283 = vsel %vm274, 1, 0
    %vm284 = vcmp.eq.s32.totalorder %v281, 1
    %vm285 = vcmp.eq.s32.totalorder %v282, 1
    %vm286 = vcmp.eq.s32.totalorder %v283, 1
    %v290 = vrot.slane %v278, 6
    %v291 = vrot.slane %v279, 6
    %v292 = vrot.slane %v280, 6
    %v296 = vsel %vm284, %v275, %v290
    %v297 = vsel %vm285, %v276, %v291
    %v298 = vsel %vm286, %v277, %v292
    %v299 = vld [vmem:[#allocation2] sm:$0xc]
    %v300 = vld [vmem:[#allocation2 + $0x8] sm:$0xc]
    %v301 = vld [vmem:[#allocation2 + $0x10] sm:$0xc]
    %v302 = vld [vmem:[#allocation2 + $0x18] sm:$0x30]
    %v303 = vld [vmem:[#allocation2 + $0x20] sm:$0x30]
    %v304 = vld [vmem:[#allocation2 + $0x28] sm:$0x30]
    %v308 = vrot.slane %v302, 2
    %v309 = vrot.slane %v303, 2
    %v310 = vrot.slane %v304, 2
    %v314 = vsel %vm284, %v299, %v308
    %v315 = vsel %vm285, %v300, %v309
    %v316 = vsel %vm286, %v301, %v310
    %v317 = vld [vmem:[#allocation2] sm:$0x30]
    %v318 = vld [vmem:[#allocation2 + $0x8] sm:$0x30]
    %v319 = vld [vmem:[#allocation2 + $0x10] sm:$0x30]
    %v320 = vld [vmem:[#allocation2 + $0x18] sm:$0xc]
    %v321 = vld [vmem:[#allocation2 + $0x20] sm:$0xc]
    %v322 = vld [vmem:[#allocation2 + $0x28] sm:$0xc]
    %v326 = vrot.slane %v320, 6
    %v327 = vrot.slane %v321, 6
    %v328 = vrot.slane %v322, 6
    %v332 = vsel %vm284, %v317, %v326
    %v333 = vsel %vm285, %v318, %v327
    %v334 = vsel %vm286, %v319, %v328
    %v335 = vld [vmem:[#allocation2] sm:$0xc0]
    %v336 = vld [vmem:[#allocation2 + $0x8] sm:$0xc0]
    %v337 = vld [vmem:[#allocation2 + $0x10] sm:$0xc0]
    %v338 = vld [vmem:[#allocation2 + $0x18] sm:$0x3]
    %v339 = vld [vmem:[#allocation2 + $0x20] sm:$0x3]
    %v340 = vld [vmem:[#allocation2 + $0x28] sm:$0x3]
    %v344 = vrot.slane %v338, 2
    %v345 = vrot.slane %v339, 2
    %v346 = vrot.slane %v340, 2
    %v350 = vsel %vm284, %v335, %v344
    %v351 = vsel %vm285, %v336, %v345
    %v352 = vsel %vm286, %v337, %v346
    %v356 = vrot.slane %v335, 6
    %v357 = vrot.slane %v336, 6
    %v358 = vrot.slane %v337, 6
    %v362 = vsel %vm284, %v338, %v356
    %v363 = vsel %vm285, %v339, %v357
    %v364 = vsel %vm286, %v340, %v358
    %v368 = vrot.slane %v317, 2
    %v369 = vrot.slane %v318, 2
    %v370 = vrot.slane %v319, 2
    %v374 = vsel %vm284, %v320, %v368
    %v375 = vsel %vm285, %v321, %v369
    %v376 = vsel %vm286, %v322, %v370
    %v380 = vrot.slane %v299, 6
    %v381 = vrot.slane %v300, 6
    %v382 = vrot.slane %v301, 6
    %v386 = vsel %vm284, %v302, %v380
    %v387 = vsel %vm285, %v303, %v381
    %v388 = vsel %vm286, %v304, %v382
    %v392 = vrot.slane %v275, 2
    %v393 = vrot.slane %v276, 2
    %v394 = vrot.slane %v277, 2
    %v398 = vsel %vm284, %v278, %v392
    %v399 = vsel %vm285, %v279, %v393
    %v400 = vsel %vm286, %v280, %v394
    %v401 = vld [vmem:[%s3] sm:$0xff]
    %v402 = vld [vmem:[%s3 + $0x8] sm:$0xf]
    %v403 = vld [vmem:[%s3 + $0xc] sm:$0xff]
    %v404 = vld [vmem:[%s3 + $0x14] sm:$0xf]
    %v405 = vld [vmem:[%s3 + $0x18] sm:$0xff]
    %v406 = vld [vmem:[%s3 + $0x20] sm:$0xf]
    %v407 = vld [vmem:[%s3 + $0x24] sm:$0xff]
    %v408 = vld [vmem:[%s3 + $0x2c] sm:$0xf]
    %v409 = vld [vmem:[%s3 + $0x30] sm:$0xff]
    %v410 = vld [vmem:[%s3 + $0x38] sm:$0xf]
    %v411 = vld [vmem:[%s3 + $0x3c] sm:$0xff]
    %v412 = vld [vmem:[%s3 + $0x44] sm:$0xf]
    %v413 = vld [vmem:[%s3 + $0x48] sm:$0xff]
    %v414 = vld [vmem:[%s3 + $0x50] sm:$0xf]
    %v415 = vld [vmem:[%s3 + $0x54] sm:$0xff]
    %v416 = vld [vmem:[%s3 + $0x5c] sm:$0xf]
    %v417 = vld [vmem:[%s3 + $0x60] sm:$0xff]
    %v418 = vld [vmem:[%s3 + $0x68] sm:$0xf]
    %v419 = vld [vmem:[%s3 + $0x6c] sm:$0xff]
    %v420 = vld [vmem:[%s3 + $0x74] sm:$0xf]
    %v421 = vld [vmem:[%s3 + $0x78] sm:$0xff]
    %v422 = vld [vmem:[%s3 + $0x80] sm:$0xf]
    %v423 = vld [vmem:[%s3 + $0x84] sm:$0xff]
    %v424 = vld [vmem:[%s3 + $0x8c] sm:$0xf]
    %v425 = vld [vmem:[%s3 + $0x90] sm:$0xff]
    %v426 = vld [vmem:[%s3 + $0x98] sm:$0xf]
    %v427 = vld [vmem:[%s3 + $0x9c] sm:$0xff]
    %v428 = vld [vmem:[%s3 + $0xa4] sm:$0xf]
    %v429 = vld [vmem:[%s3 + $0xa8] sm:$0xff]
    %v430 = vld [vmem:[%s3 + $0xb0] sm:$0xf]
    %v431 = vld [vmem:[%s3 + $0xb4] sm:$0xff]
    %v432 = vld [vmem:[%s3 + $0xbc] sm:$0xf]
    %v433 = vld [vmem:[%s4] sm:$0x7]
    %v435 = vlaneseq
    %v436 = vshrl.u32 %v435, 7
    %v437 = vsub.s32 0, %v436
    %v438 = vrot.slane %v433, %v437
    %v439 = vlaneseq
    %v440 = vshrl.u32 %v439, 7
    %v441 = vsub.s32 1, %v440
    %v442 = vrot.slane %v433, %v441
    %v443 = vlaneseq
    %v444 = vshrl.u32 %v443, 7
    %v445 = vsub.s32 2, %v444
    %v446 = vrot.slane %v433, %v445
    %v482 = vunpack.c.l.b16 %v401
    %v483 = vunpack.c.h.b16 %v401
    %v484 = vunpack.c.l.b16 %v402
    %v485 = vunpack.c.l.b16 %v403
    %v486 = vunpack.c.h.b16 %v403
    %v487 = vunpack.c.l.b16 %v404
    %v488 = vunpack.c.l.b16 %v405
    %v489 = vunpack.c.h.b16 %v405
    %v490 = vunpack.c.l.b16 %v406
    %v491 = vunpack.c.l.b16 %v407
    %v492 = vunpack.c.h.b16 %v407
    %v493 = vunpack.c.l.b16 %v408
    %v494 = vunpack.c.l.b16 %v409
    %v495 = vunpack.c.h.b16 %v409
    %v496 = vunpack.c.l.b16 %v410
    %v497 = vunpack.c.l.b16 %v411
    %v498 = vunpack.c.h.b16 %v411
    %v499 = vunpack.c.l.b16 %v412
    %v500 = vunpack.c.l.b16 %v413
    %v501 = vunpack.c.h.b16 %v413
    %v502 = vunpack.c.l.b16 %v414
    %v503 = vunpack.c.l.b16 %v415
    %v504 = vunpack.c.h.b16 %v415
    %v505 = vunpack.c.l.b16 %v416
    %v506 = vunpack.c.l.b16 %v417
    %v507 = vunpack.c.h.b16 %v417
    %v508 = vunpack.c.l.b16 %v418
    %v509 = vunpack.c.l.b16 %v419
    %v510 = vunpack.c.h.b16 %v419
    %v511 = vunpack.c.l.b16 %v420
    %v512 = vunpack.c.l.b16 %v421
    %v513 = vunpack.c.h.b16 %v421
    %v514 = vunpack.c.l.b16 %v422
    %v515 = vunpack.c.l.b16 %v423
    %v516 = vunpack.c.h.b16 %v423
    %v517 = vunpack.c.l.b16 %v424
    %v518 = vunpack.c.l.b16 %v425
    %v519 = vunpack.c.h.b16 %v425
    %v520 = vunpack.c.l.b16 %v426
    %v521 = vunpack.c.l.b16 %v427
    %v522 = vunpack.c.h.b16 %v427
    %v523 = vunpack.c.l.b16 %v428
    %v524 = vunpack.c.l.b16 %v429
    %v525 = vunpack.c.h.b16 %v429
    %v526 = vunpack.c.l.b16 %v430
    %v527 = vunpack.c.l.b16 %v431
    %v528 = vunpack.c.h.b16 %v431
    %v529 = vunpack.c.l.b16 %v432
    %v530 = vpack.c.b16 %v485, %v482
    %v531 = vpack.c.b16 %v486, %v483
    %v532 = vpack.c.b16 %v487, %v484
    %v533 = vpack.c.b16 %v491, %v488
    %v534 = vpack.c.b16 %v492, %v489
    %v535 = vpack.c.b16 %v493, %v490
    %v536 = vpack.c.b16 %v497, %v494
    %v537 = vpack.c.b16 %v498, %v495
    %v538 = vpack.c.b16 %v499, %v496
    %v539 = vpack.c.b16 %v503, %v500
    %v540 = vpack.c.b16 %v504, %v501
    %v541 = vpack.c.b16 %v505, %v502
    %v542 = vpack.c.b16 %v509, %v506
    %v543 = vpack.c.b16 %v510, %v507
    %v544 = vpack.c.b16 %v511, %v508
    %v545 = vpack.c.b16 %v515, %v512
    %v546 = vpack.c.b16 %v516, %v513
    %v547 = vpack.c.b16 %v517, %v514
    %v548 = vpack.c.b16 %v521, %v518
    %v549 = vpack.c.b16 %v522, %v519
    %v550 = vpack.c.b16 %v523, %v520
    %v551 = vpack.c.b16 %v527, %v524
    %v552 = vpack.c.b16 %v528, %v525
    %v553 = vpack.c.b16 %v529, %v526
    %578 = vmatprep.subr.bf16.mxu0 %v552
    %579 = vmatpush1.bf16.msra.mxu0 %v551
    %580 = vmatprep.subr.bf16.mxu0 %v549
    %581 = vmatpush1.bf16.msra.mxu0 %v548
    %582 = vmatprep.subr.bf16.mxu0 %v546
    %583 = vmatpush1.bf16.msra.mxu0 %v545
    %584 = vmatprep.subr.bf16.mxu0 %v543
    %585 = vmatpush1.bf16.msra.mxu0 %v542
    %586 = vmatprep.subr.bf16.mxu0 %v540
    %587 = vmatpush1.bf16.msra.mxu0 %v539
    %588 = vmatprep.subr.bf16.mxu0 %v537
    %589 = vmatpush1.bf16.msra.mxu0 %v536
    %590 = vmatprep.subr.bf16.mxu0 %v534
    %591 = vmatpush1.bf16.msra.mxu0 %v533
    %592 = vmatprep.subr.bf16.mxu0 %v531
    %593 = vmatpush1.bf16.msra.mxu0 %v530
    %594 = vmatprep.subr.bf16.mxu0 0
    %595 = vmatpush2.bf16.msra.mxu0 0
    %596 = vmatprep.subr.bf16.mxu0 0
    %597 = vmatpush2.bf16.msra.mxu0 0
    %598 = vmatprep.subr.bf16.mxu0 0
    %599 = vmatpush2.bf16.msra.mxu0 0
    %600 = vmatprep.subr.bf16.mxu0 0
    %601 = vmatpush2.bf16.msra.mxu0 0
    %602 = vmatprep.subr.bf16.mxu0 0
    %603 = vmatpush2.bf16.msra.mxu0 0
    %604 = vmatprep.subr.bf16.mxu0 0
    %605 = vmatpush2.bf16.msra.mxu0 0
    %606 = vmatprep.subr.bf16.mxu0 0
    %607 = vmatpush2.bf16.msra.mxu0 0
    %608 = vmatprep.subr.bf16.mxu0 0
    %609 = vmatpush2.bf16.msra.mxu0 0
    %610 = vmatprep.mubr.bf16.mxu0 0
    %611 = vmatmul.mubr.bf16.gmra.mxu0 0
    %v612 = vpop.f32.mrf.mxu0
    %v613 = vadd.f32 %v438, %v612
    %v614 = vpop.f32.mrf.mxu0
    %v615 = vadd.f32 %v442, %v614
    %v616 = vpop.f32.mrf.mxu0
    %v617 = vpop.f32.mrf.mxu0
    %618 = vdwg.mxu0
    %619 = vmatprep.subr.bf16.mxu0 0
    %620 = vmatpush1.bf16.msra.mxu0 %v553
    %621 = vmatprep.subr.bf16.mxu0 0
    %622 = vmatpush1.bf16.msra.mxu0 %v550
    %623 = vmatprep.subr.bf16.mxu0 0
    %624 = vmatpush1.bf16.msra.mxu0 %v547
    %625 = vmatprep.subr.bf16.mxu0 0
    %626 = vmatpush1.bf16.msra.mxu0 %v544
    %627 = vmatprep.subr.bf16.mxu0 0
    %628 = vmatpush1.bf16.msra.mxu0 %v541
    %629 = vmatprep.subr.bf16.mxu0 0
    %630 = vmatpush1.bf16.msra.mxu0 %v538
    %631 = vmatprep.subr.bf16.mxu0 0
    %632 = vmatpush1.bf16.msra.mxu0 %v535
    %633 = vmatprep.subr.bf16.mxu0 0
    %634 = vmatpush1.bf16.msra.mxu0 %v532
    %635 = vmatprep.subr.bf16.mxu0 0
    %636 = vmatpush2.bf16.msra.mxu0 0
    %637 = vmatprep.subr.bf16.mxu0 0
    %638 = vmatpush2.bf16.msra.mxu0 0
    %639 = vmatprep.subr.bf16.mxu0 0
    %640 = vmatpush2.bf16.msra.mxu0 0
    %641 = vmatprep.subr.bf16.mxu0 0
    %642 = vmatpush2.bf16.msra.mxu0 0
    %643 = vmatprep.subr.bf16.mxu0 0
    %644 = vmatpush2.bf16.msra.mxu0 0
    %645 = vmatprep.subr.bf16.mxu0 0
    %646 = vmatpush2.bf16.msra.mxu0 0
    %647 = vmatprep.subr.bf16.mxu0 0
    %648 = vmatpush2.bf16.msra.mxu0 0
    %649 = vmatprep.subr.bf16.mxu0 0
    %650 = vmatpush2.bf16.msra.mxu0 0
    %651 = vmatprep.mubr.bf16.mxu0 0
    %652 = vmatmul.mubr.bf16.gmra.mxu0 0
    %v653 = vpop.f32.mrf.mxu0
    %v654 = vadd.f32 %v446, %v653
    %v655 = vpop.f32.mrf.mxu0
    %v656 = vpop.f32.mrf.mxu0
    %v657 = vpop.f32.mrf.mxu0
    %658 = vdwg.mxu0
    %v659 = vadd.f32 %v296, %v613
    %v660 = vxor.u32 %v659, 2147483648
    %v661 = vmul.f32 %v660, 1.442695
    %v662 = vpow.pop %v661
    %v663 = vadd.f32 %v662, 1.0
    %v664 = vrcp.pop %v663
    %v665 = vmul.f32 1.0, %v664
    %v666 = vadd.f32 %v297, %v615
    %v667 = vxor.u32 %v666, 2147483648
    %v668 = vmul.f32 %v667, 1.442695
    %v669 = vpow.pop %v668
    %v670 = vadd.f32 %v669, 1.0
    %v671 = vrcp.pop %v670
    %v672 = vmul.f32 1.0, %v671
    %v673 = vmul.f32 %v665, %v654
    %v674 = vadd.f32 %v298, %v673
    %v675 = vtanh.pop %v674
    %v676 = vsub.f32 1.0, %v672
    %v677 = vmul.f32 %v676, %v675
    %v678 = vmul.f32 %v672, 0.0
    %v679 = vadd.f32 %v677, %v678
    %680 = vst [vmem:[#allocation3] sm:$0x3] %v679
    %v681 = vpack.c.bf16 %v679, %v679
    %682 = vmatprep.subr.bf16.mxu0 %v552
    %683 = vmatpush1.bf16.msra.mxu0 %v551
    %684 = vmatprep.subr.bf16.mxu0 %v549
    %685 = vmatpush1.bf16.msra.mxu0 %v548
    %686 = vmatprep.subr.bf16.mxu0 %v546
    %687 = vmatpush1.bf16.msra.mxu0 %v545
    %688 = vmatprep.subr.bf16.mxu0 %v543
    %689 = vmatpush1.bf16.msra.mxu0 %v542
    %690 = vmatprep.subr.bf16.mxu0 %v540
    %691 = vmatpush1.bf16.msra.mxu0 %v539
    %692 = vmatprep.subr.bf16.mxu0 %v537
    %693 = vmatpush1.bf16.msra.mxu0 %v536
    %694 = vmatprep.subr.bf16.mxu0 %v534
    %695 = vmatpush1.bf16.msra.mxu0 %v533
    %696 = vmatprep.subr.bf16.mxu0 %v531
    %697 = vmatpush1.bf16.msra.mxu0 %v530
    %698 = vmatprep.subr.bf16.mxu0 0
    %699 = vmatpush2.bf16.msra.mxu0 0
    %700 = vmatprep.subr.bf16.mxu0 0
    %701 = vmatpush2.bf16.msra.mxu0 0
    %702 = vmatprep.subr.bf16.mxu0 0
    %703 = vmatpush2.bf16.msra.mxu0 0
    %704 = vmatprep.subr.bf16.mxu0 0
    %705 = vmatpush2.bf16.msra.mxu0 0
    %706 = vmatprep.subr.bf16.mxu0 0
    %707 = vmatpush2.bf16.msra.mxu0 0
    %708 = vmatprep.subr.bf16.mxu0 0
    %709 = vmatpush2.bf16.msra.mxu0 0
    %710 = vmatprep.subr.bf16.mxu0 0
    %711 = vmatpush2.bf16.msra.mxu0 0
    %712 = vmatprep.subr.bf16.mxu0 0
    %713 = vmatpush2.bf16.msra.mxu0 0
    %714 = vmatprep.mubr.bf16.mxu0 0
    %715 = vmatmul.mubr.bf16.gmra.mxu0 %v681
    %v716 = vpop.f32.mrf.mxu0
    %v717 = vadd.f32 %v438, %v716
    %v718 = vpop.f32.mrf.mxu0
    %v719 = vadd.f32 %v442, %v718
    %v720 = vpop.f32.mrf.mxu0
    %v721 = vpop.f32.mrf.mxu0
    %722 = vdwg.mxu0
    %723 = vmatprep.subr.bf16.mxu0 0
    %724 = vmatpush1.bf16.msra.mxu0 %v553
    %725 = vmatprep.subr.bf16.mxu0 0
    %726 = vmatpush1.bf16.msra.mxu0 %v550
    %727 = vmatprep.subr.bf16.mxu0 0
    %728 = vmatpush1.bf16.msra.mxu0 %v547
    %729 = vmatprep.subr.bf16.mxu0 0
    %730 = vmatpush1.bf16.msra.mxu0 %v544
    %731 = vmatprep.subr.bf16.mxu0 0
    %732 = vmatpush1.bf16.msra.mxu0 %v541
    %733 = vmatprep.subr.bf16.mxu0 0
    %734 = vmatpush1.bf16.msra.mxu0 %v538
    %735 = vmatprep.subr.bf16.mxu0 0
    %736 = vmatpush1.bf16.msra.mxu0 %v535
    %737 = vmatprep.subr.bf16.mxu0 0
    %738 = vmatpush1.bf16.msra.mxu0 %v532
    %739 = vmatprep.subr.bf16.mxu0 0
    %740 = vmatpush2.bf16.msra.mxu0 0
    %741 = vmatprep.subr.bf16.mxu0 0
    %742 = vmatpush2.bf16.msra.mxu0 0
    %743 = vmatprep.subr.bf16.mxu0 0
    %744 = vmatpush2.bf16.msra.mxu0 0
    %745 = vmatprep.subr.bf16.mxu0 0
    %746 = vmatpush2.bf16.msra.mxu0 0
    %747 = vmatprep.subr.bf16.mxu0 0
    %748 = vmatpush2.bf16.msra.mxu0 0
    %749 = vmatprep.subr.bf16.mxu0 0
    %750 = vmatpush2.bf16.msra.mxu0 0
    %751 = vmatprep.subr.bf16.mxu0 0
    %752 = vmatpush2.bf16.msra.mxu0 0
    %753 = vmatprep.subr.bf16.mxu0 0
    %754 = vmatpush2.bf16.msra.mxu0 0
    %755 = vmatprep.mubr.bf16.mxu0 0
    %756 = vmatmul.mubr.bf16.gmra.mxu0 %v681
    %v757 = vpop.f32.mrf.mxu0
    %v758 = vadd.f32 %v446, %v757
    %v759 = vpop.f32.mrf.mxu0
    %v760 = vpop.f32.mrf.mxu0
    %v761 = vpop.f32.mrf.mxu0
    %762 = vdwg.mxu0
    %v764 = vrot.slane %v717, 6
    %v766 = vadd.f32 %v314, %v764
    %v767 = vxor.u32 %v766, 2147483648
    %v768 = vmul.f32 %v767, 1.442695
    %v769 = vpow.pop %v768
    %v770 = vadd.f32 %v769, 1.0
    %v771 = vrcp.pop %v770
    %v772 = vmul.f32 1.0, %v771
    %v774 = vrot.slane %v719, 6
    %v776 = vadd.f32 %v315, %v774
    %v777 = vxor.u32 %v776, 2147483648
    %v778 = vmul.f32 %v777, 1.442695
    %v779 = vpow.pop %v778
    %v780 = vadd.f32 %v779, 1.0
    %v781 = vrcp.pop %v780
    %v782 = vmul.f32 1.0, %v781
    %v784 = vrot.slane %v758, 6
    %v786 = vmul.f32 %v772, %v784
    %v787 = vadd.f32 %v316, %v786
    %v788 = vtanh.pop %v787
    %v789 = vsub.f32 1.0, %v782
    %v790 = vmul.f32 %v789, %v788
    %v792 = vrot.slane %v679, 6
    %v794 = vmul.f32 %v782, %v792
    %v795 = vadd.f32 %v790, %v794
    %796 = vst [vmem:[#allocation3] sm:$0xc] %v795
    %v797 = vpack.c.bf16 %v795, %v795
    %v799 = vrot.slane %v797, 1
    %801 = vmatprep.subr.bf16.mxu0 %v552
    %802 = vmatpush1.bf16.msra.mxu0 %v551
    %803 = vmatprep.subr.bf16.mxu0 %v549
    %804 = vmatpush1.bf16.msra.mxu0 %v548
    %805 = vmatprep.subr.bf16.mxu0 %v546
    %806 = vmatpush1.bf16.msra.mxu0 %v545
    %807 = vmatprep.subr.bf16.mxu0 %v543
    %808 = vmatpush1.bf16.msra.mxu0 %v542
    %809 = vmatprep.subr.bf16.mxu0 %v540
    %810 = vmatpush1.bf16.msra.mxu0 %v539
    %811 = vmatprep.subr.bf16.mxu0 %v537
    %812 = vmatpush1.bf16.msra.mxu0 %v536
    %813 = vmatprep.subr.bf16.mxu0 %v534
    %814 = vmatpush1.bf16.msra.mxu0 %v533
    %815 = vmatprep.subr.bf16.mxu0 %v531
    %816 = vmatpush1.bf16.msra.mxu0 %v530
    %817 = vmatprep.subr.bf16.mxu0 0
    %818 = vmatpush2.bf16.msra.mxu0 0
    %819 = vmatprep.subr.bf16.mxu0 0
    %820 = vmatpush2.bf16.msra.mxu0 0
    %821 = vmatprep.subr.bf16.mxu0 0
    %822 = vmatpush2.bf16.msra.mxu0 0
    %823 = vmatprep.subr.bf16.mxu0 0
    %824 = vmatpush2.bf16.msra.mxu0 0
    %825 = vmatprep.subr.bf16.mxu0 0
    %826 = vmatpush2.bf16.msra.mxu0 0
    %827 = vmatprep.subr.bf16.mxu0 0
    %828 = vmatpush2.bf16.msra.mxu0 0
    %829 = vmatprep.subr.bf16.mxu0 0
    %830 = vmatpush2.bf16.msra.mxu0 0
    %831 = vmatprep.subr.bf16.mxu0 0
    %832 = vmatpush2.bf16.msra.mxu0 0
    %833 = vmatprep.mubr.bf16.mxu0 0
    %834 = vmatmul.mubr.bf16.gmra.mxu0 %v799
    %v835 = vpop.f32.mrf.mxu0
    %v836 = vadd.f32 %v438, %v835
    %v837 = vpop.f32.mrf.mxu0
    %v838 = vadd.f32 %v442, %v837
    %v839 = vpop.f32.mrf.mxu0
    %v840 = vpop.f32.mrf.mxu0
    %841 = vdwg.mxu0
    %842 = vmatprep.subr.bf16.mxu0 0
    %843 = vmatpush1.bf16.msra.mxu0 %v553
    %844 = vmatprep.subr.bf16.mxu0 0
    %845 = vmatpush1.bf16.msra.mxu0 %v550
    %846 = vmatprep.subr.bf16.mxu0 0
    %847 = vmatpush1.bf16.msra.mxu0 %v547
    %848 = vmatprep.subr.bf16.mxu0 0
    %849 = vmatpush1.bf16.msra.mxu0 %v544
    %850 = vmatprep.subr.bf16.mxu0 0
    %851 = vmatpush1.bf16.msra.mxu0 %v541
    %852 = vmatprep.subr.bf16.mxu0 0
    %853 = vmatpush1.bf16.msra.mxu0 %v538
    %854 = vmatprep.subr.bf16.mxu0 0
    %855 = vmatpush1.bf16.msra.mxu0 %v535
    %856 = vmatprep.subr.bf16.mxu0 0
    %857 = vmatpush1.bf16.msra.mxu0 %v532
    %858 = vmatprep.subr.bf16.mxu0 0
    %859 = vmatpush2.bf16.msra.mxu0 0
    %860 = vmatprep.subr.bf16.mxu0 0
    %861 = vmatpush2.bf16.msra.mxu0 0
    %862 = vmatprep.subr.bf16.mxu0 0
    %863 = vmatpush2.bf16.msra.mxu0 0
    %864 = vmatprep.subr.bf16.mxu0 0
    %865 = vmatpush2.bf16.msra.mxu0 0
    %866 = vmatprep.subr.bf16.mxu0 0
    %867 = vmatpush2.bf16.msra.mxu0 0
    %868 = vmatprep.subr.bf16.mxu0 0
    %869 = vmatpush2.bf16.msra.mxu0 0
    %870 = vmatprep.subr.bf16.mxu0 0
    %871 = vmatpush2.bf16.msra.mxu0 0
    %872 = vmatprep.subr.bf16.mxu0 0
    %873 = vmatpush2.bf16.msra.mxu0 0
    %874 = vmatprep.mubr.bf16.mxu0 0
    %875 = vmatmul.mubr.bf16.gmra.mxu0 %v799
    %v876 = vpop.f32.mrf.mxu0
    %v877 = vadd.f32 %v446, %v876
    %v878 = vpop.f32.mrf.mxu0
    %v879 = vpop.f32.mrf.mxu0
    %v880 = vpop.f32.mrf.mxu0
    %881 = vdwg.mxu0
    %v883 = vrot.slane %v836, 4
    %v885 = vadd.f32 %v332, %v883
    %v886 = vxor.u32 %v885, 2147483648
    %v887 = vmul.f32 %v886, 1.442695
    %v888 = vpow.pop %v887
    %v889 = vadd.f32 %v888, 1.0
    %v890 = vrcp.pop %v889
    %v891 = vmul.f32 1.0, %v890
    %v893 = vrot.slane %v838, 4
    %v895 = vadd.f32 %v333, %v893
    %v896 = vxor.u32 %v895, 2147483648
    %v897 = vmul.f32 %v896, 1.442695
    %v898 = vpow.pop %v897
    %v899 = vadd.f32 %v898, 1.0
    %v900 = vrcp.pop %v899
    %v901 = vmul.f32 1.0, %v900
    %v903 = vrot.slane %v877, 4
    %v905 = vmul.f32 %v891, %v903
    %v906 = vadd.f32 %v334, %v905
    %v907 = vtanh.pop %v906
    %v908 = vsub.f32 1.0, %v901
    %v909 = vmul.f32 %v908, %v907
    %v911 = vrot.slane %v795, 6
    %v913 = vmul.f32 %v901, %v911
    %v914 = vadd.f32 %v909, %v913
    %915 = vst [vmem:[#allocation3] sm:$0x30] %v914
    %v916 = vpack.c.bf16 %v914, %v914
    %v918 = vrot.slane %v916, 2
    %920 = vmatprep.subr.bf16.mxu0 %v552
    %921 = vmatpush1.bf16.msra.mxu0 %v551
    %922 = vmatprep.subr.bf16.mxu0 %v549
    %923 = vmatpush1.bf16.msra.mxu0 %v548
    %924 = vmatprep.subr.bf16.mxu0 %v546
    %925 = vmatpush1.bf16.msra.mxu0 %v545
    %926 = vmatprep.subr.bf16.mxu0 %v543
    %927 = vmatpush1.bf16.msra.mxu0 %v542
    %928 = vmatprep.subr.bf16.mxu0 %v540
    %929 = vmatpush1.bf16.msra.mxu0 %v539
    %930 = vmatprep.subr.bf16.mxu0 %v537
    %931 = vmatpush1.bf16.msra.mxu0 %v536
    %932 = vmatprep.subr.bf16.mxu0 %v534
    %933 = vmatpush1.bf16.msra.mxu0 %v533
    %934 = vmatprep.subr.bf16.mxu0 %v531
    %935 = vmatpush1.bf16.msra.mxu0 %v530
    %936 = vmatprep.subr.bf16.mxu0 0
    %937 = vmatpush2.bf16.msra.mxu0 0
    %938 = vmatprep.subr.bf16.mxu0 0
    %939 = vmatpush2.bf16.msra.mxu0 0
    %940 = vmatprep.subr.bf16.mxu0 0
    %941 = vmatpush2.bf16.msra.mxu0 0
    %942 = vmatprep.subr.bf16.mxu0 0
    %943 = vmatpush2.bf16.msra.mxu0 0
    %944 = vmatprep.subr.bf16.mxu0 0
    %945 = vmatpush2.bf16.msra.mxu0 0
    %946 = vmatprep.subr.bf16.mxu0 0
    %947 = vmatpush2.bf16.msra.mxu0 0
    %948 = vmatprep.subr.bf16.mxu0 0
    %949 = vmatpush2.bf16.msra.mxu0 0
    %950 = vmatprep.subr.bf16.mxu0 0
    %951 = vmatpush2.bf16.msra.mxu0 0
    %952 = vmatprep.mubr.bf16.mxu0 0
    %953 = vmatmul.mubr.bf16.gmra.mxu0 %v918
    %v954 = vpop.f32.mrf.mxu0
    %v955 = vadd.f32 %v438, %v954
    %v956 = vpop.f32.mrf.mxu0
    %v957 = vadd.f32 %v442, %v956
    %v958 = vpop.f32.mrf.mxu0
    %v959 = vpop.f32.mrf.mxu0
    %960 = vdwg.mxu0
    %961 = vmatprep.subr.bf16.mxu0 0
    %962 = vmatpush1.bf16.msra.mxu0 %v553
    %963 = vmatprep.subr.bf16.mxu0 0
    %964 = vmatpush1.bf16.msra.mxu0 %v550
    %965 = vmatprep.subr.bf16.mxu0 0
    %966 = vmatpush1.bf16.msra.mxu0 %v547
    %967 = vmatprep.subr.bf16.mxu0 0
    %968 = vmatpush1.bf16.msra.mxu0 %v544
    %969 = vmatprep.subr.bf16.mxu0 0
    %970 = vmatpush1.bf16.msra.mxu0 %v541
    %971 = vmatprep.subr.bf16.mxu0 0
    %972 = vmatpush1.bf16.msra.mxu0 %v538
    %973 = vmatprep.subr.bf16.mxu0 0
    %974 = vmatpush1.bf16.msra.mxu0 %v535
    %975 = vmatprep.subr.bf16.mxu0 0
    %976 = vmatpush1.bf16.msra.mxu0 %v532
    %977 = vmatprep.subr.bf16.mxu0 0
    %978 = vmatpush2.bf16.msra.mxu0 0
    %979 = vmatprep.subr.bf16.mxu0 0
    %980 = vmatpush2.bf16.msra.mxu0 0
    %981 = vmatprep.subr.bf16.mxu0 0
    %982 = vmatpush2.bf16.msra.mxu0 0
    %983 = vmatprep.subr.bf16.mxu0 0
    %984 = vmatpush2.bf16.msra.mxu0 0
    %985 = vmatprep.subr.bf16.mxu0 0
    %986 = vmatpush2.bf16.msra.mxu0 0
    %987 = vmatprep.subr.bf16.mxu0 0
    %988 = vmatpush2.bf16.msra.mxu0 0
    %989 = vmatprep.subr.bf16.mxu0 0
    %990 = vmatpush2.bf16.msra.mxu0 0
    %991 = vmatprep.subr.bf16.mxu0 0
    %992 = vmatpush2.bf16.msra.mxu0 0
    %993 = vmatprep.mubr.bf16.mxu0 0
    %994 = vmatmul.mubr.bf16.gmra.mxu0 %v918
    %v995 = vpop.f32.mrf.mxu0
    %v996 = vadd.f32 %v446, %v995
    %v997 = vpop.f32.mrf.mxu0
    %v998 = vpop.f32.mrf.mxu0
    %v999 = vpop.f32.mrf.mxu0
    %1000 = vdwg.mxu0
    %v1002 = vrot.slane %v955, 2
    %v1004 = vadd.f32 %v350, %v1002
    %v1005 = vxor.u32 %v1004, 2147483648
    %v1006 = vmul.f32 %v1005, 1.442695
    %v1007 = vpow.pop %v1006
    %v1008 = vadd.f32 %v1007, 1.0
    %v1009 = vrcp.pop %v1008
    %v1010 = vmul.f32 1.0, %v1009
    %v1012 = vrot.slane %v957, 2
    %v1014 = vadd.f32 %v351, %v1012
    %v1015 = vxor.u32 %v1014, 2147483648
    %v1016 = vmul.f32 %v1015, 1.442695
    %v1017 = vpow.pop %v1016
    %v1018 = vadd.f32 %v1017, 1.0
    %v1019 = vrcp.pop %v1018
    %v1020 = vmul.f32 1.0, %v1019
    %v1022 = vrot.slane %v996, 2
    %v1024 = vmul.f32 %v1010, %v1022
    %v1025 = vadd.f32 %v352, %v1024
    %v1026 = vtanh.pop %v1025
    %v1027 = vsub.f32 1.0, %v1020
    %v1028 = vmul.f32 %v1027, %v1026
    %v1030 = vrot.slane %v914, 6
    %v1032 = vmul.f32 %v1020, %v1030
    %v1033 = vadd.f32 %v1028, %v1032
    %1034 = vst [vmem:[#allocation3] sm:$0xc0] %v1033
    %v1035 = vpack.c.bf16 %v1033, %v1033
    %v1037 = vrot.slane %v1035, 3
    %1039 = vmatprep.subr.bf16.mxu0 %v552
    %1040 = vmatpush1.bf16.msra.mxu0 %v551
    %1041 = vmatprep.subr.bf16.mxu0 %v549
    %1042 = vmatpush1.bf16.msra.mxu0 %v548
    %1043 = vmatprep.subr.bf16.mxu0 %v546
    %1044 = vmatpush1.bf16.msra.mxu0 %v545
    %1045 = vmatprep.subr.bf16.mxu0 %v543
    %1046 = vmatpush1.bf16.msra.mxu0 %v542
    %1047 = vmatprep.subr.bf16.mxu0 %v540
    %1048 = vmatpush1.bf16.msra.mxu0 %v539
    %1049 = vmatprep.subr.bf16.mxu0 %v537
    %1050 = vmatpush1.bf16.msra.mxu0 %v536
    %1051 = vmatprep.subr.bf16.mxu0 %v534
    %1052 = vmatpush1.bf16.msra.mxu0 %v533
    %1053 = vmatprep.subr.bf16.mxu0 %v531
    %1054 = vmatpush1.bf16.msra.mxu0 %v530
    %1055 = vmatprep.subr.bf16.mxu0 0
    %1056 = vmatpush2.bf16.msra.mxu0 0
    %1057 = vmatprep.subr.bf16.mxu0 0
    %1058 = vmatpush2.bf16.msra.mxu0 0
    %1059 = vmatprep.subr.bf16.mxu0 0
    %1060 = vmatpush2.bf16.msra.mxu0 0
    %1061 = vmatprep.subr.bf16.mxu0 0
    %1062 = vmatpush2.bf16.msra.mxu0 0
    %1063 = vmatprep.subr.bf16.mxu0 0
    %1064 = vmatpush2.bf16.msra.mxu0 0
    %1065 = vmatprep.subr.bf16.mxu0 0
    %1066 = vmatpush2.bf16.msra.mxu0 0
    %1067 = vmatprep.subr.bf16.mxu0 0
    %1068 = vmatpush2.bf16.msra.mxu0 0
    %1069 = vmatprep.subr.bf16.mxu0 0
    %1070 = vmatpush2.bf16.msra.mxu0 0
    %1071 = vmatprep.mubr.bf16.mxu0 0
    %1072 = vmatmul.mubr.bf16.gmra.mxu0 %v1037
    %v1073 = vpop.f32.mrf.mxu0
    %v1074 = vadd.f32 %v438, %v1073
    %v1075 = vpop.f32.mrf.mxu0
    %v1076 = vadd.f32 %v442, %v1075
    %v1077 = vpop.f32.mrf.mxu0
    %v1078 = vpop.f32.mrf.mxu0
    %1079 = vdwg.mxu0
    %1080 = vmatprep.subr.bf16.mxu0 0
    %1081 = vmatpush1.bf16.msra.mxu0 %v553
    %1082 = vmatprep.subr.bf16.mxu0 0
    %1083 = vmatpush1.bf16.msra.mxu0 %v550
    %1084 = vmatprep.subr.bf16.mxu0 0
    %1085 = vmatpush1.bf16.msra.mxu0 %v547
    %1086 = vmatprep.subr.bf16.mxu0 0
    %1087 = vmatpush1.bf16.msra.mxu0 %v544
    %1088 = vmatprep.subr.bf16.mxu0 0
    %1089 = vmatpush1.bf16.msra.mxu0 %v541
    %1090 = vmatprep.subr.bf16.mxu0 0
    %1091 = vmatpush1.bf16.msra.mxu0 %v538
    %1092 = vmatprep.subr.bf16.mxu0 0
    %1093 = vmatpush1.bf16.msra.mxu0 %v535
    %1094 = vmatprep.subr.bf16.mxu0 0
    %1095 = vmatpush1.bf16.msra.mxu0 %v532
    %1096 = vmatprep.subr.bf16.mxu0 0
    %1097 = vmatpush2.bf16.msra.mxu0 0
    %1098 = vmatprep.subr.bf16.mxu0 0
    %1099 = vmatpush2.bf16.msra.mxu0 0
    %1100 = vmatprep.subr.bf16.mxu0 0
    %1101 = vmatpush2.bf16.msra.mxu0 0
    %1102 = vmatprep.subr.bf16.mxu0 0
    %1103 = vmatpush2.bf16.msra.mxu0 0
    %1104 = vmatprep.subr.bf16.mxu0 0
    %1105 = vmatpush2.bf16.msra.mxu0 0
    %1106 = vmatprep.subr.bf16.mxu0 0
    %1107 = vmatpush2.bf16.msra.mxu0 0
    %1108 = vmatprep.subr.bf16.mxu0 0
    %1109 = vmatpush2.bf16.msra.mxu0 0
    %1110 = vmatprep.subr.bf16.mxu0 0
    %1111 = vmatpush2.bf16.msra.mxu0 0
    %1112 = vmatprep.mubr.bf16.mxu0 0
    %1113 = vmatmul.mubr.bf16.gmra.mxu0 %v1037
    %v1114 = vpop.f32.mrf.mxu0
    %v1115 = vadd.f32 %v446, %v1114
    %v1116 = vpop.f32.mrf.mxu0
    %v1117 = vpop.f32.mrf.mxu0
    %v1118 = vpop.f32.mrf.mxu0
    %1119 = vdwg.mxu0
    %v1120 = vadd.f32 %v362, %v1074
    %v1121 = vxor.u32 %v1120, 2147483648
    %v1122 = vmul.f32 %v1121, 1.442695
    %v1123 = vpow.pop %v1122
    %v1124 = vadd.f32 %v1123, 1.0
    %v1125 = vrcp.pop %v1124
    %v1126 = vmul.f32 1.0, %v1125
    %v1127 = vadd.f32 %v363, %v1076
    %v1128 = vxor.u32 %v1127, 2147483648
    %v1129 = vmul.f32 %v1128, 1.442695
    %v1130 = vpow.pop %v1129
    %v1131 = vadd.f32 %v1130, 1.0
    %v1132 = vrcp.pop %v1131
    %v1133 = vmul.f32 1.0, %v1132
    %v1134 = vmul.f32 %v1126, %v1115
    %v1135 = vadd.f32 %v364, %v1134
    %v1136 = vtanh.pop %v1135
    %v1137 = vsub.f32 1.0, %v1133
    %v1138 = vmul.f32 %v1137, %v1136
    %v1140 = vrot.slane %v1033, 6
    %v1142 = vmul.f32 %v1133, %v1140
    %v1143 = vadd.f32 %v1138, %v1142
    %1144 = vst [vmem:[#allocation3 + $0x8] sm:$0x3] %v1143
    %v1145 = vpack.c.bf16 %v1143, %v1143
    %1146 = vmatprep.subr.bf16.mxu0 %v552
    %1147 = vmatpush1.bf16.msra.mxu0 %v551
    %1148 = vmatprep.subr.bf16.mxu0 %v549
    %1149 = vmatpush1.bf16.msra.mxu0 %v548
    %1150 = vmatprep.subr.bf16.mxu0 %v546
    %1151 = vmatpush1.bf16.msra.mxu0 %v545
    %1152 = vmatprep.subr.bf16.mxu0 %v543
    %1153 = vmatpush1.bf16.msra.mxu0 %v542
    %1154 = vmatprep.subr.bf16.mxu0 %v540
    %1155 = vmatpush1.bf16.msra.mxu0 %v539
    %1156 = vmatprep.subr.bf16.mxu0 %v537
    %1157 = vmatpush1.bf16.msra.mxu0 %v536
    %1158 = vmatprep.subr.bf16.mxu0 %v534
    %1159 = vmatpush1.bf16.msra.mxu0 %v533
    %1160 = vmatprep.subr.bf16.mxu0 %v531
    %1161 = vmatpush1.bf16.msra.mxu0 %v530
    %1162 = vmatprep.subr.bf16.mxu0 0
    %1163 = vmatpush2.bf16.msra.mxu0 0
    %1164 = vmatprep.subr.bf16.mxu0 0
    %1165 = vmatpush2.bf16.msra.mxu0 0
    %1166 = vmatprep.subr.bf16.mxu0 0
    %1167 = vmatpush2.bf16.msra.mxu0 0
    %1168 = vmatprep.subr.bf16.mxu0 0
    %1169 = vmatpush2.bf16.msra.mxu0 0
    %1170 = vmatprep.subr.bf16.mxu0 0
    %1171 = vmatpush2.bf16.msra.mxu0 0
    %1172 = vmatprep.subr.bf16.mxu0 0
    %1173 = vmatpush2.bf16.msra.mxu0 0
    %1174 = vmatprep.subr.bf16.mxu0 0
    %1175 = vmatpush2.bf16.msra.mxu0 0
    %1176 = vmatprep.subr.bf16.mxu0 0
    %1177 = vmatpush2.bf16.msra.mxu0 0
    %1178 = vmatprep.mubr.bf16.mxu0 0
    %1179 = vmatmul.mubr.bf16.gmra.mxu0 %v1145
    %v1180 = vpop.f32.mrf.mxu0
    %v1181 = vadd.f32 %v438, %v1180
    %v1182 = vpop.f32.mrf.mxu0
    %v1183 = vadd.f32 %v442, %v1182
    %v1184 = vpop.f32.mrf.mxu0
    %v1185 = vpop.f32.mrf.mxu0
    %1186 = vdwg.mxu0
    %1187 = vmatprep.subr.bf16.mxu0 0
    %1188 = vmatpush1.bf16.msra.mxu0 %v553
    %1189 = vmatprep.subr.bf16.mxu0 0
    %1190 = vmatpush1.bf16.msra.mxu0 %v550
    %1191 = vmatprep.subr.bf16.mxu0 0
    %1192 = vmatpush1.bf16.msra.mxu0 %v547
    %1193 = vmatprep.subr.bf16.mxu0 0
    %1194 = vmatpush1.bf16.msra.mxu0 %v544
    %1195 = vmatprep.subr.bf16.mxu0 0
    %1196 = vmatpush1.bf16.msra.mxu0 %v541
    %1197 = vmatprep.subr.bf16.mxu0 0
    %1198 = vmatpush1.bf16.msra.mxu0 %v538
    %1199 = vmatprep.subr.bf16.mxu0 0
    %1200 = vmatpush1.bf16.msra.mxu0 %v535
    %1201 = vmatprep.subr.bf16.mxu0 0
    %1202 = vmatpush1.bf16.msra.mxu0 %v532
    %1203 = vmatprep.subr.bf16.mxu0 0
    %1204 = vmatpush2.bf16.msra.mxu0 0
    %1205 = vmatprep.subr.bf16.mxu0 0
    %1206 = vmatpush2.bf16.msra.mxu0 0
    %1207 = vmatprep.subr.bf16.mxu0 0
    %1208 = vmatpush2.bf16.msra.mxu0 0
    %1209 = vmatprep.subr.bf16.mxu0 0
    %1210 = vmatpush2.bf16.msra.mxu0 0
    %1211 = vmatprep.subr.bf16.mxu0 0
    %1212 = vmatpush2.bf16.msra.mxu0 0
    %1213 = vmatprep.subr.bf16.mxu0 0
    %1214 = vmatpush2.bf16.msra.mxu0 0
    %1215 = vmatprep.subr.bf16.mxu0 0
    %1216 = vmatpush2.bf16.msra.mxu0 0
    %1217 = vmatprep.subr.bf16.mxu0 0
    %1218 = vmatpush2.bf16.msra.mxu0 0
    %1219 = vmatprep.mubr.bf16.mxu0 0
    %1220 = vmatmul.mubr.bf16.gmra.mxu0 %v1145
    %v1221 = vpop.f32.mrf.mxu0
    %v1222 = vadd.f32 %v446, %v1221
    %v1223 = vpop.f32.mrf.mxu0
    %v1224 = vpop.f32.mrf.mxu0
    %v1225 = vpop.f32.mrf.mxu0
    %1226 = vdwg.mxu0
    %v1228 = vrot.slane %v1181, 6
    %v1230 = vadd.f32 %v374, %v1228
    %v1231 = vxor.u32 %v1230, 2147483648
    %v1232 = vmul.f32 %v1231, 1.442695
    %v1233 = vpow.pop %v1232
    %v1234 = vadd.f32 %v1233, 1.0
    %v1235 = vrcp.pop %v1234
    %v1236 = vmul.f32 1.0, %v1235
    %v1238 = vrot.slane %v1183, 6
    %v1240 = vadd.f32 %v375, %v1238
    %v1241 = vxor.u32 %v1240, 2147483648
    %v1242 = vmul.f32 %v1241, 1.442695
    %v1243 = vpow.pop %v1242
    %v1244 = vadd.f32 %v1243, 1.0
    %v1245 = vrcp.pop %v1244
    %v1246 = vmul.f32 1.0, %v1245
    %v1248 = vrot.slane %v1222, 6
    %v1250 = vmul.f32 %v1236, %v1248
    %v1251 = vadd.f32 %v376, %v1250
    %v1252 = vtanh.pop %v1251
    %v1253 = vsub.f32 1.0, %v1246
    %v1254 = vmul.f32 %v1253, %v1252
    %v1256 = vrot.slane %v1143, 6
    %v1258 = vmul.f32 %v1246, %v1256
    %v1259 = vadd.f32 %v1254, %v1258
    %1260 = vst [vmem:[#allocation3 + $0x8] sm:$0xc] %v1259
    %v1261 = vpack.c.bf16 %v1259, %v1259
    %v1263 = vrot.slane %v1261, 1
    %1265 = vmatprep.subr.bf16.mxu0 %v552
    %1266 = vmatpush1.bf16.msra.mxu0 %v551
    %1267 = vmatprep.subr.bf16.mxu0 %v549
    %1268 = vmatpush1.bf16.msra.mxu0 %v548
    %1269 = vmatprep.subr.bf16.mxu0 %v546
    %1270 = vmatpush1.bf16.msra.mxu0 %v545
    %1271 = vmatprep.subr.bf16.mxu0 %v543
    %1272 = vmatpush1.bf16.msra.mxu0 %v542
    %1273 = vmatprep.subr.bf16.mxu0 %v540
    %1274 = vmatpush1.bf16.msra.mxu0 %v539
    %1275 = vmatprep.subr.bf16.mxu0 %v537
    %1276 = vmatpush1.bf16.msra.mxu0 %v536
    %1277 = vmatprep.subr.bf16.mxu0 %v534
    %1278 = vmatpush1.bf16.msra.mxu0 %v533
    %1279 = vmatprep.subr.bf16.mxu0 %v531
    %1280 = vmatpush1.bf16.msra.mxu0 %v530
    %1281 = vmatprep.subr.bf16.mxu0 0
    %1282 = vmatpush2.bf16.msra.mxu0 0
    %1283 = vmatprep.subr.bf16.mxu0 0
    %1284 = vmatpush2.bf16.msra.mxu0 0
    %1285 = vmatprep.subr.bf16.mxu0 0
    %1286 = vmatpush2.bf16.msra.mxu0 0
    %1287 = vmatprep.subr.bf16.mxu0 0
    %1288 = vmatpush2.bf16.msra.mxu0 0
    %1289 = vmatprep.subr.bf16.mxu0 0
    %1290 = vmatpush2.bf16.msra.mxu0 0
    %1291 = vmatprep.subr.bf16.mxu0 0
    %1292 = vmatpush2.bf16.msra.mxu0 0
    %1293 = vmatprep.subr.bf16.mxu0 0
    %1294 = vmatpush2.bf16.msra.mxu0 0
    %1295 = vmatprep.subr.bf16.mxu0 0
    %1296 = vmatpush2.bf16.msra.mxu0 0
    %1297 = vmatprep.mubr.bf16.mxu0 0
    %1298 = vmatmul.mubr.bf16.gmra.mxu0 %v1263
    %v1299 = vpop.f32.mrf.mxu0
    %v1300 = vadd.f32 %v438, %v1299
    %v1301 = vpop.f32.mrf.mxu0
    %v1302 = vadd.f32 %v442, %v1301
    %v1303 = vpop.f32.mrf.mxu0
    %v1304 = vpop.f32.mrf.mxu0
    %1305 = vdwg.mxu0
    %1306 = vmatprep.subr.bf16.mxu0 0
    %1307 = vmatpush1.bf16.msra.mxu0 %v553
    %1308 = vmatprep.subr.bf16.mxu0 0
    %1309 = vmatpush1.bf16.msra.mxu0 %v550
    %1310 = vmatprep.subr.bf16.mxu0 0
    %1311 = vmatpush1.bf16.msra.mxu0 %v547
    %1312 = vmatprep.subr.bf16.mxu0 0
    %1313 = vmatpush1.bf16.msra.mxu0 %v544
    %1314 = vmatprep.subr.bf16.mxu0 0
    %1315 = vmatpush1.bf16.msra.mxu0 %v541
    %1316 = vmatprep.subr.bf16.mxu0 0
    %1317 = vmatpush1.bf16.msra.mxu0 %v538
    %1318 = vmatprep.subr.bf16.mxu0 0
    %1319 = vmatpush1.bf16.msra.mxu0 %v535
    %1320 = vmatprep.subr.bf16.mxu0 0
    %1321 = vmatpush1.bf16.msra.mxu0 %v532
    %1322 = vmatprep.subr.bf16.mxu0 0
    %1323 = vmatpush2.bf16.msra.mxu0 0
    %1324 = vmatprep.subr.bf16.mxu0 0
    %1325 = vmatpush2.bf16.msra.mxu0 0
    %1326 = vmatprep.subr.bf16.mxu0 0
    %1327 = vmatpush2.bf16.msra.mxu0 0
    %1328 = vmatprep.subr.bf16.mxu0 0
    %1329 = vmatpush2.bf16.msra.mxu0 0
    %1330 = vmatprep.subr.bf16.mxu0 0
    %1331 = vmatpush2.bf16.msra.mxu0 0
    %1332 = vmatprep.subr.bf16.mxu0 0
    %1333 = vmatpush2.bf16.msra.mxu0 0
    %1334 = vmatprep.subr.bf16.mxu0 0
    %1335 = vmatpush2.bf16.msra.mxu0 0
    %1336 = vmatprep.subr.bf16.mxu0 0
    %1337 = vmatpush2.bf16.msra.mxu0 0
    %1338 = vmatprep.mubr.bf16.mxu0 0
    %1339 = vmatmul.mubr.bf16.gmra.mxu0 %v1263
    %v1340 = vpop.f32.mrf.mxu0
    %v1341 = vadd.f32 %v446, %v1340
    %v1342 = vpop.f32.mrf.mxu0
    %v1343 = vpop.f32.mrf.mxu0
    %v1344 = vpop.f32.mrf.mxu0
    %1345 = vdwg.mxu0
    %v1347 = vrot.slane %v1300, 4
    %v1349 = vadd.f32 %v386, %v1347
    %v1350 = vxor.u32 %v1349, 2147483648
    %v1351 = vmul.f32 %v1350, 1.442695
    %v1352 = vpow.pop %v1351
    %v1353 = vadd.f32 %v1352, 1.0
    %v1354 = vrcp.pop %v1353
    %v1355 = vmul.f32 1.0, %v1354
    %v1357 = vrot.slane %v1302, 4
    %v1359 = vadd.f32 %v387, %v1357
    %v1360 = vxor.u32 %v1359, 2147483648
    %v1361 = vmul.f32 %v1360, 1.442695
    %v1362 = vpow.pop %v1361
    %v1363 = vadd.f32 %v1362, 1.0
    %v1364 = vrcp.pop %v1363
    %v1365 = vmul.f32 1.0, %v1364
    %v1367 = vrot.slane %v1341, 4
    %v1369 = vmul.f32 %v1355, %v1367
    %v1370 = vadd.f32 %v388, %v1369
    %v1371 = vtanh.pop %v1370
    %v1372 = vsub.f32 1.0, %v1365
    %v1373 = vmul.f32 %v1372, %v1371
    %v1375 = vrot.slane %v1259, 6
    %v1377 = vmul.f32 %v1365, %v1375
    %v1378 = vadd.f32 %v1373, %v1377
    %1379 = vst [vmem:[#allocation3 + $0x8] sm:$0x30] %v1378
    %v1380 = vpack.c.bf16 %v1378, %v1378
    %v1382 = vrot.slane %v1380, 2
    %1384 = vmatprep.subr.bf16.mxu0 %v552
    %1385 = vmatpush1.bf16.msra.mxu0 %v551
    %1386 = vmatprep.subr.bf16.mxu0 %v549
    %1387 = vmatpush1.bf16.msra.mxu0 %v548
    %1388 = vmatprep.subr.bf16.mxu0 %v546
    %1389 = vmatpush1.bf16.msra.mxu0 %v545
    %1390 = vmatprep.subr.bf16.mxu0 %v543
    %1391 = vmatpush1.bf16.msra.mxu0 %v542
    %1392 = vmatprep.subr.bf16.mxu0 %v540
    %1393 = vmatpush1.bf16.msra.mxu0 %v539
    %1394 = vmatprep.subr.bf16.mxu0 %v537
    %1395 = vmatpush1.bf16.msra.mxu0 %v536
    %1396 = vmatprep.subr.bf16.mxu0 %v534
    %1397 = vmatpush1.bf16.msra.mxu0 %v533
    %1398 = vmatprep.subr.bf16.mxu0 %v531
    %1399 = vmatpush1.bf16.msra.mxu0 %v530
    %1400 = vmatprep.subr.bf16.mxu0 0
    %1401 = vmatpush2.bf16.msra.mxu0 0
    %1402 = vmatprep.subr.bf16.mxu0 0
    %1403 = vmatpush2.bf16.msra.mxu0 0
    %1404 = vmatprep.subr.bf16.mxu0 0
    %1405 = vmatpush2.bf16.msra.mxu0 0
    %1406 = vmatprep.subr.bf16.mxu0 0
    %1407 = vmatpush2.bf16.msra.mxu0 0
    %1408 = vmatprep.subr.bf16.mxu0 0
    %1409 = vmatpush2.bf16.msra.mxu0 0
    %1410 = vmatprep.subr.bf16.mxu0 0
    %1411 = vmatpush2.bf16.msra.mxu0 0
    %1412 = vmatprep.subr.bf16.mxu0 0
    %1413 = vmatpush2.bf16.msra.mxu0 0
    %1414 = vmatprep.subr.bf16.mxu0 0
    %1415 = vmatpush2.bf16.msra.mxu0 0
    %1416 = vmatprep.mubr.bf16.mxu0 0
    %1417 = vmatmul.mubr.bf16.gmra.mxu0 %v1382
    %v1418 = vpop.f32.mrf.mxu0
    %v1419 = vadd.f32 %v438, %v1418
    %v1420 = vpop.f32.mrf.mxu0
    %v1421 = vadd.f32 %v442, %v1420
    %v1422 = vpop.f32.mrf.mxu0
    %v1423 = vpop.f32.mrf.mxu0
    %1424 = vdwg.mxu0
    %1425 = vmatprep.subr.bf16.mxu0 0
    %1426 = vmatpush1.bf16.msra.mxu0 %v553
    %1427 = vmatprep.subr.bf16.mxu0 0
    %1428 = vmatpush1.bf16.msra.mxu0 %v550
    %1429 = vmatprep.subr.bf16.mxu0 0
    %1430 = vmatpush1.bf16.msra.mxu0 %v547
    %1431 = vmatprep.subr.bf16.mxu0 0
    %1432 = vmatpush1.bf16.msra.mxu0 %v544
    %1433 = vmatprep.subr.bf16.mxu0 0
    %1434 = vmatpush1.bf16.msra.mxu0 %v541
    %1435 = vmatprep.subr.bf16.mxu0 0
    %1436 = vmatpush1.bf16.msra.mxu0 %v538
    %1437 = vmatprep.subr.bf16.mxu0 0
    %1438 = vmatpush1.bf16.msra.mxu0 %v535
    %1439 = vmatprep.subr.bf16.mxu0 0
    %1440 = vmatpush1.bf16.msra.mxu0 %v532
    %1441 = vmatprep.subr.bf16.mxu0 0
    %1442 = vmatpush2.bf16.msra.mxu0 0
    %1443 = vmatprep.subr.bf16.mxu0 0
    %1444 = vmatpush2.bf16.msra.mxu0 0
    %1445 = vmatprep.subr.bf16.mxu0 0
    %1446 = vmatpush2.bf16.msra.mxu0 0
    %1447 = vmatprep.subr.bf16.mxu0 0
    %1448 = vmatpush2.bf16.msra.mxu0 0
    %1449 = vmatprep.subr.bf16.mxu0 0
    %1450 = vmatpush2.bf16.msra.mxu0 0
    %1451 = vmatprep.subr.bf16.mxu0 0
    %1452 = vmatpush2.bf16.msra.mxu0 0
    %1453 = vmatprep.subr.bf16.mxu0 0
    %1454 = vmatpush2.bf16.msra.mxu0 0
    %1455 = vmatprep.subr.bf16.mxu0 0
    %1456 = vmatpush2.bf16.msra.mxu0 0
    %1457 = vmatprep.mubr.bf16.mxu0 0
    %1458 = vmatmul.mubr.bf16.gmra.mxu0 %v1382
    %v1459 = vpop.f32.mrf.mxu0
    %v1460 = vadd.f32 %v446, %v1459
    %v1461 = vpop.f32.mrf.mxu0
    %v1462 = vpop.f32.mrf.mxu0
    %v1463 = vpop.f32.mrf.mxu0
    %1464 = vdwg.mxu0
    %v1466 = vrot.slane %v1419, 2
    %v1468 = vadd.f32 %v398, %v1466
    %v1469 = vxor.u32 %v1468, 2147483648
    %v1470 = vmul.f32 %v1469, 1.442695
    %v1471 = vpow.pop %v1470
    %v1472 = vadd.f32 %v1471, 1.0
    %v1473 = vrcp.pop %v1472
    %v1474 = vmul.f32 1.0, %v1473
    %v1476 = vrot.slane %v1421, 2
    %v1478 = vadd.f32 %v399, %v1476
    %v1479 = vxor.u32 %v1478, 2147483648
    %v1480 = vmul.f32 %v1479, 1.442695
    %v1481 = vpow.pop %v1480
    %v1482 = vadd.f32 %v1481, 1.0
    %v1483 = vrcp.pop %v1482
    %v1484 = vmul.f32 1.0, %v1483
    %v1486 = vrot.slane %v1460, 2
    %v1488 = vmul.f32 %v1474, %v1486
    %v1489 = vadd.f32 %v400, %v1488
    %v1490 = vtanh.pop %v1489
    %v1491 = vsub.f32 1.0, %v1484
    %v1492 = vmul.f32 %v1491, %v1490
    %v1494 = vrot.slane %v1378, 6
    %v1496 = vmul.f32 %v1484, %v1494
    %v1497 = vadd.f32 %v1492, %v1496
    %1498 = vst [vmem:[#allocation3 + $0x8] sm:$0xc0] %v1497
    %vm1499 = vcmp.lt.s32.totalorder %v233, 32
    %v1500 = vld [vmem:[#allocation3] sm:$0x3]
    %v1501 = vld [vmem:[#allocation3 + $0xe] sm:$0x3]
    %v1502 = vsel %vm1499, 1, 0
    %vm1503 = vcmp.eq.s32.totalorder %v1502, 1
    %v1504 = vsel %vm1503, %v1500, %v1501
    %vm1505 = vcmask 517120
    %1506 = vst.msk [vmem:[#allocation4] sm:$0x3] %vm1505, %v1504
    %v1507 = vld [vmem:[#allocation3 + $0x2] sm:$0x3]
    %v1508 = vld [vmem:[#allocation3 + $0xc] sm:$0x3]
    %v1509 = vsel %vm1503, %v1507, %v1508
    %1510 = vst.msk [vmem:[#allocation4 + $0x2] sm:$0x3] %vm1505, %v1509
    %v1511 = vld [vmem:[#allocation3 + $0x4] sm:$0x3]
    %v1512 = vld [vmem:[#allocation3 + $0xa] sm:$0x3]
    %v1513 = vsel %vm1503, %v1511, %v1512
    %1514 = vst.msk [vmem:[#allocation4 + $0x4] sm:$0x3] %vm1505, %v1513
    %v1515 = vld [vmem:[#allocation3 + $0x6] sm:$0x3]
    %v1516 = vld [vmem:[#allocation3 + $0x8] sm:$0x3]
    %v1517 = vsel %vm1503, %v1515, %v1516
    %1518 = vst.msk [vmem:[#allocation4 + $0x6] sm:$0x3] %vm1505, %v1517
    %v1519 = vld [vmem:[#allocation3 + $0x8] sm:$0x3]
    %v1520 = vld [vmem:[#allocation3 + $0x6] sm:$0x3]
    %v1521 = vsel %vm1503, %v1519, %v1520
    %1522 = vst.msk [vmem:[#allocation4 + $0x8] sm:$0x3] %vm1505, %v1521
    %v1523 = vld [vmem:[#allocation3 + $0xa] sm:$0x3]
    %v1524 = vld [vmem:[#allocation3 + $0x4] sm:$0x3]
    %v1525 = vsel %vm1503, %v1523, %v1524
    %1526 = vst.msk [vmem:[#allocation4 + $0xa] sm:$0x3] %vm1505, %v1525
    %v1527 = vld [vmem:[#allocation3 + $0xc] sm:$0x3]
    %v1528 = vld [vmem:[#allocation3 + $0x2] sm:$0x3]
    %v1529 = vsel %vm1503, %v1527, %v1528
    %1530 = vst.msk [vmem:[#allocation4 + $0xc] sm:$0x3] %vm1505, %v1529
    %v1531 = vld [vmem:[#allocation3 + $0xe] sm:$0x3]
    %v1532 = vld [vmem:[#allocation3] sm:$0x3]
    %v1533 = vsel %vm1503, %v1531, %v1532
    %1534 = vst.msk [vmem:[#allocation4 + $0xe] sm:$0x3] %vm1505, %v1533
    %v1535 = vld [vmem:[#allocation4] sm:$0xff]
    %v1536 = vld [vmem:[#allocation4 + $0x8] sm:$0xff]
    %v1537 = vsel %vm138, %v1535, 0.0
    %1538 = vadd.xlane.f32.xlu0 %v1537
    %v1539 = vpop.xlane.xlu0 %1538
    %v1540 = vsel %vm138, %v1536, 0.0
    %1541 = vadd.xlane.f32.xlu0 %v1540
    %v1542 = vpop.xlane.xlu0 %1541
    %v1543 = vrcp.pop 64.0
    %v1544 = vmul.f32 %v1539, %v1543
    %v1545 = vmul.f32 %v1542, %v1543
    %v1546 = vsub.f32 %v1535, %v1544
    %v1547 = vsub.f32 %v1536, %v1545
    %v1548 = vmul.f32 %v1546, %v1546
    %v1549 = vmul.f32 %v1547, %v1547
    %v1550 = vsel %vm138, %v1548, 0.0
    %1551 = vadd.xlane.f32.xlu0 %v1550
    %v1552 = vpop.xlane.xlu0 %1551
    %v1553 = vsel %vm138, %v1549, 0.0
    %1554 = vadd.xlane.f32.xlu0 %v1553
    %v1555 = vpop.xlane.xlu0 %1554
    %v1556 = vmul.f32 %v1552, %v1543
    %v1557 = vmul.f32 %v1555, %v1543
    %v1558 = vadd.f32 %v1556, 1e-05
    %v1559 = vadd.f32 %v1557, 1e-05
    %v1560 = vrsqrt.pop %v1558
    %v1561 = vrsqrt.pop %v1559
    %v1562 = vmul.f32 %v1546, %v1560
    %v1563 = vmul.f32 %v1547, %v1561
    %v1564 = vld [vmem:[%s5] sm:$0x1]
    %v1566 = vlaneseq
    %v1567 = vshrl.u32 %v1566, 7
    %v1568 = vsub.s32 0, %v1567
    %v1569 = vrot.slane %v1564, %v1568
    %v1571 = vmul.f32 %v1562, %v1569
    %v1572 = vmul.f32 %v1563, %v1569
    %v1573 = vld [vmem:[%s6] sm:$0x1]
    %v1575 = vlaneseq
    %v1576 = vshrl.u32 %v1575, 7
    %v1577 = vsub.s32 0, %v1576
    %v1578 = vrot.slane %v1573, %v1577
    %v1580 = vadd.f32 %v1571, %v1578
    %v1581 = vadd.f32 %v1572, %v1578
    %v1582 = vpack.c.bf16 %v1581, %v1580
    %v1583 = vld [vmem:[%s7] sm:$0xf]
    %v1584 = vld [vmem:[%s7 + $0x4] sm:$0xf]
    %v1585 = vld [vmem:[%s7 + $0x8] sm:$0xf]
    %v1586 = vld [vmem:[%s7 + $0xc] sm:$0xf]
    %v1587 = vld [vmem:[%s7 + $0x10] sm:$0xf]
    %v1588 = vld [vmem:[%s7 + $0x14] sm:$0xf]
    %v1589 = vld [vmem:[%s7 + $0x18] sm:$0xf]
    %v1590 = vld [vmem:[%s7 + $0x1c] sm:$0xf]
    %v1591 = vld [vmem:[%s8] sm:$0x1]
    %v1593 = vlaneseq
    %v1594 = vshrl.u32 %v1593, 7
    %v1595 = vsub.s32 0, %v1594
    %v1596 = vrot.slane %v1591, %v1595
    %v1606 = vunpack.c.l.b16 %v1583
    %v1607 = vunpack.c.l.b16 %v1584
    %v1608 = vunpack.c.l.b16 %v1585
    %v1609 = vunpack.c.l.b16 %v1586
    %v1610 = vunpack.c.l.b16 %v1587
    %v1611 = vunpack.c.l.b16 %v1588
    %v1612 = vunpack.c.l.b16 %v1589
    %v1613 = vunpack.c.l.b16 %v1590
    %v1614 = vpack.c.b16 %v1607, %v1606
    %v1615 = vpack.c.b16 %v1609, %v1608
    %v1616 = vpack.c.b16 %v1611, %v1610
    %v1617 = vpack.c.b16 %v1613, %v1612
    %v1623 = vsel %vm138, %v1582, 0
    %1625 = vmatprep.subr.bf16.mxu0 0
    %1626 = vmatpush1.bf16.msra.mxu0 0
    %1627 = vmatprep.subr.bf16.mxu0 0
    %1628 = vmatpush1.bf16.msra.mxu0 0
    %1629 = vmatprep.subr.bf16.mxu0 0
    %1630 = vmatpush1.bf16.msra.mxu0 0
    %1631 = vmatprep.subr.bf16.mxu0 0
    %1632 = vmatpush1.bf16.msra.mxu0 0
    %1633 = vmatprep.subr.bf16.mxu0 0
    %1634 = vmatpush1.bf16.msra.mxu0 %v1617
    %1635 = vmatprep.subr.bf16.mxu0 0
    %1636 = vmatpush1.bf16.msra.mxu0 %v1616
    %1637 = vmatprep.subr.bf16.mxu0 0
    %1638 = vmatpush1.bf16.msra.mxu0 %v1615
    %1639 = vmatprep.subr.bf16.mxu0 0
    %1640 = vmatpush1.bf16.msra.mxu0 %v1614
    %1641 = vmatprep.subr.bf16.mxu0 0
    %1642 = vmatpush2.bf16.msra.mxu0 0
    %1643 = vmatprep.subr.bf16.mxu0 0
    %1644 = vmatpush2.bf16.msra.mxu0 0
    %1645 = vmatprep.subr.bf16.mxu0 0
    %1646 = vmatpush2.bf16.msra.mxu0 0
    %1647 = vmatprep.subr.bf16.mxu0 0
    %1648 = vmatpush2.bf16.msra.mxu0 0
    %1649 = vmatprep.subr.bf16.mxu0 0
    %1650 = vmatpush2.bf16.msra.mxu0 0
    %1651 = vmatprep.subr.bf16.mxu0 0
    %1652 = vmatpush2.bf16.msra.mxu0 0
    %1653 = vmatprep.subr.bf16.mxu0 0
    %1654 = vmatpush2.bf16.msra.mxu0 0
    %1655 = vmatprep.subr.bf16.mxu0 0
    %1656 = vmatpush2.bf16.msra.mxu0 0
    %1657 = vmatprep.mubr.bf16.mxu0 0
    %1658 = vmatmul.mubr.bf16.gmra.mxu0 %v1623
    %v1659 = vpop.f32.mrf.mxu0
    %v1660 = vadd.f32 %v1596, %v1659
    %v1661 = vpop.f32.mrf.mxu0
    %v1662 = vpop.f32.mrf.mxu0
    %v1663 = vadd.f32 %v1596, %v1662
    %v1664 = vpop.f32.mrf.mxu0
    %1665 = vdwg.mxu0
    %vm1666 = vcmask 130048
    %v1667 = vsel %vm1666, %v1660, -inf
    %1668 = vmax.xlane.f32.xlu0 %v1667
    %v1669 = vpop.xlane.xlu0 %1668
    %v1670 = vsel %vm1666, %v1663, -inf
    %1671 = vmax.xlane.f32.xlu0 %v1670
    %v1672 = vpop.xlane.xlu0 %1671
    %v1673 = vsub.f32 %v1660, %v1669
    %v1674 = vsub.f32 %v1663, %v1672
    %v1675 = vmul.f32 %v1673, 1.442695
    %v1676 = vpow.pop %v1675
    %v1677 = vmul.f32 %v1674, 1.442695
    %v1678 = vpow.pop %v1677
    %v1679 = vsel %vm1666, %v1676, 0.0
    %1680 = vadd.xlane.f32.xlu0 %v1679
    %v1681 = vpop.xlane.xlu0 %1680
    %v1682 = vsel %vm1666, %v1678, 0.0
    %1683 = vadd.xlane.f32.xlu0 %v1682
    %v1684 = vpop.xlane.xlu0 %1683
    %v1685 = vlog2.pop %v1681
    %v1686 = vmul.f32 %v1685, 0.6931472
    %v1687 = vlog2.pop %v1684
    %v1688 = vmul.f32 %v1687, 0.6931472
    %v1689 = vadd.f32 %v1669, %v1686
    %v1690 = vadd.f32 %v1672, %v1688
    %v1691 = vsub.f32 %v1660, %v1689
    %v1692 = vsub.f32 %v1663, %v1690
    %1693 = vst.msk [vmem:[#allocation5] sm:$0xff] %vm1666, %v1691
    %1694 = vst.msk [vmem:[#allocation5 + $0x8] sm:$0xff] %vm1666, %v1692
    // Predicated region
    $region38: #{crnn_forward.5} parent=1 // pred_check
      _
    $region39: #{crnn_forward.5} parent=1 // pred_check_branch
      %1696 = sbr.rel (0) target = $region41
    $region40: #{crnn_forward.5} parent=1 // pred_region
      %s1698 = ssub.s32 256, 256
      %1699 = vsyncadd [#allocation6], %s1698
      %s1700 = sshll.u32 [#allocation5], 4
      %s1701 = int_to_ptr.vmem [resolvable:$true] %s1700
      %1706 = dma.vmem_to_hbm [thread:$0]  %s1701, 256, %s9, [#allocation6], 128, 128, 8
    $region41: #{crnn_forward.5} parent=1 // pred_fallthru
      _
    // Predicated region
    $region42: #{crnn_forward.5} parent=1 // pred_check
      _
    $region43: #{crnn_forward.5} parent=1 // pred_check_branch
      %1708 = sbr.rel (0) target = $region45
    $region44: #{crnn_forward.5} parent=1 // pred_region
      %1709 = dma.done [#allocation6], 256
    $region45: #{crnn_forward.5} parent=1 // pred_fallthru
      _
    %1710 = vsyncpa [#allocation6], 1

// kernel: crnn_forward.4
$region0: #{crnn_forward.4}
  #allocation0 [shape = 'u32[]', space=smem, size = 0x4, offset = 0x4, fixed_abs, tag = 'smem constant byte address 0x4 - core index']
  #allocation1 [shape = 'u32[144,128]{1,0:T(1,128)}', space=vmem, size = 0x12000, scoped, tag = 'internal scratch']
  #allocation2 [shape = 'f32[16,384]{1,0:T(8,128)}', space=vmem, size = 0x6000, scoped, tag = 'scratch operand']
  #allocation3 [shape = 'f32[16,128]{1,0:T(8,128)}', space=vmem, size = 0x2000, scoped, tag = 'scratch operand']
  %s0 = inlined_call_operand.vmem [shape: bf16[16,512], index: 0, kind: input, shape index: {}]
  %s1 = inlined_call_operand.vmem [shape: bf16[512,384], index: 1, kind: input, shape index: {}]
  %s2 = inlined_call_operand.vmem [shape: f32[1,384], index: 2, kind: input, shape index: {}]
  %s3 = inlined_call_operand.vmem [shape: bf16[128,384], index: 3, kind: input, shape index: {}]
  %s4 = inlined_call_operand.vmem [shape: f32[1,384], index: 4, kind: input, shape index: {}]
  %s5 = inlined_call_operand.vmem [shape: bf16[16,64], index: 5, kind: output, shape index: {}]
  %s6 = sld [smem:[#allocation0]]
  $region30: #{crnn_forward.4} parent=0
    _
  %s8 = ssub.s32 1, %s6
  %s9 = scalar_select 0, %s8, %s6
  // Predicated region
  $region2: #{crnn_forward.4} parent=0 // pred_check
    _
  $region3: #{crnn_forward.4} parent=0 // pred_check_branch
    %11 = sbr.rel (0) target = $region5
  $region4: #{crnn_forward.4} parent=0 // pred_region
    _
  $region5: #{crnn_forward.4} parent=0 // pred_fallthru
    _
  // Predicated region
  $region6: #{crnn_forward.4} parent=0 // pred_check
    _
  $region7: #{crnn_forward.4} parent=0 // pred_check_branch
    %13 = sbr.rel (0) target = $region9
  $region8: #{crnn_forward.4} parent=0 // pred_region
    _
  $region9: #{crnn_forward.4} parent=0 // pred_fallthru
    _
  // Predicated region
  $region10: #{crnn_forward.4} parent=0 // pred_check
    _
  $region11: #{crnn_forward.4} parent=0 // pred_check_branch
    %15 = sbr.rel (0) target = $region13
  $region12: #{crnn_forward.4} parent=0 // pred_region
    _
  $region13: #{crnn_forward.4} parent=0 // pred_fallthru
    _
  // Predicated region
  $region14: #{crnn_forward.4} parent=0 // pred_check
    _
  $region15: #{crnn_forward.4} parent=0 // pred_check_branch
    %17 = sbr.rel (0) target = $region17
  $region16: #{crnn_forward.4} parent=0 // pred_region
    _
  $region17: #{crnn_forward.4} parent=0 // pred_fallthru
    _
  // Predicated region
  $region18: #{crnn_forward.4} parent=0 // pred_check
    _
  $region19: #{crnn_forward.4} parent=0 // pred_check_branch
    %19 = sbr.rel (0) target = $region21
  $region20: #{crnn_forward.4} parent=0 // pred_region
    _
  $region21: #{crnn_forward.4} parent=0 // pred_fallthru
    _
  %v21 = vld [vmem:[%s0] sm:$0xff]
  %v22 = vld [vmem:[%s0 + $0x8] sm:$0xff]
  %v23 = vld [vmem:[%s0 + $0x10] sm:$0xff]
  %v24 = vld [vmem:[%s0 + $0x18] sm:$0xff]
  %v25 = vld [vmem:[%s1] sm:$0xff]
  %v26 = vld [vmem:[%s1 + $0x8] sm:$0xf]
  %v27 = vld [vmem:[%s1 + $0xc] sm:$0xff]
  %v28 = vld [vmem:[%s1 + $0x14] sm:$0xf]
  %v29 = vld [vmem:[%s1 + $0x18] sm:$0xff]
  %v30 = vld [vmem:[%s1 + $0x20] sm:$0xf]
  %v31 = vld [vmem:[%s1 + $0x24] sm:$0xff]
  %v32 = vld [vmem:[%s1 + $0x2c] sm:$0xf]
  %v33 = vld [vmem:[%s1 + $0x30] sm:$0xff]
  %v34 = vld [vmem:[%s1 + $0x38] sm:$0xf]
  %v35 = vld [vmem:[%s1 + $0x3c] sm:$0xff]
  %v36 = vld [vmem:[%s1 + $0x44] sm:$0xf]
  %v37 = vld [vmem:[%s1 + $0x48] sm:$0xff]
  %v38 = vld [vmem:[%s1 + $0x50] sm:$0xf]
  %v39 = vld [vmem:[%s1 + $0x54] sm:$0xff]
  %v40 = vld [vmem:[%s1 + $0x5c] sm:$0xf]
  %v41 = vld [vmem:[%s1 + $0x60] sm:$0xff]
  %v42 = vld [vmem:[%s1 + $0x68] sm:$0xf]
  %v43 = vld [vmem:[%s1 + $0x6c] sm:$0xff]
  %v44 = vld [vmem:[%s1 + $0x74] sm:$0xf]
  %v45 = vld [vmem:[%s1 + $0x78] sm:$0xff]
  %v46 = vld [vmem:[%s1 + $0x80] sm:$0xf]
  %v47 = vld [vmem:[%s1 + $0x84] sm:$0xff]
  %v48 = vld [vmem:[%s1 + $0x8c] sm:$0xf]
  %v49 = vld [vmem:[%s1 + $0x90] sm:$0xff]
  %v50 = vld [vmem:[%s1 + $0x98] sm:$0xf]
  %v51 = vld [vmem:[%s1 + $0x9c] sm:$0xff]
  %v52 = vld [vmem:[%s1 + $0xa4] sm:$0xf]
  %v53 = vld [vmem:[%s1 + $0xa8] sm:$0xff]
  %v54 = vld [vmem:[%s1 + $0xb0] sm:$0xf]
  %v55 = vld [vmem:[%s1 + $0xb4] sm:$0xff]
  %v56 = vld [vmem:[%s1 + $0xbc] sm:$0xf]
  %v57 = vld [vmem:[%s1 + $0xc0] sm:$0xff]
  %v58 = vld [vmem:[%s1 + $0xc8] sm:$0xf]
  %v59 = vld [vmem:[%s1 + $0xcc] sm:$0xff]
  %v60 = vld [vmem:[%s1 + $0xd4] sm:$0xf]
  %v61 = vld [vmem:[%s1 + $0xd8] sm:$0xff]
  %v62 = vld [vmem:[%s1 + $0xe0] sm:$0xf]
  %v63 = vld [vmem:[%s1 + $0xe4] sm:$0xff]
  %v64 = vld [vmem:[%s1 + $0xec] sm:$0xf]
  %v65 = vld [vmem:[%s1 + $0xf0] sm:$0xff]
  %v66 = vld [vmem:[%s1 + $0xf8] sm:$0xf]
  %v67 = vld [vmem:[%s1 + $0xfc] sm:$0xff]
  %v68 = vld [vmem:[%s1 + $0x104] sm:$0xf]
  %v69 = vld [vmem:[%s1 + $0x108] sm:$0xff]
  %v70 = vld [vmem:[%s1 + $0x110] sm:$0xf]
  %v71 = vld [vmem:[%s1 + $0x114] sm:$0xff]
  %v72 = vld [vmem:[%s1 + $0x11c] sm:$0xf]
  %v73 = vld [vmem:[%s1 + $0x120] sm:$0xff]
  %v74 = vld [vmem:[%s1 + $0x128] sm:$0xf]
  %v75 = vld [vmem:[%s1 + $0x12c] sm:$0xff]
  %v76 = vld [vmem:[%s1 + $0x134] sm:$0xf]
  %v77 = vld [vmem:[%s1 + $0x138] sm:$0xff]
  %v78 = vld [vmem:[%s1 + $0x140] sm:$0xf]
  %v79 = vld [vmem:[%s1 + $0x144] sm:$0xff]
  %v80 = vld [vmem:[%s1 + $0x14c] sm:$0xf]
  %v81 = vld [vmem:[%s1 + $0x150] sm:$0xff]
  %v82 = vld [vmem:[%s1 + $0x158] sm:$0xf]
  %v83 = vld [vmem:[%s1 + $0x15c] sm:$0xff]
  %v84 = vld [vmem:[%s1 + $0x164] sm:$0xf]
  %v85 = vld [vmem:[%s1 + $0x168] sm:$0xff]
  %v86 = vld [vmem:[%s1 + $0x170] sm:$0xf]
  %v87 = vld [vmem:[%s1 + $0x174] sm:$0xff]
  %v88 = vld [vmem:[%s1 + $0x17c] sm:$0xf]
  %v89 = vld [vmem:[%s1 + $0x180] sm:$0xff]
  %v90 = vld [vmem:[%s1 + $0x188] sm:$0xf]
  %v91 = vld [vmem:[%s1 + $0x18c] sm:$0xff]
  %v92 = vld [vmem:[%s1 + $0x194] sm:$0xf]
  %v93 = vld [vmem:[%s1 + $0x198] sm:$0xff]
  %v94 = vld [vmem:[%s1 + $0x1a0] sm:$0xf]
  %v95 = vld [vmem:[%s1 + $0x1a4] sm:$0xff]
  %v96 = vld [vmem:[%s1 + $0x1ac] sm:$0xf]
  %v97 = vld [vmem:[%s1 + $0x1b0] sm:$0xff]
  %v98 = vld [vmem:[%s1 + $0x1b8] sm:$0xf]
  %v99 = vld [vmem:[%s1 + $0x1bc] sm:$0xff]
  %v100 = vld [vmem:[%s1 + $0x1c4] sm:$0xf]
  %v101 = vld [vmem:[%s1 + $0x1c8] sm:$0xff]
  %v102 = vld [vmem:[%s1 + $0x1d0] sm:$0xf]
  %v103 = vld [vmem:[%s1 + $0x1d4] sm:$0xff]
  %v104 = vld [vmem:[%s1 + $0x1dc] sm:$0xf]
  %v105 = vld [vmem:[%s1 + $0x1e0] sm:$0xff]
  %v106 = vld [vmem:[%s1 + $0x1e8] sm:$0xf]
  %v107 = vld [vmem:[%s1 + $0x1ec] sm:$0xff]
  %v108 = vld [vmem:[%s1 + $0x1f4] sm:$0xf]
  %v109 = vld [vmem:[%s1 + $0x1f8] sm:$0xff]
  %v110 = vld [vmem:[%s1 + $0x200] sm:$0xf]
  %v111 = vld [vmem:[%s1 + $0x204] sm:$0xff]
  %v112 = vld [vmem:[%s1 + $0x20c] sm:$0xf]
  %v113 = vld [vmem:[%s1 + $0x210] sm:$0xff]
  %v114 = vld [vmem:[%s1 + $0x218] sm:$0xf]
  %v115 = vld [vmem:[%s1 + $0x21c] sm:$0xff]
  %v116 = vld [vmem:[%s1 + $0x224] sm:$0xf]
  %v117 = vld [vmem:[%s1 + $0x228] sm:$0xff]
  %v118 = vld [vmem:[%s1 + $0x230] sm:$0xf]
  %v119 = vld [vmem:[%s1 + $0x234] sm:$0xff]
  %v120 = vld [vmem:[%s1 + $0x23c] sm:$0xf]
  %v121 = vld [vmem:[%s1 + $0x240] sm:$0xff]
  %v122 = vld [vmem:[%s1 + $0x248] sm:$0xf]
  %v123 = vld [vmem:[%s1 + $0x24c] sm:$0xff]
  %v124 = vld [vmem:[%s1 + $0x254] sm:$0xf]
  %v125 = vld [vmem:[%s1 + $0x258] sm:$0xff]
  %v126 = vld [vmem:[%s1 + $0x260] sm:$0xf]
  %v127 = vld [vmem:[%s1 + $0x264] sm:$0xff]
  %v128 = vld [vmem:[%s1 + $0x26c] sm:$0xf]
  %v129 = vld [vmem:[%s1 + $0x270] sm:$0xff]
  %v130 = vld [vmem:[%s1 + $0x278] sm:$0xf]
  %v131 = vld [vmem:[%s1 + $0x27c] sm:$0xff]
  %v132 = vld [vmem:[%s1 + $0x284] sm:$0xf]
  %v133 = vld [vmem:[%s1 + $0x288] sm:$0xff]
  %v134 = vld [vmem:[%s1 + $0x290] sm:$0xf]
  %v135 = vld [vmem:[%s1 + $0x294] sm:$0xff]
  %v136 = vld [vmem:[%s1 + $0x29c] sm:$0xf]
  %v137 = vld [vmem:[%s1 + $0x2a0] sm:$0xff]
  %v138 = vld [vmem:[%s1 + $0x2a8] sm:$0xf]
  %v139 = vld [vmem:[%s1 + $0x2ac] sm:$0xff]
  %v140 = vld [vmem:[%s1 + $0x2b4] sm:$0xf]
  %v141 = vld [vmem:[%s1 + $0x2b8] sm:$0xff]
  %v142 = vld [vmem:[%s1 + $0x2c0] sm:$0xf]
  %v143 = vld [vmem:[%s1 + $0x2c4] sm:$0xff]
  %v144 = vld [vmem:[%s1 + $0x2cc] sm:$0xf]
  %v145 = vld [vmem:[%s1 + $0x2d0] sm:$0xff]
  %v146 = vld [vmem:[%s1 + $0x2d8] sm:$0xf]
  %v147 = vld [vmem:[%s1 + $0x2dc] sm:$0xff]
  %v148 = vld [vmem:[%s1 + $0x2e4] sm:$0xf]
  %v149 = vld [vmem:[%s1 + $0x2e8] sm:$0xff]
  %v150 = vld [vmem:[%s1 + $0x2f0] sm:$0xf]
  %v151 = vld [vmem:[%s1 + $0x2f4] sm:$0xff]
  %v152 = vld [vmem:[%s1 + $0x2fc] sm:$0xf]
  %v153 = vld [vmem:[%s2] sm:$0x7]
  %v155 = vlaneseq
  %v156 = vshrl.u32 %v155, 7
  %v157 = vsub.s32 0, %v156
  %v158 = vrot.slane %v153, %v157
  %v159 = vlaneseq
  %v160 = vshrl.u32 %v159, 7
  %v161 = vsub.s32 1, %v160
  %v162 = vrot.slane %v153, %v161
  %v163 = vlaneseq
  %v164 = vshrl.u32 %v163, 7
  %v165 = vsub.s32 2, %v164
  %v166 = vrot.slane %v153, %v165
  %v174 = vunpack.c.l.b16 %v21
  %v175 = vunpack.c.h.b16 %v21
  %v176 = vunpack.c.l.b16 %v22
  %v177 = vunpack.c.h.b16 %v22
  %v178 = vunpack.c.l.b16 %v23
  %v179 = vunpack.c.h.b16 %v23
  %v180 = vunpack.c.l.b16 %v24
  %v181 = vunpack.c.h.b16 %v24
  %v182 = vpack.c.b16 %v178, %v174
  %v183 = vpack.c.b16 %v179, %v175
  %v184 = vpack.c.b16 %v180, %v176
  %v185 = vpack.c.b16 %v181, %v177
  %v318 = vunpack.c.l.b16 %v25
  %v319 = vunpack.c.h.b16 %v25
  %v320 = vunpack.c.l.b16 %v26
  %v321 = vunpack.c.l.b16 %v27
  %v322 = vunpack.c.h.b16 %v27
  %v323 = vunpack.c.l.b16 %v28
  %v324 = vunpack.c.l.b16 %v29
  %v325 = vunpack.c.h.b16 %v29
  %v326 = vunpack.c.l.b16 %v30
  %v327 = vunpack.c.l.b16 %v31
  %v328 = vunpack.c.h.b16 %v31
  %v329 = vunpack.c.l.b16 %v32
  %v330 = vunpack.c.l.b16 %v33
  %v331 = vunpack.c.h.b16 %v33
  %v332 = vunpack.c.l.b16 %v34
  %v333 = vunpack.c.l.b16 %v35
  %v334 = vunpack.c.h.b16 %v35
  %v335 = vunpack.c.l.b16 %v36
  %v336 = vunpack.c.l.b16 %v37
  %v337 = vunpack.c.h.b16 %v37
  %v338 = vunpack.c.l.b16 %v38
  %v339 = vunpack.c.l.b16 %v39
  %v340 = vunpack.c.h.b16 %v39
  %v341 = vunpack.c.l.b16 %v40
  %v342 = vunpack.c.l.b16 %v41
  %v343 = vunpack.c.h.b16 %v41
  %v344 = vunpack.c.l.b16 %v42
  %v345 = vunpack.c.l.b16 %v43
  %v346 = vunpack.c.h.b16 %v43
  %v347 = vunpack.c.l.b16 %v44
  %v348 = vunpack.c.l.b16 %v45
  %v349 = vunpack.c.h.b16 %v45
  %v350 = vunpack.c.l.b16 %v46
  %v351 = vunpack.c.l.b16 %v47
  %v352 = vunpack.c.h.b16 %v47
  %v353 = vunpack.c.l.b16 %v48
  %v354 = vunpack.c.l.b16 %v49
  %v355 = vunpack.c.h.b16 %v49
  %v356 = vunpack.c.l.b16 %v50
  %v357 = vunpack.c.l.b16 %v51
  %v358 = vunpack.c.h.b16 %v51
  %v359 = vunpack.c.l.b16 %v52
  %v360 = vunpack.c.l.b16 %v53
  %v361 = vunpack.c.h.b16 %v53
  %v362 = vunpack.c.l.b16 %v54
  %v363 = vunpack.c.l.b16 %v55
  %v364 = vunpack.c.h.b16 %v55
  %v365 = vunpack.c.l.b16 %v56
  %v366 = vunpack.c.l.b16 %v57
  %v367 = vunpack.c.h.b16 %v57
  %v368 = vunpack.c.l.b16 %v58
  %v369 = vunpack.c.l.b16 %v59
  %v370 = vunpack.c.h.b16 %v59
  %v371 = vunpack.c.l.b16 %v60
  %v372 = vunpack.c.l.b16 %v61
  %v373 = vunpack.c.h.b16 %v61
  %v374 = vunpack.c.l.b16 %v62
  %v375 = vunpack.c.l.b16 %v63
  %v376 = vunpack.c.h.b16 %v63
  %v377 = vunpack.c.l.b16 %v64
  %v378 = vunpack.c.l.b16 %v65
  %v379 = vunpack.c.h.b16 %v65
  %v380 = vunpack.c.l.b16 %v66
  %v381 = vunpack.c.l.b16 %v67
  %v382 = vunpack.c.h.b16 %v67
  %v383 = vunpack.c.l.b16 %v68
  %v384 = vunpack.c.l.b16 %v69
  %v385 = vunpack.c.h.b16 %v69
  %v386 = vunpack.c.l.b16 %v70
  %v387 = vunpack.c.l.b16 %v71
  %v388 = vunpack.c.h.b16 %v71
  %v389 = vunpack.c.l.b16 %v72
  %v390 = vunpack.c.l.b16 %v73
  %v391 = vunpack.c.h.b16 %v73
  %v392 = vunpack.c.l.b16 %v74
  %v393 = vunpack.c.l.b16 %v75
  %v394 = vunpack.c.h.b16 %v75
  %v395 = vunpack.c.l.b16 %v76
  %v396 = vunpack.c.l.b16 %v77
  %v397 = vunpack.c.h.b16 %v77
  %v398 = vunpack.c.l.b16 %v78
  %v399 = vunpack.c.l.b16 %v79
  %v400 = vunpack.c.h.b16 %v79
  %v401 = vunpack.c.l.b16 %v80
  %v402 = vunpack.c.l.b16 %v81
  %v403 = vunpack.c.h.b16 %v81
  %v404 = vunpack.c.l.b16 %v82
  %v405 = vunpack.c.l.b16 %v83
  %v406 = vunpack.c.h.b16 %v83
  %v407 = vunpack.c.l.b16 %v84
  %v408 = vunpack.c.l.b16 %v85
  %v409 = vunpack.c.h.b16 %v85
  %v410 = vunpack.c.l.b16 %v86
  %v411 = vunpack.c.l.b16 %v87
  %v412 = vunpack.c.h.b16 %v87
  %v413 = vunpack.c.l.b16 %v88
  %v414 = vunpack.c.l.b16 %v89
  %v415 = vunpack.c.h.b16 %v89
  %v416 = vunpack.c.l.b16 %v90
  %v417 = vunpack.c.l.b16 %v91
  %v418 = vunpack.c.h.b16 %v91
  %v419 = vunpack.c.l.b16 %v92
  %v420 = vunpack.c.l.b16 %v93
  %v421 = vunpack.c.h.b16 %v93
  %v422 = vunpack.c.l.b16 %v94
  %v423 = vunpack.c.l.b16 %v95
  %v424 = vunpack.c.h.b16 %v95
  %v425 = vunpack.c.l.b16 %v96
  %v426 = vunpack.c.l.b16 %v97
  %v427 = vunpack.c.h.b16 %v97
  %v428 = vunpack.c.l.b16 %v98
  %v429 = vunpack.c.l.b16 %v99
  %v430 = vunpack.c.h.b16 %v99
  %v431 = vunpack.c.l.b16 %v100
  %v432 = vunpack.c.l.b16 %v101
  %v433 = vunpack.c.h.b16 %v101
  %v434 = vunpack.c.l.b16 %v102
  %v435 = vunpack.c.l.b16 %v103
  %v436 = vunpack.c.h.b16 %v103
  %v437 = vunpack.c.l.b16 %v104
  %v438 = vunpack.c.l.b16 %v105
  %v439 = vunpack.c.h.b16 %v105
  %v440 = vunpack.c.l.b16 %v106
  %v441 = vunpack.c.l.b16 %v107
  %v442 = vunpack.c.h.b16 %v107
  %v443 = vunpack.c.l.b16 %v108
  %v444 = vunpack.c.l.b16 %v109
  %v445 = vunpack.c.h.b16 %v109
  %v446 = vunpack.c.l.b16 %v110
  %v447 = vunpack.c.l.b16 %v111
  %v448 = vunpack.c.h.b16 %v111
  %v449 = vunpack.c.l.b16 %v112
  %v450 = vunpack.c.l.b16 %v113
  %v451 = vunpack.c.h.b16 %v113
  %v452 = vunpack.c.l.b16 %v114
  %v453 = vunpack.c.l.b16 %v115
  %v454 = vunpack.c.h.b16 %v115
  %v455 = vunpack.c.l.b16 %v116
  %v456 = vunpack.c.l.b16 %v117
  %v457 = vunpack.c.h.b16 %v117
  %v458 = vunpack.c.l.b16 %v118
  %v459 = vunpack.c.l.b16 %v119
  %v460 = vunpack.c.h.b16 %v119
  %v461 = vunpack.c.l.b16 %v120
  %v462 = vunpack.c.l.b16 %v121
  %v463 = vunpack.c.h.b16 %v121
  %v464 = vunpack.c.l.b16 %v122
  %v465 = vunpack.c.l.b16 %v123
  %v466 = vunpack.c.h.b16 %v123
  %v467 = vunpack.c.l.b16 %v124
  %v468 = vunpack.c.l.b16 %v125
  %v469 = vunpack.c.h.b16 %v125
  %v470 = vunpack.c.l.b16 %v126
  %v471 = vunpack.c.l.b16 %v127
  %v472 = vunpack.c.h.b16 %v127
  %v473 = vunpack.c.l.b16 %v128
  %v474 = vunpack.c.l.b16 %v129
  %v475 = vunpack.c.h.b16 %v129
  %v476 = vunpack.c.l.b16 %v130
  %v477 = vunpack.c.l.b16 %v131
  %v478 = vunpack.c.h.b16 %v131
  %v479 = vunpack.c.l.b16 %v132
  %v480 = vunpack.c.l.b16 %v133
  %v481 = vunpack.c.h.b16 %v133
  %v482 = vunpack.c.l.b16 %v134
  %v483 = vunpack.c.l.b16 %v135
  %v484 = vunpack.c.h.b16 %v135
  %v485 = vunpack.c.l.b16 %v136
  %v486 = vunpack.c.l.b16 %v137
  %v487 = vunpack.c.h.b16 %v137
  %v488 = vunpack.c.l.b16 %v138
  %v489 = vunpack.c.l.b16 %v139
  %v490 = vunpack.c.h.b16 %v139
  %v491 = vunpack.c.l.b16 %v140
  %v492 = vunpack.c.l.b16 %v141
  %v493 = vunpack.c.h.b16 %v141
  %v494 = vunpack.c.l.b16 %v142
  %v495 = vunpack.c.l.b16 %v143
  %v496 = vunpack.c.h.b16 %v143
  %v497 = vunpack.c.l.b16 %v144
  %v498 = vunpack.c.l.b16 %v145
  %v499 = vunpack.c.h.b16 %v145
  %v500 = vunpack.c.l.b16 %v146
  %v501 = vunpack.c.l.b16 %v147
  %v502 = vunpack.c.h.b16 %v147
  %v503 = vunpack.c.l.b16 %v148
  %v504 = vunpack.c.l.b16 %v149
  %v505 = vunpack.c.h.b16 %v149
  %v506 = vunpack.c.l.b16 %v150
  %v507 = vunpack.c.l.b16 %v151
  %v508 = vunpack.c.h.b16 %v151
  %v509 = vunpack.c.l.b16 %v152
  %v510 = vpack.c.b16 %v321, %v318
  %v511 = vpack.c.b16 %v322, %v319
  %v512 = vpack.c.b16 %v323, %v320
  %v513 = vpack.c.b16 %v327, %v324
  %v514 = vpack.c.b16 %v328, %v325
  %v515 = vpack.c.b16 %v329, %v326
  %v516 = vpack.c.b16 %v333, %v330
  %v517 = vpack.c.b16 %v334, %v331
  %v518 = vpack.c.b16 %v335, %v332
  %v519 = vpack.c.b16 %v339, %v336
  %v520 = vpack.c.b16 %v340, %v337
  %v521 = vpack.c.b16 %v341, %v338
  %v522 = vpack.c.b16 %v345, %v342
  %v523 = vpack.c.b16 %v346, %v343
  %v524 = vpack.c.b16 %v347, %v344
  %v525 = vpack.c.b16 %v351, %v348
  %v526 = vpack.c.b16 %v352, %v349
  %v527 = vpack.c.b16 %v353, %v350
  %v528 = vpack.c.b16 %v357, %v354
  %v529 = vpack.c.b16 %v358, %v355
  %v530 = vpack.c.b16 %v359, %v356
  %v531 = vpack.c.b16 %v363, %v360
  %v532 = vpack.c.b16 %v364, %v361
  %v533 = vpack.c.b16 %v365, %v362
  %v534 = vpack.c.b16 %v369, %v366
  %v535 = vpack.c.b16 %v370, %v367
  %v536 = vpack.c.b16 %v371, %v368
  %v537 = vpack.c.b16 %v375, %v372
  %v538 = vpack.c.b16 %v376, %v373
  %v539 = vpack.c.b16 %v377, %v374
  %v540 = vpack.c.b16 %v381, %v378
  %v541 = vpack.c.b16 %v382, %v379
  %v542 = vpack.c.b16 %v383, %v380
  %v543 = vpack.c.b16 %v387, %v384
  %v544 = vpack.c.b16 %v388, %v385
  %v545 = vpack.c.b16 %v389, %v386
  %v546 = vpack.c.b16 %v393, %v390
  %v547 = vpack.c.b16 %v394, %v391
  %v548 = vpack.c.b16 %v395, %v392
  %v549 = vpack.c.b16 %v399, %v396
  %v550 = vpack.c.b16 %v400, %v397
  %v551 = vpack.c.b16 %v401, %v398
  %v552 = vpack.c.b16 %v405, %v402
  %v553 = vpack.c.b16 %v406, %v403
  %v554 = vpack.c.b16 %v407, %v404
  %v555 = vpack.c.b16 %v411, %v408
  %v556 = vpack.c.b16 %v412, %v409
  %v557 = vpack.c.b16 %v413, %v410
  %v558 = vpack.c.b16 %v417, %v414
  %v559 = vpack.c.b16 %v418, %v415
  %v560 = vpack.c.b16 %v419, %v416
  %v561 = vpack.c.b16 %v423, %v420
  %v562 = vpack.c.b16 %v424, %v421
  %v563 = vpack.c.b16 %v425, %v422
  %v564 = vpack.c.b16 %v429, %v426
  %v565 = vpack.c.b16 %v430, %v427
  %v566 = vpack.c.b16 %v431, %v428
  %v567 = vpack.c.b16 %v435, %v432
  %v568 = vpack.c.b16 %v436, %v433
  %v569 = vpack.c.b16 %v437, %v434
  %v570 = vpack.c.b16 %v441, %v438
  %v571 = vpack.c.b16 %v442, %v439
  %v572 = vpack.c.b16 %v443, %v440
  %v573 = vpack.c.b16 %v447, %v444
  %v574 = vpack.c.b16 %v448, %v445
  %v575 = vpack.c.b16 %v449, %v446
  %v576 = vpack.c.b16 %v453, %v450
  %v577 = vpack.c.b16 %v454, %v451
  %v578 = vpack.c.b16 %v455, %v452
  %v579 = vpack.c.b16 %v459, %v456
  %v580 = vpack.c.b16 %v460, %v457
  %v581 = vpack.c.b16 %v461, %v458
  %v582 = vpack.c.b16 %v465, %v462
  %v583 = vpack.c.b16 %v466, %v463
  %v584 = vpack.c.b16 %v467, %v464
  %v585 = vpack.c.b16 %v471, %v468
  %v586 = vpack.c.b16 %v472, %v469
  %v587 = vpack.c.b16 %v473, %v470
  %v588 = vpack.c.b16 %v477, %v474
  %v589 = vpack.c.b16 %v478, %v475
  %v590 = vpack.c.b16 %v479, %v476
  %v591 = vpack.c.b16 %v483, %v480
  %v592 = vpack.c.b16 %v484, %v481
  %v593 = vpack.c.b16 %v485, %v482
  %v594 = vpack.c.b16 %v489, %v486
  %v595 = vpack.c.b16 %v490, %v487
  %v596 = vpack.c.b16 %v491, %v488
  %v597 = vpack.c.b16 %v495, %v492
  %v598 = vpack.c.b16 %v496, %v493
  %v599 = vpack.c.b16 %v497, %v494
  %v600 = vpack.c.b16 %v501, %v498
  %v601 = vpack.c.b16 %v502, %v499
  %v602 = vpack.c.b16 %v503, %v500
  %v603 = vpack.c.b16 %v507, %v504
  %v604 = vpack.c.b16 %v508, %v505
  %v605 = vpack.c.b16 %v509, %v506
  %702 = vmatprep.subr.bf16.mxu0 %v532
  %703 = vmatpush1.bf16.msra.mxu0 %v531
  %704 = vmatprep.subr.bf16.mxu0 %v529
  %705 = vmatpush1.bf16.msra.mxu0 %v528
  %706 = vmatprep.subr.bf16.mxu0 %v526
  %707 = vmatpush1.bf16.msra.mxu0 %v525
  %708 = vmatprep.subr.bf16.mxu0 %v523
  %709 = vmatpush1.bf16.msra.mxu0 %v522
  %710 = vmatprep.subr.bf16.mxu0 %v520
  %711 = vmatpush1.bf16.msra.mxu0 %v519
  %712 = vmatprep.subr.bf16.mxu0 %v517
  %713 = vmatpush1.bf16.msra.mxu0 %v516
  %714 = vmatprep.subr.bf16.mxu0 %v514
  %715 = vmatpush1.bf16.msra.mxu0 %v513
  %716 = vmatprep.subr.bf16.mxu0 %v511
  %717 = vmatpush1.bf16.msra.mxu0 %v510
  %718 = vmatprep.subr.bf16.mxu0 %v556
  %719 = vmatpush2.bf16.msra.mxu0 %v555
  %720 = vmatprep.subr.bf16.mxu0 %v553
  %721 = vmatpush2.bf16.msra.mxu0 %v552
  %722 = vmatprep.subr.bf16.mxu0 %v550
  %723 = vmatpush2.bf16.msra.mxu0 %v549
  %724 = vmatprep.subr.bf16.mxu0 %v547
  %725 = vmatpush2.bf16.msra.mxu0 %v546
  %726 = vmatprep.subr.bf16.mxu0 %v544
  %727 = vmatpush2.bf16.msra.mxu0 %v543
  %728 = vmatprep.subr.bf16.mxu0 %v541
  %729 = vmatpush2.bf16.msra.mxu0 %v540
  %730 = vmatprep.subr.bf16.mxu0 %v538
  %731 = vmatpush2.bf16.msra.mxu0 %v537
  %732 = vmatprep.subr.bf16.mxu0 %v535
  %733 = vmatpush2.bf16.msra.mxu0 %v534
  %734 = vmatprep.mubr.bf16.mxu0 %v183
  %735 = vmatmul.mubr.bf16.gmra.mxu0 %v182
  %v736 = vpop.f32.mrf.mxu0
  %v737 = vadd.f32 %v158, %v736
  %v738 = vpop.f32.mrf.mxu0
  %v739 = vadd.f32 %v162, %v738
  %v740 = vpop.f32.mrf.mxu0
  %v741 = vadd.f32 %v158, %v740
  %v742 = vpop.f32.mrf.mxu0
  %v743 = vadd.f32 %v162, %v742
  %744 = vdwg.mxu0
  %745 = vmatprep.subr.bf16.mxu0 %v580
  %746 = vmatpush1.bf16.msra.mxu0 %v579
  %747 = vmatprep.subr.bf16.mxu0 %v577
  %748 = vmatpush1.bf16.msra.mxu0 %v576
  %749 = vmatprep.subr.bf16.mxu0 %v574
  %750 = vmatpush1.bf16.msra.mxu0 %v573
  %751 = vmatprep.subr.bf16.mxu0 %v571
  %752 = vmatpush1.bf16.msra.mxu0 %v570
  %753 = vmatprep.subr.bf16.mxu0 %v568
  %754 = vmatpush1.bf16.msra.mxu0 %v567
  %755 = vmatprep.subr.bf16.mxu0 %v565
  %756 = vmatpush1.bf16.msra.mxu0 %v564
  %757 = vmatprep.subr.bf16.mxu0 %v562
  %758 = vmatpush1.bf16.msra.mxu0 %v561
  %759 = vmatprep.subr.bf16.mxu0 %v559
  %760 = vmatpush1.bf16.msra.mxu0 %v558
  %761 = vmatprep.subr.bf16.mxu0 %v604
  %762 = vmatpush2.bf16.msra.mxu0 %v603
  %763 = vmatprep.subr.bf16.mxu0 %v601
  %764 = vmatpush2.bf16.msra.mxu0 %v600
  %765 = vmatprep.subr.bf16.mxu0 %v598
  %766 = vmatpush2.bf16.msra.mxu0 %v597
  %767 = vmatprep.subr.bf16.mxu0 %v595
  %768 = vmatpush2.bf16.msra.mxu0 %v594
  %769 = vmatprep.subr.bf16.mxu0 %v592
  %770 = vmatpush2.bf16.msra.mxu0 %v591
  %771 = vmatprep.subr.bf16.mxu0 %v589
  %772 = vmatpush2.bf16.msra.mxu0 %v588
  %773 = vmatprep.subr.bf16.mxu0 %v586
  %774 = vmatpush2.bf16.msra.mxu0 %v585
  %775 = vmatprep.subr.bf16.mxu0 %v583
  %776 = vmatpush2.bf16.msra.mxu0 %v582
  %777 = vmatprep.mubr.bf16.mxu0 %v185
  %778 = vmatmul.mubr.bf16.gmra.mxu0 %v184
  %v779 = vpop.f32.mrf.mxu0
  %v780 = vadd.f32 %v737, %v779
  %v781 = vpop.f32.mrf.mxu0
  %v782 = vadd.f32 %v739, %v781
  %v783 = vpop.f32.mrf.mxu0
  %v784 = vadd.f32 %v741, %v783
  %v785 = vpop.f32.mrf.mxu0
  %v786 = vadd.f32 %v743, %v785
  %787 = vdwg.mxu0
  %788 = vmatprep.subr.bf16.mxu0 0
  %789 = vmatpush1.bf16.msra.mxu0 %v533
  %790 = vmatprep.subr.bf16.mxu0 0
  %791 = vmatpush1.bf16.msra.mxu0 %v530
  %792 = vmatprep.subr.bf16.mxu0 0
  %793 = vmatpush1.bf16.msra.mxu0 %v527
  %794 = vmatprep.subr.bf16.mxu0 0
  %795 = vmatpush1.bf16.msra.mxu0 %v524
  %796 = vmatprep.subr.bf16.mxu0 0
  %797 = vmatpush1.bf16.msra.mxu0 %v521
  %798 = vmatprep.subr.bf16.mxu0 0
  %799 = vmatpush1.bf16.msra.mxu0 %v518
  %800 = vmatprep.subr.bf16.mxu0 0
  %801 = vmatpush1.bf16.msra.mxu0 %v515
  %802 = vmatprep.subr.bf16.mxu0 0
  %803 = vmatpush1.bf16.msra.mxu0 %v512
  %804 = vmatprep.subr.bf16.mxu0 0
  %805 = vmatpush2.bf16.msra.mxu0 %v557
  %806 = vmatprep.subr.bf16.mxu0 0
  %807 = vmatpush2.bf16.msra.mxu0 %v554
  %808 = vmatprep.subr.bf16.mxu0 0
  %809 = vmatpush2.bf16.msra.mxu0 %v551
  %810 = vmatprep.subr.bf16.mxu0 0
  %811 = vmatpush2.bf16.msra.mxu0 %v548
  %812 = vmatprep.subr.bf16.mxu0 0
  %813 = vmatpush2.bf16.msra.mxu0 %v545
  %814 = vmatprep.subr.bf16.mxu0 0
  %815 = vmatpush2.bf16.msra.mxu0 %v542
  %816 = vmatprep.subr.bf16.mxu0 0
  %817 = vmatpush2.bf16.msra.mxu0 %v539
  %818 = vmatprep.subr.bf16.mxu0 0
  %819 = vmatpush2.bf16.msra.mxu0 %v536
  %820 = vmatprep.mubr.bf16.mxu0 %v183
  %821 = vmatmul.mubr.bf16.gmra.mxu0 %v182
  %v822 = vpop.f32.mrf.mxu0
  %v823 = vadd.f32 %v166, %v822
  %v824 = vpop.f32.mrf.mxu0
  %v825 = vpop.f32.mrf.mxu0
  %v826 = vadd.f32 %v166, %v825
  %v827 = vpop.f32.mrf.mxu0
  %828 = vdwg.mxu0
  %829 = vmatprep.subr.bf16.mxu0 0
  %830 = vmatpush1.bf16.msra.mxu0 %v581
  %831 = vmatprep.subr.bf16.mxu0 0
  %832 = vmatpush1.bf16.msra.mxu0 %v578
  %833 = vmatprep.subr.bf16.mxu0 0
  %834 = vmatpush1.bf16.msra.mxu0 %v575
  %835 = vmatprep.subr.bf16.mxu0 0
  %836 = vmatpush1.bf16.msra.mxu0 %v572
  %837 = vmatprep.subr.bf16.mxu0 0
  %838 = vmatpush1.bf16.msra.mxu0 %v569
  %839 = vmatprep.subr.bf16.mxu0 0
  %840 = vmatpush1.bf16.msra.mxu0 %v566
  %841 = vmatprep.subr.bf16.mxu0 0
  %842 = vmatpush1.bf16.msra.mxu0 %v563
  %843 = vmatprep.subr.bf16.mxu0 0
  %844 = vmatpush1.bf16.msra.mxu0 %v560
  %845 = vmatprep.subr.bf16.mxu0 0
  %846 = vmatpush2.bf16.msra.mxu0 %v605
  %847 = vmatprep.subr.bf16.mxu0 0
  %848 = vmatpush2.bf16.msra.mxu0 %v602
  %849 = vmatprep.subr.bf16.mxu0 0
  %850 = vmatpush2.bf16.msra.mxu0 %v599
  %851 = vmatprep.subr.bf16.mxu0 0
  %852 = vmatpush2.bf16.msra.mxu0 %v596
  %853 = vmatprep.subr.bf16.mxu0 0
  %854 = vmatpush2.bf16.msra.mxu0 %v593
  %855 = vmatprep.subr.bf16.mxu0 0
  %856 = vmatpush2.bf16.msra.mxu0 %v590
  %857 = vmatprep.subr.bf16.mxu0 0
  %858 = vmatpush2.bf16.msra.mxu0 %v587
  %859 = vmatprep.subr.bf16.mxu0 0
  %860 = vmatpush2.bf16.msra.mxu0 %v584
  %861 = vmatprep.mubr.bf16.mxu0 %v185
  %862 = vmatmul.mubr.bf16.gmra.mxu0 %v184
  %v863 = vpop.f32.mrf.mxu0
  %v864 = vadd.f32 %v823, %v863
  %v865 = vpop.f32.mrf.mxu0
  %v866 = vpop.f32.mrf.mxu0
  %v867 = vadd.f32 %v826, %v866
  %v868 = vpop.f32.mrf.mxu0
  %869 = vdwg.mxu0
  %870 = vst [vmem:[#allocation2] sm:$0xff] %v780
  %871 = vst [vmem:[#allocation2 + $0x8] sm:$0xff] %v782
  %872 = vst [vmem:[#allocation2 + $0x10] sm:$0xff] %v864
  %873 = vst [vmem:[#allocation2 + $0x18] sm:$0xff] %v784
  %874 = vst [vmem:[#allocation2 + $0x20] sm:$0xff] %v786
  %875 = vst [vmem:[#allocation2 + $0x28] sm:$0xff] %v867
  %v876 = vlaneseq
  %v877 = vand.u32 %v876, 127
  %v878 = vadd.s32 %v877, 128
  %v879 = vadd.s32 %v877, 256
  %vm880 = vcmp.lt.s32.totalorder %v877, 0
  %v881 = vsub.s32 0, %v877
  %v882 = vsel %vm880, %v881, %v877
  %v883 = vshrl.u32 %v882, 7
  %v884 = vand.u32 %v882, 127
  %v885 = vsub.s32 0, %v884
  %v886 = vsel %vm880, %v885, %v884
  %vm887 = vcmp.lt.s32.totalorder %v878, 0
  %v888 = vsub.s32 0, %v878
  %v889 = vsel %vm887, %v888, %v878
  %v890 = vshrl.u32 %v889, 7
  %v891 = vand.u32 %v889, 127
  %v892 = vsub.s32 0, %v891
  %v893 = vsel %vm887, %v892, %v891
  %vm894 = vcmp.lt.s32.totalorder %v879, 0
  %v895 = vsub.s32 0, %v879
  %v896 = vsel %vm894, %v895, %v879
  %v897 = vshrl.u32 %v896, 7
  %v898 = vand.u32 %v896, 127
  %v899 = vsub.s32 0, %v898
  %v900 = vsel %vm894, %v899, %v898
  %vm901 = vcmp.ne.s32.totalorder %v886, 0
  %vm902 = vcmp.ne.s32.totalorder %v893, 0
  %vm903 = vcmp.ne.s32.totalorder %v900, 0
  %vm904 = vcmp.lt.s32.totalorder %v886, 0
  %vm905 = vcmp.lt.s32.totalorder %v893, 0
  %vm906 = vcmp.lt.s32.totalorder %v900, 0
  %vm907 = vmand %vm904, %vm901
  %vm908 = vmand %vm905, %vm902
  %vm909 = vmand %vm906, %vm903
  %v910 = vadd.s32 %v886, 128
  %v911 = vadd.s32 %v893, 128
  %v912 = vadd.s32 %v900, 128
  %v913 = vsel %vm907, %v910, %v886
  %v914 = vsel %vm908, %v911, %v893
  %v915 = vsel %vm909, %v912, %v900
  %vm916 = vcmp.lt.s32.totalorder %v913, 32
  %vm917 = vcmp.lt.s32.totalorder %v914, 32
  %vm918 = vcmp.lt.s32.totalorder %v915, 32
  %v919 = vld [vmem:[#allocation2] sm:$0x3]
  %v920 = vld [vmem:[#allocation2 + $0x8] sm:$0x3]
  %v921 = vld [vmem:[#allocation2 + $0x10] sm:$0x3]
  %v922 = vld [vmem:[#allocation2 + $0x18] sm:$0xc0]
  %v923 = vld [vmem:[#allocation2 + $0x20] sm:$0xc0]
  %v924 = vld [vmem:[#allocation2 + $0x28] sm:$0xc0]
  %v925 = vsel %vm916, 1, 0
  %v926 = vsel %vm917, 1, 0
  %v927 = vsel %vm918, 1, 0
  %vm928 = vcmp.eq.s32.totalorder %v925, 1
  %vm929 = vcmp.eq.s32.totalorder %v926, 1
  %vm930 = vcmp.eq.s32.totalorder %v927, 1
  %v934 = vrot.slane %v922, 6
  %v935 = vrot.slane %v923, 6
  %v936 = vrot.slane %v924, 6
  %v940 = vsel %vm928, %v919, %v934
  %v941 = vsel %vm929, %v920, %v935
  %v942 = vsel %vm930, %v921, %v936
  %v943 = vld [vmem:[#allocation2] sm:$0xc]
  %v944 = vld [vmem:[#allocation2 + $0x8] sm:$0xc]
  %v945 = vld [vmem:[#allocation2 + $0x10] sm:$0xc]
  %v946 = vld [vmem:[#allocation2 + $0x18] sm:$0x30]
  %v947 = vld [vmem:[#allocation2 + $0x20] sm:$0x30]
  %v948 = vld [vmem:[#allocation2 + $0x28] sm:$0x30]
  %v952 = vrot.slane %v946, 2
  %v953 = vrot.slane %v947, 2
  %v954 = vrot.slane %v948, 2
  %v958 = vsel %vm928, %v943, %v952
  %v959 = vsel %vm929, %v944, %v953
  %v960 = vsel %vm930, %v945, %v954
  %v961 = vld [vmem:[#allocation2] sm:$0x30]
  %v962 = vld [vmem:[#allocation2 + $0x8] sm:$0x30]
  %v963 = vld [vmem:[#allocation2 + $0x10] sm:$0x30]
  %v964 = vld [vmem:[#allocation2 + $0x18] sm:$0xc]
  %v965 = vld [vmem:[#allocation2 + $0x20] sm:$0xc]
  %v966 = vld [vmem:[#allocation2 + $0x28] sm:$0xc]
  %v970 = vrot.slane %v964, 6
  %v971 = vrot.slane %v965, 6
  %v972 = vrot.slane %v966, 6
  %v976 = vsel %vm928, %v961, %v970
  %v977 = vsel %vm929, %v962, %v971
  %v978 = vsel %vm930, %v963, %v972
  %v979 = vld [vmem:[#allocation2] sm:$0xc0]
  %v980 = vld [vmem:[#allocation2 + $0x8] sm:$0xc0]
  %v981 = vld [vmem:[#allocation2 + $0x10] sm:$0xc0]
  %v982 = vld [vmem:[#allocation2 + $0x18] sm:$0x3]
  %v983 = vld [vmem:[#allocation2 + $0x20] sm:$0x3]
  %v984 = vld [vmem:[#allocation2 + $0x28] sm:$0x3]
  %v988 = vrot.slane %v982, 2
  %v989 = vrot.slane %v983, 2
  %v990 = vrot.slane %v984, 2
  %v994 = vsel %vm928, %v979, %v988
  %v995 = vsel %vm929, %v980, %v989
  %v996 = vsel %vm930, %v981, %v990
  %v1000 = vrot.slane %v979, 6
  %v1001 = vrot.slane %v980, 6
  %v1002 = vrot.slane %v981, 6
  %v1006 = vsel %vm928, %v982, %v1000
  %v1007 = vsel %vm929, %v983, %v1001
  %v1008 = vsel %vm930, %v984, %v1002
  %v1012 = vrot.slane %v961, 2
  %v1013 = vrot.slane %v962, 2
  %v1014 = vrot.slane %v963, 2
  %v1018 = vsel %vm928, %v964, %v1012
  %v1019 = vsel %vm929, %v965, %v1013
  %v1020 = vsel %vm930, %v966, %v1014
  %v1024 = vrot.slane %v943, 6
  %v1025 = vrot.slane %v944, 6
  %v1026 = vrot.slane %v945, 6
  %v1030 = vsel %vm928, %v946, %v1024
  %v1031 = vsel %vm929, %v947, %v1025
  %v1032 = vsel %vm930, %v948, %v1026
  %v1036 = vrot.slane %v919, 2
  %v1037 = vrot.slane %v920, 2
  %v1038 = vrot.slane %v921, 2
  %v1042 = vsel %vm928, %v922, %v1036
  %v1043 = vsel %vm929, %v923, %v1037
  %v1044 = vsel %vm930, %v924, %v1038
  %v1045 = vld [vmem:[%s3] sm:$0xff]
  %v1046 = vld [vmem:[%s3 + $0x8] sm:$0xf]
  %v1047 = vld [vmem:[%s3 + $0xc] sm:$0xff]
  %v1048 = vld [vmem:[%s3 + $0x14] sm:$0xf]
  %v1049 = vld [vmem:[%s3 + $0x18] sm:$0xff]
  %v1050 = vld [vmem:[%s3 + $0x20] sm:$0xf]
  %v1051 = vld [vmem:[%s3 + $0x24] sm:$0xff]
  %v1052 = vld [vmem:[%s3 + $0x2c] sm:$0xf]
  %v1053 = vld [vmem:[%s3 + $0x30] sm:$0xff]
  %v1054 = vld [vmem:[%s3 + $0x38] sm:$0xf]
  %v1055 = vld [vmem:[%s3 + $0x3c] sm:$0xff]
  %v1056 = vld [vmem:[%s3 + $0x44] sm:$0xf]
  %v1057 = vld [vmem:[%s3 + $0x48] sm:$0xff]
  %v1058 = vld [vmem:[%s3 + $0x50] sm:$0xf]
  %v1059 = vld [vmem:[%s3 + $0x54] sm:$0xff]
  %v1060 = vld [vmem:[%s3 + $0x5c] sm:$0xf]
  %v1061 = vld [vmem:[%s3 + $0x60] sm:$0xff]
  %v1062 = vld [vmem:[%s3 + $0x68] sm:$0xf]
  %v1063 = vld [vmem:[%s3 + $0x6c] sm:$0xff]
  %v1064 = vld [vmem:[%s3 + $0x74] sm:$0xf]
  %v1065 = vld [vmem:[%s3 + $0x78] sm:$0xff]
  %v1066 = vld [vmem:[%s3 + $0x80] sm:$0xf]
  %v1067 = vld [vmem:[%s3 + $0x84] sm:$0xff]
  %v1068 = vld [vmem:[%s3 + $0x8c] sm:$0xf]
  %v1069 = vld [vmem:[%s3 + $0x90] sm:$0xff]
  %v1070 = vld [vmem:[%s3 + $0x98] sm:$0xf]
  %v1071 = vld [vmem:[%s3 + $0x9c] sm:$0xff]
  %v1072 = vld [vmem:[%s3 + $0xa4] sm:$0xf]
  %v1073 = vld [vmem:[%s3 + $0xa8] sm:$0xff]
  %v1074 = vld [vmem:[%s3 + $0xb0] sm:$0xf]
  %v1075 = vld [vmem:[%s3 + $0xb4] sm:$0xff]
  %v1076 = vld [vmem:[%s3 + $0xbc] sm:$0xf]
  %v1077 = vld [vmem:[%s4] sm:$0x7]
  %v1079 = vlaneseq
  %v1080 = vshrl.u32 %v1079, 7
  %v1081 = vsub.s32 0, %v1080
  %v1082 = vrot.slane %v1077, %v1081
  %v1083 = vlaneseq
  %v1084 = vshrl.u32 %v1083, 7
  %v1085 = vsub.s32 1, %v1084
  %v1086 = vrot.slane %v1077, %v1085
  %v1087 = vlaneseq
  %v1088 = vshrl.u32 %v1087, 7
  %v1089 = vsub.s32 2, %v1088
  %v1090 = vrot.slane %v1077, %v1089
  %v1126 = vunpack.c.l.b16 %v1045
  %v1127 = vunpack.c.h.b16 %v1045
  %v1128 = vunpack.c.l.b16 %v1046
  %v1129 = vunpack.c.l.b16 %v1047
  %v1130 = vunpack.c.h.b16 %v1047
  %v1131 = vunpack.c.l.b16 %v1048
  %v1132 = vunpack.c.l.b16 %v1049
  %v1133 = vunpack.c.h.b16 %v1049
  %v1134 = vunpack.c.l.b16 %v1050
  %v1135 = vunpack.c.l.b16 %v1051
  %v1136 = vunpack.c.h.b16 %v1051
  %v1137 = vunpack.c.l.b16 %v1052
  %v1138 = vunpack.c.l.b16 %v1053
  %v1139 = vunpack.c.h.b16 %v1053
  %v1140 = vunpack.c.l.b16 %v1054
  %v1141 = vunpack.c.l.b16 %v1055
  %v1142 = vunpack.c.h.b16 %v1055
  %v1143 = vunpack.c.l.b16 %v1056
  %v1144 = vunpack.c.l.b16 %v1057
  %v1145 = vunpack.c.h.b16 %v1057
  %v1146 = vunpack.c.l.b16 %v1058
  %v1147 = vunpack.c.l.b16 %v1059
  %v1148 = vunpack.c.h.b16 %v1059
  %v1149 = vunpack.c.l.b16 %v1060
  %v1150 = vunpack.c.l.b16 %v1061
  %v1151 = vunpack.c.h.b16 %v1061
  %v1152 = vunpack.c.l.b16 %v1062
  %v1153 = vunpack.c.l.b16 %v1063
  %v1154 = vunpack.c.h.b16 %v1063
  %v1155 = vunpack.c.l.b16 %v1064
  %v1156 = vunpack.c.l.b16 %v1065
  %v1157 = vunpack.c.h.b16 %v1065
  %v1158 = vunpack.c.l.b16 %v1066
  %v1159 = vunpack.c.l.b16 %v1067
  %v1160 = vunpack.c.h.b16 %v1067
  %v1161 = vunpack.c.l.b16 %v1068
  %v1162 = vunpack.c.l.b16 %v1069
  %v1163 = vunpack.c.h.b16 %v1069
  %v1164 = vunpack.c.l.b16 %v1070
  %v1165 = vunpack.c.l.b16 %v1071
  %v1166 = vunpack.c.h.b16 %v1071
  %v1167 = vunpack.c.l.b16 %v1072
  %v1168 = vunpack.c.l.b16 %v1073
  %v1169 = vunpack.c.h.b16 %v1073
  %v1170 = vunpack.c.l.b16 %v1074
  %v1171 = vunpack.c.l.b16 %v1075
  %v1172 = vunpack.c.h.b16 %v1075
  %v1173 = vunpack.c.l.b16 %v1076
  %v1174 = vpack.c.b16 %v1129, %v1126
  %v1175 = vpack.c.b16 %v1130, %v1127
  %v1176 = vpack.c.b16 %v1131, %v1128
  %v1177 = vpack.c.b16 %v1135, %v1132
  %v1178 = vpack.c.b16 %v1136, %v1133
  %v1179 = vpack.c.b16 %v1137, %v1134
  %v1180 = vpack.c.b16 %v1141, %v1138
  %v1181 = vpack.c.b16 %v1142, %v1139
  %v1182 = vpack.c.b16 %v1143, %v1140
  %v1183 = vpack.c.b16 %v1147, %v1144
  %v1184 = vpack.c.b16 %v1148, %v1145
  %v1185 = vpack.c.b16 %v1149, %v1146
  %v1186 = vpack.c.b16 %v1153, %v1150
  %v1187 = vpack.c.b16 %v1154, %v1151
  %v1188 = vpack.c.b16 %v1155, %v1152
  %v1189 = vpack.c.b16 %v1159, %v1156
  %v1190 = vpack.c.b16 %v1160, %v1157
  %v1191 = vpack.c.b16 %v1161, %v1158
  %v1192 = vpack.c.b16 %v1165, %v1162
  %v1193 = vpack.c.b16 %v1166, %v1163
  %v1194 = vpack.c.b16 %v1167, %v1164
  %v1195 = vpack.c.b16 %v1171, %v1168
  %v1196 = vpack.c.b16 %v1172, %v1169
  %v1197 = vpack.c.b16 %v1173, %v1170
  %1222 = vmatprep.subr.bf16.mxu0 %v1196
  %1223 = vmatpush1.bf16.msra.mxu0 %v1195
  %1224 = vmatprep.subr.bf16.mxu0 %v1193
  %1225 = vmatpush1.bf16.msra.mxu0 %v1192
  %1226 = vmatprep.subr.bf16.mxu0 %v1190
  %1227 = vmatpush1.bf16.msra.mxu0 %v1189
  %1228 = vmatprep.subr.bf16.mxu0 %v1187
  %1229 = vmatpush1.bf16.msra.mxu0 %v1186
  %1230 = vmatprep.subr.bf16.mxu0 %v1184
  %1231 = vmatpush1.bf16.msra.mxu0 %v1183
  %1232 = vmatprep.subr.bf16.mxu0 %v1181
  %1233 = vmatpush1.bf16.msra.mxu0 %v1180
  %1234 = vmatprep.subr.bf16.mxu0 %v1178
  %1235 = vmatpush1.bf16.msra.mxu0 %v1177
  %1236 = vmatprep.subr.bf16.mxu0 %v1175
  %1237 = vmatpush1.bf16.msra.mxu0 %v1174
  %1238 = vmatprep.subr.bf16.mxu0 0
  %1239 = vmatpush2.bf16.msra.mxu0 0
  %1240 = vmatprep.subr.bf16.mxu0 0
  %1241 = vmatpush2.bf16.msra.mxu0 0
  %1242 = vmatprep.subr.bf16.mxu0 0
  %1243 = vmatpush2.bf16.msra.mxu0 0
  %1244 = vmatprep.subr.bf16.mxu0 0
  %1245 = vmatpush2.bf16.msra.mxu0 0
  %1246 = vmatprep.subr.bf16.mxu0 0
  %1247 = vmatpush2.bf16.msra.mxu0 0
  %1248 = vmatprep.subr.bf16.mxu0 0
  %1249 = vmatpush2.bf16.msra.mxu0 0
  %1250 = vmatprep.subr.bf16.mxu0 0
  %1251 = vmatpush2.bf16.msra.mxu0 0
  %1252 = vmatprep.subr.bf16.mxu0 0
  %1253 = vmatpush2.bf16.msra.mxu0 0
  %1254 = vmatprep.mubr.bf16.mxu0 0
  %1255 = vmatmul.mubr.bf16.gmra.mxu0 0
  %v1256 = vpop.f32.mrf.mxu0
  %v1257 = vadd.f32 %v1082, %v1256
  %v1258 = vpop.f32.mrf.mxu0
  %v1259 = vadd.f32 %v1086, %v1258
  %v1260 = vpop.f32.mrf.mxu0
  %v1261 = vpop.f32.mrf.mxu0
  %1262 = vdwg.mxu0
  %1263 = vmatprep.subr.bf16.mxu0 0
  %1264 = vmatpush1.bf16.msra.mxu0 %v1197
  %1265 = vmatprep.subr.bf16.mxu0 0
  %1266 = vmatpush1.bf16.msra.mxu0 %v1194
  %1267 = vmatprep.subr.bf16.mxu0 0
  %1268 = vmatpush1.bf16.msra.mxu0 %v1191
  %1269 = vmatprep.subr.bf16.mxu0 0
  %1270 = vmatpush1.bf16.msra.mxu0 %v1188
  %1271 = vmatprep.subr.bf16.mxu0 0
  %1272 = vmatpush1.bf16.msra.mxu0 %v1185
  %1273 = vmatprep.subr.bf16.mxu0 0
  %1274 = vmatpush1.bf16.msra.mxu0 %v1182
  %1275 = vmatprep.subr.bf16.mxu0 0
  %1276 = vmatpush1.bf16.msra.mxu0 %v1179
  %1277 = vmatprep.subr.bf16.mxu0 0
  %1278 = vmatpush1.bf16.msra.mxu0 %v1176
  %1279 = vmatprep.subr.bf16.mxu0 0
  %1280 = vmatpush2.bf16.msra.mxu0 0
  %1281 = vmatprep.subr.bf16.mxu0 0
  %1282 = vmatpush2.bf16.msra.mxu0 0
  %1283 = vmatprep.subr.bf16.mxu0 0
  %1284 = vmatpush2.bf16.msra.mxu0 0
  %1285 = vmatprep.subr.bf16.mxu0 0
  %1286 = vmatpush2.bf16.msra.mxu0 0
  %1287 = vmatprep.subr.bf16.mxu0 0
  %1288 = vmatpush2.bf16.msra.mxu0 0
  %1289 = vmatprep.subr.bf16.mxu0 0
  %1290 = vmatpush2.bf16.msra.mxu0 0
  %1291 = vmatprep.subr.bf16.mxu0 0
  %1292 = vmatpush2.bf16.msra.mxu0 0
  %1293 = vmatprep.subr.bf16.mxu0 0
  %1294 = vmatpush2.bf16.msra.mxu0 0
  %1295 = vmatprep.mubr.bf16.mxu0 0
  %1296 = vmatmul.mubr.bf16.gmra.mxu0 0
  %v1297 = vpop.f32.mrf.mxu0
  %v1298 = vadd.f32 %v1090, %v1297
  %v1299 = vpop.f32.mrf.mxu0
  %v1300 = vpop.f32.mrf.mxu0
  %v1301 = vpop.f32.mrf.mxu0
  %1302 = vdwg.mxu0
  %v1303 = vadd.f32 %v940, %v1257
  %v1304 = vxor.u32 %v1303, 2147483648
  %v1305 = vmul.f32 %v1304, 1.442695
  %v1306 = vpow.pop %v1305
  %v1307 = vadd.f32 %v1306, 1.0
  %v1308 = vrcp.pop %v1307
  %v1309 = vmul.f32 1.0, %v1308
  %v1310 = vadd.f32 %v941, %v1259
  %v1311 = vxor.u32 %v1310, 2147483648
  %v1312 = vmul.f32 %v1311, 1.442695
  %v1313 = vpow.pop %v1312
  %v1314 = vadd.f32 %v1313, 1.0
  %v1315 = vrcp.pop %v1314
  %v1316 = vmul.f32 1.0, %v1315
  %v1317 = vmul.f32 %v1309, %v1298
  %v1318 = vadd.f32 %v942, %v1317
  %v1319 = vtanh.pop %v1318
  %v1320 = vsub.f32 1.0, %v1316
  %v1321 = vmul.f32 %v1320, %v1319
  %v1322 = vmul.f32 %v1316, 0.0
  %v1323 = vadd.f32 %v1321, %v1322
  %1324 = vst [vmem:[#allocation3] sm:$0x3] %v1323
  %v1325 = vpack.c.bf16 %v1323, %v1323
  %1326 = vmatprep.subr.bf16.mxu0 %v1196
  %1327 = vmatpush1.bf16.msra.mxu0 %v1195
  %1328 = vmatprep.subr.bf16.mxu0 %v1193
  %1329 = vmatpush1.bf16.msra.mxu0 %v1192
  %1330 = vmatprep.subr.bf16.mxu0 %v1190
  %1331 = vmatpush1.bf16.msra.mxu0 %v1189
  %1332 = vmatprep.subr.bf16.mxu0 %v1187
  %1333 = vmatpush1.bf16.msra.mxu0 %v1186
  %1334 = vmatprep.subr.bf16.mxu0 %v1184
  %1335 = vmatpush1.bf16.msra.mxu0 %v1183
  %1336 = vmatprep.subr.bf16.mxu0 %v1181
  %1337 = vmatpush1.bf16.msra.mxu0 %v1180
  %1338 = vmatprep.subr.bf16.mxu0 %v1178
  %1339 = vmatpush1.bf16.msra.mxu0 %v1177
  %1340 = vmatprep.subr.bf16.mxu0 %v1175
  %1341 = vmatpush1.bf16.msra.mxu0 %v1174
  %1342 = vmatprep.subr.bf16.mxu0 0
  %1343 = vmatpush2.bf16.msra.mxu0 0
  %1344 = vmatprep.subr.bf16.mxu0 0
  %1345 = vmatpush2.bf16.msra.mxu0 0
  %1346 = vmatprep.subr.bf16.mxu0 0
  %1347 = vmatpush2.bf16.msra.mxu0 0
  %1348 = vmatprep.subr.bf16.mxu0 0
  %1349 = vmatpush2.bf16.msra.mxu0 0
  %1350 = vmatprep.subr.bf16.mxu0 0
  %1351 = vmatpush2.bf16.msra.mxu0 0
  %1352 = vmatprep.subr.bf16.mxu0 0
  %1353 = vmatpush2.bf16.msra.mxu0 0
  %1354 = vmatprep.subr.bf16.mxu0 0
  %1355 = vmatpush2.bf16.msra.mxu0 0
  %1356 = vmatprep.subr.bf16.mxu0 0
  %1357 = vmatpush2.bf16.msra.mxu0 0
  %1358 = vmatprep.mubr.bf16.mxu0 0
  %1359 = vmatmul.mubr.bf16.gmra.mxu0 %v1325
  %v1360 = vpop.f32.mrf.mxu0
  %v1361 = vadd.f32 %v1082, %v1360
  %v1362 = vpop.f32.mrf.mxu0
  %v1363 = vadd.f32 %v1086, %v1362
  %v1364 = vpop.f32.mrf.mxu0
  %v1365 = vpop.f32.mrf.mxu0
  %1366 = vdwg.mxu0
  %1367 = vmatprep.subr.bf16.mxu0 0
  %1368 = vmatpush1.bf16.msra.mxu0 %v1197
  %1369 = vmatprep.subr.bf16.mxu0 0
  %1370 = vmatpush1.bf16.msra.mxu0 %v1194
  %1371 = vmatprep.subr.bf16.mxu0 0
  %1372 = vmatpush1.bf16.msra.mxu0 %v1191
  %1373 = vmatprep.subr.bf16.mxu0 0
  %1374 = vmatpush1.bf16.msra.mxu0 %v1188
  %1375 = vmatprep.subr.bf16.mxu0 0
  %1376 = vmatpush1.bf16.msra.mxu0 %v1185
  %1377 = vmatprep.subr.bf16.mxu0 0
  %1378 = vmatpush1.bf16.msra.mxu0 %v1182
  %1379 = vmatprep.subr.bf16.mxu0 0
  %1380 = vmatpush1.bf16.msra.mxu0 %v1179
  %1381 = vmatprep.subr.bf16.mxu0 0
  %1382 = vmatpush1.bf16.msra.mxu0 %v1176
  %1383 = vmatprep.subr.bf16.mxu0 0
  %1384 = vmatpush2.bf16.msra.mxu0 0
  %1385 = vmatprep.subr.bf16.mxu0 0
  %1386 = vmatpush2.bf16.msra.mxu0 0
  %1387 = vmatprep.subr.bf16.mxu0 0
  %1388 = vmatpush2.bf16.msra.mxu0 0
  %1389 = vmatprep.subr.bf16.mxu0 0
  %1390 = vmatpush2.bf16.msra.mxu0 0
  %1391 = vmatprep.subr.bf16.mxu0 0
  %1392 = vmatpush2.bf16.msra.mxu0 0
  %1393 = vmatprep.subr.bf16.mxu0 0
  %1394 = vmatpush2.bf16.msra.mxu0 0
  %1395 = vmatprep.subr.bf16.mxu0 0
  %1396 = vmatpush2.bf16.msra.mxu0 0
  %1397 = vmatprep.subr.bf16.mxu0 0
  %1398 = vmatpush2.bf16.msra.mxu0 0
  %1399 = vmatprep.mubr.bf16.mxu0 0
  %1400 = vmatmul.mubr.bf16.gmra.mxu0 %v1325
  %v1401 = vpop.f32.mrf.mxu0
  %v1402 = vadd.f32 %v1090, %v1401
  %v1403 = vpop.f32.mrf.mxu0
  %v1404 = vpop.f32.mrf.mxu0
  %v1405 = vpop.f32.mrf.mxu0
  %1406 = vdwg.mxu0
  %v1408 = vrot.slane %v1361, 6
  %v1410 = vadd.f32 %v958, %v1408
  %v1411 = vxor.u32 %v1410, 2147483648
  %v1412 = vmul.f32 %v1411, 1.442695
  %v1413 = vpow.pop %v1412
  %v1414 = vadd.f32 %v1413, 1.0
  %v1415 = vrcp.pop %v1414
  %v1416 = vmul.f32 1.0, %v1415
  %v1418 = vrot.slane %v1363, 6
  %v1420 = vadd.f32 %v959, %v1418
  %v1421 = vxor.u32 %v1420, 2147483648
  %v1422 = vmul.f32 %v1421, 1.442695
  %v1423 = vpow.pop %v1422
  %v1424 = vadd.f32 %v1423, 1.0
  %v1425 = vrcp.pop %v1424
  %v1426 = vmul.f32 1.0, %v1425
  %v1428 = vrot.slane %v1402, 6
  %v1430 = vmul.f32 %v1416, %v1428
  %v1431 = vadd.f32 %v960, %v1430
  %v1432 = vtanh.pop %v1431
  %v1433 = vsub.f32 1.0, %v1426
  %v1434 = vmul.f32 %v1433, %v1432
  %v1436 = vrot.slane %v1323, 6
  %v1438 = vmul.f32 %v1426, %v1436
  %v1439 = vadd.f32 %v1434, %v1438
  %1440 = vst [vmem:[#allocation3] sm:$0xc] %v1439
  %v1441 = vpack.c.bf16 %v1439, %v1439
  %v1443 = vrot.slane %v1441, 1
  %1445 = vmatprep.subr.bf16.mxu0 %v1196
  %1446 = vmatpush1.bf16.msra.mxu0 %v1195
  %1447 = vmatprep.subr.bf16.mxu0 %v1193
  %1448 = vmatpush1.bf16.msra.mxu0 %v1192
  %1449 = vmatprep.subr.bf16.mxu0 %v1190
  %1450 = vmatpush1.bf16.msra.mxu0 %v1189
  %1451 = vmatprep.subr.bf16.mxu0 %v1187
  %1452 = vmatpush1.bf16.msra.mxu0 %v1186
  %1453 = vmatprep.subr.bf16.mxu0 %v1184
  %1454 = vmatpush1.bf16.msra.mxu0 %v1183
  %1455 = vmatprep.subr.bf16.mxu0 %v1181
  %1456 = vmatpush1.bf16.msra.mxu0 %v1180
  %1457 = vmatprep.subr.bf16.mxu0 %v1178
  %1458 = vmatpush1.bf16.msra.mxu0 %v1177
  %1459 = vmatprep.subr.bf16.mxu0 %v1175
  %1460 = vmatpush1.bf16.msra.mxu0 %v1174
  %1461 = vmatprep.subr.bf16.mxu0 0
  %1462 = vmatpush2.bf16.msra.mxu0 0
  %1463 = vmatprep.subr.bf16.mxu0 0
  %1464 = vmatpush2.bf16.msra.mxu0 0
  %1465 = vmatprep.subr.bf16.mxu0 0
  %1466 = vmatpush2.bf16.msra.mxu0 0
  %1467 = vmatprep.subr.bf16.mxu0 0
  %1468 = vmatpush2.bf16.msra.mxu0 0
  %1469 = vmatprep.subr.bf16.mxu0 0
  %1470 = vmatpush2.bf16.msra.mxu0 0
  %1471 = vmatprep.subr.bf16.mxu0 0
  %1472 = vmatpush2.bf16.msra.mxu0 0
  %1473 = vmatprep.subr.bf16.mxu0 0
  %1474 = vmatpush2.bf16.msra.mxu0 0
  %1475 = vmatprep.subr.bf16.mxu0 0
  %1476 = vmatpush2.bf16.msra.mxu0 0
  %1477 = vmatprep.mubr.bf16.mxu0 0
  %1478 = vmatmul.mubr.bf16.gmra.mxu0 %v1443
  %v1479 = vpop.f32.mrf.mxu0
  %v1480 = vadd.f32 %v1082, %v1479
  %v1481 = vpop.f32.mrf.mxu0
  %v1482 = vadd.f32 %v1086, %v1481
  %v1483 = vpop.f32.mrf.mxu0
  %v1484 = vpop.f32.mrf.mxu0
  %1485 = vdwg.mxu0
  %1486 = vmatprep.subr.bf16.mxu0 0
  %1487 = vmatpush1.bf16.msra.mxu0 %v1197
  %1488 = vmatprep.subr.bf16.mxu0 0
  %1489 = vmatpush1.bf16.msra.mxu0 %v1194
  %1490 = vmatprep.subr.bf16.mxu0 0
  %1491 = vmatpush1.bf16.msra.mxu0 %v1191
  %1492 = vmatprep.subr.bf16.mxu0 0
  %1493 = vmatpush1.bf16.msra.mxu0 %v1188
  %1494 = vmatprep.subr.bf16.mxu0 0
  %1495 = vmatpush1.bf16.msra.mxu0 %v1185
  %1496 = vmatprep.subr.bf16.mxu0 0
  %1497 = vmatpush1.bf16.msra.mxu0 %v1182
  %1498 = vmatprep.subr.bf16.mxu0 0
  %1499 = vmatpush1.bf16.msra.mxu0 %v1179
  %1500 = vmatprep.subr.bf16.mxu0 0
  %1501 = vmatpush1.bf16.msra.mxu0 %v1176
  %1502 = vmatprep.subr.bf16.mxu0 0
  %1503 = vmatpush2.bf16.msra.mxu0 0
  %1504 = vmatprep.subr.bf16.mxu0 0
  %1505 = vmatpush2.bf16.msra.mxu0 0
  %1506 = vmatprep.subr.bf16.mxu0 0
  %1507 = vmatpush2.bf16.msra.mxu0 0
  %1508 = vmatprep.subr.bf16.mxu0 0
  %1509 = vmatpush2.bf16.msra.mxu0 0
  %1510 = vmatprep.subr.bf16.mxu0 0
  %1511 = vmatpush2.bf16.msra.mxu0 0
  %1512 = vmatprep.subr.bf16.mxu0 0
  %1513 = vmatpush2.bf16.msra.mxu0 0
  %1514 = vmatprep.subr.bf16.mxu0 0
  %1515 = vmatpush2.bf16.msra.mxu0 0
  %1516 = vmatprep.subr.bf16.mxu0 0
  %1517 = vmatpush2.bf16.msra.mxu0 0
  %1518 = vmatprep.mubr.bf16.mxu0 0
  %1519 = vmatmul.mubr.bf16.gmra.mxu0 %v1443
  %v1520 = vpop.f32.mrf.mxu0
  %v1521 = vadd.f32 %v1090, %v1520
  %v1522 = vpop.f32.mrf.mxu0
  %v1523 = vpop.f32.mrf.mxu0
  %v1524 = vpop.f32.mrf.mxu0
  %1525 = vdwg.mxu0
  %v1527 = vrot.slane %v1480, 4
  %v1529 = vadd.f32 %v976, %v1527
  %v1530 = vxor.u32 %v1529, 2147483648
  %v1531 = vmul.f32 %v1530, 1.442695
  %v1532 = vpow.pop %v1531
  %v1533 = vadd.f32 %v1532, 1.0
  %v1534 = vrcp.pop %v1533
  %v1535 = vmul.f32 1.0, %v1534
  %v1537 = vrot.slane %v1482, 4
  %v1539 = vadd.f32 %v977, %v1537
  %v1540 = vxor.u32 %v1539, 2147483648
  %v1541 = vmul.f32 %v1540, 1.442695
  %v1542 = vpow.pop %v1541
  %v1543 = vadd.f32 %v1542, 1.0
  %v1544 = vrcp.pop %v1543
  %v1545 = vmul.f32 1.0, %v1544
  %v1547 = vrot.slane %v1521, 4
  %v1549 = vmul.f32 %v1535, %v1547
  %v1550 = vadd.f32 %v978, %v1549
  %v1551 = vtanh.pop %v1550
  %v1552 = vsub.f32 1.0, %v1545
  %v1553 = vmul.f32 %v1552, %v1551
  %v1555 = vrot.slane %v1439, 6
  %v1557 = vmul.f32 %v1545, %v1555
  %v1558 = vadd.f32 %v1553, %v1557
  %1559 = vst [vmem:[#allocation3] sm:$0x30] %v1558
  %v1560 = vpack.c.bf16 %v1558, %v1558
  %v1562 = vrot.slane %v1560, 2
  %1564 = vmatprep.subr.bf16.mxu0 %v1196
  %1565 = vmatpush1.bf16.msra.mxu0 %v1195
  %1566 = vmatprep.subr.bf16.mxu0 %v1193
  %1567 = vmatpush1.bf16.msra.mxu0 %v1192
  %1568 = vmatprep.subr.bf16.mxu0 %v1190
  %1569 = vmatpush1.bf16.msra.mxu0 %v1189
  %1570 = vmatprep.subr.bf16.mxu0 %v1187
  %1571 = vmatpush1.bf16.msra.mxu0 %v1186
  %1572 = vmatprep.subr.bf16.mxu0 %v1184
  %1573 = vmatpush1.bf16.msra.mxu0 %v1183
  %1574 = vmatprep.subr.bf16.mxu0 %v1181
  %1575 = vmatpush1.bf16.msra.mxu0 %v1180
  %1576 = vmatprep.subr.bf16.mxu0 %v1178
  %1577 = vmatpush1.bf16.msra.mxu0 %v1177
  %1578 = vmatprep.subr.bf16.mxu0 %v1175
  %1579 = vmatpush1.bf16.msra.mxu0 %v1174
  %1580 = vmatprep.subr.bf16.mxu0 0
  %1581 = vmatpush2.bf16.msra.mxu0 0
  %1582 = vmatprep.subr.bf16.mxu0 0
  %1583 = vmatpush2.bf16.msra.mxu0 0
  %1584 = vmatprep.subr.bf16.mxu0 0
  %1585 = vmatpush2.bf16.msra.mxu0 0
  %1586 = vmatprep.subr.bf16.mxu0 0
  %1587 = vmatpush2.bf16.msra.mxu0 0
  %1588 = vmatprep.subr.bf16.mxu0 0
  %1589 = vmatpush2.bf16.msra.mxu0 0
  %1590 = vmatprep.subr.bf16.mxu0 0
  %1591 = vmatpush2.bf16.msra.mxu0 0
  %1592 = vmatprep.subr.bf16.mxu0 0
  %1593 = vmatpush2.bf16.msra.mxu0 0
  %1594 = vmatprep.subr.bf16.mxu0 0
  %1595 = vmatpush2.bf16.msra.mxu0 0
  %1596 = vmatprep.mubr.bf16.mxu0 0
  %1597 = vmatmul.mubr.bf16.gmra.mxu0 %v1562
  %v1598 = vpop.f32.mrf.mxu0
  %v1599 = vadd.f32 %v1082, %v1598
  %v1600 = vpop.f32.mrf.mxu0
  %v1601 = vadd.f32 %v1086, %v1600
  %v1602 = vpop.f32.mrf.mxu0
  %v1603 = vpop.f32.mrf.mxu0
  %1604 = vdwg.mxu0
  %1605 = vmatprep.subr.bf16.mxu0 0
  %1606 = vmatpush1.bf16.msra.mxu0 %v1197
  %1607 = vmatprep.subr.bf16.mxu0 0
  %1608 = vmatpush1.bf16.msra.mxu0 %v1194
  %1609 = vmatprep.subr.bf16.mxu0 0
  %1610 = vmatpush1.bf16.msra.mxu0 %v1191
  %1611 = vmatprep.subr.bf16.mxu0 0
  %1612 = vmatpush1.bf16.msra.mxu0 %v1188
  %1613 = vmatprep.subr.bf16.mxu0 0
  %1614 = vmatpush1.bf16.msra.mxu0 %v1185
  %1615 = vmatprep.subr.bf16.mxu0 0
  %1616 = vmatpush1.bf16.msra.mxu0 %v1182
  %1617 = vmatprep.subr.bf16.mxu0 0
  %1618 = vmatpush1.bf16.msra.mxu0 %v1179
  %1619 = vmatprep.subr.bf16.mxu0 0
  %1620 = vmatpush1.bf16.msra.mxu0 %v1176
  %1621 = vmatprep.subr.bf16.mxu0 0
  %1622 = vmatpush2.bf16.msra.mxu0 0
  %1623 = vmatprep.subr.bf16.mxu0 0
  %1624 = vmatpush2.bf16.msra.mxu0 0
  %1625 = vmatprep.subr.bf16.mxu0 0
  %1626 = vmatpush2.bf16.msra.mxu0 0
  %1627 = vmatprep.subr.bf16.mxu0 0
  %1628 = vmatpush2.bf16.msra.mxu0 0
  %1629 = vmatprep.subr.bf16.mxu0 0
  %1630 = vmatpush2.bf16.msra.mxu0 0
  %1631 = vmatprep.subr.bf16.mxu0 0
  %1632 = vmatpush2.bf16.msra.mxu0 0
  %1633 = vmatprep.subr.bf16.mxu0 0
  %1634 = vmatpush2.bf16.msra.mxu0 0
  %1635 = vmatprep.subr.bf16.mxu0 0
  %1636 = vmatpush2.bf16.msra.mxu0 0
  %1637 = vmatprep.mubr.bf16.mxu0 0
  %1638 = vmatmul.mubr.bf16.gmra.mxu0 %v1562
  %v1639 = vpop.f32.mrf.mxu0
  %v1640 = vadd.f32 %v1090, %v1639
  %v1641 = vpop.f32.mrf.mxu0
  %v1642 = vpop.f32.mrf.mxu0
  %v1643 = vpop.f32.mrf.mxu0
  %1644 = vdwg.mxu0
  %v1646 = vrot.slane %v1599, 2
  %v1648 = vadd.f32 %v994, %v1646
  %v1649 = vxor.u32 %v1648, 2147483648
  %v1650 = vmul.f32 %v1649, 1.442695
  %v1651 = vpow.pop %v1650
  %v1652 = vadd.f32 %v1651, 1.0
  %v1653 = vrcp.pop %v1652
  %v1654 = vmul.f32 1.0, %v1653
  %v1656 = vrot.slane %v1601, 2
  %v1658 = vadd.f32 %v995, %v1656
  %v1659 = vxor.u32 %v1658, 2147483648
  %v1660 = vmul.f32 %v1659, 1.442695
  %v1661 = vpow.pop %v1660
  %v1662 = vadd.f32 %v1661, 1.0
  %v1663 = vrcp.pop %v1662
  %v1664 = vmul.f32 1.0, %v1663
  %v1666 = vrot.slane %v1640, 2
  %v1668 = vmul.f32 %v1654, %v1666
  %v1669 = vadd.f32 %v996, %v1668
  %v1670 = vtanh.pop %v1669
  %v1671 = vsub.f32 1.0, %v1664
  %v1672 = vmul.f32 %v1671, %v1670
  %v1674 = vrot.slane %v1558, 6
  %v1676 = vmul.f32 %v1664, %v1674
  %v1677 = vadd.f32 %v1672, %v1676
  %1678 = vst [vmem:[#allocation3] sm:$0xc0] %v1677
  %v1679 = vpack.c.bf16 %v1677, %v1677
  %v1681 = vrot.slane %v1679, 3
  %1683 = vmatprep.subr.bf16.mxu0 %v1196
  %1684 = vmatpush1.bf16.msra.mxu0 %v1195
  %1685 = vmatprep.subr.bf16.mxu0 %v1193
  %1686 = vmatpush1.bf16.msra.mxu0 %v1192
  %1687 = vmatprep.subr.bf16.mxu0 %v1190
  %1688 = vmatpush1.bf16.msra.mxu0 %v1189
  %1689 = vmatprep.subr.bf16.mxu0 %v1187
  %1690 = vmatpush1.bf16.msra.mxu0 %v1186
  %1691 = vmatprep.subr.bf16.mxu0 %v1184
  %1692 = vmatpush1.bf16.msra.mxu0 %v1183
  %1693 = vmatprep.subr.bf16.mxu0 %v1181
  %1694 = vmatpush1.bf16.msra.mxu0 %v1180
  %1695 = vmatprep.subr.bf16.mxu0 %v1178
  %1696 = vmatpush1.bf16.msra.mxu0 %v1177
  %1697 = vmatprep.subr.bf16.mxu0 %v1175
  %1698 = vmatpush1.bf16.msra.mxu0 %v1174
  %1699 = vmatprep.subr.bf16.mxu0 0
  %1700 = vmatpush2.bf16.msra.mxu0 0
  %1701 = vmatprep.subr.bf16.mxu0 0
  %1702 = vmatpush2.bf16.msra.mxu0 0
  %1703 = vmatprep.subr.bf16.mxu0 0
  %1704 = vmatpush2.bf16.msra.mxu0 0
  %1705 = vmatprep.subr.bf16.mxu0 0
  %1706 = vmatpush2.bf16.msra.mxu0 0
  %1707 = vmatprep.subr.bf16.mxu0 0
  %1708 = vmatpush2.bf16.msra.mxu0 0
  %1709 = vmatprep.subr.bf16.mxu0 0
  %1710 = vmatpush2.bf16.msra.mxu0 0
  %1711 = vmatprep.subr.bf16.mxu0 0
  %1712 = vmatpush2.bf16.msra.mxu0 0
  %1713 = vmatprep.subr.bf16.mxu0 0
  %1714 = vmatpush2.bf16.msra.mxu0 0
  %1715 = vmatprep.mubr.bf16.mxu0 0
  %1716 = vmatmul.mubr.bf16.gmra.mxu0 %v1681
  %v1717 = vpop.f32.mrf.mxu0
  %v1718 = vadd.f32 %v1082, %v1717
  %v1719 = vpop.f32.mrf.mxu0
  %v1720 = vadd.f32 %v1086, %v1719
  %v1721 = vpop.f32.mrf.mxu0
  %v1722 = vpop.f32.mrf.mxu0
  %1723 = vdwg.mxu0
  %1724 = vmatprep.subr.bf16.mxu0 0
  %1725 = vmatpush1.bf16.msra.mxu0 %v1197
  %1726 = vmatprep.subr.bf16.mxu0 0
  %1727 = vmatpush1.bf16.msra.mxu0 %v1194
  %1728 = vmatprep.subr.bf16.mxu0 0
  %1729 = vmatpush1.bf16.msra.mxu0 %v1191
  %1730 = vmatprep.subr.bf16.mxu0 0
  %1731 = vmatpush1.bf16.msra.mxu0 %v1188
  %1732 = vmatprep.subr.bf16.mxu0 0
  %1733 = vmatpush1.bf16.msra.mxu0 %v1185
  %1734 = vmatprep.subr.bf16.mxu0 0
  %1735 = vmatpush1.bf16.msra.mxu0 %v1182
  %1736 = vmatprep.subr.bf16.mxu0 0
  %1737 = vmatpush1.bf16.msra.mxu0 %v1179
  %1738 = vmatprep.subr.bf16.mxu0 0
  %1739 = vmatpush1.bf16.msra.mxu0 %v1176
  %1740 = vmatprep.subr.bf16.mxu0 0
  %1741 = vmatpush2.bf16.msra.mxu0 0
  %1742 = vmatprep.subr.bf16.mxu0 0
  %1743 = vmatpush2.bf16.msra.mxu0 0
  %1744 = vmatprep.subr.bf16.mxu0 0
  %1745 = vmatpush2.bf16.msra.mxu0 0
  %1746 = vmatprep.subr.bf16.mxu0 0
  %1747 = vmatpush2.bf16.msra.mxu0 0
  %1748 = vmatprep.subr.bf16.mxu0 0
  %1749 = vmatpush2.bf16.msra.mxu0 0
  %1750 = vmatprep.subr.bf16.mxu0 0
  %1751 = vmatpush2.bf16.msra.mxu0 0
  %1752 = vmatprep.subr.bf16.mxu0 0
  %1753 = vmatpush2.bf16.msra.mxu0 0
  %1754 = vmatprep.subr.bf16.mxu0 0
  %1755 = vmatpush2.bf16.msra.mxu0 0
  %1756 = vmatprep.mubr.bf16.mxu0 0
  %1757 = vmatmul.mubr.bf16.gmra.mxu0 %v1681
  %v1758 = vpop.f32.mrf.mxu0
  %v1759 = vadd.f32 %v1090, %v1758
  %v1760 = vpop.f32.mrf.mxu0
  %v1761 = vpop.f32.mrf.mxu0
  %v1762 = vpop.f32.mrf.mxu0
  %1763 = vdwg.mxu0
  %v1764 = vadd.f32 %v1006, %v1718
  %v1765 = vxor.u32 %v1764, 2147483648
  %v1766 = vmul.f32 %v1765, 1.442695
  %v1767 = vpow.pop %v1766
  %v1768 = vadd.f32 %v1767, 1.0
  %v1769 = vrcp.pop %v1768
  %v1770 = vmul.f32 1.0, %v1769
  %v1771 = vadd.f32 %v1007, %v1720
  %v1772 = vxor.u32 %v1771, 2147483648
  %v1773 = vmul.f32 %v1772, 1.442695
  %v1774 = vpow.pop %v1773
  %v1775 = vadd.f32 %v1774, 1.0
  %v1776 = vrcp.pop %v1775
  %v1777 = vmul.f32 1.0, %v1776
  %v1778 = vmul.f32 %v1770, %v1759
  %v1779 = vadd.f32 %v1008, %v1778
  %v1780 = vtanh.pop %v1779
  %v1781 = vsub.f32 1.0, %v1777
  %v1782 = vmul.f32 %v1781, %v1780
  %v1784 = vrot.slane %v1677, 6
  %v1786 = vmul.f32 %v1777, %v1784
  %v1787 = vadd.f32 %v1782, %v1786
  %1788 = vst [vmem:[#allocation3 + $0x8] sm:$0x3] %v1787
  %v1789 = vpack.c.bf16 %v1787, %v1787
  %1790 = vmatprep.subr.bf16.mxu0 %v1196
  %1791 = vmatpush1.bf16.msra.mxu0 %v1195
  %1792 = vmatprep.subr.bf16.mxu0 %v1193
  %1793 = vmatpush1.bf16.msra.mxu0 %v1192
  %1794 = vmatprep.subr.bf16.mxu0 %v1190
  %1795 = vmatpush1.bf16.msra.mxu0 %v1189
  %1796 = vmatprep.subr.bf16.mxu0 %v1187
  %1797 = vmatpush1.bf16.msra.mxu0 %v1186
  %1798 = vmatprep.subr.bf16.mxu0 %v1184
  %1799 = vmatpush1.bf16.msra.mxu0 %v1183
  %1800 = vmatprep.subr.bf16.mxu0 %v1181
  %1801 = vmatpush1.bf16.msra.mxu0 %v1180
  %1802 = vmatprep.subr.bf16.mxu0 %v1178
  %1803 = vmatpush1.bf16.msra.mxu0 %v1177
  %1804 = vmatprep.subr.bf16.mxu0 %v1175
  %1805 = vmatpush1.bf16.msra.mxu0 %v1174
  %1806 = vmatprep.subr.bf16.mxu0 0
  %1807 = vmatpush2.bf16.msra.mxu0 0
  %1808 = vmatprep.subr.bf16.mxu0 0
  %1809 = vmatpush2.bf16.msra.mxu0 0
  %1810 = vmatprep.subr.bf16.mxu0 0
  %1811 = vmatpush2.bf16.msra.mxu0 0
  %1812 = vmatprep.subr.bf16.mxu0 0
  %1813 = vmatpush2.bf16.msra.mxu0 0
  %1814 = vmatprep.subr.bf16.mxu0 0
  %1815 = vmatpush2.bf16.msra.mxu0 0
  %1816 = vmatprep.subr.bf16.mxu0 0
  %1817 = vmatpush2.bf16.msra.mxu0 0
  %1818 = vmatprep.subr.bf16.mxu0 0
  %1819 = vmatpush2.bf16.msra.mxu0 0
  %1820 = vmatprep.subr.bf16.mxu0 0
  %1821 = vmatpush2.bf16.msra.mxu0 0
  %1822 = vmatprep.mubr.bf16.mxu0 0
  %1823 = vmatmul.mubr.bf16.gmra.mxu0 %v1789
  %v1824 = vpop.f32.mrf.mxu0
  %v1825 = vadd.f32 %v1082, %v1824
  %v1826 = vpop.f32.mrf.mxu0
  %v1827 = vadd.f32 %v1086, %v1826
  %v1828 = vpop.f32.mrf.mxu0
  %v1829 = vpop.f32.mrf.mxu0
  %1830 = vdwg.mxu0
  %1831 = vmatprep.subr.bf16.mxu0 0
  %1832 = vmatpush1.bf16.msra.mxu0 %v1197
  %1833 = vmatprep.subr.bf16.mxu0 0
  %1834 = vmatpush1.bf16.msra.mxu0 %v1194
  %1835 = vmatprep.subr.bf16.mxu0 0
  %1836 = vmatpush1.bf16.msra.mxu0 %v1191
  %1837 = vmatprep.subr.bf16.mxu0 0
  %1838 = vmatpush1.bf16.msra.mxu0 %v1188
  %1839 = vmatprep.subr.bf16.mxu0 0
  %1840 = vmatpush1.bf16.msra.mxu0 %v1185
  %1841 = vmatprep.subr.bf16.mxu0 0
  %1842 = vmatpush1.bf16.msra.mxu0 %v1182
  %1843 = vmatprep.subr.bf16.mxu0 0
  %1844 = vmatpush1.bf16.msra.mxu0 %v1179
  %1845 = vmatprep.subr.bf16.mxu0 0
  %1846 = vmatpush1.bf16.msra.mxu0 %v1176
  %1847 = vmatprep.subr.bf16.mxu0 0
  %1848 = vmatpush2.bf16.msra.mxu0 0
  %1849 = vmatprep.subr.bf16.mxu0 0
  %1850 = vmatpush2.bf16.msra.mxu0 0
  %1851 = vmatprep.subr.bf16.mxu0 0
  %1852 = vmatpush2.bf16.msra.mxu0 0
  %1853 = vmatprep.subr.bf16.mxu0 0
  %1854 = vmatpush2.bf16.msra.mxu0 0
  %1855 = vmatprep.subr.bf16.mxu0 0
  %1856 = vmatpush2.bf16.msra.mxu0 0
  %1857 = vmatprep.subr.bf16.mxu0 0
  %1858 = vmatpush2.bf16.msra.mxu0 0
  %1859 = vmatprep.subr.bf16.mxu0 0
  %1860 = vmatpush2.bf16.msra.mxu0 0
  %1861 = vmatprep.subr.bf16.mxu0 0
  %1862 = vmatpush2.bf16.msra.mxu0 0
  %1863 = vmatprep.mubr.bf16.mxu0 0
  %1864 = vmatmul.mubr.bf16.gmra.mxu0 %v1789
  %v1865 = vpop.f32.mrf.mxu0
  %v1866 = vadd.f32 %v1090, %v1865
  %v1867 = vpop.f32.mrf.mxu0
  %v1868 = vpop.f32.mrf.mxu0
  %v1869 = vpop.f32.mrf.mxu0
  %1870 = vdwg.mxu0
  %v1872 = vrot.slane %v1825, 6
  %v1874 = vadd.f32 %v1018, %v1872
  %v1875 = vxor.u32 %v1874, 2147483648
  %v1876 = vmul.f32 %v1875, 1.442695
  %v1877 = vpow.pop %v1876
  %v1878 = vadd.f32 %v1877, 1.0
  %v1879 = vrcp.pop %v1878
  %v1880 = vmul.f32 1.0, %v1879
  %v1882 = vrot.slane %v1827, 6
  %v1884 = vadd.f32 %v1019, %v1882
  %v1885 = vxor.u32 %v1884, 2147483648
  %v1886 = vmul.f32 %v1885, 1.442695
  %v1887 = vpow.pop %v1886
  %v1888 = vadd.f32 %v1887, 1.0
  %v1889 = vrcp.pop %v1888
  %v1890 = vmul.f32 1.0, %v1889
  %v1892 = vrot.slane %v1866, 6
  %v1894 = vmul.f32 %v1880, %v1892
  %v1895 = vadd.f32 %v1020, %v1894
  %v1896 = vtanh.pop %v1895
  %v1897 = vsub.f32 1.0, %v1890
  %v1898 = vmul.f32 %v1897, %v1896
  %v1900 = vrot.slane %v1787, 6
  %v1902 = vmul.f32 %v1890, %v1900
  %v1903 = vadd.f32 %v1898, %v1902
  %1904 = vst [vmem:[#allocation3 + $0x8] sm:$0xc] %v1903
  %v1905 = vpack.c.bf16 %v1903, %v1903
  %v1907 = vrot.slane %v1905, 1
  %1909 = vmatprep.subr.bf16.mxu0 %v1196
  %1910 = vmatpush1.bf16.msra.mxu0 %v1195
  %1911 = vmatprep.subr.bf16.mxu0 %v1193
  %1912 = vmatpush1.bf16.msra.mxu0 %v1192
  %1913 = vmatprep.subr.bf16.mxu0 %v1190
  %1914 = vmatpush1.bf16.msra.mxu0 %v1189
  %1915 = vmatprep.subr.bf16.mxu0 %v1187
  %1916 = vmatpush1.bf16.msra.mxu0 %v1186
  %1917 = vmatprep.subr.bf16.mxu0 %v1184
  %1918 = vmatpush1.bf16.msra.mxu0 %v1183
  %1919 = vmatprep.subr.bf16.mxu0 %v1181
  %1920 = vmatpush1.bf16.msra.mxu0 %v1180
  %1921 = vmatprep.subr.bf16.mxu0 %v1178
  %1922 = vmatpush1.bf16.msra.mxu0 %v1177
  %1923 = vmatprep.subr.bf16.mxu0 %v1175
  %1924 = vmatpush1.bf16.msra.mxu0 %v1174
  %1925 = vmatprep.subr.bf16.mxu0 0
  %1926 = vmatpush2.bf16.msra.mxu0 0
  %1927 = vmatprep.subr.bf16.mxu0 0
  %1928 = vmatpush2.bf16.msra.mxu0 0
  %1929 = vmatprep.subr.bf16.mxu0 0
  %1930 = vmatpush2.bf16.msra.mxu0 0
  %1931 = vmatprep.subr.bf16.mxu0 0
  %1932 = vmatpush2.bf16.msra.mxu0 0
  %1933 = vmatprep.subr.bf16.mxu0 0
  %1934 = vmatpush2.bf16.msra.mxu0 0
  %1935 = vmatprep.subr.bf16.mxu0 0
  %1936 = vmatpush2.bf16.msra.mxu0 0
  %1937 = vmatprep.subr.bf16.mxu0 0
  %1938 = vmatpush2.bf16.msra.mxu0 0
  %1939 = vmatprep.subr.bf16.mxu0 0
  %1940 = vmatpush2.bf16.msra.mxu0 0
  %1941 = vmatprep.mubr.bf16.mxu0 0
  %1942 = vmatmul.mubr.bf16.gmra.mxu0 %v1907
  %v1943 = vpop.f32.mrf.mxu0
  %v1944 = vadd.f32 %v1082, %v1943
  %v1945 = vpop.f32.mrf.mxu0
  %v1946 = vadd.f32 %v1086, %v1945
  %v1947 = vpop.f32.mrf.mxu0
  %v1948 = vpop.f32.mrf.mxu0
  %1949 = vdwg.mxu0
  %1950 = vmatprep.subr.bf16.mxu0 0
  %1951 = vmatpush1.bf16.msra.mxu0 %v1197
  %1952 = vmatprep.subr.bf16.mxu0 0
  %1953 = vmatpush1.bf16.msra.mxu0 %v1194
  %1954 = vmatprep.subr.bf16.mxu0 0
  %1955 = vmatpush1.bf16.msra.mxu0 %v1191
  %1956 = vmatprep.subr.bf16.mxu0 0
  %1957 = vmatpush1.bf16.msra.mxu0 %v1188
  %1958 = vmatprep.subr.bf16.mxu0 0
  %1959 = vmatpush1.bf16.msra.mxu0 %v1185
  %1960 = vmatprep.subr.bf16.mxu0 0
  %1961 = vmatpush1.bf16.msra.mxu0 %v1182
  %1962 = vmatprep.subr.bf16.mxu0 0
  %1963 = vmatpush1.bf16.msra.mxu0 %v1179
  %1964 = vmatprep.subr.bf16.mxu0 0
  %1965 = vmatpush1.bf16.msra.mxu0 %v1176
  %1966 = vmatprep.subr.bf16.mxu0 0
  %1967 = vmatpush2.bf16.msra.mxu0 0
  %1968 = vmatprep.subr.bf16.mxu0 0
  %1969 = vmatpush2.bf16.msra.mxu0 0
  %1970 = vmatprep.subr.bf16.mxu0 0
  %1971 = vmatpush2.bf16.msra.mxu0 0
  %1972 = vmatprep.subr.bf16.mxu0 0
  %1973 = vmatpush2.bf16.msra.mxu0 0
  %1974 = vmatprep.subr.bf16.mxu0 0
  %1975 = vmatpush2.bf16.msra.mxu0 0
  %1976 = vmatprep.subr.bf16.mxu0 0
  %1977 = vmatpush2.bf16.msra.mxu0 0
  %1978 = vmatprep.subr.bf16.mxu0 0
  %1979 = vmatpush2.bf16.msra.mxu0 0
  %1980 = vmatprep.subr.bf16.mxu0 0
  %1981 = vmatpush2.bf16.msra.mxu0 0
  %1982 = vmatprep.mubr.bf16.mxu0 0
  %1983 = vmatmul.mubr.bf16.gmra.mxu0 %v1907
  %v1984 = vpop.f32.mrf.mxu0
  %v1985 = vadd.f32 %v1090, %v1984
  %v1986 = vpop.f32.mrf.mxu0
  %v1987 = vpop.f32.mrf.mxu0
  %v1988 = vpop.f32.mrf.mxu0
  %1989 = vdwg.mxu0
  %v1991 = vrot.slane %v1944, 4
  %v1993 = vadd.f32 %v1030, %v1991
  %v1994 = vxor.u32 %v1993, 2147483648
  %v1995 = vmul.f32 %v1994, 1.442695
  %v1996 = vpow.pop %v1995
  %v1997 = vadd.f32 %v1996, 1.0
  %v1998 = vrcp.pop %v1997
  %v1999 = vmul.f32 1.0, %v1998
  %v2001 = vrot.slane %v1946, 4
  %v2003 = vadd.f32 %v1031, %v2001
  %v2004 = vxor.u32 %v2003, 2147483648
  %v2005 = vmul.f32 %v2004, 1.442695
  %v2006 = vpow.pop %v2005
  %v2007 = vadd.f32 %v2006, 1.0
  %v2008 = vrcp.pop %v2007
  %v2009 = vmul.f32 1.0, %v2008
  %v2011 = vrot.slane %v1985, 4
  %v2013 = vmul.f32 %v1999, %v2011
  %v2014 = vadd.f32 %v1032, %v2013
  %v2015 = vtanh.pop %v2014
  %v2016 = vsub.f32 1.0, %v2009
  %v2017 = vmul.f32 %v2016, %v2015
  %v2019 = vrot.slane %v1903, 6
  %v2021 = vmul.f32 %v2009, %v2019
  %v2022 = vadd.f32 %v2017, %v2021
  %2023 = vst [vmem:[#allocation3 + $0x8] sm:$0x30] %v2022
  %v2024 = vpack.c.bf16 %v2022, %v2022
  %v2026 = vrot.slane %v2024, 2
  %2028 = vmatprep.subr.bf16.mxu0 %v1196
  %2029 = vmatpush1.bf16.msra.mxu0 %v1195
  %2030 = vmatprep.subr.bf16.mxu0 %v1193
  %2031 = vmatpush1.bf16.msra.mxu0 %v1192
  %2032 = vmatprep.subr.bf16.mxu0 %v1190
  %2033 = vmatpush1.bf16.msra.mxu0 %v1189
  %2034 = vmatprep.subr.bf16.mxu0 %v1187
  %2035 = vmatpush1.bf16.msra.mxu0 %v1186
  %2036 = vmatprep.subr.bf16.mxu0 %v1184
  %2037 = vmatpush1.bf16.msra.mxu0 %v1183
  %2038 = vmatprep.subr.bf16.mxu0 %v1181
  %2039 = vmatpush1.bf16.msra.mxu0 %v1180
  %2040 = vmatprep.subr.bf16.mxu0 %v1178
  %2041 = vmatpush1.bf16.msra.mxu0 %v1177
  %2042 = vmatprep.subr.bf16.mxu0 %v1175
  %2043 = vmatpush1.bf16.msra.mxu0 %v1174
  %2044 = vmatprep.subr.bf16.mxu0 0
  %2045 = vmatpush2.bf16.msra.mxu0 0
  %2046 = vmatprep.subr.bf16.mxu0 0
  %2047 = vmatpush2.bf16.msra.mxu0 0
  %2048 = vmatprep.subr.bf16.mxu0 0
  %2049 = vmatpush2.bf16.msra.mxu0 0
  %2050 = vmatprep.subr.bf16.mxu0 0
  %2051 = vmatpush2.bf16.msra.mxu0 0
  %2052 = vmatprep.subr.bf16.mxu0 0
  %2053 = vmatpush2.bf16.msra.mxu0 0
  %2054 = vmatprep.subr.bf16.mxu0 0
  %2055 = vmatpush2.bf16.msra.mxu0 0
  %2056 = vmatprep.subr.bf16.mxu0 0
  %2057 = vmatpush2.bf16.msra.mxu0 0
  %2058 = vmatprep.subr.bf16.mxu0 0
  %2059 = vmatpush2.bf16.msra.mxu0 0
  %2060 = vmatprep.mubr.bf16.mxu0 0
  %2061 = vmatmul.mubr.bf16.gmra.mxu0 %v2026
  %v2062 = vpop.f32.mrf.mxu0
  %v2063 = vadd.f32 %v1082, %v2062
  %v2064 = vpop.f32.mrf.mxu0
  %v2065 = vadd.f32 %v1086, %v2064
  %v2066 = vpop.f32.mrf.mxu0
  %v2067 = vpop.f32.mrf.mxu0
  %2068 = vdwg.mxu0
  %2069 = vmatprep.subr.bf16.mxu0 0
  %2070 = vmatpush1.bf16.msra.mxu0 %v1197
  %2071 = vmatprep.subr.bf16.mxu0 0
  %2072 = vmatpush1.bf16.msra.mxu0 %v1194
  %2073 = vmatprep.subr.bf16.mxu0 0
  %2074 = vmatpush1.bf16.msra.mxu0 %v1191
  %2075 = vmatprep.subr.bf16.mxu0 0
  %2076 = vmatpush1.bf16.msra.mxu0 %v1188
  %2077 = vmatprep.subr.bf16.mxu0 0
  %2078 = vmatpush1.bf16.msra.mxu0 %v1185
  %2079 = vmatprep.subr.bf16.mxu0 0
  %2080 = vmatpush1.bf16.msra.mxu0 %v1182
  %2081 = vmatprep.subr.bf16.mxu0 0
  %2082 = vmatpush1.bf16.msra.mxu0 %v1179
  %2083 = vmatprep.subr.bf16.mxu0 0
  %2084 = vmatpush1.bf16.msra.mxu0 %v1176
  %2085 = vmatprep.subr.bf16.mxu0 0
  %2086 = vmatpush2.bf16.msra.mxu0 0
  %2087 = vmatprep.subr.bf16.mxu0 0
  %2088 = vmatpush2.bf16.msra.mxu0 0
  %2089 = vmatprep.subr.bf16.mxu0 0
  %2090 = vmatpush2.bf16.msra.mxu0 0
  %2091 = vmatprep.subr.bf16.mxu0 0
  %2092 = vmatpush2.bf16.msra.mxu0 0
  %2093 = vmatprep.subr.bf16.mxu0 0
  %2094 = vmatpush2.bf16.msra.mxu0 0
  %2095 = vmatprep.subr.bf16.mxu0 0
  %2096 = vmatpush2.bf16.msra.mxu0 0
  %2097 = vmatprep.subr.bf16.mxu0 0
  %2098 = vmatpush2.bf16.msra.mxu0 0
  %2099 = vmatprep.subr.bf16.mxu0 0
  %2100 = vmatpush2.bf16.msra.mxu0 0
  %2101 = vmatprep.mubr.bf16.mxu0 0
  %2102 = vmatmul.mubr.bf16.gmra.mxu0 %v2026
  %v2103 = vpop.f32.mrf.mxu0
  %v2104 = vadd.f32 %v1090, %v2103
  %v2105 = vpop.f32.mrf.mxu0
  %v2106 = vpop.f32.mrf.mxu0
  %v2107 = vpop.f32.mrf.mxu0
  %2108 = vdwg.mxu0
  %v2110 = vrot.slane %v2063, 2
  %v2112 = vadd.f32 %v1042, %v2110
  %v2113 = vxor.u32 %v2112, 2147483648
  %v2114 = vmul.f32 %v2113, 1.442695
  %v2115 = vpow.pop %v2114
  %v2116 = vadd.f32 %v2115, 1.0
  %v2117 = vrcp.pop %v2116
  %v2118 = vmul.f32 1.0, %v2117
  %v2120 = vrot.slane %v2065, 2
  %v2122 = vadd.f32 %v1043, %v2120
  %v2123 = vxor.u32 %v2122, 2147483648
  %v2124 = vmul.f32 %v2123, 1.442695
  %v2125 = vpow.pop %v2124
  %v2126 = vadd.f32 %v2125, 1.0
  %v2127 = vrcp.pop %v2126
  %v2128 = vmul.f32 1.0, %v2127
  %v2130 = vrot.slane %v2104, 2
  %v2132 = vmul.f32 %v2118, %v2130
  %v2133 = vadd.f32 %v1044, %v2132
  %v2134 = vtanh.pop %v2133
  %v2135 = vsub.f32 1.0, %v2128
  %v2136 = vmul.f32 %v2135, %v2134
  %v2138 = vrot.slane %v2022, 6
  %v2140 = vmul.f32 %v2128, %v2138
  %v2141 = vadd.f32 %v2136, %v2140
  %2142 = vst [vmem:[#allocation3 + $0x8] sm:$0xc0] %v2141
  %vm2143 = vcmp.lt.s32.totalorder %v877, 32
  %v2144 = vld [vmem:[#allocation3] sm:$0x3]
  %v2145 = vld [vmem:[#allocation3 + $0xe] sm:$0x3]
  %v2146 = vsel %vm2143, 1, 0
  %vm2147 = vcmp.eq.s32.totalorder %v2146, 1
  %v2148 = vsel %vm2147, %v2144, %v2145
  %v2149 = vpack.c.bf16 %v2148, %v2148
  %vm2150 = vcmask 516096
  %2151 = vst.msk [vmem:[%s5] sm:$0x1] %vm2150, %v2149
  %v2152 = vld [vmem:[#allocation3 + $0x2] sm:$0x3]
  %v2153 = vld [vmem:[#allocation3 + $0xc] sm:$0x3]
  %v2154 = vsel %vm2147, %v2152, %v2153
  %v2155 = vpack.c.bf16 %v2154, %v2154
  %v2157 = vunpack.c.l.b16 %v2155
  %v2158 = vpack.c.b16 %v2157, %v2157
  %v2159 = vrot.slane %v2158, 7
  %vm2161 = vcmask 517121
  %2162 = vst.msk [vmem:[%s5] sm:$0x2] %vm2161, %v2159
  %v2163 = vld [vmem:[#allocation3 + $0x4] sm:$0x3]
  %v2164 = vld [vmem:[#allocation3 + $0xa] sm:$0x3]
  %v2165 = vsel %vm2147, %v2163, %v2164
  %v2166 = vpack.c.bf16 %v2165, %v2165
  %v2168 = vunpack.c.l.b16 %v2166
  %v2169 = vpack.c.b16 %v2168, %v2168
  %v2170 = vrot.slane %v2169, 6
  %vm2172 = vcmask 518146
  %2173 = vst.msk [vmem:[%s5] sm:$0x4] %vm2172, %v2170
  %v2174 = vld [vmem:[#allocation3 + $0x6] sm:$0x3]
  %v2175 = vld [vmem:[#allocation3 + $0x8] sm:$0x3]
  %v2176 = vsel %vm2147, %v2174, %v2175
  %v2177 = vpack.c.bf16 %v2176, %v2176
  %v2179 = vunpack.c.l.b16 %v2177
  %v2180 = vpack.c.b16 %v2179, %v2179
  %v2181 = vrot.slane %v2180, 5
  %vm2183 = vcmask 519171
  %2184 = vst.msk [vmem:[%s5] sm:$0x8] %vm2183, %v2181
  %v2185 = vld [vmem:[#allocation3 + $0x8] sm:$0x3]
  %v2186 = vld [vmem:[#allocation3 + $0x6] sm:$0x3]
  %v2187 = vsel %vm2147, %v2185, %v2186
  %v2188 = vpack.c.bf16 %v2187, %v2187
  %2189 = vst.msk [vmem:[%s5 + $0x4] sm:$0x1] %vm2150, %v2188
  %v2190 = vld [vmem:[#allocation3 + $0xa] sm:$0x3]
  %v2191 = vld [vmem:[#allocation3 + $0x4] sm:$0x3]
  %v2192 = vsel %vm2147, %v2190, %v2191
  %v2193 = vpack.c.bf16 %v2192, %v2192
  %v2195 = vunpack.c.l.b16 %v2193
  %v2196 = vpack.c.b16 %v2195, %v2195
  %v2197 = vrot.slane %v2196, 7
  %2199 = vst.msk [vmem:[%s5 + $0x4] sm:$0x2] %vm2161, %v2197
  %v2200 = vld [vmem:[#allocation3 + $0xc] sm:$0x3]
  %v2201 = vld [vmem:[#allocation3 + $0x2] sm:$0x3]
  %v2202 = vsel %vm2147, %v2200, %v2201
  %v2203 = vpack.c.bf16 %v2202, %v2202
  %v2205 = vunpack.c.l.b16 %v2203
  %v2206 = vpack.c.b16 %v2205, %v2205
  %v2207 = vrot.slane %v2206, 6
  %2209 = vst.msk [vmem:[%s5 + $0x4] sm:$0x4] %vm2172, %v2207
  %v2210 = vld [vmem:[#allocation3 + $0xe] sm:$0x3]
  %v2211 = vld [vmem:[#allocation3] sm:$0x3]
  %v2212 = vsel %vm2147, %v2210, %v2211
  %v2213 = vpack.c.bf16 %v2212, %v2212
  %v2215 = vunpack.c.l.b16 %v2213
  %v2216 = vpack.c.b16 %v2215, %v2215
  %v2217 = vrot.slane %v2216, 5
  %2219 = vst.msk [vmem:[%s5 + $0x4] sm:$0x8] %vm2183, %v2217
  // Predicated region
  $region22: #{crnn_forward.4} parent=0 // pred_check
    _
  $region23: #{crnn_forward.4} parent=0 // pred_check_branch
    %2221 = sbr.rel (0) target = $region25
  $region24: #{crnn_forward.4} parent=0 // pred_region
    _
  $region25: #{crnn_forward.4} parent=0 // pred_fallthru
    _
  // Predicated region
  $region26: #{crnn_forward.4} parent=0 // pred_check
    _
  $region27: #{crnn_forward.4} parent=0 // pred_check_branch
    %2223 = sbr.rel (0) target = $region29
  $region28: #{crnn_forward.4} parent=0 // pred_region
    _
  $region29: #{crnn_forward.4} parent=0 // pred_fallthru
    _

// kernel: crnn_forward.3
$region0: #{crnn_forward.3}
  #allocation0 [shape = 'u32[]', space=smem, size = 0x4, offset = 0x4, fixed_abs, tag = 'smem constant byte address 0x4 - core index']
  #allocation1 [shape = 'u32[144,128]{1,0:T(1,128)}', space=vmem, size = 0x12000, scoped, tag = 'internal scratch']
  %s0 = inlined_call_operand.vmem [shape: f32[64,16], index: 0, kind: input, shape index: {}]
  %s1 = inlined_call_operand.hbm [shape: bf16[16,2048], index: 1, kind: input, shape index: {}]
  %s2 = inlined_call_operand.hbm [shape: f32[1,2048], index: 2, kind: input, shape index: {}]
  %s3 = inlined_call_operand.hbm [shape: bf16[2048,512], index: 3, kind: input, shape index: {}]
  %s4 = inlined_call_operand.hbm [shape: f32[1,512], index: 4, kind: input, shape index: {}]
  %s5 = inlined_call_operand.vmem [shape: bf16[16,512], index: 5, kind: output, shape index: {}]
  %s6 = sld [smem:[#allocation0]]
  $region46: #{crnn_forward.3} parent=0
    _
  %s8 = ssub.s32 1, %s6
  %s9 = scalar_select 0, %s8, %s6
  $region1: #{crnn_forward.3} parent=0
    #allocation2 [shape = 'u8[65536]{0}', space=vmem, size = 0x10000, scoped, tag = 'input window, operand 1, single buffered']
    #allocation3 [shape = 's32[1]{0}', space=sflag, size = 0x4, scoped, tag = 'scoped memory for crnn_forward.3']
    #allocation4 [shape = 'u8[8192]{0}', space=vmem, size = 0x2000, scoped, tag = 'input window, operand 2, single buffered']
    #allocation5 [shape = 's32[1]{0}', space=sflag, size = 0x4, scoped, tag = 'scoped memory for crnn_forward.3']
    #allocation6 [shape = 'u8[2097152]{0}', space=vmem, size = 0x200000, scoped, tag = 'input window, operand 3, single buffered']
    #allocation7 [shape = 'u8[2048]{0}', space=vmem, size = 0x800, scoped, tag = 'input window, operand 4, single buffered']
    #allocation8 [shape = 's32[1]{0}', space=sflag, size = 0x4, scoped, tag = 'scoped memory for crnn_forward.3']
    %10 = vsyncpa [#allocation3], 0
    %11 = vsyncpa [#allocation5], 0
    %12 = vsyncpa [#allocation8], 0
    // Predicated region
    $region2: #{crnn_forward.3} parent=1 // pred_check
      _
    $region3: #{crnn_forward.3} parent=1 // pred_check_branch
      %14 = sbr.rel (0) target = $region5
    $region4: #{crnn_forward.3} parent=1 // pred_region
      _
    $region5: #{crnn_forward.3} parent=1 // pred_fallthru
      _
    // Predicated region
    $region6: #{crnn_forward.3} parent=1 // pred_check
      _
    $region7: #{crnn_forward.3} parent=1 // pred_check_branch
      %16 = sbr.rel (0) target = $region9
    $region8: #{crnn_forward.3} parent=1 // pred_region
      %s18 = ssub.s32 2048, 2048
      %19 = vsyncadd [#allocation3], %s18
      %s20 = sshll.u32 [#allocation2], 4
      %s21 = int_to_ptr.vmem [resolvable:$true] %s20
      %26 = dma.hbm_to_vmem [thread:$0]  %s1, 2048, %s21, [#allocation3], 1024, 1024, 64
    $region9: #{crnn_forward.3} parent=1 // pred_fallthru
      _
    // Predicated region
    $region10: #{crnn_forward.3} parent=1 // pred_check
      _
    $region11: #{crnn_forward.3} parent=1 // pred_check_branch
      %28 = sbr.rel (0) target = $region13
    $region12: #{crnn_forward.3} parent=1 // pred_region
      %s30 = ssub.s32 256, 256
      %31 = vsyncadd [#allocation5], %s30
      %s33 = sshll.u32 [#allocation4], 4
      %s34 = int_to_ptr.vmem [resolvable:$true] %s33
      %36 = dma.hbm_to_vmem [thread:$0]  %s2, 256, %s34, [#allocation5]
    $region13: #{crnn_forward.3} parent=1 // pred_fallthru
      _
    // Predicated region
    $region14: #{crnn_forward.3} parent=1 // pred_check
      _
    $region15: #{crnn_forward.3} parent=1 // pred_check_branch
      %38 = sbr.rel (0) target = $region17
    $region16: #{crnn_forward.3} parent=1 // pred_region
      %s40 = ssub.s32 65536, 65536
      %41 = vsyncadd [#allocation5], %s40
      %s42 = sshll.u32 [#allocation6], 4
      %s43 = int_to_ptr.vmem [resolvable:$true] %s42
      %48 = dma.hbm_to_vmem [thread:$0]  %s3, 65536, %s43, [#allocation5], 256, 256, 16
    $region17: #{crnn_forward.3} parent=1 // pred_fallthru
      _
    // Predicated region
    $region18: #{crnn_forward.3} parent=1 // pred_check
      _
    $region19: #{crnn_forward.3} parent=1 // pred_check_branch
      %50 = sbr.rel (0) target = $region21
    $region20: #{crnn_forward.3} parent=1 // pred_region
      %s52 = ssub.s32 64, 64
      %53 = vsyncadd [#allocation8], %s52
      %s55 = sshll.u32 [#allocation7], 4
      %s56 = int_to_ptr.vmem [resolvable:$true] %s55
      %58 = dma.hbm_to_vmem [thread:$0]  %s4, 64, %s56, [#allocation8]
    $region21: #{crnn_forward.3} parent=1 // pred_fallthru
      _
    // Predicated region
    $region22: #{crnn_forward.3} parent=1 // pred_check
      _
    $region23: #{crnn_forward.3} parent=1 // pred_check_branch
      %60 = sbr.rel (0) target = $region25
    $region24: #{crnn_forward.3} parent=1 // pred_region
      %61 = dma.done [#allocation3], 2048
    $region25: #{crnn_forward.3} parent=1 // pred_fallthru
      _
    // Predicated region
    $region26: #{crnn_forward.3} parent=1 // pred_check
      _
    $region27: #{crnn_forward.3} parent=1 // pred_check_branch
      %63 = sbr.rel (0) target = $region29
    $region28: #{crnn_forward.3} parent=1 // pred_region
      %64 = dma.done [#allocation5], 256
    $region29: #{crnn_forward.3} parent=1 // pred_fallthru
      _
    // Predicated region
    $region30: #{crnn_forward.3} parent=1 // pred_check
      _
    $region31: #{crnn_forward.3} parent=1 // pred_check_branch
      %66 = sbr.rel (0) target = $region33
    $region32: #{crnn_forward.3} parent=1 // pred_region
      %67 = dma.done [#allocation5], 65536
    $region33: #{crnn_forward.3} parent=1 // pred_fallthru
      _
    // Predicated region
    $region34: #{crnn_forward.3} parent=1 // pred_check
      _
    $region35: #{crnn_forward.3} parent=1 // pred_check_branch
      %69 = sbr.rel (0) target = $region37
    $region36: #{crnn_forward.3} parent=1 // pred_region
      %70 = dma.done [#allocation8], 64
    $region37: #{crnn_forward.3} parent=1 // pred_fallthru
      _
    %v72 = vld [vmem:[%s0] sm:$0xff]
    %v73 = vld [vmem:[%s0 + $0x8] sm:$0xff]
    %v74 = vld [vmem:[%s0 + $0x10] sm:$0xff]
    %v75 = vld [vmem:[%s0 + $0x18] sm:$0xff]
    %v76 = vld [vmem:[%s0 + $0x20] sm:$0xff]
    %v77 = vld [vmem:[%s0 + $0x28] sm:$0xff]
    %v78 = vld [vmem:[%s0 + $0x30] sm:$0xff]
    %v79 = vld [vmem:[%s0 + $0x38] sm:$0xff]
    %v80 = vpack.c.bf16 %v73, %v72
    %v81 = vpack.c.bf16 %v75, %v74
    %v82 = vpack.c.bf16 %v77, %v76
    %v83 = vpack.c.bf16 %v79, %v78
    %v84 = vld [vmem:[#allocation2] sm:$0xff]
    %v85 = vld [vmem:[#allocation2 + $0x8] sm:$0xff]
    %v86 = vld [vmem:[#allocation2 + $0x10] sm:$0xff]
    %v87 = vld [vmem:[#allocation2 + $0x18] sm:$0xff]
    %v88 = vld [vmem:[#allocation2 + $0x20] sm:$0xff]
    %v89 = vld [vmem:[#allocation2 + $0x28] sm:$0xff]
    %v90 = vld [vmem:[#allocation2 + $0x30] sm:$0xff]
    %v91 = vld [vmem:[#allocation2 + $0x38] sm:$0xff]
    %v92 = vld [vmem:[#allocation2 + $0x40] sm:$0xff]
    %v93 = vld [vmem:[#allocation2 + $0x48] sm:$0xff]
    %v94 = vld [vmem:[#allocation2 + $0x50] sm:$0xff]
    %v95 = vld [vmem:[#allocation2 + $0x58] sm:$0xff]
    %v96 = vld [vmem:[#allocation2 + $0x60] sm:$0xff]
    %v97 = vld [vmem:[#allocation2 + $0x68] sm:$0xff]
    %v98 = vld [vmem:[#allocation2 + $0x70] sm:$0xff]
    %v99 = vld [vmem:[#allocation2 + $0x78] sm:$0xff]
    %v100 = vld [vmem:[#allocation4] sm:$0xff]
    %v101 = vld [vmem:[#allocation4 + $0x8] sm:$0xff]
    %v104 = vlaneseq
    %v105 = vshrl.u32 %v104, 7
    %v106 = vsub.s32 0, %v105
    %v107 = vrot.slane %v100, %v106
    %v108 = vlaneseq
    %v109 = vshrl.u32 %v108, 7
    %v110 = vsub.s32 1, %v109
    %v111 = vrot.slane %v100, %v110
    %v112 = vlaneseq
    %v113 = vshrl.u32 %v112, 7
    %v114 = vsub.s32 2, %v113
    %v115 = vrot.slane %v100, %v114
    %v116 = vlaneseq
    %v117 = vshrl.u32 %v116, 7
    %v118 = vsub.s32 3, %v117
    %v119 = vrot.slane %v100, %v118
    %v120 = vlaneseq
    %v121 = vshrl.u32 %v120, 7
    %v122 = vsub.s32 4, %v121
    %v123 = vrot.slane %v100, %v122
    %v124 = vlaneseq
    %v125 = vshrl.u32 %v124, 7
    %v126 = vsub.s32 5, %v125
    %v127 = vrot.slane %v100, %v126
    %v128 = vlaneseq
    %v129 = vshrl.u32 %v128, 7
    %v130 = vsub.s32 6, %v129
    %v131 = vrot.slane %v100, %v130
    %v132 = vlaneseq
    %v133 = vshrl.u32 %v132, 7
    %v134 = vsub.s32 7, %v133
    %v135 = vrot.slane %v100, %v134
    %v136 = vlaneseq
    %v137 = vshrl.u32 %v136, 7
    %v138 = vsub.s32 0, %v137
    %v139 = vrot.slane %v101, %v138
    %v140 = vlaneseq
    %v141 = vshrl.u32 %v140, 7
    %v142 = vsub.s32 1, %v141
    %v143 = vrot.slane %v101, %v142
    %v144 = vlaneseq
    %v145 = vshrl.u32 %v144, 7
    %v146 = vsub.s32 2, %v145
    %v147 = vrot.slane %v101, %v146
    %v148 = vlaneseq
    %v149 = vshrl.u32 %v148, 7
    %v150 = vsub.s32 3, %v149
    %v151 = vrot.slane %v101, %v150
    %v152 = vlaneseq
    %v153 = vshrl.u32 %v152, 7
    %v154 = vsub.s32 4, %v153
    %v155 = vrot.slane %v101, %v154
    %v156 = vlaneseq
    %v157 = vshrl.u32 %v156, 7
    %v158 = vsub.s32 5, %v157
    %v159 = vrot.slane %v101, %v158
    %v160 = vlaneseq
    %v161 = vshrl.u32 %v160, 7
    %v162 = vsub.s32 6, %v161
    %v163 = vrot.slane %v101, %v162
    %v164 = vlaneseq
    %v165 = vshrl.u32 %v164, 7
    %v166 = vsub.s32 7, %v165
    %v167 = vrot.slane %v101, %v166
    %v200 = vunpack.c.l.b16 %v84
    %v201 = vunpack.c.h.b16 %v84
    %v202 = vunpack.c.l.b16 %v85
    %v203 = vunpack.c.h.b16 %v85
    %v204 = vunpack.c.l.b16 %v86
    %v205 = vunpack.c.h.b16 %v86
    %v206 = vunpack.c.l.b16 %v87
    %v207 = vunpack.c.h.b16 %v87
    %v208 = vunpack.c.l.b16 %v88
    %v209 = vunpack.c.h.b16 %v88
    %v210 = vunpack.c.l.b16 %v89
    %v211 = vunpack.c.h.b16 %v89
    %v212 = vunpack.c.l.b16 %v90
    %v213 = vunpack.c.h.b16 %v90
    %v214 = vunpack.c.l.b16 %v91
    %v215 = vunpack.c.h.b16 %v91
    %v216 = vunpack.c.l.b16 %v92
    %v217 = vunpack.c.h.b16 %v92
    %v218 = vunpack.c.l.b16 %v93
    %v219 = vunpack.c.h.b16 %v93
    %v220 = vunpack.c.l.b16 %v94
    %v221 = vunpack.c.h.b16 %v94
    %v222 = vunpack.c.l.b16 %v95
    %v223 = vunpack.c.h.b16 %v95
    %v224 = vunpack.c.l.b16 %v96
    %v225 = vunpack.c.h.b16 %v96
    %v226 = vunpack.c.l.b16 %v97
    %v227 = vunpack.c.h.b16 %v97
    %v228 = vunpack.c.l.b16 %v98
    %v229 = vunpack.c.h.b16 %v98
    %v230 = vunpack.c.l.b16 %v99
    %v231 = vunpack.c.h.b16 %v99
    %v232 = vpack.c.b16 %v216, %v200
    %v233 = vpack.c.b16 %v217, %v201
    %v234 = vpack.c.b16 %v218, %v202
    %v235 = vpack.c.b16 %v219, %v203
    %v236 = vpack.c.b16 %v220, %v204
    %v237 = vpack.c.b16 %v221, %v205
    %v238 = vpack.c.b16 %v222, %v206
    %v239 = vpack.c.b16 %v223, %v207
    %v240 = vpack.c.b16 %v224, %v208
    %v241 = vpack.c.b16 %v225, %v209
    %v242 = vpack.c.b16 %v226, %v210
    %v243 = vpack.c.b16 %v227, %v211
    %v244 = vpack.c.b16 %v228, %v212
    %v245 = vpack.c.b16 %v229, %v213
    %v246 = vpack.c.b16 %v230, %v214
    %v247 = vpack.c.b16 %v231, %v215
    %vm264 = vcmask 130048
    %v266 = vsel %vm264, %v80, 0
    %v269 = vsel %vm264, %v81, 0
    %v272 = vsel %vm264, %v82, 0
    %v275 = vsel %vm264, %v83, 0
    %277 = vmatprep.subr.bf16.mxu0 0
    %278 = vmatpush1.bf16.msra.mxu0 0
    %279 = vmatprep.subr.bf16.mxu0 0
    %280 = vmatpush1.bf16.msra.mxu0 0
    %281 = vmatprep.subr.bf16.mxu0 0
    %282 = vmatpush1.bf16.msra.mxu0 0
    %283 = vmatprep.subr.bf16.mxu0 0
    %284 = vmatpush1.bf16.msra.mxu0 0
    %285 = vmatprep.subr.bf16.mxu0 0
    %286 = vmatpush1.bf16.msra.mxu0 0
    %287 = vmatprep.subr.bf16.mxu0 0
    %288 = vmatpush1.bf16.msra.mxu0 0
    %289 = vmatprep.subr.bf16.mxu0 0
    %290 = vmatpush1.bf16.msra.mxu0 0
    %291 = vmatprep.subr.bf16.mxu0 %v233
    %292 = vmatpush1.bf16.msra.mxu0 %v232
    %293 = vmatprep.subr.bf16.mxu0 0
    %294 = vmatpush2.bf16.msra.mxu0 0
    %295 = vmatprep.subr.bf16.mxu0 0
    %296 = vmatpush2.bf16.msra.mxu0 0
    %297 = vmatprep.subr.bf16.mxu0 0
    %298 = vmatpush2.bf16.msra.mxu0 0
    %299 = vmatprep.subr.bf16.mxu0 0
    %300 = vmatpush2.bf16.msra.mxu0 0
    %301 = vmatprep.subr.bf16.mxu0 0
    %302 = vmatpush2.bf16.msra.mxu0 0
    %303 = vmatprep.subr.bf16.mxu0 0
    %304 = vmatpush2.bf16.msra.mxu0 0
    %305 = vmatprep.subr.bf16.mxu0 0
    %306 = vmatpush2.bf16.msra.mxu0 0
    %307 = vmatprep.subr.bf16.mxu0 0
    %308 = vmatpush2.bf16.msra.mxu0 0
    %309 = vmatprep.mubr.bf16.mxu0 0
    %310 = vmatmul.mubr.bf16.gmra.mxu0 %v266
    %v311 = vpop.f32.mrf.mxu0
    %v312 = vadd.f32 %v107, %v311
    %v313 = vpop.f32.mrf.mxu0
    %v314 = vadd.f32 %v111, %v313
    %v315 = vpop.f32.mrf.mxu0
    %v316 = vadd.f32 %v107, %v315
    %v317 = vpop.f32.mrf.mxu0
    %v318 = vadd.f32 %v111, %v317
    %319 = vmatprep.mubr.bf16.mxu0 0
    %320 = vmatmul.mubr.bf16.gmra.mxu0 %v269
    %v321 = vpop.f32.mrf.mxu0
    %v322 = vadd.f32 %v107, %v321
    %v323 = vpop.f32.mrf.mxu0
    %v324 = vadd.f32 %v111, %v323
    %v325 = vpop.f32.mrf.mxu0
    %v326 = vadd.f32 %v107, %v325
    %v327 = vpop.f32.mrf.mxu0
    %v328 = vadd.f32 %v111, %v327
    %329 = vmatprep.mubr.bf16.mxu0 0
    %330 = vmatmul.mubr.bf16.gmra.mxu0 %v272
    %v331 = vpop.f32.mrf.mxu0
    %v332 = vadd.f32 %v107, %v331
    %v333 = vpop.f32.mrf.mxu0
    %v334 = vadd.f32 %v111, %v333
    %v335 = vpop.f32.mrf.mxu0
    %v336 = vadd.f32 %v107, %v335
    %v337 = vpop.f32.mrf.mxu0
    %v338 = vadd.f32 %v111, %v337
    %339 = vmatprep.mubr.bf16.mxu0 0
    %340 = vmatmul.mubr.bf16.gmra.mxu0 %v275
    %v341 = vpop.f32.mrf.mxu0
    %v342 = vadd.f32 %v107, %v341
    %v343 = vpop.f32.mrf.mxu0
    %v344 = vadd.f32 %v111, %v343
    %v345 = vpop.f32.mrf.mxu0
    %v346 = vadd.f32 %v107, %v345
    %v347 = vpop.f32.mrf.mxu0
    %v348 = vadd.f32 %v111, %v347
    %349 = vdwg.mxu0
    %350 = vmatprep.subr.bf16.mxu0 0
    %351 = vmatpush1.bf16.msra.mxu0 0
    %352 = vmatprep.subr.bf16.mxu0 0
    %353 = vmatpush1.bf16.msra.mxu0 0
    %354 = vmatprep.subr.bf16.mxu0 0
    %355 = vmatpush1.bf16.msra.mxu0 0
    %356 = vmatprep.subr.bf16.mxu0 0
    %357 = vmatpush1.bf16.msra.mxu0 0
    %358 = vmatprep.subr.bf16.mxu0 0
    %359 = vmatpush1.bf16.msra.mxu0 0
    %360 = vmatprep.subr.bf16.mxu0 0
    %361 = vmatpush1.bf16.msra.mxu0 0
    %362 = vmatprep.subr.bf16.mxu0 0
    %363 = vmatpush1.bf16.msra.mxu0 0
    %364 = vmatprep.subr.bf16.mxu0 %v235
    %365 = vmatpush1.bf16.msra.mxu0 %v234
    %366 = vmatprep.subr.bf16.mxu0 0
    %367 = vmatpush2.bf16.msra.mxu0 0
    %368 = vmatprep.subr.bf16.mxu0 0
    %369 = vmatpush2.bf16.msra.mxu0 0
    %370 = vmatprep.subr.bf16.mxu0 0
    %371 = vmatpush2.bf16.msra.mxu0 0
    %372 = vmatprep.subr.bf16.mxu0 0
    %373 = vmatpush2.bf16.msra.mxu0 0
    %374 = vmatprep.subr.bf16.mxu0 0
    %375 = vmatpush2.bf16.msra.mxu0 0
    %376 = vmatprep.subr.bf16.mxu0 0
    %377 = vmatpush2.bf16.msra.mxu0 0
    %378 = vmatprep.subr.bf16.mxu0 0
    %379 = vmatpush2.bf16.msra.mxu0 0
    %380 = vmatprep.subr.bf16.mxu0 0
    %381 = vmatpush2.bf16.msra.mxu0 0
    %382 = vmatprep.mubr.bf16.mxu0 0
    %383 = vmatmul.mubr.bf16.gmra.mxu0 %v266
    %v384 = vpop.f32.mrf.mxu0
    %v385 = vadd.f32 %v115, %v384
    %v386 = vpop.f32.mrf.mxu0
    %v387 = vadd.f32 %v119, %v386
    %v388 = vpop.f32.mrf.mxu0
    %v389 = vadd.f32 %v115, %v388
    %v390 = vpop.f32.mrf.mxu0
    %v391 = vadd.f32 %v119, %v390
    %392 = vmatprep.mubr.bf16.mxu0 0
    %393 = vmatmul.mubr.bf16.gmra.mxu0 %v269
    %v394 = vpop.f32.mrf.mxu0
    %v395 = vadd.f32 %v115, %v394
    %v396 = vpop.f32.mrf.mxu0
    %v397 = vadd.f32 %v119, %v396
    %v398 = vpop.f32.mrf.mxu0
    %v399 = vadd.f32 %v115, %v398
    %v400 = vpop.f32.mrf.mxu0
    %v401 = vadd.f32 %v119, %v400
    %402 = vmatprep.mubr.bf16.mxu0 0
    %403 = vmatmul.mubr.bf16.gmra.mxu0 %v272
    %v404 = vpop.f32.mrf.mxu0
    %v405 = vadd.f32 %v115, %v404
    %v406 = vpop.f32.mrf.mxu0
    %v407 = vadd.f32 %v119, %v406
    %v408 = vpop.f32.mrf.mxu0
    %v409 = vadd.f32 %v115, %v408
    %v410 = vpop.f32.mrf.mxu0
    %v411 = vadd.f32 %v119, %v410
    %412 = vmatprep.mubr.bf16.mxu0 0
    %413 = vmatmul.mubr.bf16.gmra.mxu0 %v275
    %v414 = vpop.f32.mrf.mxu0
    %v415 = vadd.f32 %v115, %v414
    %v416 = vpop.f32.mrf.mxu0
    %v417 = vadd.f32 %v119, %v416
    %v418 = vpop.f32.mrf.mxu0
    %v419 = vadd.f32 %v115, %v418
    %v420 = vpop.f32.mrf.mxu0
    %v421 = vadd.f32 %v119, %v420
    %422 = vdwg.mxu0
    %423 = vmatprep.subr.bf16.mxu0 0
    %424 = vmatpush1.bf16.msra.mxu0 0
    %425 = vmatprep.subr.bf16.mxu0 0
    %426 = vmatpush1.bf16.msra.mxu0 0
    %427 = vmatprep.subr.bf16.mxu0 0
    %428 = vmatpush1.bf16.msra.mxu0 0
    %429 = vmatprep.subr.bf16.mxu0 0
    %430 = vmatpush1.bf16.msra.mxu0 0
    %431 = vmatprep.subr.bf16.mxu0 0
    %432 = vmatpush1.bf16.msra.mxu0 0
    %433 = vmatprep.subr.bf16.mxu0 0
    %434 = vmatpush1.bf16.msra.mxu0 0
    %435 = vmatprep.subr.bf16.mxu0 0
    %436 = vmatpush1.bf16.msra.mxu0 0
    %437 = vmatprep.subr.bf16.mxu0 %v237
    %438 = vmatpush1.bf16.msra.mxu0 %v236
    %439 = vmatprep.subr.bf16.mxu0 0
    %440 = vmatpush2.bf16.msra.mxu0 0
    %441 = vmatprep.subr.bf16.mxu0 0
    %442 = vmatpush2.bf16.msra.mxu0 0
    %443 = vmatprep.subr.bf16.mxu0 0
    %444 = vmatpush2.bf16.msra.mxu0 0
    %445 = vmatprep.subr.bf16.mxu0 0
    %446 = vmatpush2.bf16.msra.mxu0 0
    %447 = vmatprep.subr.bf16.mxu0 0
    %448 = vmatpush2.bf16.msra.mxu0 0
    %449 = vmatprep.subr.bf16.mxu0 0
    %450 = vmatpush2.bf16.msra.mxu0 0
    %451 = vmatprep.subr.bf16.mxu0 0
    %452 = vmatpush2.bf16.msra.mxu0 0
    %453 = vmatprep.subr.bf16.mxu0 0
    %454 = vmatpush2.bf16.msra.mxu0 0
    %455 = vmatprep.mubr.bf16.mxu0 0
    %456 = vmatmul.mubr.bf16.gmra.mxu0 %v266
    %v457 = vpop.f32.mrf.mxu0
    %v458 = vadd.f32 %v123, %v457
    %v459 = vpop.f32.mrf.mxu0
    %v460 = vadd.f32 %v127, %v459
    %v461 = vpop.f32.mrf.mxu0
    %v462 = vadd.f32 %v123, %v461
    %v463 = vpop.f32.mrf.mxu0
    %v464 = vadd.f32 %v127, %v463
    %465 = vmatprep.mubr.bf16.mxu0 0
    %466 = vmatmul.mubr.bf16.gmra.mxu0 %v269
    %v467 = vpop.f32.mrf.mxu0
    %v468 = vadd.f32 %v123, %v467
    %v469 = vpop.f32.mrf.mxu0
    %v470 = vadd.f32 %v127, %v469
    %v471 = vpop.f32.mrf.mxu0
    %v472 = vadd.f32 %v123, %v471
    %v473 = vpop.f32.mrf.mxu0
    %v474 = vadd.f32 %v127, %v473
    %475 = vmatprep.mubr.bf16.mxu0 0
    %476 = vmatmul.mubr.bf16.gmra.mxu0 %v272
    %v477 = vpop.f32.mrf.mxu0
    %v478 = vadd.f32 %v123, %v477
    %v479 = vpop.f32.mrf.mxu0
    %v480 = vadd.f32 %v127, %v479
    %v481 = vpop.f32.mrf.mxu0
    %v482 = vadd.f32 %v123, %v481
    %v483 = vpop.f32.mrf.mxu0
    %v484 = vadd.f32 %v127, %v483
    %485 = vmatprep.mubr.bf16.mxu0 0
    %486 = vmatmul.mubr.bf16.gmra.mxu0 %v275
    %v487 = vpop.f32.mrf.mxu0
    %v488 = vadd.f32 %v123, %v487
    %v489 = vpop.f32.mrf.mxu0
    %v490 = vadd.f32 %v127, %v489
    %v491 = vpop.f32.mrf.mxu0
    %v492 = vadd.f32 %v123, %v491
    %v493 = vpop.f32.mrf.mxu0
    %v494 = vadd.f32 %v127, %v493
    %495 = vdwg.mxu0
    %496 = vmatprep.subr.bf16.mxu0 0
    %497 = vmatpush1.bf16.msra.mxu0 0
    %498 = vmatprep.subr.bf16.mxu0 0
    %499 = vmatpush1.bf16.msra.mxu0 0
    %500 = vmatprep.subr.bf16.mxu0 0
    %501 = vmatpush1.bf16.msra.mxu0 0
    %502 = vmatprep.subr.bf16.mxu0 0
    %503 = vmatpush1.bf16.msra.mxu0 0
    %504 = vmatprep.subr.bf16.mxu0 0
    %505 = vmatpush1.bf16.msra.mxu0 0
    %506 = vmatprep.subr.bf16.mxu0 0
    %507 = vmatpush1.bf16.msra.mxu0 0
    %508 = vmatprep.subr.bf16.mxu0 0
    %509 = vmatpush1.bf16.msra.mxu0 0
    %510 = vmatprep.subr.bf16.mxu0 %v239
    %511 = vmatpush1.bf16.msra.mxu0 %v238
    %512 = vmatprep.subr.bf16.mxu0 0
    %513 = vmatpush2.bf16.msra.mxu0 0
    %514 = vmatprep.subr.bf16.mxu0 0
    %515 = vmatpush2.bf16.msra.mxu0 0
    %516 = vmatprep.subr.bf16.mxu0 0
    %517 = vmatpush2.bf16.msra.mxu0 0
    %518 = vmatprep.subr.bf16.mxu0 0
    %519 = vmatpush2.bf16.msra.mxu0 0
    %520 = vmatprep.subr.bf16.mxu0 0
    %521 = vmatpush2.bf16.msra.mxu0 0
    %522 = vmatprep.subr.bf16.mxu0 0
    %523 = vmatpush2.bf16.msra.mxu0 0
    %524 = vmatprep.subr.bf16.mxu0 0
    %525 = vmatpush2.bf16.msra.mxu0 0
    %526 = vmatprep.subr.bf16.mxu0 0
    %527 = vmatpush2.bf16.msra.mxu0 0
    %528 = vmatprep.mubr.bf16.mxu0 0
    %529 = vmatmul.mubr.bf16.gmra.mxu0 %v266
    %v530 = vpop.f32.mrf.mxu0
    %v531 = vadd.f32 %v131, %v530
    %v532 = vpop.f32.mrf.mxu0
    %v533 = vadd.f32 %v135, %v532
    %v534 = vpop.f32.mrf.mxu0
    %v535 = vadd.f32 %v131, %v534
    %v536 = vpop.f32.mrf.mxu0
    %v537 = vadd.f32 %v135, %v536
    %538 = vmatprep.mubr.bf16.mxu0 0
    %539 = vmatmul.mubr.bf16.gmra.mxu0 %v269
    %v540 = vpop.f32.mrf.mxu0
    %v541 = vadd.f32 %v131, %v540
    %v542 = vpop.f32.mrf.mxu0
    %v543 = vadd.f32 %v135, %v542
    %v544 = vpop.f32.mrf.mxu0
    %v545 = vadd.f32 %v131, %v544
    %v546 = vpop.f32.mrf.mxu0
    %v547 = vadd.f32 %v135, %v546
    %548 = vmatprep.mubr.bf16.mxu0 0
    %549 = vmatmul.mubr.bf16.gmra.mxu0 %v272
    %v550 = vpop.f32.mrf.mxu0
    %v551 = vadd.f32 %v131, %v550
    %v552 = vpop.f32.mrf.mxu0
    %v553 = vadd.f32 %v135, %v552
    %v554 = vpop.f32.mrf.mxu0
    %v555 = vadd.f32 %v131, %v554
    %v556 = vpop.f32.mrf.mxu0
    %v557 = vadd.f32 %v135, %v556
    %558 = vmatprep.mubr.bf16.mxu0 0
    %559 = vmatmul.mubr.bf16.gmra.mxu0 %v275
    %v560 = vpop.f32.mrf.mxu0
    %v561 = vadd.f32 %v131, %v560
    %v562 = vpop.f32.mrf.mxu0
    %v563 = vadd.f32 %v135, %v562
    %v564 = vpop.f32.mrf.mxu0
    %v565 = vadd.f32 %v131, %v564
    %v566 = vpop.f32.mrf.mxu0
    %v567 = vadd.f32 %v135, %v566
    %568 = vdwg.mxu0
    %569 = vmatprep.subr.bf16.mxu0 0
    %570 = vmatpush1.bf16.msra.mxu0 0
    %571 = vmatprep.subr.bf16.mxu0 0
    %572 = vmatpush1.bf16.msra.mxu0 0
    %573 = vmatprep.subr.bf16.mxu0 0
    %574 = vmatpush1.bf16.msra.mxu0 0
    %575 = vmatprep.subr.bf16.mxu0 0
    %576 = vmatpush1.bf16.msra.mxu0 0
    %577 = vmatprep.subr.bf16.mxu0 0
    %578 = vmatpush1.bf16.msra.mxu0 0
    %579 = vmatprep.subr.bf16.mxu0 0
    %580 = vmatpush1.bf16.msra.mxu0 0
    %581 = vmatprep.subr.bf16.mxu0 0
    %582 = vmatpush1.bf16.msra.mxu0 0
    %583 = vmatprep.subr.bf16.mxu0 %v241
    %584 = vmatpush1.bf16.msra.mxu0 %v240
    %585 = vmatprep.subr.bf16.mxu0 0
    %586 = vmatpush2.bf16.msra.mxu0 0
    %587 = vmatprep.subr.bf16.mxu0 0
    %588 = vmatpush2.bf16.msra.mxu0 0
    %589 = vmatprep.subr.bf16.mxu0 0
    %590 = vmatpush2.bf16.msra.mxu0 0
    %591 = vmatprep.subr.bf16.mxu0 0
    %592 = vmatpush2.bf16.msra.mxu0 0
    %593 = vmatprep.subr.bf16.mxu0 0
    %594 = vmatpush2.bf16.msra.mxu0 0
    %595 = vmatprep.subr.bf16.mxu0 0
    %596 = vmatpush2.bf16.msra.mxu0 0
    %597 = vmatprep.subr.bf16.mxu0 0
    %598 = vmatpush2.bf16.msra.mxu0 0
    %599 = vmatprep.subr.bf16.mxu0 0
    %600 = vmatpush2.bf16.msra.mxu0 0
    %601 = vmatprep.mubr.bf16.mxu0 0
    %602 = vmatmul.mubr.bf16.gmra.mxu0 %v266
    %v603 = vpop.f32.mrf.mxu0
    %v604 = vadd.f32 %v139, %v603
    %v605 = vpop.f32.mrf.mxu0
    %v606 = vadd.f32 %v143, %v605
    %v607 = vpop.f32.mrf.mxu0
    %v608 = vadd.f32 %v139, %v607
    %v609 = vpop.f32.mrf.mxu0
    %v610 = vadd.f32 %v143, %v609
    %611 = vmatprep.mubr.bf16.mxu0 0
    %612 = vmatmul.mubr.bf16.gmra.mxu0 %v269
    %v613 = vpop.f32.mrf.mxu0
    %v614 = vadd.f32 %v139, %v613
    %v615 = vpop.f32.mrf.mxu0
    %v616 = vadd.f32 %v143, %v615
    %v617 = vpop.f32.mrf.mxu0
    %v618 = vadd.f32 %v139, %v617
    %v619 = vpop.f32.mrf.mxu0
    %v620 = vadd.f32 %v143, %v619
    %621 = vmatprep.mubr.bf16.mxu0 0
    %622 = vmatmul.mubr.bf16.gmra.mxu0 %v272
    %v623 = vpop.f32.mrf.mxu0
    %v624 = vadd.f32 %v139, %v623
    %v625 = vpop.f32.mrf.mxu0
    %v626 = vadd.f32 %v143, %v625
    %v627 = vpop.f32.mrf.mxu0
    %v628 = vadd.f32 %v139, %v627
    %v629 = vpop.f32.mrf.mxu0
    %v630 = vadd.f32 %v143, %v629
    %631 = vmatprep.mubr.bf16.mxu0 0
    %632 = vmatmul.mubr.bf16.gmra.mxu0 %v275
    %v633 = vpop.f32.mrf.mxu0
    %v634 = vadd.f32 %v139, %v633
    %v635 = vpop.f32.mrf.mxu0
    %v636 = vadd.f32 %v143, %v635
    %v637 = vpop.f32.mrf.mxu0
    %v638 = vadd.f32 %v139, %v637
    %v639 = vpop.f32.mrf.mxu0
    %v640 = vadd.f32 %v143, %v639
    %641 = vdwg.mxu0
    %642 = vmatprep.subr.bf16.mxu0 0
    %643 = vmatpush1.bf16.msra.mxu0 0
    %644 = vmatprep.subr.bf16.mxu0 0
    %645 = vmatpush1.bf16.msra.mxu0 0
    %646 = vmatprep.subr.bf16.mxu0 0
    %647 = vmatpush1.bf16.msra.mxu0 0
    %648 = vmatprep.subr.bf16.mxu0 0
    %649 = vmatpush1.bf16.msra.mxu0 0
    %650 = vmatprep.subr.bf16.mxu0 0
    %651 = vmatpush1.bf16.msra.mxu0 0
    %652 = vmatprep.subr.bf16.mxu0 0
    %653 = vmatpush1.bf16.msra.mxu0 0
    %654 = vmatprep.subr.bf16.mxu0 0
    %655 = vmatpush1.bf16.msra.mxu0 0
    %656 = vmatprep.subr.bf16.mxu0 %v243
    %657 = vmatpush1.bf16.msra.mxu0 %v242
    %658 = vmatprep.subr.bf16.mxu0 0
    %659 = vmatpush2.bf16.msra.mxu0 0
    %660 = vmatprep.subr.bf16.mxu0 0
    %661 = vmatpush2.bf16.msra.mxu0 0
    %662 = vmatprep.subr.bf16.mxu0 0
    %663 = vmatpush2.bf16.msra.mxu0 0
    %664 = vmatprep.subr.bf16.mxu0 0
    %665 = vmatpush2.bf16.msra.mxu0 0
    %666 = vmatprep.subr.bf16.mxu0 0
    %667 = vmatpush2.bf16.msra.mxu0 0
    %668 = vmatprep.subr.bf16.mxu0 0
    %669 = vmatpush2.bf16.msra.mxu0 0
    %670 = vmatprep.subr.bf16.mxu0 0
    %671 = vmatpush2.bf16.msra.mxu0 0
    %672 = vmatprep.subr.bf16.mxu0 0
    %673 = vmatpush2.bf16.msra.mxu0 0
    %674 = vmatprep.mubr.bf16.mxu0 0
    %675 = vmatmul.mubr.bf16.gmra.mxu0 %v266
    %v676 = vpop.f32.mrf.mxu0
    %v677 = vadd.f32 %v147, %v676
    %v678 = vpop.f32.mrf.mxu0
    %v679 = vadd.f32 %v151, %v678
    %v680 = vpop.f32.mrf.mxu0
    %v681 = vadd.f32 %v147, %v680
    %v682 = vpop.f32.mrf.mxu0
    %v683 = vadd.f32 %v151, %v682
    %684 = vmatprep.mubr.bf16.mxu0 0
    %685 = vmatmul.mubr.bf16.gmra.mxu0 %v269
    %v686 = vpop.f32.mrf.mxu0
    %v687 = vadd.f32 %v147, %v686
    %v688 = vpop.f32.mrf.mxu0
    %v689 = vadd.f32 %v151, %v688
    %v690 = vpop.f32.mrf.mxu0
    %v691 = vadd.f32 %v147, %v690
    %v692 = vpop.f32.mrf.mxu0
    %v693 = vadd.f32 %v151, %v692
    %694 = vmatprep.mubr.bf16.mxu0 0
    %695 = vmatmul.mubr.bf16.gmra.mxu0 %v272
    %v696 = vpop.f32.mrf.mxu0
    %v697 = vadd.f32 %v147, %v696
    %v698 = vpop.f32.mrf.mxu0
    %v699 = vadd.f32 %v151, %v698
    %v700 = vpop.f32.mrf.mxu0
    %v701 = vadd.f32 %v147, %v700
    %v702 = vpop.f32.mrf.mxu0
    %v703 = vadd.f32 %v151, %v702
    %704 = vmatprep.mubr.bf16.mxu0 0
    %705 = vmatmul.mubr.bf16.gmra.mxu0 %v275
    %v706 = vpop.f32.mrf.mxu0
    %v707 = vadd.f32 %v147, %v706
    %v708 = vpop.f32.mrf.mxu0
    %v709 = vadd.f32 %v151, %v708
    %v710 = vpop.f32.mrf.mxu0
    %v711 = vadd.f32 %v147, %v710
    %v712 = vpop.f32.mrf.mxu0
    %v713 = vadd.f32 %v151, %v712
    %714 = vdwg.mxu0
    %715 = vmatprep.subr.bf16.mxu0 0
    %716 = vmatpush1.bf16.msra.mxu0 0
    %717 = vmatprep.subr.bf16.mxu0 0
    %718 = vmatpush1.bf16.msra.mxu0 0
    %719 = vmatprep.subr.bf16.mxu0 0
    %720 = vmatpush1.bf16.msra.mxu0 0
    %721 = vmatprep.subr.bf16.mxu0 0
    %722 = vmatpush1.bf16.msra.mxu0 0
    %723 = vmatprep.subr.bf16.mxu0 0
    %724 = vmatpush1.bf16.msra.mxu0 0
    %725 = vmatprep.subr.bf16.mxu0 0
    %726 = vmatpush1.bf16.msra.mxu0 0
    %727 = vmatprep.subr.bf16.mxu0 0
    %728 = vmatpush1.bf16.msra.mxu0 0
    %729 = vmatprep.subr.bf16.mxu0 %v245
    %730 = vmatpush1.bf16.msra.mxu0 %v244
    %731 = vmatprep.subr.bf16.mxu0 0
    %732 = vmatpush2.bf16.msra.mxu0 0
    %733 = vmatprep.subr.bf16.mxu0 0
    %734 = vmatpush2.bf16.msra.mxu0 0
    %735 = vmatprep.subr.bf16.mxu0 0
    %736 = vmatpush2.bf16.msra.mxu0 0
    %737 = vmatprep.subr.bf16.mxu0 0
    %738 = vmatpush2.bf16.msra.mxu0 0
    %739 = vmatprep.subr.bf16.mxu0 0
    %740 = vmatpush2.bf16.msra.mxu0 0
    %741 = vmatprep.subr.bf16.mxu0 0
    %742 = vmatpush2.bf16.msra.mxu0 0
    %743 = vmatprep.subr.bf16.mxu0 0
    %744 = vmatpush2.bf16.msra.mxu0 0
    %745 = vmatprep.subr.bf16.mxu0 0
    %746 = vmatpush2.bf16.msra.mxu0 0
    %747 = vmatprep.mubr.bf16.mxu0 0
    %748 = vmatmul.mubr.bf16.gmra.mxu0 %v266
    %v749 = vpop.f32.mrf.mxu0
    %v750 = vadd.f32 %v155, %v749
    %v751 = vpop.f32.mrf.mxu0
    %v752 = vadd.f32 %v159, %v751
    %v753 = vpop.f32.mrf.mxu0
    %v754 = vadd.f32 %v155, %v753
    %v755 = vpop.f32.mrf.mxu0
    %v756 = vadd.f32 %v159, %v755
    %757 = vmatprep.mubr.bf16.mxu0 0
    %758 = vmatmul.mubr.bf16.gmra.mxu0 %v269
    %v759 = vpop.f32.mrf.mxu0
    %v760 = vadd.f32 %v155, %v759
    %v761 = vpop.f32.mrf.mxu0
    %v762 = vadd.f32 %v159, %v761
    %v763 = vpop.f32.mrf.mxu0
    %v764 = vadd.f32 %v155, %v763
    %v765 = vpop.f32.mrf.mxu0
    %v766 = vadd.f32 %v159, %v765
    %767 = vmatprep.mubr.bf16.mxu0 0
    %768 = vmatmul.mubr.bf16.gmra.mxu0 %v272
    %v769 = vpop.f32.mrf.mxu0
    %v770 = vadd.f32 %v155, %v769
    %v771 = vpop.f32.mrf.mxu0
    %v772 = vadd.f32 %v159, %v771
    %v773 = vpop.f32.mrf.mxu0
    %v774 = vadd.f32 %v155, %v773
    %v775 = vpop.f32.mrf.mxu0
    %v776 = vadd.f32 %v159, %v775
    %777 = vmatprep.mubr.bf16.mxu0 0
    %778 = vmatmul.mubr.bf16.gmra.mxu0 %v275
    %v779 = vpop.f32.mrf.mxu0
    %v780 = vadd.f32 %v155, %v779
    %v781 = vpop.f32.mrf.mxu0
    %v782 = vadd.f32 %v159, %v781
    %v783 = vpop.f32.mrf.mxu0
    %v784 = vadd.f32 %v155, %v783
    %v785 = vpop.f32.mrf.mxu0
    %v786 = vadd.f32 %v159, %v785
    %787 = vdwg.mxu0
    %788 = vmatprep.subr.bf16.mxu0 0
    %789 = vmatpush1.bf16.msra.mxu0 0
    %790 = vmatprep.subr.bf16.mxu0 0
    %791 = vmatpush1.bf16.msra.mxu0 0
    %792 = vmatprep.subr.bf16.mxu0 0
    %793 = vmatpush1.bf16.msra.mxu0 0
    %794 = vmatprep.subr.bf16.mxu0 0
    %795 = vmatpush1.bf16.msra.mxu0 0
    %796 = vmatprep.subr.bf16.mxu0 0
    %797 = vmatpush1.bf16.msra.mxu0 0
    %798 = vmatprep.subr.bf16.mxu0 0
    %799 = vmatpush1.bf16.msra.mxu0 0
    %800 = vmatprep.subr.bf16.mxu0 0
    %801 = vmatpush1.bf16.msra.mxu0 0
    %802 = vmatprep.subr.bf16.mxu0 %v247
    %803 = vmatpush1.bf16.msra.mxu0 %v246
    %804 = vmatprep.subr.bf16.mxu0 0
    %805 = vmatpush2.bf16.msra.mxu0 0
    %806 = vmatprep.subr.bf16.mxu0 0
    %807 = vmatpush2.bf16.msra.mxu0 0
    %808 = vmatprep.subr.bf16.mxu0 0
    %809 = vmatpush2.bf16.msra.mxu0 0
    %810 = vmatprep.subr.bf16.mxu0 0
    %811 = vmatpush2.bf16.msra.mxu0 0
    %812 = vmatprep.subr.bf16.mxu0 0
    %813 = vmatpush2.bf16.msra.mxu0 0
    %814 = vmatprep.subr.bf16.mxu0 0
    %815 = vmatpush2.bf16.msra.mxu0 0
    %816 = vmatprep.subr.bf16.mxu0 0
    %817 = vmatpush2.bf16.msra.mxu0 0
    %818 = vmatprep.subr.bf16.mxu0 0
    %819 = vmatpush2.bf16.msra.mxu0 0
    %820 = vmatprep.mubr.bf16.mxu0 0
    %821 = vmatmul.mubr.bf16.gmra.mxu0 %v266
    %v822 = vpop.f32.mrf.mxu0
    %v823 = vadd.f32 %v163, %v822
    %v824 = vpop.f32.mrf.mxu0
    %v825 = vadd.f32 %v167, %v824
    %v826 = vpop.f32.mrf.mxu0
    %v827 = vadd.f32 %v163, %v826
    %v828 = vpop.f32.mrf.mxu0
    %v829 = vadd.f32 %v167, %v828
    %830 = vmatprep.mubr.bf16.mxu0 0
    %831 = vmatmul.mubr.bf16.gmra.mxu0 %v269
    %v832 = vpop.f32.mrf.mxu0
    %v833 = vadd.f32 %v163, %v832
    %v834 = vpop.f32.mrf.mxu0
    %v835 = vadd.f32 %v167, %v834
    %v836 = vpop.f32.mrf.mxu0
    %v837 = vadd.f32 %v163, %v836
    %v838 = vpop.f32.mrf.mxu0
    %v839 = vadd.f32 %v167, %v838
    %840 = vmatprep.mubr.bf16.mxu0 0
    %841 = vmatmul.mubr.bf16.gmra.mxu0 %v272
    %v842 = vpop.f32.mrf.mxu0
    %v843 = vadd.f32 %v163, %v842
    %v844 = vpop.f32.mrf.mxu0
    %v845 = vadd.f32 %v167, %v844
    %v846 = vpop.f32.mrf.mxu0
    %v847 = vadd.f32 %v163, %v846
    %v848 = vpop.f32.mrf.mxu0
    %v849 = vadd.f32 %v167, %v848
    %850 = vmatprep.mubr.bf16.mxu0 0
    %851 = vmatmul.mubr.bf16.gmra.mxu0 %v275
    %v852 = vpop.f32.mrf.mxu0
    %v853 = vadd.f32 %v163, %v852
    %v854 = vpop.f32.mrf.mxu0
    %v855 = vadd.f32 %v167, %v854
    %v856 = vpop.f32.mrf.mxu0
    %v857 = vadd.f32 %v163, %v856
    %v858 = vpop.f32.mrf.mxu0
    %v859 = vadd.f32 %v167, %v858
    %860 = vdwg.mxu0
    %v861 = vmax.f32 %v312, 0.0
    %v862 = vmax.f32 %v314, 0.0
    %v863 = vmax.f32 %v385, 0.0
    %v864 = vmax.f32 %v387, 0.0
    %v865 = vmax.f32 %v458, 0.0
    %v866 = vmax.f32 %v460, 0.0
    %v867 = vmax.f32 %v531, 0.0
    %v868 = vmax.f32 %v533, 0.0
    %v869 = vmax.f32 %v604, 0.0
    %v870 = vmax.f32 %v606, 0.0
    %v871 = vmax.f32 %v677, 0.0
    %v872 = vmax.f32 %v679, 0.0
    %v873 = vmax.f32 %v750, 0.0
    %v874 = vmax.f32 %v752, 0.0
    %v875 = vmax.f32 %v823, 0.0
    %v876 = vmax.f32 %v825, 0.0
    %v877 = vmax.f32 %v316, 0.0
    %v878 = vmax.f32 %v318, 0.0
    %v879 = vmax.f32 %v389, 0.0
    %v880 = vmax.f32 %v391, 0.0
    %v881 = vmax.f32 %v462, 0.0
    %v882 = vmax.f32 %v464, 0.0
    %v883 = vmax.f32 %v535, 0.0
    %v884 = vmax.f32 %v537, 0.0
    %v885 = vmax.f32 %v608, 0.0
    %v886 = vmax.f32 %v610, 0.0
    %v887 = vmax.f32 %v681, 0.0
    %v888 = vmax.f32 %v683, 0.0
    %v889 = vmax.f32 %v754, 0.0
    %v890 = vmax.f32 %v756, 0.0
    %v891 = vmax.f32 %v827, 0.0
    %v892 = vmax.f32 %v829, 0.0
    %v893 = vmax.f32 %v322, 0.0
    %v894 = vmax.f32 %v324, 0.0
    %v895 = vmax.f32 %v395, 0.0
    %v896 = vmax.f32 %v397, 0.0
    %v897 = vmax.f32 %v468, 0.0
    %v898 = vmax.f32 %v470, 0.0
    %v899 = vmax.f32 %v541, 0.0
    %v900 = vmax.f32 %v543, 0.0
    %v901 = vmax.f32 %v614, 0.0
    %v902 = vmax.f32 %v616, 0.0
    %v903 = vmax.f32 %v687, 0.0
    %v904 = vmax.f32 %v689, 0.0
    %v905 = vmax.f32 %v760, 0.0
    %v906 = vmax.f32 %v762, 0.0
    %v907 = vmax.f32 %v833, 0.0
    %v908 = vmax.f32 %v835, 0.0
    %v909 = vmax.f32 %v326, 0.0
    %v910 = vmax.f32 %v328, 0.0
    %v911 = vmax.f32 %v399, 0.0
    %v912 = vmax.f32 %v401, 0.0
    %v913 = vmax.f32 %v472, 0.0
    %v914 = vmax.f32 %v474, 0.0
    %v915 = vmax.f32 %v545, 0.0
    %v916 = vmax.f32 %v547, 0.0
    %v917 = vmax.f32 %v618, 0.0
    %v918 = vmax.f32 %v620, 0.0
    %v919 = vmax.f32 %v691, 0.0
    %v920 = vmax.f32 %v693, 0.0
    %v921 = vmax.f32 %v764, 0.0
    %v922 = vmax.f32 %v766, 0.0
    %v923 = vmax.f32 %v837, 0.0
    %v924 = vmax.f32 %v839, 0.0
    %v925 = vmax.f32 %v332, 0.0
    %v926 = vmax.f32 %v334, 0.0
    %v927 = vmax.f32 %v405, 0.0
    %v928 = vmax.f32 %v407, 0.0
    %v929 = vmax.f32 %v478, 0.0
    %v930 = vmax.f32 %v480, 0.0
    %v931 = vmax.f32 %v551, 0.0
    %v932 = vmax.f32 %v553, 0.0
    %v933 = vmax.f32 %v624, 0.0
    %v934 = vmax.f32 %v626, 0.0
    %v935 = vmax.f32 %v697, 0.0
    %v936 = vmax.f32 %v699, 0.0
    %v937 = vmax.f32 %v770, 0.0
    %v938 = vmax.f32 %v772, 0.0
    %v939 = vmax.f32 %v843, 0.0
    %v940 = vmax.f32 %v845, 0.0
    %v941 = vmax.f32 %v336, 0.0
    %v942 = vmax.f32 %v338, 0.0
    %v943 = vmax.f32 %v409, 0.0
    %v944 = vmax.f32 %v411, 0.0
    %v945 = vmax.f32 %v482, 0.0
    %v946 = vmax.f32 %v484, 0.0
    %v947 = vmax.f32 %v555, 0.0
    %v948 = vmax.f32 %v557, 0.0
    %v949 = vmax.f32 %v628, 0.0
    %v950 = vmax.f32 %v630, 0.0
    %v951 = vmax.f32 %v701, 0.0
    %v952 = vmax.f32 %v703, 0.0
    %v953 = vmax.f32 %v774, 0.0
    %v954 = vmax.f32 %v776, 0.0
    %v955 = vmax.f32 %v847, 0.0
    %v956 = vmax.f32 %v849, 0.0
    %v957 = vmax.f32 %v342, 0.0
    %v958 = vmax.f32 %v344, 0.0
    %v959 = vmax.f32 %v415, 0.0
    %v960 = vmax.f32 %v417, 0.0
    %v961 = vmax.f32 %v488, 0.0
    %v962 = vmax.f32 %v490, 0.0
    %v963 = vmax.f32 %v561, 0.0
    %v964 = vmax.f32 %v563, 0.0
    %v965 = vmax.f32 %v634, 0.0
    %v966 = vmax.f32 %v636, 0.0
    %v967 = vmax.f32 %v707, 0.0
    %v968 = vmax.f32 %v709, 0.0
    %v969 = vmax.f32 %v780, 0.0
    %v970 = vmax.f32 %v782, 0.0
    %v971 = vmax.f32 %v853, 0.0
    %v972 = vmax.f32 %v855, 0.0
    %v973 = vmax.f32 %v346, 0.0
    %v974 = vmax.f32 %v348, 0.0
    %v975 = vmax.f32 %v419, 0.0
    %v976 = vmax.f32 %v421, 0.0
    %v977 = vmax.f32 %v492, 0.0
    %v978 = vmax.f32 %v494, 0.0
    %v979 = vmax.f32 %v565, 0.0
    %v980 = vmax.f32 %v567, 0.0
    %v981 = vmax.f32 %v638, 0.0
    %v982 = vmax.f32 %v640, 0.0
    %v983 = vmax.f32 %v711, 0.0
    %v984 = vmax.f32 %v713, 0.0
    %v985 = vmax.f32 %v784, 0.0
    %v986 = vmax.f32 %v786, 0.0
    %v987 = vmax.f32 %v857, 0.0
    %v988 = vmax.f32 %v859, 0.0
    %v989 = vadd.f32 %v861, %v893
    %v990 = vadd.f32 %v862, %v894
    %v991 = vadd.f32 %v863, %v895
    %v992 = vadd.f32 %v864, %v896
    %v993 = vadd.f32 %v865, %v897
    %v994 = vadd.f32 %v866, %v898
    %v995 = vadd.f32 %v867, %v899
    %v996 = vadd.f32 %v868, %v900
    %v997 = vadd.f32 %v869, %v901
    %v998 = vadd.f32 %v870, %v902
    %v999 = vadd.f32 %v871, %v903
    %v1000 = vadd.f32 %v872, %v904
    %v1001 = vadd.f32 %v873, %v905
    %v1002 = vadd.f32 %v874, %v906
    %v1003 = vadd.f32 %v875, %v907
    %v1004 = vadd.f32 %v876, %v908
    %v1005 = vadd.f32 %v877, %v909
    %v1006 = vadd.f32 %v878, %v910
    %v1007 = vadd.f32 %v879, %v911
    %v1008 = vadd.f32 %v880, %v912
    %v1009 = vadd.f32 %v881, %v913
    %v1010 = vadd.f32 %v882, %v914
    %v1011 = vadd.f32 %v883, %v915
    %v1012 = vadd.f32 %v884, %v916
    %v1013 = vadd.f32 %v885, %v917
    %v1014 = vadd.f32 %v886, %v918
    %v1015 = vadd.f32 %v887, %v919
    %v1016 = vadd.f32 %v888, %v920
    %v1017 = vadd.f32 %v889, %v921
    %v1018 = vadd.f32 %v890, %v922
    %v1019 = vadd.f32 %v891, %v923
    %v1020 = vadd.f32 %v892, %v924
    %v1021 = vadd.f32 %v989, %v925
    %v1022 = vadd.f32 %v990, %v926
    %v1023 = vadd.f32 %v991, %v927
    %v1024 = vadd.f32 %v992, %v928
    %v1025 = vadd.f32 %v993, %v929
    %v1026 = vadd.f32 %v994, %v930
    %v1027 = vadd.f32 %v995, %v931
    %v1028 = vadd.f32 %v996, %v932
    %v1029 = vadd.f32 %v997, %v933
    %v1030 = vadd.f32 %v998, %v934
    %v1031 = vadd.f32 %v999, %v935
    %v1032 = vadd.f32 %v1000, %v936
    %v1033 = vadd.f32 %v1001, %v937
    %v1034 = vadd.f32 %v1002, %v938
    %v1035 = vadd.f32 %v1003, %v939
    %v1036 = vadd.f32 %v1004, %v940
    %v1037 = vadd.f32 %v1005, %v941
    %v1038 = vadd.f32 %v1006, %v942
    %v1039 = vadd.f32 %v1007, %v943
    %v1040 = vadd.f32 %v1008, %v944
    %v1041 = vadd.f32 %v1009, %v945
    %v1042 = vadd.f32 %v1010, %v946
    %v1043 = vadd.f32 %v1011, %v947
    %v1044 = vadd.f32 %v1012, %v948
    %v1045 = vadd.f32 %v1013, %v949
    %v1046 = vadd.f32 %v1014, %v950
    %v1047 = vadd.f32 %v1015, %v951
    %v1048 = vadd.f32 %v1016, %v952
    %v1049 = vadd.f32 %v1017, %v953
    %v1050 = vadd.f32 %v1018, %v954
    %v1051 = vadd.f32 %v1019, %v955
    %v1052 = vadd.f32 %v1020, %v956
    %v1053 = vadd.f32 %v1021, %v957
    %v1054 = vadd.f32 %v1022, %v958
    %v1055 = vadd.f32 %v1023, %v959
    %v1056 = vadd.f32 %v1024, %v960
    %v1057 = vadd.f32 %v1025, %v961
    %v1058 = vadd.f32 %v1026, %v962
    %v1059 = vadd.f32 %v1027, %v963
    %v1060 = vadd.f32 %v1028, %v964
    %v1061 = vadd.f32 %v1029, %v965
    %v1062 = vadd.f32 %v1030, %v966
    %v1063 = vadd.f32 %v1031, %v967
    %v1064 = vadd.f32 %v1032, %v968
    %v1065 = vadd.f32 %v1033, %v969
    %v1066 = vadd.f32 %v1034, %v970
    %v1067 = vadd.f32 %v1035, %v971
    %v1068 = vadd.f32 %v1036, %v972
    %v1069 = vadd.f32 %v1037, %v973
    %v1070 = vadd.f32 %v1038, %v974
    %v1071 = vadd.f32 %v1039, %v975
    %v1072 = vadd.f32 %v1040, %v976
    %v1073 = vadd.f32 %v1041, %v977
    %v1074 = vadd.f32 %v1042, %v978
    %v1075 = vadd.f32 %v1043, %v979
    %v1076 = vadd.f32 %v1044, %v980
    %v1077 = vadd.f32 %v1045, %v981
    %v1078 = vadd.f32 %v1046, %v982
    %v1079 = vadd.f32 %v1047, %v983
    %v1080 = vadd.f32 %v1048, %v984
    %v1081 = vadd.f32 %v1049, %v985
    %v1082 = vadd.f32 %v1050, %v986
    %v1083 = vadd.f32 %v1051, %v987
    %v1084 = vadd.f32 %v1052, %v988
    %v1085 = vmul.f32 %v1053, 0.25
    %v1086 = vmul.f32 %v1054, 0.25
    %v1087 = vmul.f32 %v1055, 0.25
    %v1088 = vmul.f32 %v1056, 0.25
    %v1089 = vmul.f32 %v1057, 0.25
    %v1090 = vmul.f32 %v1058, 0.25
    %v1091 = vmul.f32 %v1059, 0.25
    %v1092 = vmul.f32 %v1060, 0.25
    %v1093 = vmul.f32 %v1061, 0.25
    %v1094 = vmul.f32 %v1062, 0.25
    %v1095 = vmul.f32 %v1063, 0.25
    %v1096 = vmul.f32 %v1064, 0.25
    %v1097 = vmul.f32 %v1065, 0.25
    %v1098 = vmul.f32 %v1066, 0.25
    %v1099 = vmul.f32 %v1067, 0.25
    %v1100 = vmul.f32 %v1068, 0.25
    %v1101 = vmul.f32 %v1069, 0.25
    %v1102 = vmul.f32 %v1070, 0.25
    %v1103 = vmul.f32 %v1071, 0.25
    %v1104 = vmul.f32 %v1072, 0.25
    %v1105 = vmul.f32 %v1073, 0.25
    %v1106 = vmul.f32 %v1074, 0.25
    %v1107 = vmul.f32 %v1075, 0.25
    %v1108 = vmul.f32 %v1076, 0.25
    %v1109 = vmul.f32 %v1077, 0.25
    %v1110 = vmul.f32 %v1078, 0.25
    %v1111 = vmul.f32 %v1079, 0.25
    %v1112 = vmul.f32 %v1080, 0.25
    %v1113 = vmul.f32 %v1081, 0.25
    %v1114 = vmul.f32 %v1082, 0.25
    %v1115 = vmul.f32 %v1083, 0.25
    %v1116 = vmul.f32 %v1084, 0.25
    %v1117 = vpack.c.bf16 %v1101, %v1085
    %v1118 = vpack.c.bf16 %v1102, %v1086
    %v1119 = vpack.c.bf16 %v1103, %v1087
    %v1120 = vpack.c.bf16 %v1104, %v1088
    %v1121 = vpack.c.bf16 %v1105, %v1089
    %v1122 = vpack.c.bf16 %v1106, %v1090
    %v1123 = vpack.c.bf16 %v1107, %v1091
    %v1124 = vpack.c.bf16 %v1108, %v1092
    %v1125 = vpack.c.bf16 %v1109, %v1093
    %v1126 = vpack.c.bf16 %v1110, %v1094
    %v1127 = vpack.c.bf16 %v1111, %v1095
    %v1128 = vpack.c.bf16 %v1112, %v1096
    %v1129 = vpack.c.bf16 %v1113, %v1097
    %v1130 = vpack.c.bf16 %v1114, %v1098
    %v1131 = vpack.c.bf16 %v1115, %v1099
    %v1132 = vpack.c.bf16 %v1116, %v1100
    %v1133 = vld [vmem:[#allocation6] sm:$0xff]
    %v1134 = vld [vmem:[#allocation6 + $0x8] sm:$0xff]
    %v1135 = vld [vmem:[#allocation6 + $0x10] sm:$0xff]
    %v1136 = vld [vmem:[#allocation6 + $0x18] sm:$0xff]
    %v1137 = vld [vmem:[#allocation6 + $0x20] sm:$0xff]
    %v1138 = vld [vmem:[#allocation6 + $0x28] sm:$0xff]
    %v1139 = vld [vmem:[#allocation6 + $0x30] sm:$0xff]
    %v1140 = vld [vmem:[#allocation6 + $0x38] sm:$0xff]
    %v1141 = vld [vmem:[#allocation6 + $0x40] sm:$0xff]
    %v1142 = vld [vmem:[#allocation6 + $0x48] sm:$0xff]
    %v1143 = vld [vmem:[#allocation6 + $0x50] sm:$0xff]
    %v1144 = vld [vmem:[#allocation6 + $0x58] sm:$0xff]
    %v1145 = vld [vmem:[#allocation6 + $0x60] sm:$0xff]
    %v1146 = vld [vmem:[#allocation6 + $0x68] sm:$0xff]
    %v1147 = vld [vmem:[#allocation6 + $0x70] sm:$0xff]
    %v1148 = vld [vmem:[#allocation6 + $0x78] sm:$0xff]
    %v1149 = vld [vmem:[#allocation6 + $0x80] sm:$0xff]
    %v1150 = vld [vmem:[#allocation6 + $0x88] sm:$0xff]
    %v1151 = vld [vmem:[#allocation6 + $0x90] sm:$0xff]
    %v1152 = vld [vmem:[#allocation6 + $0x98] sm:$0xff]
    %v1153 = vld [vmem:[#allocation6 + $0xa0] sm:$0xff]
    %v1154 = vld [vmem:[#allocation6 + $0xa8] sm:$0xff]
    %v1155 = vld [vmem:[#allocation6 + $0xb0] sm:$0xff]
    %v1156 = vld [vmem:[#allocation6 + $0xb8] sm:$0xff]
    %v1157 = vld [vmem:[#allocation6 + $0xc0] sm:$0xff]
    %v1158 = vld [vmem:[#allocation6 + $0xc8] sm:$0xff]
    %v1159 = vld [vmem:[#allocation6 + $0xd0] sm:$0xff]
    %v1160 = vld [vmem:[#allocation6 + $0xd8] sm:$0xff]
    %v1161 = vld [vmem:[#allocation6 + $0xe0] sm:$0xff]
    %v1162 = vld [vmem:[#allocation6 + $0xe8] sm:$0xff]
    %v1163 = vld [vmem:[#allocation6 + $0xf0] sm:$0xff]
    %v1164 = vld [vmem:[#allocation6 + $0xf8] sm:$0xff]
    %v1165 = vld [vmem:[#allocation6 + $0x100] sm:$0xff]
    %v1166 = vld [vmem:[#allocation6 + $0x108] sm:$0xff]
    %v1167 = vld [vmem:[#allocation6 + $0x110] sm:$0xff]
    %v1168 = vld [vmem:[#allocation6 + $0x118] sm:$0xff]
    %v1169 = vld [vmem:[#allocation6 + $0x120] sm:$0xff]
    %v1170 = vld [vmem:[#allocation6 + $0x128] sm:$0xff]
    %v1171 = vld [vmem:[#allocation6 + $0x130] sm:$0xff]
    %v1172 = vld [vmem:[#allocation6 + $0x138] sm:$0xff]
    %v1173 = vld [vmem:[#allocation6 + $0x140] sm:$0xff]
    %v1174 = vld [vmem:[#allocation6 + $0x148] sm:$0xff]
    %v1175 = vld [vmem:[#allocation6 + $0x150] sm:$0xff]
    %v1176 = vld [vmem:[#allocation6 + $0x158] sm:$0xff]
    %v1177 = vld [vmem:[#allocation6 + $0x160] sm:$0xff]
    %v1178 = vld [vmem:[#allocation6 + $0x168] sm:$0xff]
    %v1179 = vld [vmem:[#allocation6 + $0x170] sm:$0xff]
    %v1180 = vld [vmem:[#allocation6 + $0x178] sm:$0xff]
    %v1181 = vld [vmem:[#allocation6 + $0x180] sm:$0xff]
    %v1182 = vld [vmem:[#allocation6 + $0x188] sm:$0xff]
    %v1183 = vld [vmem:[#allocation6 + $0x190] sm:$0xff]
    %v1184 = vld [vmem:[#allocation6 + $0x198] sm:$0xff]
    %v1185 = vld [vmem:[#allocation6 + $0x1a0] sm:$0xff]
    %v1186 = vld [vmem:[#allocation6 + $0x1a8] sm:$0xff]
    %v1187 = vld [vmem:[#allocation6 + $0x1b0] sm:$0xff]
    %v1188 = vld [vmem:[#allocation6 + $0x1b8] sm:$0xff]
    %v1189 = vld [vmem:[#allocation6 + $0x1c0] sm:$0xff]
    %v1190 = vld [vmem:[#allocation6 + $0x1c8] sm:$0xff]
    %v1191 = vld [vmem:[#allocation6 + $0x1d0] sm:$0xff]
    %v1192 = vld [vmem:[#allocation6 + $0x1d8] sm:$0xff]
    %v1193 = vld [vmem:[#allocation6 + $0x1e0] sm:$0xff]
    %v1194 = vld [vmem:[#allocation6 + $0x1e8] sm:$0xff]
    %v1195 = vld [vmem:[#allocation6 + $0x1f0] sm:$0xff]
    %v1196 = vld [vmem:[#allocation6 + $0x1f8] sm:$0xff]
    %v1197 = vld [vmem:[#allocation6 + $0x200] sm:$0xff]
    %v1198 = vld [vmem:[#allocation6 + $0x208] sm:$0xff]
    %v1199 = vld [vmem:[#allocation6 + $0x210] sm:$0xff]
    %v1200 = vld [vmem:[#allocation6 + $0x218] sm:$0xff]
    %v1201 = vld [vmem:[#allocation6 + $0x220] sm:$0xff]
    %v1202 = vld [vmem:[#allocation6 + $0x228] sm:$0xff]
    %v1203 = vld [vmem:[#allocation6 + $0x230] sm:$0xff]
    %v1204 = vld [vmem:[#allocation6 + $0x238] sm:$0xff]
    %v1205 = vld [vmem:[#allocation6 + $0x240] sm:$0xff]
    %v1206 = vld [vmem:[#allocation6 + $0x248] sm:$0xff]
    %v1207 = vld [vmem:[#allocation6 + $0x250] sm:$0xff]
    %v1208 = vld [vmem:[#allocation6 + $0x258] sm:$0xff]
    %v1209 = vld [vmem:[#allocation6 + $0x260] sm:$0xff]
    %v1210 = vld [vmem:[#allocation6 + $0x268] sm:$0xff]
    %v1211 = vld [vmem:[#allocation6 + $0x270] sm:$0xff]
    %v1212 = vld [vmem:[#allocation6 + $0x278] sm:$0xff]
    %v1213 = vld [vmem:[#allocation6 + $0x280] sm:$0xff]
    %v1214 = vld [vmem:[#allocation6 + $0x288] sm:$0xff]
    %v1215 = vld [vmem:[#allocation6 + $0x290] sm:$0xff]
    %v1216 = vld [vmem:[#allocation6 + $0x298] sm:$0xff]
    %v1217 = vld [vmem:[#allocation6 + $0x2a0] sm:$0xff]
    %v1218 = vld [vmem:[#allocation6 + $0x2a8] sm:$0xff]
    %v1219 = vld [vmem:[#allocation6 + $0x2b0] sm:$0xff]
    %v1220 = vld [vmem:[#allocation6 + $0x2b8] sm:$0xff]
    %v1221 = vld [vmem:[#allocation6 + $0x2c0] sm:$0xff]
    %v1222 = vld [vmem:[#allocation6 + $0x2c8] sm:$0xff]
    %v1223 = vld [vmem:[#allocation6 + $0x2d0] sm:$0xff]
    %v1224 = vld [vmem:[#allocation6 + $0x2d8] sm:$0xff]
    %v1225 = vld [vmem:[#allocation6 + $0x2e0] sm:$0xff]
    %v1226 = vld [vmem:[#allocation6 + $0x2e8] sm:$0xff]
    %v1227 = vld [vmem:[#allocation6 + $0x2f0] sm:$0xff]
    %v1228 = vld [vmem:[#allocation6 + $0x2f8] sm:$0xff]
    %v1229 = vld [vmem:[#allocation6 + $0x300] sm:$0xff]
    %v1230 = vld [vmem:[#allocation6 + $0x308] sm:$0xff]
    %v1231 = vld [vmem:[#allocation6 + $0x310] sm:$0xff]
    %v1232 = vld [vmem:[#allocation6 + $0x318] sm:$0xff]
    %v1233 = vld [vmem:[#allocation6 + $0x320] sm:$0xff]
    %v1234 = vld [vmem:[#allocation6 + $0x328] sm:$0xff]
    %v1235 = vld [vmem:[#allocation6 + $0x330] sm:$0xff]
    %v1236 = vld [vmem:[#allocation6 + $0x338] sm:$0xff]
    %v1237 = vld [vmem:[#allocation6 + $0x340] sm:$0xff]
    %v1238 = vld [vmem:[#allocation6 + $0x348] sm:$0xff]
    %v1239 = vld [vmem:[#allocation6 + $0x350] sm:$0xff]
    %v1240 = vld [vmem:[#allocation6 + $0x358] sm:$0xff]
    %v1241 = vld [vmem:[#allocation6 + $0x360] sm:$0xff]
    %v1242 = vld [vmem:[#allocation6 + $0x368] sm:$0xff]
    %v1243 = vld [vmem:[#allocation6 + $0x370] sm:$0xff]
    %v1244 = vld [vmem:[#allocation6 + $0x378] sm:$0xff]
    %v1245 = vld [vmem:[#allocation6 + $0x380] sm:$0xff]
    %v1246 = vld [vmem:[#allocation6 + $0x388] sm:$0xff]
    %v1247 = vld [vmem:[#allocation6 + $0x390] sm:$0xff]
    %v1248 = vld [vmem:[#allocation6 + $0x398] sm:$0xff]
    %v1249 = vld [vmem:[#allocation6 + $0x3a0] sm:$0xff]
    %v1250 = vld [vmem:[#allocation6 + $0x3a8] sm:$0xff]
    %v1251 = vld [vmem:[#allocation6 + $0x3b0] sm:$0xff]
    %v1252 = vld [vmem:[#allocation6 + $0x3b8] sm:$0xff]
    %v1253 = vld [vmem:[#allocation6 + $0x3c0] sm:$0xff]
    %v1254 = vld [vmem:[#allocation6 + $0x3c8] sm:$0xff]
    %v1255 = vld [vmem:[#allocation6 + $0x3d0] sm:$0xff]
    %v1256 = vld [vmem:[#allocation6 + $0x3d8] sm:$0xff]
    %v1257 = vld [vmem:[#allocation6 + $0x3e0] sm:$0xff]
    %v1258 = vld [vmem:[#allocation6 + $0x3e8] sm:$0xff]
    %v1259 = vld [vmem:[#allocation6 + $0x3f0] sm:$0xff]
    %v1260 = vld [vmem:[#allocation6 + $0x3f8] sm:$0xff]
    %v1261 = vld [vmem:[#allocation6 + $0x400] sm:$0xff]
    %v1262 = vld [vmem:[#allocation6 + $0x408] sm:$0xff]
    %v1263 = vld [vmem:[#allocation6 + $0x410] sm:$0xff]
    %v1264 = vld [vmem:[#allocation6 + $0x418] sm:$0xff]
    %v1265 = vld [vmem:[#allocation6 + $0x420] sm:$0xff]
    %v1266 = vld [vmem:[#allocation6 + $0x428] sm:$0xff]
    %v1267 = vld [vmem:[#allocation6 + $0x430] sm:$0xff]
    %v1268 = vld [vmem:[#allocation6 + $0x438] sm:$0xff]
    %v1269 = vld [vmem:[#allocation6 + $0x440] sm:$0xff]
    %v1270 = vld [vmem:[#allocation6 + $0x448] sm:$0xff]
    %v1271 = vld [vmem:[#allocation6 + $0x450] sm:$0xff]
    %v1272 = vld [vmem:[#allocation6 + $0x458] sm:$0xff]
    %v1273 = vld [vmem:[#allocation6 + $0x460] sm:$0xff]
    %v1274 = vld [vmem:[#allocation6 + $0x468] sm:$0xff]
    %v1275 = vld [vmem:[#allocation6 + $0x470] sm:$0xff]
    %v1276 = vld [vmem:[#allocation6 + $0x478] sm:$0xff]
    %v1277 = vld [vmem:[#allocation6 + $0x480] sm:$0xff]
    %v1278 = vld [vmem:[#allocation6 + $0x488] sm:$0xff]
    %v1279 = vld [vmem:[#allocation6 + $0x490] sm:$0xff]
    %v1280 = vld [vmem:[#allocation6 + $0x498] sm:$0xff]
    %v1281 = vld [vmem:[#allocation6 + $0x4a0] sm:$0xff]
    %v1282 = vld [vmem:[#allocation6 + $0x4a8] sm:$0xff]
    %v1283 = vld [vmem:[#allocation6 + $0x4b0] sm:$0xff]
    %v1284 = vld [vmem:[#allocation6 + $0x4b8] sm:$0xff]
    %v1285 = vld [vmem:[#allocation6 + $0x4c0] sm:$0xff]
    %v1286 = vld [vmem:[#allocation6 + $0x4c8] sm:$0xff]
    %v1287 = vld [vmem:[#allocation6 + $0x4d0] sm:$0xff]
    %v1288 = vld [vmem:[#allocation6 + $0x4d8] sm:$0xff]
    %v1289 = vld [vmem:[#allocation6 + $0x4e0] sm:$0xff]
    %v1290 = vld [vmem:[#allocation6 + $0x4e8] sm:$0xff]
    %v1291 = vld [vmem:[#allocation6 + $0x4f0] sm:$0xff]
    %v1292 = vld [vmem:[#allocation6 + $0x4f8] sm:$0xff]
    %v1293 = vld [vmem:[#allocation6 + $0x500] sm:$0xff]
    %v1294 = vld [vmem:[#allocation6 + $0x508] sm:$0xff]
    %v1295 = vld [vmem:[#allocation6 + $0x510] sm:$0xff]
    %v1296 = vld [vmem:[#allocation6 + $0x518] sm:$0xff]
    %v1297 = vld [vmem:[#allocation6 + $0x520] sm:$0xff]
    %v1298 = vld [vmem:[#allocation6 + $0x528] sm:$0xff]
    %v1299 = vld [vmem:[#allocation6 + $0x530] sm:$0xff]
    %v1300 = vld [vmem:[#allocation6 + $0x538] sm:$0xff]
    %v1301 = vld [vmem:[#allocation6 + $0x540] sm:$0xff]
    %v1302 = vld [vmem:[#allocation6 + $0x548] sm:$0xff]
    %v1303 = vld [vmem:[#allocation6 + $0x550] sm:$0xff]
    %v1304 = vld [vmem:[#allocation6 + $0x558] sm:$0xff]
    %v1305 = vld [vmem:[#allocation6 + $0x560] sm:$0xff]
    %v1306 = vld [vmem:[#allocation6 + $0x568] sm:$0xff]
    %v1307 = vld [vmem:[#allocation6 + $0x570] sm:$0xff]
    %v1308 = vld [vmem:[#allocation6 + $0x578] sm:$0xff]
    %v1309 = vld [vmem:[#allocation6 + $0x580] sm:$0xff]
    %v1310 = vld [vmem:[#allocation6 + $0x588] sm:$0xff]
    %v1311 = vld [vmem:[#allocation6 + $0x590] sm:$0xff]
    %v1312 = vld [vmem:[#allocation6 + $0x598] sm:$0xff]
    %v1313 = vld [vmem:[#allocation6 + $0x5a0] sm:$0xff]
    %v1314 = vld [vmem:[#allocation6 + $0x5a8] sm:$0xff]
    %v1315 = vld [vmem:[#allocation6 + $0x5b0] sm:$0xff]
    %v1316 = vld [vmem:[#allocation6 + $0x5b8] sm:$0xff]
    %v1317 = vld [vmem:[#allocation6 + $0x5c0] sm:$0xff]
    %v1318 = vld [vmem:[#allocation6 + $0x5c8] sm:$0xff]
    %v1319 = vld [vmem:[#allocation6 + $0x5d0] sm:$0xff]
    %v1320 = vld [vmem:[#allocation6 + $0x5d8] sm:$0xff]
    %v1321 = vld [vmem:[#allocation6 + $0x5e0] sm:$0xff]
    %v1322 = vld [vmem:[#allocation6 + $0x5e8] sm:$0xff]
    %v1323 = vld [vmem:[#allocation6 + $0x5f0] sm:$0xff]
    %v1324 = vld [vmem:[#allocation6 + $0x5f8] sm:$0xff]
    %v1325 = vld [vmem:[#allocation6 + $0x600] sm:$0xff]
    %v1326 = vld [vmem:[#allocation6 + $0x608] sm:$0xff]
    %v1327 = vld [vmem:[#allocation6 + $0x610] sm:$0xff]
    %v1328 = vld [vmem:[#allocation6 + $0x618] sm:$0xff]
    %v1329 = vld [vmem:[#allocation6 + $0x620] sm:$0xff]
    %v1330 = vld [vmem:[#allocation6 + $0x628] sm:$0xff]
    %v1331 = vld [vmem:[#allocation6 + $0x630] sm:$0xff]
    %v1332 = vld [vmem:[#allocation6 + $0x638] sm:$0xff]
    %v1333 = vld [vmem:[#allocation6 + $0x640] sm:$0xff]
    %v1334 = vld [vmem:[#allocation6 + $0x648] sm:$0xff]
    %v1335 = vld [vmem:[#allocation6 + $0x650] sm:$0xff]
    %v1336 = vld [vmem:[#allocation6 + $0x658] sm:$0xff]
    %v1337 = vld [vmem:[#allocation6 + $0x660] sm:$0xff]
    %v1338 = vld [vmem:[#allocation6 + $0x668] sm:$0xff]
    %v1339 = vld [vmem:[#allocation6 + $0x670] sm:$0xff]
    %v1340 = vld [vmem:[#allocation6 + $0x678] sm:$0xff]
    %v1341 = vld [vmem:[#allocation6 + $0x680] sm:$0xff]
    %v1342 = vld [vmem:[#allocation6 + $0x688] sm:$0xff]
    %v1343 = vld [vmem:[#allocation6 + $0x690] sm:$0xff]
    %v1344 = vld [vmem:[#allocation6 + $0x698] sm:$0xff]
    %v1345 = vld [vmem:[#allocation6 + $0x6a0] sm:$0xff]
    %v1346 = vld [vmem:[#allocation6 + $0x6a8] sm:$0xff]
    %v1347 = vld [vmem:[#allocation6 + $0x6b0] sm:$0xff]
    %v1348 = vld [vmem:[#allocation6 + $0x6b8] sm:$0xff]
    %v1349 = vld [vmem:[#allocation6 + $0x6c0] sm:$0xff]
    %v1350 = vld [vmem:[#allocation6 + $0x6c8] sm:$0xff]
    %v1351 = vld [vmem:[#allocation6 + $0x6d0] sm:$0xff]
    %v1352 = vld [vmem:[#allocation6 + $0x6d8] sm:$0xff]
    %v1353 = vld [vmem:[#allocation6 + $0x6e0] sm:$0xff]
    %v1354 = vld [vmem:[#allocation6 + $0x6e8] sm:$0xff]
    %v1355 = vld [vmem:[#allocation6 + $0x6f0] sm:$0xff]
    %v1356 = vld [vmem:[#allocation6 + $0x6f8] sm:$0xff]
    %v1357 = vld [vmem:[#allocation6 + $0x700] sm:$0xff]
    %v1358 = vld [vmem:[#allocation6 + $0x708] sm:$0xff]
    %v1359 = vld [vmem:[#allocation6 + $0x710] sm:$0xff]
    %v1360 = vld [vmem:[#allocation6 + $0x718] sm:$0xff]
    %v1361 = vld [vmem:[#allocation6 + $0x720] sm:$0xff]
    %v1362 = vld [vmem:[#allocation6 + $0x728] sm:$0xff]
    %v1363 = vld [vmem:[#allocation6 + $0x730] sm:$0xff]
    %v1364 = vld [vmem:[#allocation6 + $0x738] sm:$0xff]
    %v1365 = vld [vmem:[#allocation6 + $0x740] sm:$0xff]
    %v1366 = vld [vmem:[#allocation6 + $0x748] sm:$0xff]
    %v1367 = vld [vmem:[#allocation6 + $0x750] sm:$0xff]
    %v1368 = vld [vmem:[#allocation6 + $0x758] sm:$0xff]
    %v1369 = vld [vmem:[#allocation6 + $0x760] sm:$0xff]
    %v1370 = vld [vmem:[#allocation6 + $0x768] sm:$0xff]
    %v1371 = vld [vmem:[#allocation6 + $0x770] sm:$0xff]
    %v1372 = vld [vmem:[#allocation6 + $0x778] sm:$0xff]
    %v1373 = vld [vmem:[#allocation6 + $0x780] sm:$0xff]
    %v1374 = vld [vmem:[#allocation6 + $0x788] sm:$0xff]
    %v1375 = vld [vmem:[#allocation6 + $0x790] sm:$0xff]
    %v1376 = vld [vmem:[#allocation6 + $0x798] sm:$0xff]
    %v1377 = vld [vmem:[#allocation6 + $0x7a0] sm:$0xff]
    %v1378 = vld [vmem:[#allocation6 + $0x7a8] sm:$0xff]
    %v1379 = vld [vmem:[#allocation6 + $0x7b0] sm:$0xff]
    %v1380 = vld [vmem:[#allocation6 + $0x7b8] sm:$0xff]
    %v1381 = vld [vmem:[#allocation6 + $0x7c0] sm:$0xff]
    %v1382 = vld [vmem:[#allocation6 + $0x7c8] sm:$0xff]
    %v1383 = vld [vmem:[#allocation6 + $0x7d0] sm:$0xff]
    %v1384 = vld [vmem:[#allocation6 + $0x7d8] sm:$0xff]
    %v1385 = vld [vmem:[#allocation6 + $0x7e0] sm:$0xff]
    %v1386 = vld [vmem:[#allocation6 + $0x7e8] sm:$0xff]
    %v1387 = vld [vmem:[#allocation6 + $0x7f0] sm:$0xff]
    %v1388 = vld [vmem:[#allocation6 + $0x7f8] sm:$0xff]
    %v1389 = vld [vmem:[#allocation6 + $0x800] sm:$0xff]
    %v1390 = vld [vmem:[#allocation6 + $0x808] sm:$0xff]
    %v1391 = vld [vmem:[#allocation6 + $0x810] sm:$0xff]
    %v1392 = vld [vmem:[#allocation6 + $0x818] sm:$0xff]
    %v1393 = vld [vmem:[#allocation6 + $0x820] sm:$0xff]
    %v1394 = vld [vmem:[#allocation6 + $0x828] sm:$0xff]
    %v1395 = vld [vmem:[#allocation6 + $0x830] sm:$0xff]
    %v1396 = vld [vmem:[#allocation6 + $0x838] sm:$0xff]
    %v1397 = vld [vmem:[#allocation6 + $0x840] sm:$0xff]
    %v1398 = vld [vmem:[#allocation6 + $0x848] sm:$0xff]
    %v1399 = vld [vmem:[#allocation6 + $0x850] sm:$0xff]
    %v1400 = vld [vmem:[#allocation6 + $0x858] sm:$0xff]
    %v1401 = vld [vmem:[#allocation6 + $0x860] sm:$0xff]
    %v1402 = vld [vmem:[#allocation6 + $0x868] sm:$0xff]
    %v1403 = vld [vmem:[#allocation6 + $0x870] sm:$0xff]
    %v1404 = vld [vmem:[#allocation6 + $0x878] sm:$0xff]
    %v1405 = vld [vmem:[#allocation6 + $0x880] sm:$0xff]
    %v1406 = vld [vmem:[#allocation6 + $0x888] sm:$0xff]
    %v1407 = vld [vmem:[#allocation6 + $0x890] sm:$0xff]
    %v1408 = vld [vmem:[#allocation6 + $0x898] sm:$0xff]
    %v1409 = vld [vmem:[#allocation6 + $0x8a0] sm:$0xff]
    %v1410 = vld [vmem:[#allocation6 + $0x8a8] sm:$0xff]
    %v1411 = vld [vmem:[#allocation6 + $0x8b0] sm:$0xff]
    %v1412 = vld [vmem:[#allocation6 + $0x8b8] sm:$0xff]
    %v1413 = vld [vmem:[#allocation6 + $0x8c0] sm:$0xff]
    %v1414 = vld [vmem:[#allocation6 + $0x8c8] sm:$0xff]
    %v1415 = vld [vmem:[#allocation6 + $0x8d0] sm:$0xff]
    %v1416 = vld [vmem:[#allocation6 + $0x8d8] sm:$0xff]
    %v1417 = vld [vmem:[#allocation6 + $0x8e0] sm:$0xff]
    %v1418 = vld [vmem:[#allocation6 + $0x8e8] sm:$0xff]
    %v1419 = vld [vmem:[#allocation6 + $0x8f0] sm:$0xff]
    %v1420 = vld [vmem:[#allocation6 + $0x8f8] sm:$0xff]
    %v1421 = vld [vmem:[#allocation6 + $0x900] sm:$0xff]
    %v1422 = vld [vmem:[#allocation6 + $0x908] sm:$0xff]
    %v1423 = vld [vmem:[#allocation6 + $0x910] sm:$0xff]
    %v1424 = vld [vmem:[#allocation6 + $0x918] sm:$0xff]
    %v1425 = vld [vmem:[#allocation6 + $0x920] sm:$0xff]
    %v1426 = vld [vmem:[#allocation6 + $0x928] sm:$0xff]
    %v1427 = vld [vmem:[#allocation6 + $0x930] sm:$0xff]
    %v1428 = vld [vmem:[#allocation6 + $0x938] sm:$0xff]
    %v1429 = vld [vmem:[#allocation6 + $0x940] sm:$0xff]
    %v1430 = vld [vmem:[#allocation6 + $0x948] sm:$0xff]
    %v1431 = vld [vmem:[#allocation6 + $0x950] sm:$0xff]
    %v1432 = vld [vmem:[#allocation6 + $0x958] sm:$0xff]
    %v1433 = vld [vmem:[#allocation6 + $0x960] sm:$0xff]
    %v1434 = vld [vmem:[#allocation6 + $0x968] sm:$0xff]
    %v1435 = vld [vmem:[#allocation6 + $0x970] sm:$0xff]
    %v1436 = vld [vmem:[#allocation6 + $0x978] sm:$0xff]
    %v1437 = vld [vmem:[#allocation6 + $0x980] sm:$0xff]
    %v1438 = vld [vmem:[#allocation6 + $0x988] sm:$0xff]
    %v1439 = vld [vmem:[#allocation6 + $0x990] sm:$0xff]
    %v1440 = vld [vmem:[#allocation6 + $0x998] sm:$0xff]
    %v1441 = vld [vmem:[#allocation6 + $0x9a0] sm:$0xff]
    %v1442 = vld [vmem:[#allocation6 + $0x9a8] sm:$0xff]
    %v1443 = vld [vmem:[#allocation6 + $0x9b0] sm:$0xff]
    %v1444 = vld [vmem:[#allocation6 + $0x9b8] sm:$0xff]
    %v1445 = vld [vmem:[#allocation6 + $0x9c0] sm:$0xff]
    %v1446 = vld [vmem:[#allocation6 + $0x9c8] sm:$0xff]
    %v1447 = vld [vmem:[#allocation6 + $0x9d0] sm:$0xff]
    %v1448 = vld [vmem:[#allocation6 + $0x9d8] sm:$0xff]
    %v1449 = vld [vmem:[#allocation6 + $0x9e0] sm:$0xff]
    %v1450 = vld [vmem:[#allocation6 + $0x9e8] sm:$0xff]
    %v1451 = vld [vmem:[#allocation6 + $0x9f0] sm:$0xff]
    %v1452 = vld [vmem:[#allocation6 + $0x9f8] sm:$0xff]
    %v1453 = vld [vmem:[#allocation6 + $0xa00] sm:$0xff]
    %v1454 = vld [vmem:[#allocation6 + $0xa08] sm:$0xff]
    %v1455 = vld [vmem:[#allocation6 + $0xa10] sm:$0xff]
    %v1456 = vld [vmem:[#allocation6 + $0xa18] sm:$0xff]
    %v1457 = vld [vmem:[#allocation6 + $0xa20] sm:$0xff]
    %v1458 = vld [vmem:[#allocation6 + $0xa28] sm:$0xff]
    %v1459 = vld [vmem:[#allocation6 + $0xa30] sm:$0xff]
    %v1460 = vld [vmem:[#allocation6 + $0xa38] sm:$0xff]
    %v1461 = vld [vmem:[#allocation6 + $0xa40] sm:$0xff]
    %v1462 = vld [vmem:[#allocation6 + $0xa48] sm:$0xff]
    %v1463 = vld [vmem:[#allocation6 + $0xa50] sm:$0xff]
    %v1464 = vld [vmem:[#allocation6 + $0xa58] sm:$0xff]
    %v1465 = vld [vmem:[#allocation6 + $0xa60] sm:$0xff]
    %v1466 = vld [vmem:[#allocation6 + $0xa68] sm:$0xff]
    %v1467 = vld [vmem:[#allocation6 + $0xa70] sm:$0xff]
    %v1468 = vld [vmem:[#allocation6 + $0xa78] sm:$0xff]
    %v1469 = vld [vmem:[#allocation6 + $0xa80] sm:$0xff]
    %v1470 = vld [vmem:[#allocation6 + $0xa88] sm:$0xff]
    %v1471 = vld [vmem:[#allocation6 + $0xa90] sm:$0xff]
    %v1472 = vld [vmem:[#allocation6 + $0xa98] sm:$0xff]
    %v1473 = vld [vmem:[#allocation6 + $0xaa0] sm:$0xff]
    %v1474 = vld [vmem:[#allocation6 + $0xaa8] sm:$0xff]
    %v1475 = vld [vmem:[#allocation6 + $0xab0] sm:$0xff]
    %v1476 = vld [vmem:[#allocation6 + $0xab8] sm:$0xff]
    %v1477 = vld [vmem:[#allocation6 + $0xac0] sm:$0xff]
    %v1478 = vld [vmem:[#allocation6 + $0xac8] sm:$0xff]
    %v1479 = vld [vmem:[#allocation6 + $0xad0] sm:$0xff]
    %v1480 = vld [vmem:[#allocation6 + $0xad8] sm:$0xff]
    %v1481 = vld [vmem:[#allocation6 + $0xae0] sm:$0xff]
    %v1482 = vld [vmem:[#allocation6 + $0xae8] sm:$0xff]
    %v1483 = vld [vmem:[#allocation6 + $0xaf0] sm:$0xff]
    %v1484 = vld [vmem:[#allocation6 + $0xaf8] sm:$0xff]
    %v1485 = vld [vmem:[#allocation6 + $0xb00] sm:$0xff]
    %v1486 = vld [vmem:[#allocation6 + $0xb08] sm:$0xff]
    %v1487 = vld [vmem:[#allocation6 + $0xb10] sm:$0xff]
    %v1488 = vld [vmem:[#allocation6 + $0xb18] sm:$0xff]
    %v1489 = vld [vmem:[#allocation6 + $0xb20] sm:$0xff]
    %v1490 = vld [vmem:[#allocation6 + $0xb28] sm:$0xff]
    %v1491 = vld [vmem:[#allocation6 + $0xb30] sm:$0xff]
    %v1492 = vld [vmem:[#allocation6 + $0xb38] sm:$0xff]
    %v1493 = vld [vmem:[#allocation6 + $0xb40] sm:$0xff]
    %v1494 = vld [vmem:[#allocation6 + $0xb48] sm:$0xff]
    %v1495 = vld [vmem:[#allocation6 + $0xb50] sm:$0xff]
    %v1496 = vld [vmem:[#allocation6 + $0xb58] sm:$0xff]
    %v1497 = vld [vmem:[#allocation6 + $0xb60] sm:$0xff]
    %v1498 = vld [vmem:[#allocation6 + $0xb68] sm:$0xff]
    %v1499 = vld [vmem:[#allocation6 + $0xb70] sm:$0xff]
    %v1500 = vld [vmem:[#allocation6 + $0xb78] sm:$0xff]
    %v1501 = vld [vmem:[#allocation6 + $0xb80] sm:$0xff]
    %v1502 = vld [vmem:[#allocation6 + $0xb88] sm:$0xff]
    %v1503 = vld [vmem:[#allocation6 + $0xb90] sm:$0xff]
    %v1504 = vld [vmem:[#allocation6 + $0xb98] sm:$0xff]
    %v1505 = vld [vmem:[#allocation6 + $0xba0] sm:$0xff]
    %v1506 = vld [vmem:[#allocation6 + $0xba8] sm:$0xff]
    %v1507 = vld [vmem:[#allocation6 + $0xbb0] sm:$0xff]
    %v1508 = vld [vmem:[#allocation6 + $0xbb8] sm:$0xff]
    %v1509 = vld [vmem:[#allocation6 + $0xbc0] sm:$0xff]
    %v1510 = vld [vmem:[#allocation6 + $0xbc8] sm:$0xff]
    %v1511 = vld [vmem:[#allocation6 + $0xbd0] sm:$0xff]
    %v1512 = vld [vmem:[#allocation6 + $0xbd8] sm:$0xff]
    %v1513 = vld [vmem:[#allocation6 + $0xbe0] sm:$0xff]
    %v1514 = vld [vmem:[#allocation6 + $0xbe8] sm:$0xff]
    %v1515 = vld [vmem:[#allocation6 + $0xbf0] sm:$0xff]
    %v1516 = vld [vmem:[#allocation6 + $0xbf8] sm:$0xff]
    %v1517 = vld [vmem:[#allocation6 + $0xc00] sm:$0xff]
    %v1518 = vld [vmem:[#allocation6 + $0xc08] sm:$0xff]
    %v1519 = vld [vmem:[#allocation6 + $0xc10] sm:$0xff]
    %v1520 = vld [vmem:[#allocation6 + $0xc18] sm:$0xff]
    %v1521 = vld [vmem:[#allocation6 + $0xc20] sm:$0xff]
    %v1522 = vld [vmem:[#allocation6 + $0xc28] sm:$0xff]
    %v1523 = vld [vmem:[#allocation6 + $0xc30] sm:$0xff]
    %v1524 = vld [vmem:[#allocation6 + $0xc38] sm:$0xff]
    %v1525 = vld [vmem:[#allocation6 + $0xc40] sm:$0xff]
    %v1526 = vld [vmem:[#allocation6 + $0xc48] sm:$0xff]
    %v1527 = vld [vmem:[#allocation6 + $0xc50] sm:$0xff]
    %v1528 = vld [vmem:[#allocation6 + $0xc58] sm:$0xff]
    %v1529 = vld [vmem:[#allocation6 + $0xc60] sm:$0xff]
    %v1530 = vld [vmem:[#allocation6 + $0xc68] sm:$0xff]
    %v1531 = vld [vmem:[#allocation6 + $0xc70] sm:$0xff]
    %v1532 = vld [vmem:[#allocation6 + $0xc78] sm:$0xff]
    %v1533 = vld [vmem:[#allocation6 + $0xc80] sm:$0xff]
    %v1534 = vld [vmem:[#allocation6 + $0xc88] sm:$0xff]
    %v1535 = vld [vmem:[#allocation6 + $0xc90] sm:$0xff]
    %v1536 = vld [vmem:[#allocation6 + $0xc98] sm:$0xff]
    %v1537 = vld [vmem:[#allocation6 + $0xca0] sm:$0xff]
    %v1538 = vld [vmem:[#allocation6 + $0xca8] sm:$0xff]
    %v1539 = vld [vmem:[#allocation6 + $0xcb0] sm:$0xff]
    %v1540 = vld [vmem:[#allocation6 + $0xcb8] sm:$0xff]
    %v1541 = vld [vmem:[#allocation6 + $0xcc0] sm:$0xff]
    %v1542 = vld [vmem:[#allocation6 + $0xcc8] sm:$0xff]
    %v1543 = vld [vmem:[#allocation6 + $0xcd0] sm:$0xff]
    %v1544 = vld [vmem:[#allocation6 + $0xcd8] sm:$0xff]
    %v1545 = vld [vmem:[#allocation6 + $0xce0] sm:$0xff]
    %v1546 = vld [vmem:[#allocation6 + $0xce8] sm:$0xff]
    %v1547 = vld [vmem:[#allocation6 + $0xcf0] sm:$0xff]
    %v1548 = vld [vmem:[#allocation6 + $0xcf8] sm:$0xff]
    %v1549 = vld [vmem:[#allocation6 + $0xd00] sm:$0xff]
    %v1550 = vld [vmem:[#allocation6 + $0xd08] sm:$0xff]
    %v1551 = vld [vmem:[#allocation6 + $0xd10] sm:$0xff]
    %v1552 = vld [vmem:[#allocation6 + $0xd18] sm:$0xff]
    %v1553 = vld [vmem:[#allocation6 + $0xd20] sm:$0xff]
    %v1554 = vld [vmem:[#allocation6 + $0xd28] sm:$0xff]
    %v1555 = vld [vmem:[#allocation6 + $0xd30] sm:$0xff]
    %v1556 = vld [vmem:[#allocation6 + $0xd38] sm:$0xff]
    %v1557 = vld [vmem:[#allocation6 + $0xd40] sm:$0xff]
    %v1558 = vld [vmem:[#allocation6 + $0xd48] sm:$0xff]
    %v1559 = vld [vmem:[#allocation6 + $0xd50] sm:$0xff]
    %v1560 = vld [vmem:[#allocation6 + $0xd58] sm:$0xff]
    %v1561 = vld [vmem:[#allocation6 + $0xd60] sm:$0xff]
    %v1562 = vld [vmem:[#allocation6 + $0xd68] sm:$0xff]
    %v1563 = vld [vmem:[#allocation6 + $0xd70] sm:$0xff]
    %v1564 = vld [vmem:[#allocation6 + $0xd78] sm:$0xff]
    %v1565 = vld [vmem:[#allocation6 + $0xd80] sm:$0xff]
    %v1566 = vld [vmem:[#allocation6 + $0xd88] sm:$0xff]
    %v1567 = vld [vmem:[#allocation6 + $0xd90] sm:$0xff]
    %v1568 = vld [vmem:[#allocation6 + $0xd98] sm:$0xff]
    %v1569 = vld [vmem:[#allocation6 + $0xda0] sm:$0xff]
    %v1570 = vld [vmem:[#allocation6 + $0xda8] sm:$0xff]
    %v1571 = vld [vmem:[#allocation6 + $0xdb0] sm:$0xff]
    %v1572 = vld [vmem:[#allocation6 + $0xdb8] sm:$0xff]
    %v1573 = vld [vmem:[#allocation6 + $0xdc0] sm:$0xff]
    %v1574 = vld [vmem:[#allocation6 + $0xdc8] sm:$0xff]
    %v1575 = vld [vmem:[#allocation6 + $0xdd0] sm:$0xff]
    %v1576 = vld [vmem:[#allocation6 + $0xdd8] sm:$0xff]
    %v1577 = vld [vmem:[#allocation6 + $0xde0] sm:$0xff]
    %v1578 = vld [vmem:[#allocation6 + $0xde8] sm:$0xff]
    %v1579 = vld [vmem:[#allocation6 + $0xdf0] sm:$0xff]
    %v1580 = vld [vmem:[#allocation6 + $0xdf8] sm:$0xff]
    %v1581 = vld [vmem:[#allocation6 + $0xe00] sm:$0xff]
    %v1582 = vld [vmem:[#allocation6 + $0xe08] sm:$0xff]
    %v1583 = vld [vmem:[#allocation6 + $0xe10] sm:$0xff]
    %v1584 = vld [vmem:[#allocation6 + $0xe18] sm:$0xff]
    %v1585 = vld [vmem:[#allocation6 + $0xe20] sm:$0xff]
    %v1586 = vld [vmem:[#allocation6 + $0xe28] sm:$0xff]
    %v1587 = vld [vmem:[#allocation6 + $0xe30] sm:$0xff]
    %v1588 = vld [vmem:[#allocation6 + $0xe38] sm:$0xff]
    %v1589 = vld [vmem:[#allocation6 + $0xe40] sm:$0xff]
    %v1590 = vld [vmem:[#allocation6 + $0xe48] sm:$0xff]
    %v1591 = vld [vmem:[#allocation6 + $0xe50] sm:$0xff]
    %v1592 = vld [vmem:[#allocation6 + $0xe58] sm:$0xff]
    %v1593 = vld [vmem:[#allocation6 + $0xe60] sm:$0xff]
    %v1594 = vld [vmem:[#allocation6 + $0xe68] sm:$0xff]
    %v1595 = vld [vmem:[#allocation6 + $0xe70] sm:$0xff]
    %v1596 = vld [vmem:[#allocation6 + $0xe78] sm:$0xff]
    %v1597 = vld [vmem:[#allocation6 + $0xe80] sm:$0xff]
    %v1598 = vld [vmem:[#allocation6 + $0xe88] sm:$0xff]
    %v1599 = vld [vmem:[#allocation6 + $0xe90] sm:$0xff]
    %v1600 = vld [vmem:[#allocation6 + $0xe98] sm:$0xff]
    %v1601 = vld [vmem:[#allocation6 + $0xea0] sm:$0xff]
    %v1602 = vld [vmem:[#allocation6 + $0xea8] sm:$0xff]
    %v1603 = vld [vmem:[#allocation6 + $0xeb0] sm:$0xff]
    %v1604 = vld [vmem:[#allocation6 + $0xeb8] sm:$0xff]
    %v1605 = vld [vmem:[#allocation6 + $0xec0] sm:$0xff]
    %v1606 = vld [vmem:[#allocation6 + $0xec8] sm:$0xff]
    %v1607 = vld [vmem:[#allocation6 + $0xed0] sm:$0xff]
    %v1608 = vld [vmem:[#allocation6 + $0xed8] sm:$0xff]
    %v1609 = vld [vmem:[#allocation6 + $0xee0] sm:$0xff]
    %v1610 = vld [vmem:[#allocation6 + $0xee8] sm:$0xff]
    %v1611 = vld [vmem:[#allocation6 + $0xef0] sm:$0xff]
    %v1612 = vld [vmem:[#allocation6 + $0xef8] sm:$0xff]
    %v1613 = vld [vmem:[#allocation6 + $0xf00] sm:$0xff]
    %v1614 = vld [vmem:[#allocation6 + $0xf08] sm:$0xff]
    %v1615 = vld [vmem:[#allocation6 + $0xf10] sm:$0xff]
    %v1616 = vld [vmem:[#allocation6 + $0xf18] sm:$0xff]
    %v1617 = vld [vmem:[#allocation6 + $0xf20] sm:$0xff]
    %v1618 = vld [vmem:[#allocation6 + $0xf28] sm:$0xff]
    %v1619 = vld [vmem:[#allocation6 + $0xf30] sm:$0xff]
    %v1620 = vld [vmem:[#allocation6 + $0xf38] sm:$0xff]
    %v1621 = vld [vmem:[#allocation6 + $0xf40] sm:$0xff]
    %v1622 = vld [vmem:[#allocation6 + $0xf48] sm:$0xff]
    %v1623 = vld [vmem:[#allocation6 + $0xf50] sm:$0xff]
    %v1624 = vld [vmem:[#allocation6 + $0xf58] sm:$0xff]
    %v1625 = vld [vmem:[#allocation6 + $0xf60] sm:$0xff]
    %v1626 = vld [vmem:[#allocation6 + $0xf68] sm:$0xff]
    %v1627 = vld [vmem:[#allocation6 + $0xf70] sm:$0xff]
    %v1628 = vld [vmem:[#allocation6 + $0xf78] sm:$0xff]
    %v1629 = vld [vmem:[#allocation6 + $0xf80] sm:$0xff]
    %v1630 = vld [vmem:[#allocation6 + $0xf88] sm:$0xff]
    %v1631 = vld [vmem:[#allocation6 + $0xf90] sm:$0xff]
    %v1632 = vld [vmem:[#allocation6 + $0xf98] sm:$0xff]
    %v1633 = vld [vmem:[#allocation6 + $0xfa0] sm:$0xff]
    %v1634 = vld [vmem:[#allocation6 + $0xfa8] sm:$0xff]
    %v1635 = vld [vmem:[#allocation6 + $0xfb0] sm:$0xff]
    %v1636 = vld [vmem:[#allocation6 + $0xfb8] sm:$0xff]
    %v1637 = vld [vmem:[#allocation6 + $0xfc0] sm:$0xff]
    %v1638 = vld [vmem:[#allocation6 + $0xfc8] sm:$0xff]
    %v1639 = vld [vmem:[#allocation6 + $0xfd0] sm:$0xff]
    %v1640 = vld [vmem:[#allocation6 + $0xfd8] sm:$0xff]
    %v1641 = vld [vmem:[#allocation6 + $0xfe0] sm:$0xff]
    %v1642 = vld [vmem:[#allocation6 + $0xfe8] sm:$0xff]
    %v1643 = vld [vmem:[#allocation6 + $0xff0] sm:$0xff]
    %v1644 = vld [vmem:[#allocation6 + $0xff8] sm:$0xff]
    %v1645 = vld [vmem:[#allocation7] sm:$0xf]
    %v1647 = vlaneseq
    %v1648 = vshrl.u32 %v1647, 7
    %v1649 = vsub.s32 0, %v1648
    %v1650 = vrot.slane %v1645, %v1649
    %v1651 = vlaneseq
    %v1652 = vshrl.u32 %v1651, 7
    %v1653 = vsub.s32 1, %v1652
    %v1654 = vrot.slane %v1645, %v1653
    %v1655 = vlaneseq
    %v1656 = vshrl.u32 %v1655, 7
    %v1657 = vsub.s32 2, %v1656
    %v1658 = vrot.slane %v1645, %v1657
    %v1659 = vlaneseq
    %v1660 = vshrl.u32 %v1659, 7
    %v1661 = vsub.s32 3, %v1660
    %v1662 = vrot.slane %v1645, %v1661
    %v2179 = vunpack.c.l.b16 %v1133
    %v2180 = vunpack.c.h.b16 %v1133
    %v2181 = vunpack.c.l.b16 %v1134
    %v2182 = vunpack.c.h.b16 %v1134
    %v2183 = vunpack.c.l.b16 %v1135
    %v2184 = vunpack.c.h.b16 %v1135
    %v2185 = vunpack.c.l.b16 %v1136
    %v2186 = vunpack.c.h.b16 %v1136
    %v2187 = vunpack.c.l.b16 %v1137
    %v2188 = vunpack.c.h.b16 %v1137
    %v2189 = vunpack.c.l.b16 %v1138
    %v2190 = vunpack.c.h.b16 %v1138
    %v2191 = vunpack.c.l.b16 %v1139
    %v2192 = vunpack.c.h.b16 %v1139
    %v2193 = vunpack.c.l.b16 %v1140
    %v2194 = vunpack.c.h.b16 %v1140
    %v2195 = vunpack.c.l.b16 %v1141
    %v2196 = vunpack.c.h.b16 %v1141
    %v2197 = vunpack.c.l.b16 %v1142
    %v2198 = vunpack.c.h.b16 %v1142
    %v2199 = vunpack.c.l.b16 %v1143
    %v2200 = vunpack.c.h.b16 %v1143
    %v2201 = vunpack.c.l.b16 %v1144
    %v2202 = vunpack.c.h.b16 %v1144
    %v2203 = vunpack.c.l.b16 %v1145
    %v2204 = vunpack.c.h.b16 %v1145
    %v2205 = vunpack.c.l.b16 %v1146
    %v2206 = vunpack.c.h.b16 %v1146
    %v2207 = vunpack.c.l.b16 %v1147
    %v2208 = vunpack.c.h.b16 %v1147
    %v2209 = vunpack.c.l.b16 %v1148
    %v2210 = vunpack.c.h.b16 %v1148
    %v2211 = vunpack.c.l.b16 %v1149
    %v2212 = vunpack.c.h.b16 %v1149
    %v2213 = vunpack.c.l.b16 %v1150
    %v2214 = vunpack.c.h.b16 %v1150
    %v2215 = vunpack.c.l.b16 %v1151
    %v2216 = vunpack.c.h.b16 %v1151
    %v2217 = vunpack.c.l.b16 %v1152
    %v2218 = vunpack.c.h.b16 %v1152
    %v2219 = vunpack.c.l.b16 %v1153
    %v2220 = vunpack.c.h.b16 %v1153
    %v2221 = vunpack.c.l.b16 %v1154
    %v2222 = vunpack.c.h.b16 %v1154
    %v2223 = vunpack.c.l.b16 %v1155
    %v2224 = vunpack.c.h.b16 %v1155
    %v2225 = vunpack.c.l.b16 %v1156
    %v2226 = vunpack.c.h.b16 %v1156
    %v2227 = vunpack.c.l.b16 %v1157
    %v2228 = vunpack.c.h.b16 %v1157
    %v2229 = vunpack.c.l.b16 %v1158
    %v2230 = vunpack.c.h.b16 %v1158
    %v2231 = vunpack.c.l.b16 %v1159
    %v2232 = vunpack.c.h.b16 %v1159
    %v2233 = vunpack.c.l.b16 %v1160
    %v2234 = vunpack.c.h.b16 %v1160
    %v2235 = vunpack.c.l.b16 %v1161
    %v2236 = vunpack.c.h.b16 %v1161
    %v2237 = vunpack.c.l.b16 %v1162
    %v2238 = vunpack.c.h.b16 %v1162
    %v2239 = vunpack.c.l.b16 %v1163
    %v2240 = vunpack.c.h.b16 %v1163
    %v2241 = vunpack.c.l.b16 %v1164
    %v2242 = vunpack.c.h.b16 %v1164
    %v2243 = vunpack.c.l.b16 %v1165
    %v2244 = vunpack.c.h.b16 %v1165
    %v2245 = vunpack.c.l.b16 %v1166
    %v2246 = vunpack.c.h.b16 %v1166
    %v2247 = vunpack.c.l.b16 %v1167
    %v2248 = vunpack.c.h.b16 %v1167
    %v2249 = vunpack.c.l.b16 %v1168
    %v2250 = vunpack.c.h.b16 %v1168
    %v2251 = vunpack.c.l.b16 %v1169
    %v2252 = vunpack.c.h.b16 %v1169
    %v2253 = vunpack.c.l.b16 %v1170
    %v2254 = vunpack.c.h.b16 %v1170
    %v2255 = vunpack.c.l.b16 %v1171
    %v2256 = vunpack.c.h.b16 %v1171
    %v2257 = vunpack.c.l.b16 %v1172
    %v2258 = vunpack.c.h.b16 %v1172
    %v2259 = vunpack.c.l.b16 %v1173
    %v2260 = vunpack.c.h.b16 %v1173
    %v2261 = vunpack.c.l.b16 %v1174
    %v2262 = vunpack.c.h.b16 %v1174
    %v2263 = vunpack.c.l.b16 %v1175
    %v2264 = vunpack.c.h.b16 %v1175
    %v2265 = vunpack.c.l.b16 %v1176
    %v2266 = vunpack.c.h.b16 %v1176
    %v2267 = vunpack.c.l.b16 %v1177
    %v2268 = vunpack.c.h.b16 %v1177
    %v2269 = vunpack.c.l.b16 %v1178
    %v2270 = vunpack.c.h.b16 %v1178
    %v2271 = vunpack.c.l.b16 %v1179
    %v2272 = vunpack.c.h.b16 %v1179
    %v2273 = vunpack.c.l.b16 %v1180
    %v2274 = vunpack.c.h.b16 %v1180
    %v2275 = vunpack.c.l.b16 %v1181
    %v2276 = vunpack.c.h.b16 %v1181
    %v2277 = vunpack.c.l.b16 %v1182
    %v2278 = vunpack.c.h.b16 %v1182
    %v2279 = vunpack.c.l.b16 %v1183
    %v2280 = vunpack.c.h.b16 %v1183
    %v2281 = vunpack.c.l.b16 %v1184
    %v2282 = vunpack.c.h.b16 %v1184
    %v2283 = vunpack.c.l.b16 %v1185
    %v2284 = vunpack.c.h.b16 %v1185
    %v2285 = vunpack.c.l.b16 %v1186
    %v2286 = vunpack.c.h.b16 %v1186
    %v2287 = vunpack.c.l.b16 %v1187
    %v2288 = vunpack.c.h.b16 %v1187
    %v2289 = vunpack.c.l.b16 %v1188
    %v2290 = vunpack.c.h.b16 %v1188
    %v2291 = vunpack.c.l.b16 %v1189
    %v2292 = vunpack.c.h.b16 %v1189
    %v2293 = vunpack.c.l.b16 %v1190
    %v2294 = vunpack.c.h.b16 %v1190
    %v2295 = vunpack.c.l.b16 %v1191
    %v2296 = vunpack.c.h.b16 %v1191
    %v2297 = vunpack.c.l.b16 %v1192
    %v2298 = vunpack.c.h.b16 %v1192
    %v2299 = vunpack.c.l.b16 %v1193
    %v2300 = vunpack.c.h.b16 %v1193
    %v2301 = vunpack.c.l.b16 %v1194
    %v2302 = vunpack.c.h.b16 %v1194
    %v2303 = vunpack.c.l.b16 %v1195
    %v2304 = vunpack.c.h.b16 %v1195
    %v2305 = vunpack.c.l.b16 %v1196
    %v2306 = vunpack.c.h.b16 %v1196
    %v2307 = vunpack.c.l.b16 %v1197
    %v2308 = vunpack.c.h.b16 %v1197
    %v2309 = vunpack.c.l.b16 %v1198
    %v2310 = vunpack.c.h.b16 %v1198
    %v2311 = vunpack.c.l.b16 %v1199
    %v2312 = vunpack.c.h.b16 %v1199
    %v2313 = vunpack.c.l.b16 %v1200
    %v2314 = vunpack.c.h.b16 %v1200
    %v2315 = vunpack.c.l.b16 %v1201
    %v2316 = vunpack.c.h.b16 %v1201
    %v2317 = vunpack.c.l.b16 %v1202
    %v2318 = vunpack.c.h.b16 %v1202
    %v2319 = vunpack.c.l.b16 %v1203
    %v2320 = vunpack.c.h.b16 %v1203
    %v2321 = vunpack.c.l.b16 %v1204
    %v2322 = vunpack.c.h.b16 %v1204
    %v2323 = vunpack.c.l.b16 %v1205
    %v2324 = vunpack.c.h.b16 %v1205
    %v2325 = vunpack.c.l.b16 %v1206
    %v2326 = vunpack.c.h.b16 %v1206
    %v2327 = vunpack.c.l.b16 %v1207
    %v2328 = vunpack.c.h.b16 %v1207
    %v2329 = vunpack.c.l.b16 %v1208
    %v2330 = vunpack.c.h.b16 %v1208
    %v2331 = vunpack.c.l.b16 %v1209
    %v2332 = vunpack.c.h.b16 %v1209
    %v2333 = vunpack.c.l.b16 %v1210
    %v2334 = vunpack.c.h.b16 %v1210
    %v2335 = vunpack.c.l.b16 %v1211
    %v2336 = vunpack.c.h.b16 %v1211
    %v2337 = vunpack.c.l.b16 %v1212
    %v2338 = vunpack.c.h.b16 %v1212
    %v2339 = vunpack.c.l.b16 %v1213
    %v2340 = vunpack.c.h.b16 %v1213
    %v2341 = vunpack.c.l.b16 %v1214
    %v2342 = vunpack.c.h.b16 %v1214
    %v2343 = vunpack.c.l.b16 %v1215
    %v2344 = vunpack.c.h.b16 %v1215
    %v2345 = vunpack.c.l.b16 %v1216
    %v2346 = vunpack.c.h.b16 %v1216
    %v2347 = vunpack.c.l.b16 %v1217
    %v2348 = vunpack.c.h.b16 %v1217
    %v2349 = vunpack.c.l.b16 %v1218
    %v2350 = vunpack.c.h.b16 %v1218
    %v2351 = vunpack.c.l.b16 %v1219
    %v2352 = vunpack.c.h.b16 %v1219
    %v2353 = vunpack.c.l.b16 %v1220
    %v2354 = vunpack.c.h.b16 %v1220
    %v2355 = vunpack.c.l.b16 %v1221
    %v2356 = vunpack.c.h.b16 %v1221
    %v2357 = vunpack.c.l.b16 %v1222
    %v2358 = vunpack.c.h.b16 %v1222
    %v2359 = vunpack.c.l.b16 %v1223
    %v2360 = vunpack.c.h.b16 %v1223
    %v2361 = vunpack.c.l.b16 %v1224
    %v2362 = vunpack.c.h.b16 %v1224
    %v2363 = vunpack.c.l.b16 %v1225
    %v2364 = vunpack.c.h.b16 %v1225
    %v2365 = vunpack.c.l.b16 %v1226
    %v2366 = vunpack.c.h.b16 %v1226
    %v2367 = vunpack.c.l.b16 %v1227
    %v2368 = vunpack.c.h.b16 %v1227
    %v2369 = vunpack.c.l.b16 %v1228
    %v2370 = vunpack.c.h.b16 %v1228
    %v2371 = vunpack.c.l.b16 %v1229
    %v2372 = vunpack.c.h.b16 %v1229
    %v2373 = vunpack.c.l.b16 %v1230
    %v2374 = vunpack.c.h.b16 %v1230
    %v2375 = vunpack.c.l.b16 %v1231
    %v2376 = vunpack.c.h.b16 %v1231
    %v2377 = vunpack.c.l.b16 %v1232
    %v2378 = vunpack.c.h.b16 %v1232
    %v2379 = vunpack.c.l.b16 %v1233
    %v2380 = vunpack.c.h.b16 %v1233
    %v2381 = vunpack.c.l.b16 %v1234
    %v2382 = vunpack.c.h.b16 %v1234
    %v2383 = vunpack.c.l.b16 %v1235
    %v2384 = vunpack.c.h.b16 %v1235
    %v2385 = vunpack.c.l.b16 %v1236
    %v2386 = vunpack.c.h.b16 %v1236
    %v2387 = vunpack.c.l.b16 %v1237
    %v2388 = vunpack.c.h.b16 %v1237
    %v2389 = vunpack.c.l.b16 %v1238
    %v2390 = vunpack.c.h.b16 %v1238
    %v2391 = vunpack.c.l.b16 %v1239
    %v2392 = vunpack.c.h.b16 %v1239
    %v2393 = vunpack.c.l.b16 %v1240
    %v2394 = vunpack.c.h.b16 %v1240
    %v2395 = vunpack.c.l.b16 %v1241
    %v2396 = vunpack.c.h.b16 %v1241
    %v2397 = vunpack.c.l.b16 %v1242
    %v2398 = vunpack.c.h.b16 %v1242
    %v2399 = vunpack.c.l.b16 %v1243
    %v2400 = vunpack.c.h.b16 %v1243
    %v2401 = vunpack.c.l.b16 %v1244
    %v2402 = vunpack.c.h.b16 %v1244
    %v2403 = vunpack.c.l.b16 %v1245
    %v2404 = vunpack.c.h.b16 %v1245
    %v2405 = vunpack.c.l.b16 %v1246
    %v2406 = vunpack.c.h.b16 %v1246
    %v2407 = vunpack.c.l.b16 %v1247
    %v2408 = vunpack.c.h.b16 %v1247
    %v2409 = vunpack.c.l.b16 %v1248
    %v2410 = vunpack.c.h.b16 %v1248
    %v2411 = vunpack.c.l.b16 %v1249
    %v2412 = vunpack.c.h.b16 %v1249
    %v2413 = vunpack.c.l.b16 %v1250
    %v2414 = vunpack.c.h.b16 %v1250
    %v2415 = vunpack.c.l.b16 %v1251
    %v2416 = vunpack.c.h.b16 %v1251
    %v2417 = vunpack.c.l.b16 %v1252
    %v2418 = vunpack.c.h.b16 %v1252
    %v2419 = vunpack.c.l.b16 %v1253
    %v2420 = vunpack.c.h.b16 %v1253
    %v2421 = vunpack.c.l.b16 %v1254
    %v2422 = vunpack.c.h.b16 %v1254
    %v2423 = vunpack.c.l.b16 %v1255
    %v2424 = vunpack.c.h.b16 %v1255
    %v2425 = vunpack.c.l.b16 %v1256
    %v2426 = vunpack.c.h.b16 %v1256
    %v2427 = vunpack.c.l.b16 %v1257
    %v2428 = vunpack.c.h.b16 %v1257
    %v2429 = vunpack.c.l.b16 %v1258
    %v2430 = vunpack.c.h.b16 %v1258
    %v2431 = vunpack.c.l.b16 %v1259
    %v2432 = vunpack.c.h.b16 %v1259
    %v2433 = vunpack.c.l.b16 %v1260
    %v2434 = vunpack.c.h.b16 %v1260
    %v2435 = vunpack.c.l.b16 %v1261
    %v2436 = vunpack.c.h.b16 %v1261
    %v2437 = vunpack.c.l.b16 %v1262
    %v2438 = vunpack.c.h.b16 %v1262
    %v2439 = vunpack.c.l.b16 %v1263
    %v2440 = vunpack.c.h.b16 %v1263
    %v2441 = vunpack.c.l.b16 %v1264
    %v2442 = vunpack.c.h.b16 %v1264
    %v2443 = vunpack.c.l.b16 %v1265
    %v2444 = vunpack.c.h.b16 %v1265
    %v2445 = vunpack.c.l.b16 %v1266
    %v2446 = vunpack.c.h.b16 %v1266
    %v2447 = vunpack.c.l.b16 %v1267
    %v2448 = vunpack.c.h.b16 %v1267
    %v2449 = vunpack.c.l.b16 %v1268
    %v2450 = vunpack.c.h.b16 %v1268
    %v2451 = vunpack.c.l.b16 %v1269
    %v2452 = vunpack.c.h.b16 %v1269
    %v2453 = vunpack.c.l.b16 %v1270
    %v2454 = vunpack.c.h.b16 %v1270
    %v2455 = vunpack.c.l.b16 %v1271
    %v2456 = vunpack.c.h.b16 %v1271
    %v2457 = vunpack.c.l.b16 %v1272
    %v2458 = vunpack.c.h.b16 %v1272
    %v2459 = vunpack.c.l.b16 %v1273
    %v2460 = vunpack.c.h.b16 %v1273
    %v2461 = vunpack.c.l.b16 %v1274
    %v2462 = vunpack.c.h.b16 %v1274
    %v2463 = vunpack.c.l.b16 %v1275
    %v2464 = vunpack.c.h.b16 %v1275
    %v2465 = vunpack.c.l.b16 %v1276
    %v2466 = vunpack.c.h.b16 %v1276
    %v2467 = vunpack.c.l.b16 %v1277
    %v2468 = vunpack.c.h.b16 %v1277
    %v2469 = vunpack.c.l.b16 %v1278
    %v2470 = vunpack.c.h.b16 %v1278
    %v2471 = vunpack.c.l.b16 %v1279
    %v2472 = vunpack.c.h.b16 %v1279
    %v2473 = vunpack.c.l.b16 %v1280
    %v2474 = vunpack.c.h.b16 %v1280
    %v2475 = vunpack.c.l.b16 %v1281
    %v2476 = vunpack.c.h.b16 %v1281
    %v2477 = vunpack.c.l.b16 %v1282
    %v2478 = vunpack.c.h.b16 %v1282
    %v2479 = vunpack.c.l.b16 %v1283
    %v2480 = vunpack.c.h.b16 %v1283
    %v2481 = vunpack.c.l.b16 %v1284
    %v2482 = vunpack.c.h.b16 %v1284
    %v2483 = vunpack.c.l.b16 %v1285
    %v2484 = vunpack.c.h.b16 %v1285
    %v2485 = vunpack.c.l.b16 %v1286
    %v2486 = vunpack.c.h.b16 %v1286
    %v2487 = vunpack.c.l.b16 %v1287
    %v2488 = vunpack.c.h.b16 %v1287
    %v2489 = vunpack.c.l.b16 %v1288
    %v2490 = vunpack.c.h.b16 %v1288
    %v2491 = vunpack.c.l.b16 %v1289
    %v2492 = vunpack.c.h.b16 %v1289
    %v2493 = vunpack.c.l.b16 %v1290
    %v2494 = vunpack.c.h.b16 %v1290
    %v2495 = vunpack.c.l.b16 %v1291
    %v2496 = vunpack.c.h.b16 %v1291
    %v2497 = vunpack.c.l.b16 %v1292
    %v2498 = vunpack.c.h.b16 %v1292
    %v2499 = vunpack.c.l.b16 %v1293
    %v2500 = vunpack.c.h.b16 %v1293
    %v2501 = vunpack.c.l.b16 %v1294
    %v2502 = vunpack.c.h.b16 %v1294
    %v2503 = vunpack.c.l.b16 %v1295
    %v2504 = vunpack.c.h.b16 %v1295
    %v2505 = vunpack.c.l.b16 %v1296
    %v2506 = vunpack.c.h.b16 %v1296
    %v2507 = vunpack.c.l.b16 %v1297
    %v2508 = vunpack.c.h.b16 %v1297
    %v2509 = vunpack.c.l.b16 %v1298
    %v2510 = vunpack.c.h.b16 %v1298
    %v2511 = vunpack.c.l.b16 %v1299
    %v2512 = vunpack.c.h.b16 %v1299
    %v2513 = vunpack.c.l.b16 %v1300
    %v2514 = vunpack.c.h.b16 %v1300
    %v2515 = vunpack.c.l.b16 %v1301
    %v2516 = vunpack.c.h.b16 %v1301
    %v2517 = vunpack.c.l.b16 %v1302
    %v2518 = vunpack.c.h.b16 %v1302
    %v2519 = vunpack.c.l.b16 %v1303
    %v2520 = vunpack.c.h.b16 %v1303
    %v2521 = vunpack.c.l.b16 %v1304
    %v2522 = vunpack.c.h.b16 %v1304
    %v2523 = vunpack.c.l.b16 %v1305
    %v2524 = vunpack.c.h.b16 %v1305
    %v2525 = vunpack.c.l.b16 %v1306
    %v2526 = vunpack.c.h.b16 %v1306
    %v2527 = vunpack.c.l.b16 %v1307
    %v2528 = vunpack.c.h.b16 %v1307
    %v2529 = vunpack.c.l.b16 %v1308
    %v2530 = vunpack.c.h.b16 %v1308
    %v2531 = vunpack.c.l.b16 %v1309
    %v2532 = vunpack.c.h.b16 %v1309
    %v2533 = vunpack.c.l.b16 %v1310
    %v2534 = vunpack.c.h.b16 %v1310
    %v2535 = vunpack.c.l.b16 %v1311
    %v2536 = vunpack.c.h.b16 %v1311
    %v2537 = vunpack.c.l.b16 %v1312
    %v2538 = vunpack.c.h.b16 %v1312
    %v2539 = vunpack.c.l.b16 %v1313
    %v2540 = vunpack.c.h.b16 %v1313
    %v2541 = vunpack.c.l.b16 %v1314
    %v2542 = vunpack.c.h.b16 %v1314
    %v2543 = vunpack.c.l.b16 %v1315
    %v2544 = vunpack.c.h.b16 %v1315
    %v2545 = vunpack.c.l.b16 %v1316
    %v2546 = vunpack.c.h.b16 %v1316
    %v2547 = vunpack.c.l.b16 %v1317
    %v2548 = vunpack.c.h.b16 %v1317
    %v2549 = vunpack.c.l.b16 %v1318
    %v2550 = vunpack.c.h.b16 %v1318
    %v2551 = vunpack.c.l.b16 %v1319
    %v2552 = vunpack.c.h.b16 %v1319
    %v2553 = vunpack.c.l.b16 %v1320
    %v2554 = vunpack.c.h.b16 %v1320
    %v2555 = vunpack.c.l.b16 %v1321
    %v2556 = vunpack.c.h.b16 %v1321
    %v2557 = vunpack.c.l.b16 %v1322
    %v2558 = vunpack.c.h.b16 %v1322
    %v2559 = vunpack.c.l.b16 %v1323
    %v2560 = vunpack.c.h.b16 %v1323
    %v2561 = vunpack.c.l.b16 %v1324
    %v2562 = vunpack.c.h.b16 %v1324
    %v2563 = vunpack.c.l.b16 %v1325
    %v2564 = vunpack.c.h.b16 %v1325
    %v2565 = vunpack.c.l.b16 %v1326
    %v2566 = vunpack.c.h.b16 %v1326
    %v2567 = vunpack.c.l.b16 %v1327
    %v2568 = vunpack.c.h.b16 %v1327
    %v2569 = vunpack.c.l.b16 %v1328
    %v2570 = vunpack.c.h.b16 %v1328
    %v2571 = vunpack.c.l.b16 %v1329
    %v2572 = vunpack.c.h.b16 %v1329
    %v2573 = vunpack.c.l.b16 %v1330
    %v2574 = vunpack.c.h.b16 %v1330
    %v2575 = vunpack.c.l.b16 %v1331
    %v2576 = vunpack.c.h.b16 %v1331
    %v2577 = vunpack.c.l.b16 %v1332
    %v2578 = vunpack.c.h.b16 %v1332
    %v2579 = vunpack.c.l.b16 %v1333
    %v2580 = vunpack.c.h.b16 %v1333
    %v2581 = vunpack.c.l.b16 %v1334
    %v2582 = vunpack.c.h.b16 %v1334
    %v2583 = vunpack.c.l.b16 %v1335
    %v2584 = vunpack.c.h.b16 %v1335
    %v2585 = vunpack.c.l.b16 %v1336
    %v2586 = vunpack.c.h.b16 %v1336
    %v2587 = vunpack.c.l.b16 %v1337
    %v2588 = vunpack.c.h.b16 %v1337
    %v2589 = vunpack.c.l.b16 %v1338
    %v2590 = vunpack.c.h.b16 %v1338
    %v2591 = vunpack.c.l.b16 %v1339
    %v2592 = vunpack.c.h.b16 %v1339
    %v2593 = vunpack.c.l.b16 %v1340
    %v2594 = vunpack.c.h.b16 %v1340
    %v2595 = vunpack.c.l.b16 %v1341
    %v2596 = vunpack.c.h.b16 %v1341
    %v2597 = vunpack.c.l.b16 %v1342
    %v2598 = vunpack.c.h.b16 %v1342
    %v2599 = vunpack.c.l.b16 %v1343
    %v2600 = vunpack.c.h.b16 %v1343
    %v2601 = vunpack.c.l.b16 %v1344
    %v2602 = vunpack.c.h.b16 %v1344
    %v2603 = vunpack.c.l.b16 %v1345
    %v2604 = vunpack.c.h.b16 %v1345
    %v2605 = vunpack.c.l.b16 %v1346
    %v2606 = vunpack.c.h.b16 %v1346
    %v2607 = vunpack.c.l.b16 %v1347
    %v2608 = vunpack.c.h.b16 %v1347
    %v2609 = vunpack.c.l.b16 %v1348
    %v2610 = vunpack.c.h.b16 %v1348
    %v2611 = vunpack.c.l.b16 %v1349
    %v2612 = vunpack.c.h.b16 %v1349
    %v2613 = vunpack.c.l.b16 %v1350
    %v2614 = vunpack.c.h.b16 %v1350
    %v2615 = vunpack.c.l.b16 %v1351
    %v2616 = vunpack.c.h.b16 %v1351
    %v2617 = vunpack.c.l.b16 %v1352
    %v2618 = vunpack.c.h.b16 %v1352
    %v2619 = vunpack.c.l.b16 %v1353
    %v2620 = vunpack.c.h.b16 %v1353
    %v2621 = vunpack.c.l.b16 %v1354
    %v2622 = vunpack.c.h.b16 %v1354
    %v2623 = vunpack.c.l.b16 %v1355
    %v2624 = vunpack.c.h.b16 %v1355
    %v2625 = vunpack.c.l.b16 %v1356
    %v2626 = vunpack.c.h.b16 %v1356
    %v2627 = vunpack.c.l.b16 %v1357
    %v2628 = vunpack.c.h.b16 %v1357
    %v2629 = vunpack.c.l.b16 %v1358
    %v2630 = vunpack.c.h.b16 %v1358
    %v2631 = vunpack.c.l.b16 %v1359
    %v2632 = vunpack.c.h.b16 %v1359
    %v2633 = vunpack.c.l.b16 %v1360
    %v2634 = vunpack.c.h.b16 %v1360
    %v2635 = vunpack.c.l.b16 %v1361
    %v2636 = vunpack.c.h.b16 %v1361
    %v2637 = vunpack.c.l.b16 %v1362
    %v2638 = vunpack.c.h.b16 %v1362
    %v2639 = vunpack.c.l.b16 %v1363
    %v2640 = vunpack.c.h.b16 %v1363
    %v2641 = vunpack.c.l.b16 %v1364
    %v2642 = vunpack.c.h.b16 %v1364
    %v2643 = vunpack.c.l.b16 %v1365
    %v2644 = vunpack.c.h.b16 %v1365
    %v2645 = vunpack.c.l.b16 %v1366
    %v2646 = vunpack.c.h.b16 %v1366
    %v2647 = vunpack.c.l.b16 %v1367
    %v2648 = vunpack.c.h.b16 %v1367
    %v2649 = vunpack.c.l.b16 %v1368
    %v2650 = vunpack.c.h.b16 %v1368
    %v2651 = vunpack.c.l.b16 %v1369
    %v2652 = vunpack.c.h.b16 %v1369
    %v2653 = vunpack.c.l.b16 %v1370
    %v2654 = vunpack.c.h.b16 %v1370
    %v2655 = vunpack.c.l.b16 %v1371
    %v2656 = vunpack.c.h.b16 %v1371
    %v2657 = vunpack.c.l.b16 %v1372
    %v2658 = vunpack.c.h.b16 %v1372
    %v2659 = vunpack.c.l.b16 %v1373
    %v2660 = vunpack.c.h.b16 %v1373
    %v2661 = vunpack.c.l.b16 %v1374
    %v2662 = vunpack.c.h.b16 %v1374
    %v2663 = vunpack.c.l.b16 %v1375
    %v2664 = vunpack.c.h.b16 %v1375
    %v2665 = vunpack.c.l.b16 %v1376
    %v2666 = vunpack.c.h.b16 %v1376
    %v2667 = vunpack.c.l.b16 %v1377
    %v2668 = vunpack.c.h.b16 %v1377
    %v2669 = vunpack.c.l.b16 %v1378
    %v2670 = vunpack.c.h.b16 %v1378
    %v2671 = vunpack.c.l.b16 %v1379
    %v2672 = vunpack.c.h.b16 %v1379
    %v2673 = vunpack.c.l.b16 %v1380
    %v2674 = vunpack.c.h.b16 %v1380
    %v2675 = vunpack.c.l.b16 %v1381
    %v2676 = vunpack.c.h.b16 %v1381
    %v2677 = vunpack.c.l.b16 %v1382
    %v2678 = vunpack.c.h.b16 %v1382
    %v2679 = vunpack.c.l.b16 %v1383
    %v2680 = vunpack.c.h.b16 %v1383
    %v2681 = vunpack.c.l.b16 %v1384
    %v2682 = vunpack.c.h.b16 %v1384
    %v2683 = vunpack.c.l.b16 %v1385
    %v2684 = vunpack.c.h.b16 %v1385
    %v2685 = vunpack.c.l.b16 %v1386
    %v2686 = vunpack.c.h.b16 %v1386
    %v2687 = vunpack.c.l.b16 %v1387
    %v2688 = vunpack.c.h.b16 %v1387
    %v2689 = vunpack.c.l.b16 %v1388
    %v2690 = vunpack.c.h.b16 %v1388
    %v2691 = vunpack.c.l.b16 %v1389
    %v2692 = vunpack.c.h.b16 %v1389
    %v2693 = vunpack.c.l.b16 %v1390
    %v2694 = vunpack.c.h.b16 %v1390
    %v2695 = vunpack.c.l.b16 %v1391
    %v2696 = vunpack.c.h.b16 %v1391
    %v2697 = vunpack.c.l.b16 %v1392
    %v2698 = vunpack.c.h.b16 %v1392
    %v2699 = vunpack.c.l.b16 %v1393
    %v2700 = vunpack.c.h.b16 %v1393
    %v2701 = vunpack.c.l.b16 %v1394
    %v2702 = vunpack.c.h.b16 %v1394
    %v2703 = vunpack.c.l.b16 %v1395
    %v2704 = vunpack.c.h.b16 %v1395
    %v2705 = vunpack.c.l.b16 %v1396
    %v2706 = vunpack.c.h.b16 %v1396
    %v2707 = vunpack.c.l.b16 %v1397
    %v2708 = vunpack.c.h.b16 %v1397
    %v2709 = vunpack.c.l.b16 %v1398
    %v2710 = vunpack.c.h.b16 %v1398
    %v2711 = vunpack.c.l.b16 %v1399
    %v2712 = vunpack.c.h.b16 %v1399
    %v2713 = vunpack.c.l.b16 %v1400
    %v2714 = vunpack.c.h.b16 %v1400
    %v2715 = vunpack.c.l.b16 %v1401
    %v2716 = vunpack.c.h.b16 %v1401
    %v2717 = vunpack.c.l.b16 %v1402
    %v2718 = vunpack.c.h.b16 %v1402
    %v2719 = vunpack.c.l.b16 %v1403
    %v2720 = vunpack.c.h.b16 %v1403
    %v2721 = vunpack.c.l.b16 %v1404
    %v2722 = vunpack.c.h.b16 %v1404
    %v2723 = vunpack.c.l.b16 %v1405
    %v2724 = vunpack.c.h.b16 %v1405
    %v2725 = vunpack.c.l.b16 %v1406
    %v2726 = vunpack.c.h.b16 %v1406
    %v2727 = vunpack.c.l.b16 %v1407
    %v2728 = vunpack.c.h.b16 %v1407
    %v2729 = vunpack.c.l.b16 %v1408
    %v2730 = vunpack.c.h.b16 %v1408
    %v2731 = vunpack.c.l.b16 %v1409
    %v2732 = vunpack.c.h.b16 %v1409
    %v2733 = vunpack.c.l.b16 %v1410
    %v2734 = vunpack.c.h.b16 %v1410
    %v2735 = vunpack.c.l.b16 %v1411
    %v2736 = vunpack.c.h.b16 %v1411
    %v2737 = vunpack.c.l.b16 %v1412
    %v2738 = vunpack.c.h.b16 %v1412
    %v2739 = vunpack.c.l.b16 %v1413
    %v2740 = vunpack.c.h.b16 %v1413
    %v2741 = vunpack.c.l.b16 %v1414
    %v2742 = vunpack.c.h.b16 %v1414
    %v2743 = vunpack.c.l.b16 %v1415
    %v2744 = vunpack.c.h.b16 %v1415
    %v2745 = vunpack.c.l.b16 %v1416
    %v2746 = vunpack.c.h.b16 %v1416
    %v2747 = vunpack.c.l.b16 %v1417
    %v2748 = vunpack.c.h.b16 %v1417
    %v2749 = vunpack.c.l.b16 %v1418
    %v2750 = vunpack.c.h.b16 %v1418
    %v2751 = vunpack.c.l.b16 %v1419
    %v2752 = vunpack.c.h.b16 %v1419
    %v2753 = vunpack.c.l.b16 %v1420
    %v2754 = vunpack.c.h.b16 %v1420
    %v2755 = vunpack.c.l.b16 %v1421
    %v2756 = vunpack.c.h.b16 %v1421
    %v2757 = vunpack.c.l.b16 %v1422
    %v2758 = vunpack.c.h.b16 %v1422
    %v2759 = vunpack.c.l.b16 %v1423
    %v2760 = vunpack.c.h.b16 %v1423
    %v2761 = vunpack.c.l.b16 %v1424
    %v2762 = vunpack.c.h.b16 %v1424
    %v2763 = vunpack.c.l.b16 %v1425
    %v2764 = vunpack.c.h.b16 %v1425
    %v2765 = vunpack.c.l.b16 %v1426
    %v2766 = vunpack.c.h.b16 %v1426
    %v2767 = vunpack.c.l.b16 %v1427
    %v2768 = vunpack.c.h.b16 %v1427
    %v2769 = vunpack.c.l.b16 %v1428
    %v2770 = vunpack.c.h.b16 %v1428
    %v2771 = vunpack.c.l.b16 %v1429
    %v2772 = vunpack.c.h.b16 %v1429
    %v2773 = vunpack.c.l.b16 %v1430
    %v2774 = vunpack.c.h.b16 %v1430
    %v2775 = vunpack.c.l.b16 %v1431
    %v2776 = vunpack.c.h.b16 %v1431
    %v2777 = vunpack.c.l.b16 %v1432
    %v2778 = vunpack.c.h.b16 %v1432
    %v2779 = vunpack.c.l.b16 %v1433
    %v2780 = vunpack.c.h.b16 %v1433
    %v2781 = vunpack.c.l.b16 %v1434
    %v2782 = vunpack.c.h.b16 %v1434
    %v2783 = vunpack.c.l.b16 %v1435
    %v2784 = vunpack.c.h.b16 %v1435
    %v2785 = vunpack.c.l.b16 %v1436
    %v2786 = vunpack.c.h.b16 %v1436
    %v2787 = vunpack.c.l.b16 %v1437
    %v2788 = vunpack.c.h.b16 %v1437
    %v2789 = vunpack.c.l.b16 %v1438
    %v2790 = vunpack.c.h.b16 %v1438
    %v2791 = vunpack.c.l.b16 %v1439
    %v2792 = vunpack.c.h.b16 %v1439
    %v2793 = vunpack.c.l.b16 %v1440
    %v2794 = vunpack.c.h.b16 %v1440
    %v2795 = vunpack.c.l.b16 %v1441
    %v2796 = vunpack.c.h.b16 %v1441
    %v2797 = vunpack.c.l.b16 %v1442
    %v2798 = vunpack.c.h.b16 %v1442
    %v2799 = vunpack.c.l.b16 %v1443
    %v2800 = vunpack.c.h.b16 %v1443
    %v2801 = vunpack.c.l.b16 %v1444
    %v2802 = vunpack.c.h.b16 %v1444
    %v2803 = vunpack.c.l.b16 %v1445
    %v2804 = vunpack.c.h.b16 %v1445
    %v2805 = vunpack.c.l.b16 %v1446
    %v2806 = vunpack.c.h.b16 %v1446
    %v2807 = vunpack.c.l.b16 %v1447
    %v2808 = vunpack.c.h.b16 %v1447
    %v2809 = vunpack.c.l.b16 %v1448
    %v2810 = vunpack.c.h.b16 %v1448
    %v2811 = vunpack.c.l.b16 %v1449
    %v2812 = vunpack.c.h.b16 %v1449
    %v2813 = vunpack.c.l.b16 %v1450
    %v2814 = vunpack.c.h.b16 %v1450
    %v2815 = vunpack.c.l.b16 %v1451
    %v2816 = vunpack.c.h.b16 %v1451
    %v2817 = vunpack.c.l.b16 %v1452
    %v2818 = vunpack.c.h.b16 %v1452
    %v2819 = vunpack.c.l.b16 %v1453
    %v2820 = vunpack.c.h.b16 %v1453
    %v2821 = vunpack.c.l.b16 %v1454
    %v2822 = vunpack.c.h.b16 %v1454
    %v2823 = vunpack.c.l.b16 %v1455
    %v2824 = vunpack.c.h.b16 %v1455
    %v2825 = vunpack.c.l.b16 %v1456
    %v2826 = vunpack.c.h.b16 %v1456
    %v2827 = vunpack.c.l.b16 %v1457
    %v2828 = vunpack.c.h.b16 %v1457
    %v2829 = vunpack.c.l.b16 %v1458
    %v2830 = vunpack.c.h.b16 %v1458
    %v2831 = vunpack.c.l.b16 %v1459
    %v2832 = vunpack.c.h.b16 %v1459
    %v2833 = vunpack.c.l.b16 %v1460
    %v2834 = vunpack.c.h.b16 %v1460
    %v2835 = vunpack.c.l.b16 %v1461
    %v2836 = vunpack.c.h.b16 %v1461
    %v2837 = vunpack.c.l.b16 %v1462
    %v2838 = vunpack.c.h.b16 %v1462
    %v2839 = vunpack.c.l.b16 %v1463
    %v2840 = vunpack.c.h.b16 %v1463
    %v2841 = vunpack.c.l.b16 %v1464
    %v2842 = vunpack.c.h.b16 %v1464
    %v2843 = vunpack.c.l.b16 %v1465
    %v2844 = vunpack.c.h.b16 %v1465
    %v2845 = vunpack.c.l.b16 %v1466
    %v2846 = vunpack.c.h.b16 %v1466
    %v2847 = vunpack.c.l.b16 %v1467
    %v2848 = vunpack.c.h.b16 %v1467
    %v2849 = vunpack.c.l.b16 %v1468
    %v2850 = vunpack.c.h.b16 %v1468
    %v2851 = vunpack.c.l.b16 %v1469
    %v2852 = vunpack.c.h.b16 %v1469
    %v2853 = vunpack.c.l.b16 %v1470
    %v2854 = vunpack.c.h.b16 %v1470
    %v2855 = vunpack.c.l.b16 %v1471
    %v2856 = vunpack.c.h.b16 %v1471
    %v2857 = vunpack.c.l.b16 %v1472
    %v2858 = vunpack.c.h.b16 %v1472
    %v2859 = vunpack.c.l.b16 %v1473
    %v2860 = vunpack.c.h.b16 %v1473
    %v2861 = vunpack.c.l.b16 %v1474
    %v2862 = vunpack.c.h.b16 %v1474
    %v2863 = vunpack.c.l.b16 %v1475
    %v2864 = vunpack.c.h.b16 %v1475
    %v2865 = vunpack.c.l.b16 %v1476
    %v2866 = vunpack.c.h.b16 %v1476
    %v2867 = vunpack.c.l.b16 %v1477
    %v2868 = vunpack.c.h.b16 %v1477
    %v2869 = vunpack.c.l.b16 %v1478
    %v2870 = vunpack.c.h.b16 %v1478
    %v2871 = vunpack.c.l.b16 %v1479
    %v2872 = vunpack.c.h.b16 %v1479
    %v2873 = vunpack.c.l.b16 %v1480
    %v2874 = vunpack.c.h.b16 %v1480
    %v2875 = vunpack.c.l.b16 %v1481
    %v2876 = vunpack.c.h.b16 %v1481
    %v2877 = vunpack.c.l.b16 %v1482
    %v2878 = vunpack.c.h.b16 %v1482
    %v2879 = vunpack.c.l.b16 %v1483
    %v2880 = vunpack.c.h.b16 %v1483
    %v2881 = vunpack.c.l.b16 %v1484
    %v2882 = vunpack.c.h.b16 %v1484
    %v2883 = vunpack.c.l.b16 %v1485
    %v2884 = vunpack.c.h.b16 %v1485
    %v2885 = vunpack.c.l.b16 %v1486
    %v2886 = vunpack.c.h.b16 %v1486
    %v2887 = vunpack.c.l.b16 %v1487
    %v2888 = vunpack.c.h.b16 %v1487
    %v2889 = vunpack.c.l.b16 %v1488
    %v2890 = vunpack.c.h.b16 %v1488
    %v2891 = vunpack.c.l.b16 %v1489
    %v2892 = vunpack.c.h.b16 %v1489
    %v2893 = vunpack.c.l.b16 %v1490
    %v2894 = vunpack.c.h.b16 %v1490
    %v2895 = vunpack.c.l.b16 %v1491
    %v2896 = vunpack.c.h.b16 %v1491
    %v2897 = vunpack.c.l.b16 %v1492
    %v2898 = vunpack.c.h.b16 %v1492
    %v2899 = vunpack.c.l.b16 %v1493
    %v2900 = vunpack.c.h.b16 %v1493
    %v2901 = vunpack.c.l.b16 %v1494
    %v2902 = vunpack.c.h.b16 %v1494
    %v2903 = vunpack.c.l.b16 %v1495
    %v2904 = vunpack.c.h.b16 %v1495
    %v2905 = vunpack.c.l.b16 %v1496
    %v2906 = vunpack.c.h.b16 %v1496
    %v2907 = vunpack.c.l.b16 %v1497
    %v2908 = vunpack.c.h.b16 %v1497
    %v2909 = vunpack.c.l.b16 %v1498
    %v2910 = vunpack.c.h.b16 %v1498
    %v2911 = vunpack.c.l.b16 %v1499
    %v2912 = vunpack.c.h.b16 %v1499
    %v2913 = vunpack.c.l.b16 %v1500
    %v2914 = vunpack.c.h.b16 %v1500
    %v2915 = vunpack.c.l.b16 %v1501
    %v2916 = vunpack.c.h.b16 %v1501
    %v2917 = vunpack.c.l.b16 %v1502
    %v2918 = vunpack.c.h.b16 %v1502
    %v2919 = vunpack.c.l.b16 %v1503
    %v2920 = vunpack.c.h.b16 %v1503
    %v2921 = vunpack.c.l.b16 %v1504
    %v2922 = vunpack.c.h.b16 %v1504
    %v2923 = vunpack.c.l.b16 %v1505
    %v2924 = vunpack.c.h.b16 %v1505
    %v2925 = vunpack.c.l.b16 %v1506
    %v2926 = vunpack.c.h.b16 %v1506
    %v2927 = vunpack.c.l.b16 %v1507
    %v2928 = vunpack.c.h.b16 %v1507
    %v2929 = vunpack.c.l.b16 %v1508
    %v2930 = vunpack.c.h.b16 %v1508
    %v2931 = vunpack.c.l.b16 %v1509
    %v2932 = vunpack.c.h.b16 %v1509
    %v2933 = vunpack.c.l.b16 %v1510
    %v2934 = vunpack.c.h.b16 %v1510
    %v2935 = vunpack.c.l.b16 %v1511
    %v2936 = vunpack.c.h.b16 %v1511
    %v2937 = vunpack.c.l.b16 %v1512
    %v2938 = vunpack.c.h.b16 %v1512
    %v2939 = vunpack.c.l.b16 %v1513
    %v2940 = vunpack.c.h.b16 %v1513
    %v2941 = vunpack.c.l.b16 %v1514
    %v2942 = vunpack.c.h.b16 %v1514
    %v2943 = vunpack.c.l.b16 %v1515
    %v2944 = vunpack.c.h.b16 %v1515
    %v2945 = vunpack.c.l.b16 %v1516
    %v2946 = vunpack.c.h.b16 %v1516
    %v2947 = vunpack.c.l.b16 %v1517
    %v2948 = vunpack.c.h.b16 %v1517
    %v2949 = vunpack.c.l.b16 %v1518
    %v2950 = vunpack.c.h.b16 %v1518
    %v2951 = vunpack.c.l.b16 %v1519
    %v2952 = vunpack.c.h.b16 %v1519
    %v2953 = vunpack.c.l.b16 %v1520
    %v2954 = vunpack.c.h.b16 %v1520
    %v2955 = vunpack.c.l.b16 %v1521
    %v2956 = vunpack.c.h.b16 %v1521
    %v2957 = vunpack.c.l.b16 %v1522
    %v2958 = vunpack.c.h.b16 %v1522
    %v2959 = vunpack.c.l.b16 %v1523
    %v2960 = vunpack.c.h.b16 %v1523
    %v2961 = vunpack.c.l.b16 %v1524
    %v2962 = vunpack.c.h.b16 %v1524
    %v2963 = vunpack.c.l.b16 %v1525
    %v2964 = vunpack.c.h.b16 %v1525
    %v2965 = vunpack.c.l.b16 %v1526
    %v2966 = vunpack.c.h.b16 %v1526
    %v2967 = vunpack.c.l.b16 %v1527
    %v2968 = vunpack.c.h.b16 %v1527
    %v2969 = vunpack.c.l.b16 %v1528
    %v2970 = vunpack.c.h.b16 %v1528
    %v2971 = vunpack.c.l.b16 %v1529
    %v2972 = vunpack.c.h.b16 %v1529
    %v2973 = vunpack.c.l.b16 %v1530
    %v2974 = vunpack.c.h.b16 %v1530
    %v2975 = vunpack.c.l.b16 %v1531
    %v2976 = vunpack.c.h.b16 %v1531
    %v2977 = vunpack.c.l.b16 %v1532
    %v2978 = vunpack.c.h.b16 %v1532
    %v2979 = vunpack.c.l.b16 %v1533
    %v2980 = vunpack.c.h.b16 %v1533
    %v2981 = vunpack.c.l.b16 %v1534
    %v2982 = vunpack.c.h.b16 %v1534
    %v2983 = vunpack.c.l.b16 %v1535
    %v2984 = vunpack.c.h.b16 %v1535
    %v2985 = vunpack.c.l.b16 %v1536
    %v2986 = vunpack.c.h.b16 %v1536
    %v2987 = vunpack.c.l.b16 %v1537
    %v2988 = vunpack.c.h.b16 %v1537
    %v2989 = vunpack.c.l.b16 %v1538
    %v2990 = vunpack.c.h.b16 %v1538
    %v2991 = vunpack.c.l.b16 %v1539
    %v2992 = vunpack.c.h.b16 %v1539
    %v2993 = vunpack.c.l.b16 %v1540
    %v2994 = vunpack.c.h.b16 %v1540
    %v2995 = vunpack.c.l.b16 %v1541
    %v2996 = vunpack.c.h.b16 %v1541
    %v2997 = vunpack.c.l.b16 %v1542
    %v2998 = vunpack.c.h.b16 %v1542
    %v2999 = vunpack.c.l.b16 %v1543
    %v3000 = vunpack.c.h.b16 %v1543
    %v3001 = vunpack.c.l.b16 %v1544
    %v3002 = vunpack.c.h.b16 %v1544
    %v3003 = vunpack.c.l.b16 %v1545
    %v3004 = vunpack.c.h.b16 %v1545
    %v3005 = vunpack.c.l.b16 %v1546
    %v3006 = vunpack.c.h.b16 %v1546
    %v3007 = vunpack.c.l.b16 %v1547
    %v3008 = vunpack.c.h.b16 %v1547
    %v3009 = vunpack.c.l.b16 %v1548
    %v3010 = vunpack.c.h.b16 %v1548
    %v3011 = vunpack.c.l.b16 %v1549
    %v3012 = vunpack.c.h.b16 %v1549
    %v3013 = vunpack.c.l.b16 %v1550
    %v3014 = vunpack.c.h.b16 %v1550
    %v3015 = vunpack.c.l.b16 %v1551
    %v3016 = vunpack.c.h.b16 %v1551
    %v3017 = vunpack.c.l.b16 %v1552
    %v3018 = vunpack.c.h.b16 %v1552
    %v3019 = vunpack.c.l.b16 %v1553
    %v3020 = vunpack.c.h.b16 %v1553
    %v3021 = vunpack.c.l.b16 %v1554
    %v3022 = vunpack.c.h.b16 %v1554
    %v3023 = vunpack.c.l.b16 %v1555
    %v3024 = vunpack.c.h.b16 %v1555
    %v3025 = vunpack.c.l.b16 %v1556
    %v3026 = vunpack.c.h.b16 %v1556
    %v3027 = vunpack.c.l.b16 %v1557
    %v3028 = vunpack.c.h.b16 %v1557
    %v3029 = vunpack.c.l.b16 %v1558
    %v3030 = vunpack.c.h.b16 %v1558
    %v3031 = vunpack.c.l.b16 %v1559
    %v3032 = vunpack.c.h.b16 %v1559
    %v3033 = vunpack.c.l.b16 %v1560
    %v3034 = vunpack.c.h.b16 %v1560
    %v3035 = vunpack.c.l.b16 %v1561
    %v3036 = vunpack.c.h.b16 %v1561
    %v3037 = vunpack.c.l.b16 %v1562
    %v3038 = vunpack.c.h.b16 %v1562
    %v3039 = vunpack.c.l.b16 %v1563
    %v3040 = vunpack.c.h.b16 %v1563
    %v3041 = vunpack.c.l.b16 %v1564
    %v3042 = vunpack.c.h.b16 %v1564
    %v3043 = vunpack.c.l.b16 %v1565
    %v3044 = vunpack.c.h.b16 %v1565
    %v3045 = vunpack.c.l.b16 %v1566
    %v3046 = vunpack.c.h.b16 %v1566
    %v3047 = vunpack.c.l.b16 %v1567
    %v3048 = vunpack.c.h.b16 %v1567
    %v3049 = vunpack.c.l.b16 %v1568
    %v3050 = vunpack.c.h.b16 %v1568
    %v3051 = vunpack.c.l.b16 %v1569
    %v3052 = vunpack.c.h.b16 %v1569
    %v3053 = vunpack.c.l.b16 %v1570
    %v3054 = vunpack.c.h.b16 %v1570
    %v3055 = vunpack.c.l.b16 %v1571
    %v3056 = vunpack.c.h.b16 %v1571
    %v3057 = vunpack.c.l.b16 %v1572
    %v3058 = vunpack.c.h.b16 %v1572
    %v3059 = vunpack.c.l.b16 %v1573
    %v3060 = vunpack.c.h.b16 %v1573
    %v3061 = vunpack.c.l.b16 %v1574
    %v3062 = vunpack.c.h.b16 %v1574
    %v3063 = vunpack.c.l.b16 %v1575
    %v3064 = vunpack.c.h.b16 %v1575
    %v3065 = vunpack.c.l.b16 %v1576
    %v3066 = vunpack.c.h.b16 %v1576
    %v3067 = vunpack.c.l.b16 %v1577
    %v3068 = vunpack.c.h.b16 %v1577
    %v3069 = vunpack.c.l.b16 %v1578
    %v3070 = vunpack.c.h.b16 %v1578
    %v3071 = vunpack.c.l.b16 %v1579
    %v3072 = vunpack.c.h.b16 %v1579
    %v3073 = vunpack.c.l.b16 %v1580
    %v3074 = vunpack.c.h.b16 %v1580
    %v3075 = vunpack.c.l.b16 %v1581
    %v3076 = vunpack.c.h.b16 %v1581
    %v3077 = vunpack.c.l.b16 %v1582
    %v3078 = vunpack.c.h.b16 %v1582
    %v3079 = vunpack.c.l.b16 %v1583
    %v3080 = vunpack.c.h.b16 %v1583
    %v3081 = vunpack.c.l.b16 %v1584
    %v3082 = vunpack.c.h.b16 %v1584
    %v3083 = vunpack.c.l.b16 %v1585
    %v3084 = vunpack.c.h.b16 %v1585
    %v3085 = vunpack.c.l.b16 %v1586
    %v3086 = vunpack.c.h.b16 %v1586
    %v3087 = vunpack.c.l.b16 %v1587
    %v3088 = vunpack.c.h.b16 %v1587
    %v3089 = vunpack.c.l.b16 %v1588
    %v3090 = vunpack.c.h.b16 %v1588
    %v3091 = vunpack.c.l.b16 %v1589
    %v3092 = vunpack.c.h.b16 %v1589
    %v3093 = vunpack.c.l.b16 %v1590
    %v3094 = vunpack.c.h.b16 %v1590
    %v3095 = vunpack.c.l.b16 %v1591
    %v3096 = vunpack.c.h.b16 %v1591
    %v3097 = vunpack.c.l.b16 %v1592
    %v3098 = vunpack.c.h.b16 %v1592
    %v3099 = vunpack.c.l.b16 %v1593
    %v3100 = vunpack.c.h.b16 %v1593
    %v3101 = vunpack.c.l.b16 %v1594
    %v3102 = vunpack.c.h.b16 %v1594
    %v3103 = vunpack.c.l.b16 %v1595
    %v3104 = vunpack.c.h.b16 %v1595
    %v3105 = vunpack.c.l.b16 %v1596
    %v3106 = vunpack.c.h.b16 %v1596
    %v3107 = vunpack.c.l.b16 %v1597
    %v3108 = vunpack.c.h.b16 %v1597
    %v3109 = vunpack.c.l.b16 %v1598
    %v3110 = vunpack.c.h.b16 %v1598
    %v3111 = vunpack.c.l.b16 %v1599
    %v3112 = vunpack.c.h.b16 %v1599
    %v3113 = vunpack.c.l.b16 %v1600
    %v3114 = vunpack.c.h.b16 %v1600
    %v3115 = vunpack.c.l.b16 %v1601
    %v3116 = vunpack.c.h.b16 %v1601
    %v3117 = vunpack.c.l.b16 %v1602
    %v3118 = vunpack.c.h.b16 %v1602
    %v3119 = vunpack.c.l.b16 %v1603
    %v3120 = vunpack.c.h.b16 %v1603
    %v3121 = vunpack.c.l.b16 %v1604
    %v3122 = vunpack.c.h.b16 %v1604
    %v3123 = vunpack.c.l.b16 %v1605
    %v3124 = vunpack.c.h.b16 %v1605
    %v3125 = vunpack.c.l.b16 %v1606
    %v3126 = vunpack.c.h.b16 %v1606
    %v3127 = vunpack.c.l.b16 %v1607
    %v3128 = vunpack.c.h.b16 %v1607
    %v3129 = vunpack.c.l.b16 %v1608
    %v3130 = vunpack.c.h.b16 %v1608
    %v3131 = vunpack.c.l.b16 %v1609
    %v3132 = vunpack.c.h.b16 %v1609
    %v3133 = vunpack.c.l.b16 %v1610
    %v3134 = vunpack.c.h.b16 %v1610
    %v3135 = vunpack.c.l.b16 %v1611
    %v3136 = vunpack.c.h.b16 %v1611
    %v3137 = vunpack.c.l.b16 %v1612
    %v3138 = vunpack.c.h.b16 %v1612
    %v3139 = vunpack.c.l.b16 %v1613
    %v3140 = vunpack.c.h.b16 %v1613
    %v3141 = vunpack.c.l.b16 %v1614
    %v3142 = vunpack.c.h.b16 %v1614
    %v3143 = vunpack.c.l.b16 %v1615
    %v3144 = vunpack.c.h.b16 %v1615
    %v3145 = vunpack.c.l.b16 %v1616
    %v3146 = vunpack.c.h.b16 %v1616
    %v3147 = vunpack.c.l.b16 %v1617
    %v3148 = vunpack.c.h.b16 %v1617
    %v3149 = vunpack.c.l.b16 %v1618
    %v3150 = vunpack.c.h.b16 %v1618
    %v3151 = vunpack.c.l.b16 %v1619
    %v3152 = vunpack.c.h.b16 %v1619
    %v3153 = vunpack.c.l.b16 %v1620
    %v3154 = vunpack.c.h.b16 %v1620
    %v3155 = vunpack.c.l.b16 %v1621
    %v3156 = vunpack.c.h.b16 %v1621
    %v3157 = vunpack.c.l.b16 %v1622
    %v3158 = vunpack.c.h.b16 %v1622
    %v3159 = vunpack.c.l.b16 %v1623
    %v3160 = vunpack.c.h.b16 %v1623
    %v3161 = vunpack.c.l.b16 %v1624
    %v3162 = vunpack.c.h.b16 %v1624
    %v3163 = vunpack.c.l.b16 %v1625
    %v3164 = vunpack.c.h.b16 %v1625
    %v3165 = vunpack.c.l.b16 %v1626
    %v3166 = vunpack.c.h.b16 %v1626
    %v3167 = vunpack.c.l.b16 %v1627
    %v3168 = vunpack.c.h.b16 %v1627
    %v3169 = vunpack.c.l.b16 %v1628
    %v3170 = vunpack.c.h.b16 %v1628
    %v3171 = vunpack.c.l.b16 %v1629
    %v3172 = vunpack.c.h.b16 %v1629
    %v3173 = vunpack.c.l.b16 %v1630
    %v3174 = vunpack.c.h.b16 %v1630
    %v3175 = vunpack.c.l.b16 %v1631
    %v3176 = vunpack.c.h.b16 %v1631
    %v3177 = vunpack.c.l.b16 %v1632
    %v3178 = vunpack.c.h.b16 %v1632
    %v3179 = vunpack.c.l.b16 %v1633
    %v3180 = vunpack.c.h.b16 %v1633
    %v3181 = vunpack.c.l.b16 %v1634
    %v3182 = vunpack.c.h.b16 %v1634
    %v3183 = vunpack.c.l.b16 %v1635
    %v3184 = vunpack.c.h.b16 %v1635
    %v3185 = vunpack.c.l.b16 %v1636
    %v3186 = vunpack.c.h.b16 %v1636
    %v3187 = vunpack.c.l.b16 %v1637
    %v3188 = vunpack.c.h.b16 %v1637
    %v3189 = vunpack.c.l.b16 %v1638
    %v3190 = vunpack.c.h.b16 %v1638
    %v3191 = vunpack.c.l.b16 %v1639
    %v3192 = vunpack.c.h.b16 %v1639
    %v3193 = vunpack.c.l.b16 %v1640
    %v3194 = vunpack.c.h.b16 %v1640
    %v3195 = vunpack.c.l.b16 %v1641
    %v3196 = vunpack.c.h.b16 %v1641
    %v3197 = vunpack.c.l.b16 %v1642
    %v3198 = vunpack.c.h.b16 %v1642
    %v3199 = vunpack.c.l.b16 %v1643
    %v3200 = vunpack.c.h.b16 %v1643
    %v3201 = vunpack.c.l.b16 %v1644
    %v3202 = vunpack.c.h.b16 %v1644
    %v3203 = vpack.c.b16 %v2183, %v2179
    %v3204 = vpack.c.b16 %v2184, %v2180
    %v3205 = vpack.c.b16 %v2185, %v2181
    %v3206 = vpack.c.b16 %v2186, %v2182
    %v3207 = vpack.c.b16 %v2191, %v2187
    %v3208 = vpack.c.b16 %v2192, %v2188
    %v3209 = vpack.c.b16 %v2193, %v2189
    %v3210 = vpack.c.b16 %v2194, %v2190
    %v3211 = vpack.c.b16 %v2199, %v2195
    %v3212 = vpack.c.b16 %v2200, %v2196
    %v3213 = vpack.c.b16 %v2201, %v2197
    %v3214 = vpack.c.b16 %v2202, %v2198
    %v3215 = vpack.c.b16 %v2207, %v2203
    %v3216 = vpack.c.b16 %v2208, %v2204
    %v3217 = vpack.c.b16 %v2209, %v2205
    %v3218 = vpack.c.b16 %v2210, %v2206
    %v3219 = vpack.c.b16 %v2215, %v2211
    %v3220 = vpack.c.b16 %v2216, %v2212
    %v3221 = vpack.c.b16 %v2217, %v2213
    %v3222 = vpack.c.b16 %v2218, %v2214
    %v3223 = vpack.c.b16 %v2223, %v2219
    %v3224 = vpack.c.b16 %v2224, %v2220
    %v3225 = vpack.c.b16 %v2225, %v2221
    %v3226 = vpack.c.b16 %v2226, %v2222
    %v3227 = vpack.c.b16 %v2231, %v2227
    %v3228 = vpack.c.b16 %v2232, %v2228
    %v3229 = vpack.c.b16 %v2233, %v2229
    %v3230 = vpack.c.b16 %v2234, %v2230
    %v3231 = vpack.c.b16 %v2239, %v2235
    %v3232 = vpack.c.b16 %v2240, %v2236
    %v3233 = vpack.c.b16 %v2241, %v2237
    %v3234 = vpack.c.b16 %v2242, %v2238
    %v3235 = vpack.c.b16 %v2247, %v2243
    %v3236 = vpack.c.b16 %v2248, %v2244
    %v3237 = vpack.c.b16 %v2249, %v2245
    %v3238 = vpack.c.b16 %v2250, %v2246
    %v3239 = vpack.c.b16 %v2255, %v2251
    %v3240 = vpack.c.b16 %v2256, %v2252
    %v3241 = vpack.c.b16 %v2257, %v2253
    %v3242 = vpack.c.b16 %v2258, %v2254
    %v3243 = vpack.c.b16 %v2263, %v2259
    %v3244 = vpack.c.b16 %v2264, %v2260
    %v3245 = vpack.c.b16 %v2265, %v2261
    %v3246 = vpack.c.b16 %v2266, %v2262
    %v3247 = vpack.c.b16 %v2271, %v2267
    %v3248 = vpack.c.b16 %v2272, %v2268
    %v3249 = vpack.c.b16 %v2273, %v2269
    %v3250 = vpack.c.b16 %v2274, %v2270
    %v3251 = vpack.c.b16 %v2279, %v2275
    %v3252 = vpack.c.b16 %v2280, %v2276
    %v3253 = vpack.c.b16 %v2281, %v2277
    %v3254 = vpack.c.b16 %v2282, %v2278
    %v3255 = vpack.c.b16 %v2287, %v2283
    %v3256 = vpack.c.b16 %v2288, %v2284
    %v3257 = vpack.c.b16 %v2289, %v2285
    %v3258 = vpack.c.b16 %v2290, %v2286
    %v3259 = vpack.c.b16 %v2295, %v2291
    %v3260 = vpack.c.b16 %v2296, %v2292
    %v3261 = vpack.c.b16 %v2297, %v2293
    %v3262 = vpack.c.b16 %v2298, %v2294
    %v3263 = vpack.c.b16 %v2303, %v2299
    %v3264 = vpack.c.b16 %v2304, %v2300
    %v3265 = vpack.c.b16 %v2305, %v2301
    %v3266 = vpack.c.b16 %v2306, %v2302
    %v3267 = vpack.c.b16 %v2311, %v2307
    %v3268 = vpack.c.b16 %v2312, %v2308
    %v3269 = vpack.c.b16 %v2313, %v2309
    %v3270 = vpack.c.b16 %v2314, %v2310
    %v3271 = vpack.c.b16 %v2319, %v2315
    %v3272 = vpack.c.b16 %v2320, %v2316
    %v3273 = vpack.c.b16 %v2321, %v2317
    %v3274 = vpack.c.b16 %v2322, %v2318
    %v3275 = vpack.c.b16 %v2327, %v2323
    %v3276 = vpack.c.b16 %v2328, %v2324
    %v3277 = vpack.c.b16 %v2329, %v2325
    %v3278 = vpack.c.b16 %v2330, %v2326
    %v3279 = vpack.c.b16 %v2335, %v2331
    %v3280 = vpack.c.b16 %v2336, %v2332
    %v3281 = vpack.c.b16 %v2337, %v2333
    %v3282 = vpack.c.b16 %v2338, %v2334
    %v3283 = vpack.c.b16 %v2343, %v2339
    %v3284 = vpack.c.b16 %v2344, %v2340
    %v3285 = vpack.c.b16 %v2345, %v2341
    %v3286 = vpack.c.b16 %v2346, %v2342
    %v3287 = vpack.c.b16 %v2351, %v2347
    %v3288 = vpack.c.b16 %v2352, %v2348
    %v3289 = vpack.c.b16 %v2353, %v2349
    %v3290 = vpack.c.b16 %v2354, %v2350
    %v3291 = vpack.c.b16 %v2359, %v2355
    %v3292 = vpack.c.b16 %v2360, %v2356
    %v3293 = vpack.c.b16 %v2361, %v2357
    %v3294 = vpack.c.b16 %v2362, %v2358
    %v3295 = vpack.c.b16 %v2367, %v2363
    %v3296 = vpack.c.b16 %v2368, %v2364
    %v3297 = vpack.c.b16 %v2369, %v2365
    %v3298 = vpack.c.b16 %v2370, %v2366
    %v3299 = vpack.c.b16 %v2375, %v2371
    %v3300 = vpack.c.b16 %v2376, %v2372
    %v3301 = vpack.c.b16 %v2377, %v2373
    %v3302 = vpack.c.b16 %v2378, %v2374
    %v3303 = vpack.c.b16 %v2383, %v2379
    %v3304 = vpack.c.b16 %v2384, %v2380
    %v3305 = vpack.c.b16 %v2385, %v2381
    %v3306 = vpack.c.b16 %v2386, %v2382
    %v3307 = vpack.c.b16 %v2391, %v2387
    %v3308 = vpack.c.b16 %v2392, %v2388
    %v3309 = vpack.c.b16 %v2393, %v2389
    %v3310 = vpack.c.b16 %v2394, %v2390
    %v3311 = vpack.c.b16 %v2399, %v2395
    %v3312 = vpack.c.b16 %v2400, %v2396
    %v3313 = vpack.c.b16 %v2401, %v2397
    %v3314 = vpack.c.b16 %v2402, %v2398
    %v3315 = vpack.c.b16 %v2407, %v2403
    %v3316 = vpack.c.b16 %v2408, %v2404
    %v3317 = vpack.c.b16 %v2409, %v2405
    %v3318 = vpack.c.b16 %v2410, %v2406
    %v3319 = vpack.c.b16 %v2415, %v2411
    %v3320 = vpack.c.b16 %v2416, %v2412
    %v3321 = vpack.c.b16 %v2417, %v2413
    %v3322 = vpack.c.b16 %v2418, %v2414
    %v3323 = vpack.c.b16 %v2423, %v2419
    %v3324 = vpack.c.b16 %v2424, %v2420
    %v3325 = vpack.c.b16 %v2425, %v2421
    %v3326 = vpack.c.b16 %v2426, %v2422
    %v3327 = vpack.c.b16 %v2431, %v2427
    %v3328 = vpack.c.b16 %v2432, %v2428
    %v3329 = vpack.c.b16 %v2433, %v2429
    %v3330 = vpack.c.b16 %v2434, %v2430
    %v3331 = vpack.c.b16 %v2439, %v2435
    %v3332 = vpack.c.b16 %v2440, %v2436
    %v3333 = vpack.c.b16 %v2441, %v2437
    %v3334 = vpack.c.b16 %v2442, %v2438
    %v3335 = vpack.c.b16 %v2447, %v2443
    %v3336 = vpack.c.b16 %v2448, %v2444
    %v3337 = vpack.c.b16 %v2449, %v2445
    %v3338 = vpack.c.b16 %v2450, %v2446
    %v3339 = vpack.c.b16 %v2455, %v2451
    %v3340 = vpack.c.b16 %v2456, %v2452
    %v3341 = vpack.c.b16 %v2457, %v2453
    %v3342 = vpack.c.b16 %v2458, %v2454
    %v3343 = vpack.c.b16 %v2463, %v2459
    %v3344 = vpack.c.b16 %v2464, %v2460
    %v3345 = vpack.c.b16 %v2465, %v2461
    %v3346 = vpack.c.b16 %v2466, %v2462
    %v3347 = vpack.c.b16 %v2471, %v2467
    %v3348 = vpack.c.b16 %v2472, %v2468
    %v3349 = vpack.c.b16 %v2473, %v2469
    %v3350 = vpack.c.b16 %v2474, %v2470
    %v3351 = vpack.c.b16 %v2479, %v2475
    %v3352 = vpack.c.b16 %v2480, %v2476
    %v3353 = vpack.c.b16 %v2481, %v2477
    %v3354 = vpack.c.b16 %v2482, %v2478
    %v3355 = vpack.c.b16 %v2487, %v2483
    %v3356 = vpack.c.b16 %v2488, %v2484
    %v3357 = vpack.c.b16 %v2489, %v2485
    %v3358 = vpack.c.b16 %v2490, %v2486
    %v3359 = vpack.c.b16 %v2495, %v2491
    %v3360 = vpack.c.b16 %v2496, %v2492
    %v3361 = vpack.c.b16 %v2497, %v2493
    %v3362 = vpack.c.b16 %v2498, %v2494
    %v3363 = vpack.c.b16 %v2503, %v2499
    %v3364 = vpack.c.b16 %v2504, %v2500
    %v3365 = vpack.c.b16 %v2505, %v2501
    %v3366 = vpack.c.b16 %v2506, %v2502
    %v3367 = vpack.c.b16 %v2511, %v2507
    %v3368 = vpack.c.b16 %v2512, %v2508
    %v3369 = vpack.c.b16 %v2513, %v2509
    %v3370 = vpack.c.b16 %v2514, %v2510
    %v3371 = vpack.c.b16 %v2519, %v2515
    %v3372 = vpack.c.b16 %v2520, %v2516
    %v3373 = vpack.c.b16 %v2521, %v2517
    %v3374 = vpack.c.b16 %v2522, %v2518
    %v3375 = vpack.c.b16 %v2527, %v2523
    %v3376 = vpack.c.b16 %v2528, %v2524
    %v3377 = vpack.c.b16 %v2529, %v2525
    %v3378 = vpack.c.b16 %v2530, %v2526
    %v3379 = vpack.c.b16 %v2535, %v2531
    %v3380 = vpack.c.b16 %v2536, %v2532
    %v3381 = vpack.c.b16 %v2537, %v2533
    %v3382 = vpack.c.b16 %v2538, %v2534
    %v3383 = vpack.c.b16 %v2543, %v2539
    %v3384 = vpack.c.b16 %v2544, %v2540
    %v3385 = vpack.c.b16 %v2545, %v2541
    %v3386 = vpack.c.b16 %v2546, %v2542
    %v3387 = vpack.c.b16 %v2551, %v2547
    %v3388 = vpack.c.b16 %v2552, %v2548
    %v3389 = vpack.c.b16 %v2553, %v2549
    %v3390 = vpack.c.b16 %v2554, %v2550
    %v3391 = vpack.c.b16 %v2559, %v2555
    %v3392 = vpack.c.b16 %v2560, %v2556
    %v3393 = vpack.c.b16 %v2561, %v2557
    %v3394 = vpack.c.b16 %v2562, %v2558
    %v3395 = vpack.c.b16 %v2567, %v2563
    %v3396 = vpack.c.b16 %v2568, %v2564
    %v3397 = vpack.c.b16 %v2569, %v2565
    %v3398 = vpack.c.b16 %v2570, %v2566
    %v3399 = vpack.c.b16 %v2575, %v2571
    %v3400 = vpack.c.b16 %v2576, %v2572
    %v3401 = vpack.c.b16 %v2577, %v2573
    %v3402 = vpack.c.b16 %v2578, %v2574
    %v3403 = vpack.c.b16 %v2583, %v2579
    %v3404 = vpack.c.b16 %v2584, %v2580
    %v3405 = vpack.c.b16 %v2585, %v2581
    %v3406 = vpack.c.b16 %v2586, %v2582
    %v3407 = vpack.c.b16 %v2591, %v2587
    %v3408 = vpack.c.b16 %v2592, %v2588
    %v3409 = vpack.c.b16 %v2593, %v2589
    %v3410 = vpack.c.b16 %v2594, %v2590
    %v3411 = vpack.c.b16 %v2599, %v2595
    %v3412 = vpack.c.b16 %v2600, %v2596
    %v3413 = vpack.c.b16 %v2601, %v2597
    %v3414 = vpack.c.b16 %v2602, %v2598
    %v3415 = vpack.c.b16 %v2607, %v2603
    %v3416 = vpack.c.b16 %v2608, %v2604
    %v3417 = vpack.c.b16 %v2609, %v2605
    %v3418 = vpack.c.b16 %v2610, %v2606
    %v3419 = vpack.c.b16 %v2615, %v2611
    %v3420 = vpack.c.b16 %v2616, %v2612
    %v3421 = vpack.c.b16 %v2617, %v2613
    %v3422 = vpack.c.b16 %v2618, %v2614
    %v3423 = vpack.c.b16 %v2623, %v2619
    %v3424 = vpack.c.b16 %v2624, %v2620
    %v3425 = vpack.c.b16 %v2625, %v2621
    %v3426 = vpack.c.b16 %v2626, %v2622
    %v3427 = vpack.c.b16 %v2631, %v2627
    %v3428 = vpack.c.b16 %v2632, %v2628
    %v3429 = vpack.c.b16 %v2633, %v2629
    %v3430 = vpack.c.b16 %v2634, %v2630
    %v3431 = vpack.c.b16 %v2639, %v2635
    %v3432 = vpack.c.b16 %v2640, %v2636
    %v3433 = vpack.c.b16 %v2641, %v2637
    %v3434 = vpack.c.b16 %v2642, %v2638
    %v3435 = vpack.c.b16 %v2647, %v2643
    %v3436 = vpack.c.b16 %v2648, %v2644
    %v3437 = vpack.c.b16 %v2649, %v2645
    %v3438 = vpack.c.b16 %v2650, %v2646
    %v3439 = vpack.c.b16 %v2655, %v2651
    %v3440 = vpack.c.b16 %v2656, %v2652
    %v3441 = vpack.c.b16 %v2657, %v2653
    %v3442 = vpack.c.b16 %v2658, %v2654
    %v3443 = vpack.c.b16 %v2663, %v2659
    %v3444 = vpack.c.b16 %v2664, %v2660
    %v3445 = vpack.c.b16 %v2665, %v2661
    %v3446 = vpack.c.b16 %v2666, %v2662
    %v3447 = vpack.c.b16 %v2671, %v2667
    %v3448 = vpack.c.b16 %v2672, %v2668
    %v3449 = vpack.c.b16 %v2673, %v2669
    %v3450 = vpack.c.b16 %v2674, %v2670
    %v3451 = vpack.c.b16 %v2679, %v2675
    %v3452 = vpack.c.b16 %v2680, %v2676
    %v3453 = vpack.c.b16 %v2681, %v2677
    %v3454 = vpack.c.b16 %v2682, %v2678
    %v3455 = vpack.c.b16 %v2687, %v2683
    %v3456 = vpack.c.b16 %v2688, %v2684
    %v3457 = vpack.c.b16 %v2689, %v2685
    %v3458 = vpack.c.b16 %v2690, %v2686
    %v3459 = vpack.c.b16 %v2695, %v2691
    %v3460 = vpack.c.b16 %v2696, %v2692
    %v3461 = vpack.c.b16 %v2697, %v2693
    %v3462 = vpack.c.b16 %v2698, %v2694
    %v3463 = vpack.c.b16 %v2703, %v2699
    %v3464 = vpack.c.b16 %v2704, %v2700
    %v3465 = vpack.c.b16 %v2705, %v2701
    %v3466 = vpack.c.b16 %v2706, %v2702
    %v3467 = vpack.c.b16 %v2711, %v2707
    %v3468 = vpack.c.b16 %v2712, %v2708
    %v3469 = vpack.c.b16 %v2713, %v2709
    %v3470 = vpack.c.b16 %v2714, %v2710
    %v3471 = vpack.c.b16 %v2719, %v2715
    %v3472 = vpack.c.b16 %v2720, %v2716
    %v3473 = vpack.c.b16 %v2721, %v2717
    %v3474 = vpack.c.b16 %v2722, %v2718
    %v3475 = vpack.c.b16 %v2727, %v2723
    %v3476 = vpack.c.b16 %v2728, %v2724
    %v3477 = vpack.c.b16 %v2729, %v2725
    %v3478 = vpack.c.b16 %v2730, %v2726
    %v3479 = vpack.c.b16 %v2735, %v2731
    %v3480 = vpack.c.b16 %v2736, %v2732
    %v3481 = vpack.c.b16 %v2737, %v2733
    %v3482 = vpack.c.b16 %v2738, %v2734
    %v3483 = vpack.c.b16 %v2743, %v2739
    %v3484 = vpack.c.b16 %v2744, %v2740
    %v3485 = vpack.c.b16 %v2745, %v2741
    %v3486 = vpack.c.b16 %v2746, %v2742
    %v3487 = vpack.c.b16 %v2751, %v2747
    %v3488 = vpack.c.b16 %v2752, %v2748
    %v3489 = vpack.c.b16 %v2753, %v2749
    %v3490 = vpack.c.b16 %v2754, %v2750
    %v3491 = vpack.c.b16 %v2759, %v2755
    %v3492 = vpack.c.b16 %v2760, %v2756
    %v3493 = vpack.c.b16 %v2761, %v2757
    %v3494 = vpack.c.b16 %v2762, %v2758
    %v3495 = vpack.c.b16 %v2767, %v2763
    %v3496 = vpack.c.b16 %v2768, %v2764
    %v3497 = vpack.c.b16 %v2769, %v2765
    %v3498 = vpack.c.b16 %v2770, %v2766
    %v3499 = vpack.c.b16 %v2775, %v2771
    %v3500 = vpack.c.b16 %v2776, %v2772
    %v3501 = vpack.c.b16 %v2777, %v2773
    %v3502 = vpack.c.b16 %v2778, %v2774
    %v3503 = vpack.c.b16 %v2783, %v2779
    %v3504 = vpack.c.b16 %v2784, %v2780
    %v3505 = vpack.c.b16 %v2785, %v2781
    %v3506 = vpack.c.b16 %v2786, %v2782
    %v3507 = vpack.c.b16 %v2791, %v2787
    %v3508 = vpack.c.b16 %v2792, %v2788
    %v3509 = vpack.c.b16 %v2793, %v2789
    %v3510 = vpack.c.b16 %v2794, %v2790
    %v3511 = vpack.c.b16 %v2799, %v2795
    %v3512 = vpack.c.b16 %v2800, %v2796
    %v3513 = vpack.c.b16 %v2801, %v2797
    %v3514 = vpack.c.b16 %v2802, %v2798
    %v3515 = vpack.c.b16 %v2807, %v2803
    %v3516 = vpack.c.b16 %v2808, %v2804
    %v3517 = vpack.c.b16 %v2809, %v2805
    %v3518 = vpack.c.b16 %v2810, %v2806
    %v3519 = vpack.c.b16 %v2815, %v2811
    %v3520 = vpack.c.b16 %v2816, %v2812
    %v3521 = vpack.c.b16 %v2817, %v2813
    %v3522 = vpack.c.b16 %v2818, %v2814
    %v3523 = vpack.c.b16 %v2823, %v2819
    %v3524 = vpack.c.b16 %v2824, %v2820
    %v3525 = vpack.c.b16 %v2825, %v2821
    %v3526 = vpack.c.b16 %v2826, %v2822
    %v3527 = vpack.c.b16 %v2831, %v2827
    %v3528 = vpack.c.b16 %v2832, %v2828
    %v3529 = vpack.c.b16 %v2833, %v2829
    %v3530 = vpack.c.b16 %v2834, %v2830
    %v3531 = vpack.c.b16 %v2839, %v2835
    %v3532 = vpack.c.b16 %v2840, %v2836
    %v3533 = vpack.c.b16 %v2841, %v2837
    %v3534 = vpack.c.b16 %v2842, %v2838
    %v3535 = vpack.c.b16 %v2847, %v2843
    %v3536 = vpack.c.b16 %v2848, %v2844
    %v3537 = vpack.c.b16 %v2849, %v2845
    %v3538 = vpack.c.b16 %v2850, %v2846
    %v3539 = vpack.c.b16 %v2855, %v2851
    %v3540 = vpack.c.b16 %v2856, %v2852
    %v3541 = vpack.c.b16 %v2857, %v2853
    %v3542 = vpack.c.b16 %v2858, %v2854
    %v3543 = vpack.c.b16 %v2863, %v2859
    %v3544 = vpack.c.b16 %v2864, %v2860
    %v3545 = vpack.c.b16 %v2865, %v2861
    %v3546 = vpack.c.b16 %v2866, %v2862
    %v3547 = vpack.c.b16 %v2871, %v2867
    %v3548 = vpack.c.b16 %v2872, %v2868
    %v3549 = vpack.c.b16 %v2873, %v2869
    %v3550 = vpack.c.b16 %v2874, %v2870
    %v3551 = vpack.c.b16 %v2879, %v2875
    %v3552 = vpack.c.b16 %v2880, %v2876
    %v3553 = vpack.c.b16 %v2881, %v2877
    %v3554 = vpack.c.b16 %v2882, %v2878
    %v3555 = vpack.c.b16 %v2887, %v2883
    %v3556 = vpack.c.b16 %v2888, %v2884
    %v3557 = vpack.c.b16 %v2889, %v2885
    %v3558 = vpack.c.b16 %v2890, %v2886
    %v3559 = vpack.c.b16 %v2895, %v2891
    %v3560 = vpack.c.b16 %v2896, %v2892
    %v3561 = vpack.c.b16 %v2897, %v2893
    %v3562 = vpack.c.b16 %v2898, %v2894
    %v3563 = vpack.c.b16 %v2903, %v2899
    %v3564 = vpack.c.b16 %v2904, %v2900
    %v3565 = vpack.c.b16 %v2905, %v2901
    %v3566 = vpack.c.b16 %v2906, %v2902
    %v3567 = vpack.c.b16 %v2911, %v2907
    %v3568 = vpack.c.b16 %v2912, %v2908
    %v3569 = vpack.c.b16 %v2913, %v2909
    %v3570 = vpack.c.b16 %v2914, %v2910
    %v3571 = vpack.c.b16 %v2919, %v2915
    %v3572 = vpack.c.b16 %v2920, %v2916
    %v3573 = vpack.c.b16 %v2921, %v2917
    %v3574 = vpack.c.b16 %v2922, %v2918
    %v3575 = vpack.c.b16 %v2927, %v2923
    %v3576 = vpack.c.b16 %v2928, %v2924
    %v3577 = vpack.c.b16 %v2929, %v2925
    %v3578 = vpack.c.b16 %v2930, %v2926
    %v3579 = vpack.c.b16 %v2935, %v2931
    %v3580 = vpack.c.b16 %v2936, %v2932
    %v3581 = vpack.c.b16 %v2937, %v2933
    %v3582 = vpack.c.b16 %v2938, %v2934
    %v3583 = vpack.c.b16 %v2943, %v2939
    %v3584 = vpack.c.b16 %v2944, %v2940
    %v3585 = vpack.c.b16 %v2945, %v2941
    %v3586 = vpack.c.b16 %v2946, %v2942
    %v3587 = vpack.c.b16 %v2951, %v2947
    %v3588 = vpack.c.b16 %v2952, %v2948
    %v3589 = vpack.c.b16 %v2953, %v2949
    %v3590 = vpack.c.b16 %v2954, %v2950
    %v3591 = vpack.c.b16 %v2959, %v2955
    %v3592 = vpack.c.b16 %v2960, %v2956
    %v3593 = vpack.c.b16 %v2961, %v2957
    %v3594 = vpack.c.b16 %v2962, %v2958
    %v3595 = vpack.c.b16 %v2967, %v2963
    %v3596 = vpack.c.b16 %v2968, %v2964
    %v3597 = vpack.c.b16 %v2969, %v2965
    %v3598 = vpack.c.b16 %v2970, %v2966
    %v3599 = vpack.c.b16 %v2975, %v2971
    %v3600 = vpack.c.b16 %v2976, %v2972
    %v3601 = vpack.c.b16 %v2977, %v2973
    %v3602 = vpack.c.b16 %v2978, %v2974
    %v3603 = vpack.c.b16 %v2983, %v2979
    %v3604 = vpack.c.b16 %v2984, %v2980
    %v3605 = vpack.c.b16 %v2985, %v2981
    %v3606 = vpack.c.b16 %v2986, %v2982
    %v3607 = vpack.c.b16 %v2991, %v2987
    %v3608 = vpack.c.b16 %v2992, %v2988
    %v3609 = vpack.c.b16 %v2993, %v2989
    %v3610 = vpack.c.b16 %v2994, %v2990
    %v3611 = vpack.c.b16 %v2999, %v2995
    %v3612 = vpack.c.b16 %v3000, %v2996
    %v3613 = vpack.c.b16 %v3001, %v2997
    %v3614 = vpack.c.b16 %v3002, %v2998
    %v3615 = vpack.c.b16 %v3007, %v3003
    %v3616 = vpack.c.b16 %v3008, %v3004
    %v3617 = vpack.c.b16 %v3009, %v3005
    %v3618 = vpack.c.b16 %v3010, %v3006
    %v3619 = vpack.c.b16 %v3015, %v3011
    %v3620 = vpack.c.b16 %v3016, %v3012
    %v3621 = vpack.c.b16 %v3017, %v3013
    %v3622 = vpack.c.b16 %v3018, %v3014
    %v3623 = vpack.c.b16 %v3023, %v3019
    %v3624 = vpack.c.b16 %v3024, %v3020
    %v3625 = vpack.c.b16 %v3025, %v3021
    %v3626 = vpack.c.b16 %v3026, %v3022
    %v3627 = vpack.c.b16 %v3031, %v3027
    %v3628 = vpack.c.b16 %v3032, %v3028
    %v3629 = vpack.c.b16 %v3033, %v3029
    %v3630 = vpack.c.b16 %v3034, %v3030
    %v3631 = vpack.c.b16 %v3039, %v3035
    %v3632 = vpack.c.b16 %v3040, %v3036
    %v3633 = vpack.c.b16 %v3041, %v3037
    %v3634 = vpack.c.b16 %v3042, %v3038
    %v3635 = vpack.c.b16 %v3047, %v3043
    %v3636 = vpack.c.b16 %v3048, %v3044
    %v3637 = vpack.c.b16 %v3049, %v3045
    %v3638 = vpack.c.b16 %v3050, %v3046
    %v3639 = vpack.c.b16 %v3055, %v3051
    %v3640 = vpack.c.b16 %v3056, %v3052
    %v3641 = vpack.c.b16 %v3057, %v3053
    %v3642 = vpack.c.b16 %v3058, %v3054
    %v3643 = vpack.c.b16 %v3063, %v3059
    %v3644 = vpack.c.b16 %v3064, %v3060
    %v3645 = vpack.c.b16 %v3065, %v3061
    %v3646 = vpack.c.b16 %v3066, %v3062
    %v3647 = vpack.c.b16 %v3071, %v3067
    %v3648 = vpack.c.b16 %v3072, %v3068
    %v3649 = vpack.c.b16 %v3073, %v3069
    %v3650 = vpack.c.b16 %v3074, %v3070
    %v3651 = vpack.c.b16 %v3079, %v3075
    %v3652 = vpack.c.b16 %v3080, %v3076
    %v3653 = vpack.c.b16 %v3081, %v3077
    %v3654 = vpack.c.b16 %v3082, %v3078
    %v3655 = vpack.c.b16 %v3087, %v3083
    %v3656 = vpack.c.b16 %v3088, %v3084
    %v3657 = vpack.c.b16 %v3089, %v3085
    %v3658 = vpack.c.b16 %v3090, %v3086
    %v3659 = vpack.c.b16 %v3095, %v3091
    %v3660 = vpack.c.b16 %v3096, %v3092
    %v3661 = vpack.c.b16 %v3097, %v3093
    %v3662 = vpack.c.b16 %v3098, %v3094
    %v3663 = vpack.c.b16 %v3103, %v3099
    %v3664 = vpack.c.b16 %v3104, %v3100
    %v3665 = vpack.c.b16 %v3105, %v3101
    %v3666 = vpack.c.b16 %v3106, %v3102
    %v3667 = vpack.c.b16 %v3111, %v3107
    %v3668 = vpack.c.b16 %v3112, %v3108
    %v3669 = vpack.c.b16 %v3113, %v3109
    %v3670 = vpack.c.b16 %v3114, %v3110
    %v3671 = vpack.c.b16 %v3119, %v3115
    %v3672 = vpack.c.b16 %v3120, %v3116
    %v3673 = vpack.c.b16 %v3121, %v3117
    %v3674 = vpack.c.b16 %v3122, %v3118
    %v3675 = vpack.c.b16 %v3127, %v3123
    %v3676 = vpack.c.b16 %v3128, %v3124
    %v3677 = vpack.c.b16 %v3129, %v3125
    %v3678 = vpack.c.b16 %v3130, %v3126
    %v3679 = vpack.c.b16 %v3135, %v3131
    %v3680 = vpack.c.b16 %v3136, %v3132
    %v3681 = vpack.c.b16 %v3137, %v3133
    %v3682 = vpack.c.b16 %v3138, %v3134
    %v3683 = vpack.c.b16 %v3143, %v3139
    %v3684 = vpack.c.b16 %v3144, %v3140
    %v3685 = vpack.c.b16 %v3145, %v3141
    %v3686 = vpack.c.b16 %v3146, %v3142
    %v3687 = vpack.c.b16 %v3151, %v3147
    %v3688 = vpack.c.b16 %v3152, %v3148
    %v3689 = vpack.c.b16 %v3153, %v3149
    %v3690 = vpack.c.b16 %v3154, %v3150
    %v3691 = vpack.c.b16 %v3159, %v3155
    %v3692 = vpack.c.b16 %v3160, %v3156
    %v3693 = vpack.c.b16 %v3161, %v3157
    %v3694 = vpack.c.b16 %v3162, %v3158
    %v3695 = vpack.c.b16 %v3167, %v3163
    %v3696 = vpack.c.b16 %v3168, %v3164
    %v3697 = vpack.c.b16 %v3169, %v3165
    %v3698 = vpack.c.b16 %v3170, %v3166
    %v3699 = vpack.c.b16 %v3175, %v3171
    %v3700 = vpack.c.b16 %v3176, %v3172
    %v3701 = vpack.c.b16 %v3177, %v3173
    %v3702 = vpack.c.b16 %v3178, %v3174
    %v3703 = vpack.c.b16 %v3183, %v3179
    %v3704 = vpack.c.b16 %v3184, %v3180
    %v3705 = vpack.c.b16 %v3185, %v3181
    %v3706 = vpack.c.b16 %v3186, %v3182
    %v3707 = vpack.c.b16 %v3191, %v3187
    %v3708 = vpack.c.b16 %v3192, %v3188
    %v3709 = vpack.c.b16 %v3193, %v3189
    %v3710 = vpack.c.b16 %v3194, %v3190
    %v3711 = vpack.c.b16 %v3199, %v3195
    %v3712 = vpack.c.b16 %v3200, %v3196
    %v3713 = vpack.c.b16 %v3201, %v3197
    %v3714 = vpack.c.b16 %v3202, %v3198
    %4227 = vmatprep.subr.bf16.mxu0 %v3232
    %4228 = vmatpush1.bf16.msra.mxu0 %v3231
    %4229 = vmatprep.subr.bf16.mxu0 %v3228
    %4230 = vmatpush1.bf16.msra.mxu0 %v3227
    %4231 = vmatprep.subr.bf16.mxu0 %v3224
    %4232 = vmatpush1.bf16.msra.mxu0 %v3223
    %4233 = vmatprep.subr.bf16.mxu0 %v3220
    %4234 = vmatpush1.bf16.msra.mxu0 %v3219
    %4235 = vmatprep.subr.bf16.mxu0 %v3216
    %4236 = vmatpush1.bf16.msra.mxu0 %v3215
    %4237 = vmatprep.subr.bf16.mxu0 %v3212
    %4238 = vmatpush1.bf16.msra.mxu0 %v3211
    %4239 = vmatprep.subr.bf16.mxu0 %v3208
    %4240 = vmatpush1.bf16.msra.mxu0 %v3207
    %4241 = vmatprep.subr.bf16.mxu0 %v3204
    %4242 = vmatpush1.bf16.msra.mxu0 %v3203
    %4243 = vmatprep.subr.bf16.mxu0 %v3264
    %4244 = vmatpush2.bf16.msra.mxu0 %v3263
    %4245 = vmatprep.subr.bf16.mxu0 %v3260
    %4246 = vmatpush2.bf16.msra.mxu0 %v3259
    %4247 = vmatprep.subr.bf16.mxu0 %v3256
    %4248 = vmatpush2.bf16.msra.mxu0 %v3255
    %4249 = vmatprep.subr.bf16.mxu0 %v3252
    %4250 = vmatpush2.bf16.msra.mxu0 %v3251
    %4251 = vmatprep.subr.bf16.mxu0 %v3248
    %4252 = vmatpush2.bf16.msra.mxu0 %v3247
    %4253 = vmatprep.subr.bf16.mxu0 %v3244
    %4254 = vmatpush2.bf16.msra.mxu0 %v3243
    %4255 = vmatprep.subr.bf16.mxu0 %v3240
    %4256 = vmatpush2.bf16.msra.mxu0 %v3239
    %4257 = vmatprep.subr.bf16.mxu0 %v3236
    %4258 = vmatpush2.bf16.msra.mxu0 %v3235
    %4259 = vmatprep.mubr.bf16.mxu0 %v1118
    %4260 = vmatmul.mubr.bf16.gmra.mxu0 %v1117
    %v4261 = vpop.f32.mrf.mxu0
    %v4262 = vadd.f32 %v1650, %v4261
    %v4263 = vpop.f32.mrf.mxu0
    %v4264 = vadd.f32 %v1654, %v4263
    %v4265 = vpop.f32.mrf.mxu0
    %v4266 = vadd.f32 %v1650, %v4265
    %v4267 = vpop.f32.mrf.mxu0
    %v4268 = vadd.f32 %v1654, %v4267
    %4269 = vdwg.mxu0
    %4270 = vmatprep.subr.bf16.mxu0 %v3296
    %4271 = vmatpush1.bf16.msra.mxu0 %v3295
    %4272 = vmatprep.subr.bf16.mxu0 %v3292
    %4273 = vmatpush1.bf16.msra.mxu0 %v3291
    %4274 = vmatprep.subr.bf16.mxu0 %v3288
    %4275 = vmatpush1.bf16.msra.mxu0 %v3287
    %4276 = vmatprep.subr.bf16.mxu0 %v3284
    %4277 = vmatpush1.bf16.msra.mxu0 %v3283
    %4278 = vmatprep.subr.bf16.mxu0 %v3280
    %4279 = vmatpush1.bf16.msra.mxu0 %v3279
    %4280 = vmatprep.subr.bf16.mxu0 %v3276
    %4281 = vmatpush1.bf16.msra.mxu0 %v3275
    %4282 = vmatprep.subr.bf16.mxu0 %v3272
    %4283 = vmatpush1.bf16.msra.mxu0 %v3271
    %4284 = vmatprep.subr.bf16.mxu0 %v3268
    %4285 = vmatpush1.bf16.msra.mxu0 %v3267
    %4286 = vmatprep.subr.bf16.mxu0 %v3328
    %4287 = vmatpush2.bf16.msra.mxu0 %v3327
    %4288 = vmatprep.subr.bf16.mxu0 %v3324
    %4289 = vmatpush2.bf16.msra.mxu0 %v3323
    %4290 = vmatprep.subr.bf16.mxu0 %v3320
    %4291 = vmatpush2.bf16.msra.mxu0 %v3319
    %4292 = vmatprep.subr.bf16.mxu0 %v3316
    %4293 = vmatpush2.bf16.msra.mxu0 %v3315
    %4294 = vmatprep.subr.bf16.mxu0 %v3312
    %4295 = vmatpush2.bf16.msra.mxu0 %v3311
    %4296 = vmatprep.subr.bf16.mxu0 %v3308
    %4297 = vmatpush2.bf16.msra.mxu0 %v3307
    %4298 = vmatprep.subr.bf16.mxu0 %v3304
    %4299 = vmatpush2.bf16.msra.mxu0 %v3303
    %4300 = vmatprep.subr.bf16.mxu0 %v3300
    %4301 = vmatpush2.bf16.msra.mxu0 %v3299
    %4302 = vmatprep.mubr.bf16.mxu0 %v1120
    %4303 = vmatmul.mubr.bf16.gmra.mxu0 %v1119
    %v4304 = vpop.f32.mrf.mxu0
    %v4305 = vadd.f32 %v4262, %v4304
    %v4306 = vpop.f32.mrf.mxu0
    %v4307 = vadd.f32 %v4264, %v4306
    %v4308 = vpop.f32.mrf.mxu0
    %v4309 = vadd.f32 %v4266, %v4308
    %v4310 = vpop.f32.mrf.mxu0
    %v4311 = vadd.f32 %v4268, %v4310
    %4312 = vdwg.mxu0
    %4313 = vmatprep.subr.bf16.mxu0 %v3360
    %4314 = vmatpush1.bf16.msra.mxu0 %v3359
    %4315 = vmatprep.subr.bf16.mxu0 %v3356
    %4316 = vmatpush1.bf16.msra.mxu0 %v3355
    %4317 = vmatprep.subr.bf16.mxu0 %v3352
    %4318 = vmatpush1.bf16.msra.mxu0 %v3351
    %4319 = vmatprep.subr.bf16.mxu0 %v3348
    %4320 = vmatpush1.bf16.msra.mxu0 %v3347
    %4321 = vmatprep.subr.bf16.mxu0 %v3344
    %4322 = vmatpush1.bf16.msra.mxu0 %v3343
    %4323 = vmatprep.subr.bf16.mxu0 %v3340
    %4324 = vmatpush1.bf16.msra.mxu0 %v3339
    %4325 = vmatprep.subr.bf16.mxu0 %v3336
    %4326 = vmatpush1.bf16.msra.mxu0 %v3335
    %4327 = vmatprep.subr.bf16.mxu0 %v3332
    %4328 = vmatpush1.bf16.msra.mxu0 %v3331
    %4329 = vmatprep.subr.bf16.mxu0 %v3392
    %4330 = vmatpush2.bf16.msra.mxu0 %v3391
    %4331 = vmatprep.subr.bf16.mxu0 %v3388
    %4332 = vmatpush2.bf16.msra.mxu0 %v3387
    %4333 = vmatprep.subr.bf16.mxu0 %v3384
    %4334 = vmatpush2.bf16.msra.mxu0 %v3383
    %4335 = vmatprep.subr.bf16.mxu0 %v3380
    %4336 = vmatpush2.bf16.msra.mxu0 %v3379
    %4337 = vmatprep.subr.bf16.mxu0 %v3376
    %4338 = vmatpush2.bf16.msra.mxu0 %v3375
    %4339 = vmatprep.subr.bf16.mxu0 %v3372
    %4340 = vmatpush2.bf16.msra.mxu0 %v3371
    %4341 = vmatprep.subr.bf16.mxu0 %v3368
    %4342 = vmatpush2.bf16.msra.mxu0 %v3367
    %4343 = vmatprep.subr.bf16.mxu0 %v3364
    %4344 = vmatpush2.bf16.msra.mxu0 %v3363
    %4345 = vmatprep.mubr.bf16.mxu0 %v1122
    %4346 = vmatmul.mubr.bf16.gmra.mxu0 %v1121
    %v4347 = vpop.f32.mrf.mxu0
    %v4348 = vadd.f32 %v4305, %v4347
    %v4349 = vpop.f32.mrf.mxu0
    %v4350 = vadd.f32 %v4307, %v4349
    %v4351 = vpop.f32.mrf.mxu0
    %v4352 = vadd.f32 %v4309, %v4351
    %v4353 = vpop.f32.mrf.mxu0
    %v4354 = vadd.f32 %v4311, %v4353
    %4355 = vdwg.mxu0
    %4356 = vmatprep.subr.bf16.mxu0 %v3424
    %4357 = vmatpush1.bf16.msra.mxu0 %v3423
    %4358 = vmatprep.subr.bf16.mxu0 %v3420
    %4359 = vmatpush1.bf16.msra.mxu0 %v3419
    %4360 = vmatprep.subr.bf16.mxu0 %v3416
    %4361 = vmatpush1.bf16.msra.mxu0 %v3415
    %4362 = vmatprep.subr.bf16.mxu0 %v3412
    %4363 = vmatpush1.bf16.msra.mxu0 %v3411
    %4364 = vmatprep.subr.bf16.mxu0 %v3408
    %4365 = vmatpush1.bf16.msra.mxu0 %v3407
    %4366 = vmatprep.subr.bf16.mxu0 %v3404
    %4367 = vmatpush1.bf16.msra.mxu0 %v3403
    %4368 = vmatprep.subr.bf16.mxu0 %v3400
    %4369 = vmatpush1.bf16.msra.mxu0 %v3399
    %4370 = vmatprep.subr.bf16.mxu0 %v3396
    %4371 = vmatpush1.bf16.msra.mxu0 %v3395
    %4372 = vmatprep.subr.bf16.mxu0 %v3456
    %4373 = vmatpush2.bf16.msra.mxu0 %v3455
    %4374 = vmatprep.subr.bf16.mxu0 %v3452
    %4375 = vmatpush2.bf16.msra.mxu0 %v3451
    %4376 = vmatprep.subr.bf16.mxu0 %v3448
    %4377 = vmatpush2.bf16.msra.mxu0 %v3447
    %4378 = vmatprep.subr.bf16.mxu0 %v3444
    %4379 = vmatpush2.bf16.msra.mxu0 %v3443
    %4380 = vmatprep.subr.bf16.mxu0 %v3440
    %4381 = vmatpush2.bf16.msra.mxu0 %v3439
    %4382 = vmatprep.subr.bf16.mxu0 %v3436
    %4383 = vmatpush2.bf16.msra.mxu0 %v3435
    %4384 = vmatprep.subr.bf16.mxu0 %v3432
    %4385 = vmatpush2.bf16.msra.mxu0 %v3431
    %4386 = vmatprep.subr.bf16.mxu0 %v3428
    %4387 = vmatpush2.bf16.msra.mxu0 %v3427
    %4388 = vmatprep.mubr.bf16.mxu0 %v1124
    %4389 = vmatmul.mubr.bf16.gmra.mxu0 %v1123
    %v4390 = vpop.f32.mrf.mxu0
    %v4391 = vadd.f32 %v4348, %v4390
    %v4392 = vpop.f32.mrf.mxu0
    %v4393 = vadd.f32 %v4350, %v4392
    %v4394 = vpop.f32.mrf.mxu0
    %v4395 = vadd.f32 %v4352, %v4394
    %v4396 = vpop.f32.mrf.mxu0
    %v4397 = vadd.f32 %v4354, %v4396
    %4398 = vdwg.mxu0
    %4399 = vmatprep.subr.bf16.mxu0 %v3488
    %4400 = vmatpush1.bf16.msra.mxu0 %v3487
    %4401 = vmatprep.subr.bf16.mxu0 %v3484
    %4402 = vmatpush1.bf16.msra.mxu0 %v3483
    %4403 = vmatprep.subr.bf16.mxu0 %v3480
    %4404 = vmatpush1.bf16.msra.mxu0 %v3479
    %4405 = vmatprep.subr.bf16.mxu0 %v3476
    %4406 = vmatpush1.bf16.msra.mxu0 %v3475
    %4407 = vmatprep.subr.bf16.mxu0 %v3472
    %4408 = vmatpush1.bf16.msra.mxu0 %v3471
    %4409 = vmatprep.subr.bf16.mxu0 %v3468
    %4410 = vmatpush1.bf16.msra.mxu0 %v3467
    %4411 = vmatprep.subr.bf16.mxu0 %v3464
    %4412 = vmatpush1.bf16.msra.mxu0 %v3463
    %4413 = vmatprep.subr.bf16.mxu0 %v3460
    %4414 = vmatpush1.bf16.msra.mxu0 %v3459
    %4415 = vmatprep.subr.bf16.mxu0 %v3520
    %4416 = vmatpush2.bf16.msra.mxu0 %v3519
    %4417 = vmatprep.subr.bf16.mxu0 %v3516
    %4418 = vmatpush2.bf16.msra.mxu0 %v3515
    %4419 = vmatprep.subr.bf16.mxu0 %v3512
    %4420 = vmatpush2.bf16.msra.mxu0 %v3511
    %4421 = vmatprep.subr.bf16.mxu0 %v3508
    %4422 = vmatpush2.bf16.msra.mxu0 %v3507
    %4423 = vmatprep.subr.bf16.mxu0 %v3504
    %4424 = vmatpush2.bf16.msra.mxu0 %v3503
    %4425 = vmatprep.subr.bf16.mxu0 %v3500
    %4426 = vmatpush2.bf16.msra.mxu0 %v3499
    %4427 = vmatprep.subr.bf16.mxu0 %v3496
    %4428 = vmatpush2.bf16.msra.mxu0 %v3495
    %4429 = vmatprep.subr.bf16.mxu0 %v3492
    %4430 = vmatpush2.bf16.msra.mxu0 %v3491
    %4431 = vmatprep.mubr.bf16.mxu0 %v1126
    %4432 = vmatmul.mubr.bf16.gmra.mxu0 %v1125
    %v4433 = vpop.f32.mrf.mxu0
    %v4434 = vadd.f32 %v4391, %v4433
    %v4435 = vpop.f32.mrf.mxu0
    %v4436 = vadd.f32 %v4393, %v4435
    %v4437 = vpop.f32.mrf.mxu0
    %v4438 = vadd.f32 %v4395, %v4437
    %v4439 = vpop.f32.mrf.mxu0
    %v4440 = vadd.f32 %v4397, %v4439
    %4441 = vdwg.mxu0
    %4442 = vmatprep.subr.bf16.mxu0 %v3552
    %4443 = vmatpush1.bf16.msra.mxu0 %v3551
    %4444 = vmatprep.subr.bf16.mxu0 %v3548
    %4445 = vmatpush1.bf16.msra.mxu0 %v3547
    %4446 = vmatprep.subr.bf16.mxu0 %v3544
    %4447 = vmatpush1.bf16.msra.mxu0 %v3543
    %4448 = vmatprep.subr.bf16.mxu0 %v3540
    %4449 = vmatpush1.bf16.msra.mxu0 %v3539
    %4450 = vmatprep.subr.bf16.mxu0 %v3536
    %4451 = vmatpush1.bf16.msra.mxu0 %v3535
    %4452 = vmatprep.subr.bf16.mxu0 %v3532
    %4453 = vmatpush1.bf16.msra.mxu0 %v3531
    %4454 = vmatprep.subr.bf16.mxu0 %v3528
    %4455 = vmatpush1.bf16.msra.mxu0 %v3527
    %4456 = vmatprep.subr.bf16.mxu0 %v3524
    %4457 = vmatpush1.bf16.msra.mxu0 %v3523
    %4458 = vmatprep.subr.bf16.mxu0 %v3584
    %4459 = vmatpush2.bf16.msra.mxu0 %v3583
    %4460 = vmatprep.subr.bf16.mxu0 %v3580
    %4461 = vmatpush2.bf16.msra.mxu0 %v3579
    %4462 = vmatprep.subr.bf16.mxu0 %v3576
    %4463 = vmatpush2.bf16.msra.mxu0 %v3575
    %4464 = vmatprep.subr.bf16.mxu0 %v3572
    %4465 = vmatpush2.bf16.msra.mxu0 %v3571
    %4466 = vmatprep.subr.bf16.mxu0 %v3568
    %4467 = vmatpush2.bf16.msra.mxu0 %v3567
    %4468 = vmatprep.subr.bf16.mxu0 %v3564
    %4469 = vmatpush2.bf16.msra.mxu0 %v3563
    %4470 = vmatprep.subr.bf16.mxu0 %v3560
    %4471 = vmatpush2.bf16.msra.mxu0 %v3559
    %4472 = vmatprep.subr.bf16.mxu0 %v3556
    %4473 = vmatpush2.bf16.msra.mxu0 %v3555
    %4474 = vmatprep.mubr.bf16.mxu0 %v1128
    %4475 = vmatmul.mubr.bf16.gmra.mxu0 %v1127
    %v4476 = vpop.f32.mrf.mxu0
    %v4477 = vadd.f32 %v4434, %v4476
    %v4478 = vpop.f32.mrf.mxu0
    %v4479 = vadd.f32 %v4436, %v4478
    %v4480 = vpop.f32.mrf.mxu0
    %v4481 = vadd.f32 %v4438, %v4480
    %v4482 = vpop.f32.mrf.mxu0
    %v4483 = vadd.f32 %v4440, %v4482
    %4484 = vdwg.mxu0
    %4485 = vmatprep.subr.bf16.mxu0 %v3616
    %4486 = vmatpush1.bf16.msra.mxu0 %v3615
    %4487 = vmatprep.subr.bf16.mxu0 %v3612
    %4488 = vmatpush1.bf16.msra.mxu0 %v3611
    %4489 = vmatprep.subr.bf16.mxu0 %v3608
    %4490 = vmatpush1.bf16.msra.mxu0 %v3607
    %4491 = vmatprep.subr.bf16.mxu0 %v3604
    %4492 = vmatpush1.bf16.msra.mxu0 %v3603
    %4493 = vmatprep.subr.bf16.mxu0 %v3600
    %4494 = vmatpush1.bf16.msra.mxu0 %v3599
    %4495 = vmatprep.subr.bf16.mxu0 %v3596
    %4496 = vmatpush1.bf16.msra.mxu0 %v3595
    %4497 = vmatprep.subr.bf16.mxu0 %v3592
    %4498 = vmatpush1.bf16.msra.mxu0 %v3591
    %4499 = vmatprep.subr.bf16.mxu0 %v3588
    %4500 = vmatpush1.bf16.msra.mxu0 %v3587
    %4501 = vmatprep.subr.bf16.mxu0 %v3648
    %4502 = vmatpush2.bf16.msra.mxu0 %v3647
    %4503 = vmatprep.subr.bf16.mxu0 %v3644
    %4504 = vmatpush2.bf16.msra.mxu0 %v3643
    %4505 = vmatprep.subr.bf16.mxu0 %v3640
    %4506 = vmatpush2.bf16.msra.mxu0 %v3639
    %4507 = vmatprep.subr.bf16.mxu0 %v3636
    %4508 = vmatpush2.bf16.msra.mxu0 %v3635
    %4509 = vmatprep.subr.bf16.mxu0 %v3632
    %4510 = vmatpush2.bf16.msra.mxu0 %v3631
    %4511 = vmatprep.subr.bf16.mxu0 %v3628
    %4512 = vmatpush2.bf16.msra.mxu0 %v3627
    %4513 = vmatprep.subr.bf16.mxu0 %v3624
    %4514 = vmatpush2.bf16.msra.mxu0 %v3623
    %4515 = vmatprep.subr.bf16.mxu0 %v3620
    %4516 = vmatpush2.bf16.msra.mxu0 %v3619
    %4517 = vmatprep.mubr.bf16.mxu0 %v1130
    %4518 = vmatmul.mubr.bf16.gmra.mxu0 %v1129
    %v4519 = vpop.f32.mrf.mxu0
    %v4520 = vadd.f32 %v4477, %v4519
    %v4521 = vpop.f32.mrf.mxu0
    %v4522 = vadd.f32 %v4479, %v4521
    %v4523 = vpop.f32.mrf.mxu0
    %v4524 = vadd.f32 %v4481, %v4523
    %v4525 = vpop.f32.mrf.mxu0
    %v4526 = vadd.f32 %v4483, %v4525
    %4527 = vdwg.mxu0
    %4528 = vmatprep.subr.bf16.mxu0 %v3680
    %4529 = vmatpush1.bf16.msra.mxu0 %v3679
    %4530 = vmatprep.subr.bf16.mxu0 %v3676
    %4531 = vmatpush1.bf16.msra.mxu0 %v3675
    %4532 = vmatprep.subr.bf16.mxu0 %v3672
    %4533 = vmatpush1.bf16.msra.mxu0 %v3671
    %4534 = vmatprep.subr.bf16.mxu0 %v3668
    %4535 = vmatpush1.bf16.msra.mxu0 %v3667
    %4536 = vmatprep.subr.bf16.mxu0 %v3664
    %4537 = vmatpush1.bf16.msra.mxu0 %v3663
    %4538 = vmatprep.subr.bf16.mxu0 %v3660
    %4539 = vmatpush1.bf16.msra.mxu0 %v3659
    %4540 = vmatprep.subr.bf16.mxu0 %v3656
    %4541 = vmatpush1.bf16.msra.mxu0 %v3655
    %4542 = vmatprep.subr.bf16.mxu0 %v3652
    %4543 = vmatpush1.bf16.msra.mxu0 %v3651
    %4544 = vmatprep.subr.bf16.mxu0 %v3712
    %4545 = vmatpush2.bf16.msra.mxu0 %v3711
    %4546 = vmatprep.subr.bf16.mxu0 %v3708
    %4547 = vmatpush2.bf16.msra.mxu0 %v3707
    %4548 = vmatprep.subr.bf16.mxu0 %v3704
    %4549 = vmatpush2.bf16.msra.mxu0 %v3703
    %4550 = vmatprep.subr.bf16.mxu0 %v3700
    %4551 = vmatpush2.bf16.msra.mxu0 %v3699
    %4552 = vmatprep.subr.bf16.mxu0 %v3696
    %4553 = vmatpush2.bf16.msra.mxu0 %v3695
    %4554 = vmatprep.subr.bf16.mxu0 %v3692
    %4555 = vmatpush2.bf16.msra.mxu0 %v3691
    %4556 = vmatprep.subr.bf16.mxu0 %v3688
    %4557 = vmatpush2.bf16.msra.mxu0 %v3687
    %4558 = vmatprep.subr.bf16.mxu0 %v3684
    %4559 = vmatpush2.bf16.msra.mxu0 %v3683
    %4560 = vmatprep.mubr.bf16.mxu0 %v1132
    %4561 = vmatmul.mubr.bf16.gmra.mxu0 %v1131
    %v4562 = vpop.f32.mrf.mxu0
    %v4563 = vadd.f32 %v4520, %v4562
    %v4564 = vpop.f32.mrf.mxu0
    %v4565 = vadd.f32 %v4522, %v4564
    %v4566 = vpop.f32.mrf.mxu0
    %v4567 = vadd.f32 %v4524, %v4566
    %v4568 = vpop.f32.mrf.mxu0
    %v4569 = vadd.f32 %v4526, %v4568
    %4570 = vdwg.mxu0
    %4571 = vmatprep.subr.bf16.mxu0 %v3234
    %4572 = vmatpush1.bf16.msra.mxu0 %v3233
    %4573 = vmatprep.subr.bf16.mxu0 %v3230
    %4574 = vmatpush1.bf16.msra.mxu0 %v3229
    %4575 = vmatprep.subr.bf16.mxu0 %v3226
    %4576 = vmatpush1.bf16.msra.mxu0 %v3225
    %4577 = vmatprep.subr.bf16.mxu0 %v3222
    %4578 = vmatpush1.bf16.msra.mxu0 %v3221
    %4579 = vmatprep.subr.bf16.mxu0 %v3218
    %4580 = vmatpush1.bf16.msra.mxu0 %v3217
    %4581 = vmatprep.subr.bf16.mxu0 %v3214
    %4582 = vmatpush1.bf16.msra.mxu0 %v3213
    %4583 = vmatprep.subr.bf16.mxu0 %v3210
    %4584 = vmatpush1.bf16.msra.mxu0 %v3209
    %4585 = vmatprep.subr.bf16.mxu0 %v3206
    %4586 = vmatpush1.bf16.msra.mxu0 %v3205
    %4587 = vmatprep.subr.bf16.mxu0 %v3266
    %4588 = vmatpush2.bf16.msra.mxu0 %v3265
    %4589 = vmatprep.subr.bf16.mxu0 %v3262
    %4590 = vmatpush2.bf16.msra.mxu0 %v3261
    %4591 = vmatprep.subr.bf16.mxu0 %v3258
    %4592 = vmatpush2.bf16.msra.mxu0 %v3257
    %4593 = vmatprep.subr.bf16.mxu0 %v3254
    %4594 = vmatpush2.bf16.msra.mxu0 %v3253
    %4595 = vmatprep.subr.bf16.mxu0 %v3250
    %4596 = vmatpush2.bf16.msra.mxu0 %v3249
    %4597 = vmatprep.subr.bf16.mxu0 %v3246
    %4598 = vmatpush2.bf16.msra.mxu0 %v3245
    %4599 = vmatprep.subr.bf16.mxu0 %v3242
    %4600 = vmatpush2.bf16.msra.mxu0 %v3241
    %4601 = vmatprep.subr.bf16.mxu0 %v3238
    %4602 = vmatpush2.bf16.msra.mxu0 %v3237
    %4603 = vmatprep.mubr.bf16.mxu0 %v1118
    %4604 = vmatmul.mubr.bf16.gmra.mxu0 %v1117
    %v4605 = vpop.f32.mrf.mxu0
    %v4606 = vadd.f32 %v1658, %v4605
    %v4607 = vpop.f32.mrf.mxu0
    %v4608 = vadd.f32 %v1662, %v4607
    %v4609 = vpop.f32.mrf.mxu0
    %v4610 = vadd.f32 %v1658, %v4609
    %v4611 = vpop.f32.mrf.mxu0
    %v4612 = vadd.f32 %v1662, %v4611
    %4613 = vdwg.mxu0
    %4614 = vmatprep.subr.bf16.mxu0 %v3298
    %4615 = vmatpush1.bf16.msra.mxu0 %v3297
    %4616 = vmatprep.subr.bf16.mxu0 %v3294
    %4617 = vmatpush1.bf16.msra.mxu0 %v3293
    %4618 = vmatprep.subr.bf16.mxu0 %v3290
    %4619 = vmatpush1.bf16.msra.mxu0 %v3289
    %4620 = vmatprep.subr.bf16.mxu0 %v3286
    %4621 = vmatpush1.bf16.msra.mxu0 %v3285
    %4622 = vmatprep.subr.bf16.mxu0 %v3282
    %4623 = vmatpush1.bf16.msra.mxu0 %v3281
    %4624 = vmatprep.subr.bf16.mxu0 %v3278
    %4625 = vmatpush1.bf16.msra.mxu0 %v3277
    %4626 = vmatprep.subr.bf16.mxu0 %v3274
    %4627 = vmatpush1.bf16.msra.mxu0 %v3273
    %4628 = vmatprep.subr.bf16.mxu0 %v3270
    %4629 = vmatpush1.bf16.msra.mxu0 %v3269
    %4630 = vmatprep.subr.bf16.mxu0 %v3330
    %4631 = vmatpush2.bf16.msra.mxu0 %v3329
    %4632 = vmatprep.subr.bf16.mxu0 %v3326
    %4633 = vmatpush2.bf16.msra.mxu0 %v3325
    %4634 = vmatprep.subr.bf16.mxu0 %v3322
    %4635 = vmatpush2.bf16.msra.mxu0 %v3321
    %4636 = vmatprep.subr.bf16.mxu0 %v3318
    %4637 = vmatpush2.bf16.msra.mxu0 %v3317
    %4638 = vmatprep.subr.bf16.mxu0 %v3314
    %4639 = vmatpush2.bf16.msra.mxu0 %v3313
    %4640 = vmatprep.subr.bf16.mxu0 %v3310
    %4641 = vmatpush2.bf16.msra.mxu0 %v3309
    %4642 = vmatprep.subr.bf16.mxu0 %v3306
    %4643 = vmatpush2.bf16.msra.mxu0 %v3305
    %4644 = vmatprep.subr.bf16.mxu0 %v3302
    %4645 = vmatpush2.bf16.msra.mxu0 %v3301
    %4646 = vmatprep.mubr.bf16.mxu0 %v1120
    %4647 = vmatmul.mubr.bf16.gmra.mxu0 %v1119
    %v4648 = vpop.f32.mrf.mxu0
    %v4649 = vadd.f32 %v4606, %v4648
    %v4650 = vpop.f32.mrf.mxu0
    %v4651 = vadd.f32 %v4608, %v4650
    %v4652 = vpop.f32.mrf.mxu0
    %v4653 = vadd.f32 %v4610, %v4652
    %v4654 = vpop.f32.mrf.mxu0
    %v4655 = vadd.f32 %v4612, %v4654
    %4656 = vdwg.mxu0
    %4657 = vmatprep.subr.bf16.mxu0 %v3362
    %4658 = vmatpush1.bf16.msra.mxu0 %v3361
    %4659 = vmatprep.subr.bf16.mxu0 %v3358
    %4660 = vmatpush1.bf16.msra.mxu0 %v3357
    %4661 = vmatprep.subr.bf16.mxu0 %v3354
    %4662 = vmatpush1.bf16.msra.mxu0 %v3353
    %4663 = vmatprep.subr.bf16.mxu0 %v3350
    %4664 = vmatpush1.bf16.msra.mxu0 %v3349
    %4665 = vmatprep.subr.bf16.mxu0 %v3346
    %4666 = vmatpush1.bf16.msra.mxu0 %v3345
    %4667 = vmatprep.subr.bf16.mxu0 %v3342
    %4668 = vmatpush1.bf16.msra.mxu0 %v3341
    %4669 = vmatprep.subr.bf16.mxu0 %v3338
    %4670 = vmatpush1.bf16.msra.mxu0 %v3337
    %4671 = vmatprep.subr.bf16.mxu0 %v3334
    %4672 = vmatpush1.bf16.msra.mxu0 %v3333
    %4673 = vmatprep.subr.bf16.mxu0 %v3394
    %4674 = vmatpush2.bf16.msra.mxu0 %v3393
    %4675 = vmatprep.subr.bf16.mxu0 %v3390
    %4676 = vmatpush2.bf16.msra.mxu0 %v3389
    %4677 = vmatprep.subr.bf16.mxu0 %v3386
    %4678 = vmatpush2.bf16.msra.mxu0 %v3385
    %4679 = vmatprep.subr.bf16.mxu0 %v3382
    %4680 = vmatpush2.bf16.msra.mxu0 %v3381
    %4681 = vmatprep.subr.bf16.mxu0 %v3378
    %4682 = vmatpush2.bf16.msra.mxu0 %v3377
    %4683 = vmatprep.subr.bf16.mxu0 %v3374
    %4684 = vmatpush2.bf16.msra.mxu0 %v3373
    %4685 = vmatprep.subr.bf16.mxu0 %v3370
    %4686 = vmatpush2.bf16.msra.mxu0 %v3369
    %4687 = vmatprep.subr.bf16.mxu0 %v3366
    %4688 = vmatpush2.bf16.msra.mxu0 %v3365
    %4689 = vmatprep.mubr.bf16.mxu0 %v1122
    %4690 = vmatmul.mubr.bf16.gmra.mxu0 %v1121
    %v4691 = vpop.f32.mrf.mxu0
    %v4692 = vadd.f32 %v4649, %v4691
    %v4693 = vpop.f32.mrf.mxu0
    %v4694 = vadd.f32 %v4651, %v4693
    %v4695 = vpop.f32.mrf.mxu0
    %v4696 = vadd.f32 %v4653, %v4695
    %v4697 = vpop.f32.mrf.mxu0
    %v4698 = vadd.f32 %v4655, %v4697
    %4699 = vdwg.mxu0
    %4700 = vmatprep.subr.bf16.mxu0 %v3426
    %4701 = vmatpush1.bf16.msra.mxu0 %v3425
    %4702 = vmatprep.subr.bf16.mxu0 %v3422
    %4703 = vmatpush1.bf16.msra.mxu0 %v3421
    %4704 = vmatprep.subr.bf16.mxu0 %v3418
    %4705 = vmatpush1.bf16.msra.mxu0 %v3417
    %4706 = vmatprep.subr.bf16.mxu0 %v3414
    %4707 = vmatpush1.bf16.msra.mxu0 %v3413
    %4708 = vmatprep.subr.bf16.mxu0 %v3410
    %4709 = vmatpush1.bf16.msra.mxu0 %v3409
    %4710 = vmatprep.subr.bf16.mxu0 %v3406
    %4711 = vmatpush1.bf16.msra.mxu0 %v3405
    %4712 = vmatprep.subr.bf16.mxu0 %v3402
    %4713 = vmatpush1.bf16.msra.mxu0 %v3401
    %4714 = vmatprep.subr.bf16.mxu0 %v3398
    %4715 = vmatpush1.bf16.msra.mxu0 %v3397
    %4716 = vmatprep.subr.bf16.mxu0 %v3458
    %4717 = vmatpush2.bf16.msra.mxu0 %v3457
    %4718 = vmatprep.subr.bf16.mxu0 %v3454
    %4719 = vmatpush2.bf16.msra.mxu0 %v3453
    %4720 = vmatprep.subr.bf16.mxu0 %v3450
    %4721 = vmatpush2.bf16.msra.mxu0 %v3449
    %4722 = vmatprep.subr.bf16.mxu0 %v3446
    %4723 = vmatpush2.bf16.msra.mxu0 %v3445
    %4724 = vmatprep.subr.bf16.mxu0 %v3442
    %4725 = vmatpush2.bf16.msra.mxu0 %v3441
    %4726 = vmatprep.subr.bf16.mxu0 %v3438
    %4727 = vmatpush2.bf16.msra.mxu0 %v3437
    %4728 = vmatprep.subr.bf16.mxu0 %v3434
    %4729 = vmatpush2.bf16.msra.mxu0 %v3433
    %4730 = vmatprep.subr.bf16.mxu0 %v3430
    %4731 = vmatpush2.bf16.msra.mxu0 %v3429
    %4732 = vmatprep.mubr.bf16.mxu0 %v1124
    %4733 = vmatmul.mubr.bf16.gmra.mxu0 %v1123
    %v4734 = vpop.f32.mrf.mxu0
    %v4735 = vadd.f32 %v4692, %v4734
    %v4736 = vpop.f32.mrf.mxu0
    %v4737 = vadd.f32 %v4694, %v4736
    %v4738 = vpop.f32.mrf.mxu0
    %v4739 = vadd.f32 %v4696, %v4738
    %v4740 = vpop.f32.mrf.mxu0
    %v4741 = vadd.f32 %v4698, %v4740
    %4742 = vdwg.mxu0
    %4743 = vmatprep.subr.bf16.mxu0 %v3490
    %4744 = vmatpush1.bf16.msra.mxu0 %v3489
    %4745 = vmatprep.subr.bf16.mxu0 %v3486
    %4746 = vmatpush1.bf16.msra.mxu0 %v3485
    %4747 = vmatprep.subr.bf16.mxu0 %v3482
    %4748 = vmatpush1.bf16.msra.mxu0 %v3481
    %4749 = vmatprep.subr.bf16.mxu0 %v3478
    %4750 = vmatpush1.bf16.msra.mxu0 %v3477
    %4751 = vmatprep.subr.bf16.mxu0 %v3474
    %4752 = vmatpush1.bf16.msra.mxu0 %v3473
    %4753 = vmatprep.subr.bf16.mxu0 %v3470
    %4754 = vmatpush1.bf16.msra.mxu0 %v3469
    %4755 = vmatprep.subr.bf16.mxu0 %v3466
    %4756 = vmatpush1.bf16.msra.mxu0 %v3465
    %4757 = vmatprep.subr.bf16.mxu0 %v3462
    %4758 = vmatpush1.bf16.msra.mxu0 %v3461
    %4759 = vmatprep.subr.bf16.mxu0 %v3522
    %4760 = vmatpush2.bf16.msra.mxu0 %v3521
    %4761 = vmatprep.subr.bf16.mxu0 %v3518
    %4762 = vmatpush2.bf16.msra.mxu0 %v3517
    %4763 = vmatprep.subr.bf16.mxu0 %v3514
    %4764 = vmatpush2.bf16.msra.mxu0 %v3513
    %4765 = vmatprep.subr.bf16.mxu0 %v3510
    %4766 = vmatpush2.bf16.msra.mxu0 %v3509
    %4767 = vmatprep.subr.bf16.mxu0 %v3506
    %4768 = vmatpush2.bf16.msra.mxu0 %v3505
    %4769 = vmatprep.subr.bf16.mxu0 %v3502
    %4770 = vmatpush2.bf16.msra.mxu0 %v3501
    %4771 = vmatprep.subr.bf16.mxu0 %v3498
    %4772 = vmatpush2.bf16.msra.mxu0 %v3497
    %4773 = vmatprep.subr.bf16.mxu0 %v3494
    %4774 = vmatpush2.bf16.msra.mxu0 %v3493
    %4775 = vmatprep.mubr.bf16.mxu0 %v1126
    %4776 = vmatmul.mubr.bf16.gmra.mxu0 %v1125
    %v4777 = vpop.f32.mrf.mxu0
    %v4778 = vadd.f32 %v4735, %v4777
    %v4779 = vpop.f32.mrf.mxu0
    %v4780 = vadd.f32 %v4737, %v4779
    %v4781 = vpop.f32.mrf.mxu0
    %v4782 = vadd.f32 %v4739, %v4781
    %v4783 = vpop.f32.mrf.mxu0
    %v4784 = vadd.f32 %v4741, %v4783
    %4785 = vdwg.mxu0
    %4786 = vmatprep.subr.bf16.mxu0 %v3554
    %4787 = vmatpush1.bf16.msra.mxu0 %v3553
    %4788 = vmatprep.subr.bf16.mxu0 %v3550
    %4789 = vmatpush1.bf16.msra.mxu0 %v3549
    %4790 = vmatprep.subr.bf16.mxu0 %v3546
    %4791 = vmatpush1.bf16.msra.mxu0 %v3545
    %4792 = vmatprep.subr.bf16.mxu0 %v3542
    %4793 = vmatpush1.bf16.msra.mxu0 %v3541
    %4794 = vmatprep.subr.bf16.mxu0 %v3538
    %4795 = vmatpush1.bf16.msra.mxu0 %v3537
    %4796 = vmatprep.subr.bf16.mxu0 %v3534
    %4797 = vmatpush1.bf16.msra.mxu0 %v3533
    %4798 = vmatprep.subr.bf16.mxu0 %v3530
    %4799 = vmatpush1.bf16.msra.mxu0 %v3529
    %4800 = vmatprep.subr.bf16.mxu0 %v3526
    %4801 = vmatpush1.bf16.msra.mxu0 %v3525
    %4802 = vmatprep.subr.bf16.mxu0 %v3586
    %4803 = vmatpush2.bf16.msra.mxu0 %v3585
    %4804 = vmatprep.subr.bf16.mxu0 %v3582
    %4805 = vmatpush2.bf16.msra.mxu0 %v3581
    %4806 = vmatprep.subr.bf16.mxu0 %v3578
    %4807 = vmatpush2.bf16.msra.mxu0 %v3577
    %4808 = vmatprep.subr.bf16.mxu0 %v3574
    %4809 = vmatpush2.bf16.msra.mxu0 %v3573
    %4810 = vmatprep.subr.bf16.mxu0 %v3570
    %4811 = vmatpush2.bf16.msra.mxu0 %v3569
    %4812 = vmatprep.subr.bf16.mxu0 %v3566
    %4813 = vmatpush2.bf16.msra.mxu0 %v3565
    %4814 = vmatprep.subr.bf16.mxu0 %v3562
    %4815 = vmatpush2.bf16.msra.mxu0 %v3561
    %4816 = vmatprep.subr.bf16.mxu0 %v3558
    %4817 = vmatpush2.bf16.msra.mxu0 %v3557
    %4818 = vmatprep.mubr.bf16.mxu0 %v1128
    %4819 = vmatmul.mubr.bf16.gmra.mxu0 %v1127
    %v4820 = vpop.f32.mrf.mxu0
    %v4821 = vadd.f32 %v4778, %v4820
    %v4822 = vpop.f32.mrf.mxu0
    %v4823 = vadd.f32 %v4780, %v4822
    %v4824 = vpop.f32.mrf.mxu0
    %v4825 = vadd.f32 %v4782, %v4824
    %v4826 = vpop.f32.mrf.mxu0
    %v4827 = vadd.f32 %v4784, %v4826
    %4828 = vdwg.mxu0
    %4829 = vmatprep.subr.bf16.mxu0 %v3618
    %4830 = vmatpush1.bf16.msra.mxu0 %v3617
    %4831 = vmatprep.subr.bf16.mxu0 %v3614
    %4832 = vmatpush1.bf16.msra.mxu0 %v3613
    %4833 = vmatprep.subr.bf16.mxu0 %v3610
    %4834 = vmatpush1.bf16.msra.mxu0 %v3609
    %4835 = vmatprep.subr.bf16.mxu0 %v3606
    %4836 = vmatpush1.bf16.msra.mxu0 %v3605
    %4837 = vmatprep.subr.bf16.mxu0 %v3602
    %4838 = vmatpush1.bf16.msra.mxu0 %v3601
    %4839 = vmatprep.subr.bf16.mxu0 %v3598
    %4840 = vmatpush1.bf16.msra.mxu0 %v3597
    %4841 = vmatprep.subr.bf16.mxu0 %v3594
    %4842 = vmatpush1.bf16.msra.mxu0 %v3593
    %4843 = vmatprep.subr.bf16.mxu0 %v3590
    %4844 = vmatpush1.bf16.msra.mxu0 %v3589
    %4845 = vmatprep.subr.bf16.mxu0 %v3650
    %4846 = vmatpush2.bf16.msra.mxu0 %v3649
    %4847 = vmatprep.subr.bf16.mxu0 %v3646
    %4848 = vmatpush2.bf16.msra.mxu0 %v3645
    %4849 = vmatprep.subr.bf16.mxu0 %v3642
    %4850 = vmatpush2.bf16.msra.mxu0 %v3641
    %4851 = vmatprep.subr.bf16.mxu0 %v3638
    %4852 = vmatpush2.bf16.msra.mxu0 %v3637
    %4853 = vmatprep.subr.bf16.mxu0 %v3634
    %4854 = vmatpush2.bf16.msra.mxu0 %v3633
    %4855 = vmatprep.subr.bf16.mxu0 %v3630
    %4856 = vmatpush2.bf16.msra.mxu0 %v3629
    %4857 = vmatprep.subr.bf16.mxu0 %v3626
    %4858 = vmatpush2.bf16.msra.mxu0 %v3625
    %4859 = vmatprep.subr.bf16.mxu0 %v3622
    %4860 = vmatpush2.bf16.msra.mxu0 %v3621
    %4861 = vmatprep.mubr.bf16.mxu0 %v1130
    %4862 = vmatmul.mubr.bf16.gmra.mxu0 %v1129
    %v4863 = vpop.f32.mrf.mxu0
    %v4864 = vadd.f32 %v4821, %v4863
    %v4865 = vpop.f32.mrf.mxu0
    %v4866 = vadd.f32 %v4823, %v4865
    %v4867 = vpop.f32.mrf.mxu0
    %v4868 = vadd.f32 %v4825, %v4867
    %v4869 = vpop.f32.mrf.mxu0
    %v4870 = vadd.f32 %v4827, %v4869
    %4871 = vdwg.mxu0
    %4872 = vmatprep.subr.bf16.mxu0 %v3682
    %4873 = vmatpush1.bf16.msra.mxu0 %v3681
    %4874 = vmatprep.subr.bf16.mxu0 %v3678
    %4875 = vmatpush1.bf16.msra.mxu0 %v3677
    %4876 = vmatprep.subr.bf16.mxu0 %v3674
    %4877 = vmatpush1.bf16.msra.mxu0 %v3673
    %4878 = vmatprep.subr.bf16.mxu0 %v3670
    %4879 = vmatpush1.bf16.msra.mxu0 %v3669
    %4880 = vmatprep.subr.bf16.mxu0 %v3666
    %4881 = vmatpush1.bf16.msra.mxu0 %v3665
    %4882 = vmatprep.subr.bf16.mxu0 %v3662
    %4883 = vmatpush1.bf16.msra.mxu0 %v3661
    %4884 = vmatprep.subr.bf16.mxu0 %v3658
    %4885 = vmatpush1.bf16.msra.mxu0 %v3657
    %4886 = vmatprep.subr.bf16.mxu0 %v3654
    %4887 = vmatpush1.bf16.msra.mxu0 %v3653
    %4888 = vmatprep.subr.bf16.mxu0 %v3714
    %4889 = vmatpush2.bf16.msra.mxu0 %v3713
    %4890 = vmatprep.subr.bf16.mxu0 %v3710
    %4891 = vmatpush2.bf16.msra.mxu0 %v3709
    %4892 = vmatprep.subr.bf16.mxu0 %v3706
    %4893 = vmatpush2.bf16.msra.mxu0 %v3705
    %4894 = vmatprep.subr.bf16.mxu0 %v3702
    %4895 = vmatpush2.bf16.msra.mxu0 %v3701
    %4896 = vmatprep.subr.bf16.mxu0 %v3698
    %4897 = vmatpush2.bf16.msra.mxu0 %v3697
    %4898 = vmatprep.subr.bf16.mxu0 %v3694
    %4899 = vmatpush2.bf16.msra.mxu0 %v3693
    %4900 = vmatprep.subr.bf16.mxu0 %v3690
    %4901 = vmatpush2.bf16.msra.mxu0 %v3689
    %4902 = vmatprep.subr.bf16.mxu0 %v3686
    %4903 = vmatpush2.bf16.msra.mxu0 %v3685
    %4904 = vmatprep.mubr.bf16.mxu0 %v1132
    %4905 = vmatmul.mubr.bf16.gmra.mxu0 %v1131
    %v4906 = vpop.f32.mrf.mxu0
    %v4907 = vadd.f32 %v4864, %v4906
    %v4908 = vpop.f32.mrf.mxu0
    %v4909 = vadd.f32 %v4866, %v4908
    %v4910 = vpop.f32.mrf.mxu0
    %v4911 = vadd.f32 %v4868, %v4910
    %v4912 = vpop.f32.mrf.mxu0
    %v4913 = vadd.f32 %v4870, %v4912
    %4914 = vdwg.mxu0
    %v4915 = vmax.f32 %v4563, 0.0
    %v4916 = vmax.f32 %v4565, 0.0
    %v4917 = vmax.f32 %v4907, 0.0
    %v4918 = vmax.f32 %v4909, 0.0
    %v4919 = vmax.f32 %v4567, 0.0
    %v4920 = vmax.f32 %v4569, 0.0
    %v4921 = vmax.f32 %v4911, 0.0
    %v4922 = vmax.f32 %v4913, 0.0
    %v4923 = vpack.c.bf16 %v4919, %v4915
    %v4924 = vpack.c.bf16 %v4920, %v4916
    %v4925 = vpack.c.bf16 %v4921, %v4917
    %v4926 = vpack.c.bf16 %v4922, %v4918
    %v4931 = vunpack.c.l.b16 %v4923
    %v4932 = vunpack.c.l.b16 %v4924
    %v4933 = vunpack.c.l.b16 %v4925
    %v4934 = vunpack.c.l.b16 %v4926
    %v4935 = vunpack.c.h.b16 %v4923
    %v4936 = vunpack.c.h.b16 %v4924
    %v4937 = vunpack.c.h.b16 %v4925
    %v4938 = vunpack.c.h.b16 %v4926
    %v4939 = vpack.c.b16 %v4932, %v4931
    %v4940 = vpack.c.b16 %v4934, %v4933
    %v4941 = vpack.c.b16 %v4936, %v4935
    %v4942 = vpack.c.b16 %v4938, %v4937
    %4947 = vst [vmem:[%s5] sm:$0xff] %v4939
    %4948 = vst [vmem:[%s5 + $0x8] sm:$0xff] %v4940
    %4949 = vst [vmem:[%s5 + $0x10] sm:$0xff] %v4941
    %4950 = vst [vmem:[%s5 + $0x18] sm:$0xff] %v4942
    // Predicated region
    $region38: #{crnn_forward.3} parent=1 // pred_check
      _
    $region39: #{crnn_forward.3} parent=1 // pred_check_branch
      %4952 = sbr.rel (0) target = $region41
    $region40: #{crnn_forward.3} parent=1 // pred_region
      _
    $region41: #{crnn_forward.3} parent=1 // pred_fallthru
      _
    // Predicated region
    $region42: #{crnn_forward.3} parent=1 // pred_check
      _
    $region43: #{crnn_forward.3} parent=1 // pred_check_branch
      %4954 = sbr.rel (0) target = $region45
    $region44: #{crnn_forward.3} parent=1 // pred_region
      _
    $region45: #{crnn_forward.3} parent=1 // pred_fallthru
      _
    %4955 = vsyncpa [#allocation3], 1
    %4956 = vsyncpa [#allocation5], 1
    %4957 = vsyncpa [#allocation8], 1

</llo_original>
